<compile_context>
chip_gen: v7x
topology: tpu7x:2x2x1
jax: 0.10.0
libtpu: 0.0.40
codegen_flags: <defaults>
</compile_context>

<pallas_src>
import functools

import jax
import jax.numpy as jnp
from jax.experimental import pallas as pl
from jax.experimental.pallas import tpu as pltpu


def _avgpool_fc_kernel(x_ref, w_ref, b_ref, o_ref):
    """One grid step over an output-column tile.

    x_ref : (N, C, HW)  f32  activations (free reshape of NCHW); constant
                             block index -> DMA'd once, stays VMEM-resident.
    w_ref : (C, tn)     bf16 column tile of the pre-transposed, 1/HW-scaled
                             fc weight (consumed natively by the MXU).
    b_ref : (1, tn)     f32  bias tile.
    o_ref : (N, tn)     f32  lane-dense output tile.
    """
    # Global average pool: lane-axis (HW) sum; the 1/(H*W) is folded into the
    # weight, so the matmul consumes raw sums.
    pooled = jnp.sum(x_ref[...], axis=-1)                       # (N, C) f32
    # bf16 x bf16 -> f32 accumulate on the MXU (no f32 upcast of the weight).
    acc = jnp.dot(pooled.astype(jnp.bfloat16), w_ref[...],
                  preferred_element_type=jnp.float32)           # (N, tn) f32
    o_ref[...] = (acc + b_ref[...]).astype(o_ref.dtype)


def prepare_fc_params(fc_weight, fc_bias, hw):
    """One-time (init) prep, NOT on the hot path:
    transpose to (C, OUT), fold the 1/(H*W) mean scale into the weight,
    zero-pad OUT to a multiple of 128 (1000 -> 1024), cast weight to bf16."""
    out_features, c = fc_weight.shape
    out_pad = ((out_features + 127) // 128) * 128
    w_scaled = (fc_weight.T * (1.0 / float(hw))).astype(jnp.bfloat16)
    w_t = jnp.zeros((c, out_pad), jnp.bfloat16).at[:, :out_features].set(w_scaled)
    b_t = jnp.zeros((1, out_pad), jnp.float32).at[0, :out_features].set(
        fc_bias.astype(jnp.float32))
    return w_t, b_t, out_features


def _pick_tn(out_pad):
    """Column-tile size: split across the two TensorCores on v7x, single grid
    step on single-TC chips (v5e/v6e) to avoid per-step overhead."""
    try:
        kind = jax.devices()[0].device_kind.lower()
    except Exception:
        kind = ""
    if "v7" in kind or "7x" in kind:
        return min(512, out_pad)
    return out_pad


def resnet50_cutted_forward(x, w_t, b_t, *, out_features, tn=None):
    """x: (N, C, H, W) NCHW. w_t: (C, OUT_PAD) bf16 (1/HW folded in).
    b_t: (1, OUT_PAD) f32."""
    N, C, H, W = x.shape
    C_w, OUT_PAD = w_t.shape
    assert C == C_w
    HW = H * W
    if tn is None:
        tn = _pick_tn(OUT_PAD)
    assert OUT_PAD % tn == 0

    # Free reshape from NCHW -- no standalone XLA transpose kernel.
    x3 = x.reshape(N, C, HW).astype(jnp.float32)                 # (N, C, HW)

    out = pl.pallas_call(
        _avgpool_fc_kernel,
        out_shape=jax.ShapeDtypeStruct((N, OUT_PAD), jnp.float32),
        grid_spec=pltpu.PrefetchScalarGridSpec(
            num_scalar_prefetch=0,
            grid=(OUT_PAD // tn,),                      # parallel output cols
            in_specs=[
                pl.BlockSpec((N, C, HW), lambda j: (0, 0, 0)),   # resident x
                pl.BlockSpec((C, tn), lambda j: (0, j)),         # bf16 weight
                pl.BlockSpec((1, tn), lambda j: (0, j)),         # bias
            ],
            out_specs=pl.BlockSpec((N, tn), lambda j: (0, j)),
        ),
        compiler_params=pltpu.CompilerParams(
            dimension_semantics=("parallel",)),          # megacore on v7x
    )(x3, w_t, b_t)

    return out[:, :out_features]


if __name__ == "__main__":
    # Shapes implied by resnet50 cut after 'layer4':
    #   x: layer4 output -> (N, 2048, 7, 7); fc: Linear(2048, 1000).
    N, C, H, W = 2, 2048, 7, 7
    OUT = 1000

    key = jax.random.PRNGKey(0)
    kx, kw, kb = jax.random.split(key, 3)
    x = jax.random.normal(kx, (N, C, H, W), dtype=jnp.float32)
    fc_weight = jax.random.normal(kw, (OUT, C), dtype=jnp.float32) * (1.0 / jnp.sqrt(C))
    fc_bias = jax.random.normal(kb, (OUT,), dtype=jnp.float32) * 0.01

    # Init-time weight prep (hoisted out of the per-call hot path).
    w_t, b_t, out_features = prepare_fc_params(fc_weight, fc_bias, hw=H * W)

    fwd = jax.jit(functools.partial(resnet50_cutted_forward,
                                    out_features=out_features))
    y = jax.block_until_ready(fwd(x, w_t, b_t))
    assert y.shape == (N, OUT)

    # Tight check vs. a reference that applies the SAME bf16 quantization the
    # kernel uses (pooled sums + 1/HW-folded weight) -> validates arithmetic.
    pooled_sum = jnp.sum(x.reshape(N, C, H * W), axis=-1)          # (N, C)
    w_scaled_bf = (fc_weight.T * (1.0 / (H * W))).astype(jnp.bfloat16)
    y_ref_bf = (pooled_sum.astype(jnp.bfloat16).astype(jnp.float32)
                @ w_scaled_bf.astype(jnp.float32)) + fc_bias
    assert jnp.allclose(y, y_ref_bf, atol=2e-3, rtol=2e-3)

    # Loose check vs. full-precision module semantics (bf16 quantization only).
    pooled_ref = jnp.mean(x, axis=(2, 3))                          # (N, C)
    y_ref_f32 = pooled_ref @ fc_weight.T + fc_bias
    assert jnp.allclose(y, y_ref_f32, atol=3e-2, rtol=3e-2)

    print("KERNEL_OK")
</pallas_src>

<mosaic_0001>
module attributes {stable_mosaic.version = 11 : i64} {
  func.func @_avgpool_fc_kernel(%arg0: i32, %arg1: memref<2x2048x49xf32, #tpu.memory_space<vmem>>, %arg2: memref<2048x1024xbf16, #tpu.memory_space<vmem>>, %arg3: memref<1x1024xf32, #tpu.memory_space<vmem>>, %arg4: memref<2x1024xf32, #tpu.memory_space<vmem>>) attributes {dimension_semantics = [#tpu.dimension_semantics<parallel>], iteration_bounds = array<i64: 1>, scalar_prefetch = 0 : i64, scratch_operands = 0 : i64, tpu.core_type = #tpu.core_type<tc>, window_params = [{pipeline_mode = #tpu.pipeline_mode<synchronous>, transform_indices = @transform_0, window_bounds = array<i64: 2, 2048, 49>}, {transform_indices = @transform_1, window_bounds = array<i64: 2048, 1024>}, {transform_indices = @transform_2, window_bounds = array<i64: 1, 1024>}, {transform_indices = @transform_3, window_bounds = array<i64: 2, 1024>}]} {
    %c0 = arith.constant 0 : index
    %c0_0 = arith.constant 0 : index
    %c0_1 = arith.constant 0 : index
    %0 = vector.load %arg1[%c0, %c0_0, %c0_1] : memref<2x2048x49xf32, #tpu.memory_space<vmem>>, vector<2x2048x49xf32>
    %cst = arith.constant dense<0.000000e+00> : vector<2x2048xf32>
    %1 = vector.multi_reduction <add>, %0, %cst [2] : vector<2x2048x49xf32> to vector<2x2048xf32>
    %2 = arith.truncf %1 : vector<2x2048xf32> to vector<2x2048xbf16>
    %c0_2 = arith.constant 0 : index
    %c0_3 = arith.constant 0 : index
    %3 = vector.load %arg2[%c0_2, %c0_3] : memref<2048x1024xbf16, #tpu.memory_space<vmem>>, vector<2048x1024xbf16>
    %cst_4 = arith.constant dense<0.000000e+00> : vector<2x1024xf32>
    %4 = tpu.matmul %2, %3, %cst_4 {dimension_numbers = #tpu.dot_dimension_numbers<[1], [0], [0], [1], [0, 0, 1, 1], [], []>} : vector<2x2048xbf16>, vector<2048x1024xbf16>, vector<2x1024xf32> -> vector<2x1024xf32>
    %c0_5 = arith.constant 0 : index
    %c0_6 = arith.constant 0 : index
    %5 = vector.load %arg3[%c0_5, %c0_6] : memref<1x1024xf32, #tpu.memory_space<vmem>>, vector<1x1024xf32>
    %6 = vector.broadcast %5 : vector<1x1024xf32> to vector<2x1024xf32>
    %7 = arith.addf %4, %6 : vector<2x1024xf32>
    %c0_7 = arith.constant 0 : index
    %c0_8 = arith.constant 0 : index
    %8 = vector.load %arg4[%c0_7, %c0_8] : memref<2x1024xf32, #tpu.memory_space<vmem>>, vector<2x1024xf32>
    tpu.vector_store %arg4[%c0_7, %c0_8], %7 {strides = array<i32>} : memref<2x1024xf32, #tpu.memory_space<vmem>>, vector<2x1024xf32>,
    return
  }
  func.func @transform_0(%arg0: i32) -> (i32, i32, i32) {
    %c0_i32 = arith.constant 0 : i32
    %c0_i32_0 = arith.constant 0 : i32
    %c0_i32_1 = arith.constant 0 : i32
    %c0_i32_2 = arith.constant 0 : i32
    return %c0_i32, %c0_i32_0, %c0_i32_1 : i32, i32, i32
  }
  func.func @transform_1(%arg0: i32) -> (i32, i32) {
    %c0_i32 = arith.constant 0 : i32
    %c0_i32_0 = arith.constant 0 : i32
    return %c0_i32, %arg0 : i32, i32
  }
  func.func @transform_2(%arg0: i32) -> (i32, i32) {
    %c0_i32 = arith.constant 0 : i32
    %c0_i32_0 = arith.constant 0 : i32
    return %c0_i32, %arg0 : i32, i32
  }
  func.func @transform_3(%arg0: i32) -> (i32, i32) {
    %c0_i32 = arith.constant 0 : i32
    %c0_i32_0 = arith.constant 0 : i32
    return %c0_i32, %arg0 : i32, i32
  }
}

</mosaic_0001>

<llo_original>
// kernel: resnet50_cutted_forward.1
$region0: #{resnet50_cutted_forward.1}
  #allocation0 [shape = 'u32[]', space=smem, size = 0x4, offset = 0x4, fixed_abs, tag = 'smem constant byte address 0x4 - core index']
  #allocation1 [shape = 'u32[144,128]{1,0:T(1,128)}', space=vmem, size = 0x12000, scoped, tag = 'internal scratch']
  %s0 = inlined_call_operand.vmem [shape: f32[2,2048,49], index: 0, kind: input, shape index: {}]
  %s1 = inlined_call_operand.hbm [shape: bf16[2048,1024], index: 1, kind: input, shape index: {}]
  %s2 = inlined_call_operand.hbm [shape: f32[1,1024], index: 2, kind: input, shape index: {}]
  %s3 = inlined_call_operand.hbm [shape: f32[2,1024], index: 3, kind: output, shape index: {}]
  %s4 = sld [smem:[#allocation0]]
  $region30: #{resnet50_cutted_forward.1} parent=0
    _
  %s6 = ssub.s32 1, %s4
  %s7 = scalar_select 0, %s6, %s4
  $region1: #{resnet50_cutted_forward.1} parent=0
    #allocation2 [shape = 'u8[4194304]{0}', space=vmem, size = 0x400000, scoped, tag = 'input window, operand 1, single buffered']
    #allocation3 [shape = 's32[1]{0}', space=sflag, size = 0x4, scoped, tag = 'scoped memory for resnet50_cutted_forward.1']
    #allocation4 [shape = 's32[1]{0}', space=sflag, size = 0x4, scoped, tag = 'scoped memory for resnet50_cutted_forward.1']
    #allocation5 [shape = 'u8[4096]{0}', space=vmem, size = 0x1000, scoped, tag = 'input window, operand 2, single buffered']
    #allocation6 [shape = 's32[1]{0}', space=sflag, size = 0x4, scoped, tag = 'scoped memory for resnet50_cutted_forward.1']
    #allocation7 [shape = 'u8[8192]{0}', space=vmem, size = 0x2000, scoped, tag = 'output window, operand 0, single buffered']
    %8 = vsyncpa [#allocation3], 0
    %9 = vsyncpa [#allocation6], 0
    %10 = vsyncpa [#allocation4], 0
    // Predicated region
    $region2: #{resnet50_cutted_forward.1} parent=1 // pred_check
      _
    $region3: #{resnet50_cutted_forward.1} parent=1 // pred_check_branch
      %12 = sbr.rel (0) target = $region5
    $region4: #{resnet50_cutted_forward.1} parent=1 // pred_region
      _
    $region5: #{resnet50_cutted_forward.1} parent=1 // pred_fallthru
      _
    // Predicated region
    $region6: #{resnet50_cutted_forward.1} parent=1 // pred_check
      _
    $region7: #{resnet50_cutted_forward.1} parent=1 // pred_check_branch
      %14 = sbr.rel (0) target = $region9
    $region8: #{resnet50_cutted_forward.1} parent=1 // pred_region
      %s16 = ssub.s32 131072, 131072
      %17 = vsyncadd [#allocation3], %s16
      %s18 = sshll.u32 [#allocation2], 4
      %s19 = int_to_ptr.vmem [resolvable:$true] %s18
      %24 = dma.hbm_to_vmem [thread:$0]  %s1, 131072, %s19, [#allocation3], 512, 512, 32
    $region9: #{resnet50_cutted_forward.1} parent=1 // pred_fallthru
      _
    // Predicated region
    $region10: #{resnet50_cutted_forward.1} parent=1 // pred_check
      _
    $region11: #{resnet50_cutted_forward.1} parent=1 // pred_check_branch
      %26 = sbr.rel (0) target = $region13
    $region12: #{resnet50_cutted_forward.1} parent=1 // pred_region
      %s28 = ssub.s32 128, 128
      %29 = vsyncadd [#allocation6], %s28
      %s31 = sshll.u32 [#allocation5], 4
      %s32 = int_to_ptr.vmem [resolvable:$true] %s31
      %34 = dma.hbm_to_vmem [thread:$0]  %s2, 128, %s32, [#allocation6]
    $region13: #{resnet50_cutted_forward.1} parent=1 // pred_fallthru
      _
    // Predicated region
    $region14: #{resnet50_cutted_forward.1} parent=1 // pred_check
      _
    $region15: #{resnet50_cutted_forward.1} parent=1 // pred_check_branch
      %36 = sbr.rel (0) target = $region17
    $region16: #{resnet50_cutted_forward.1} parent=1 // pred_region
      %37 = dma.done [#allocation3], 131072
    $region17: #{resnet50_cutted_forward.1} parent=1 // pred_fallthru
      _
    // Predicated region
    $region18: #{resnet50_cutted_forward.1} parent=1 // pred_check
      _
    $region19: #{resnet50_cutted_forward.1} parent=1 // pred_check_branch
      %39 = sbr.rel (0) target = $region21
    $region20: #{resnet50_cutted_forward.1} parent=1 // pred_region
      %40 = dma.done [#allocation6], 128
    $region21: #{resnet50_cutted_forward.1} parent=1 // pred_fallthru
      _
    %v41 = vld [vmem:[%s0] sm:$0xff]
    %v42 = vld [vmem:[%s0 + $0x8] sm:$0xff]
    %v43 = vld [vmem:[%s0 + $0x10] sm:$0xff]
    %v44 = vld [vmem:[%s0 + $0x18] sm:$0xff]
    %v45 = vld [vmem:[%s0 + $0x20] sm:$0xff]
    %v46 = vld [vmem:[%s0 + $0x28] sm:$0xff]
    %v47 = vld [vmem:[%s0 + $0x30] sm:$0xff]
    %v48 = vld [vmem:[%s0 + $0x38] sm:$0xff]
    %v49 = vld [vmem:[%s0 + $0x40] sm:$0xff]
    %v50 = vld [vmem:[%s0 + $0x48] sm:$0xff]
    %v51 = vld [vmem:[%s0 + $0x50] sm:$0xff]
    %v52 = vld [vmem:[%s0 + $0x58] sm:$0xff]
    %v53 = vld [vmem:[%s0 + $0x60] sm:$0xff]
    %v54 = vld [vmem:[%s0 + $0x68] sm:$0xff]
    %v55 = vld [vmem:[%s0 + $0x70] sm:$0xff]
    %v56 = vld [vmem:[%s0 + $0x78] sm:$0xff]
    %v57 = vld [vmem:[%s0 + $0x80] sm:$0xff]
    %v58 = vld [vmem:[%s0 + $0x88] sm:$0xff]
    %v59 = vld [vmem:[%s0 + $0x90] sm:$0xff]
    %v60 = vld [vmem:[%s0 + $0x98] sm:$0xff]
    %v61 = vld [vmem:[%s0 + $0xa0] sm:$0xff]
    %v62 = vld [vmem:[%s0 + $0xa8] sm:$0xff]
    %v63 = vld [vmem:[%s0 + $0xb0] sm:$0xff]
    %v64 = vld [vmem:[%s0 + $0xb8] sm:$0xff]
    %v65 = vld [vmem:[%s0 + $0xc0] sm:$0xff]
    %v66 = vld [vmem:[%s0 + $0xc8] sm:$0xff]
    %v67 = vld [vmem:[%s0 + $0xd0] sm:$0xff]
    %v68 = vld [vmem:[%s0 + $0xd8] sm:$0xff]
    %v69 = vld [vmem:[%s0 + $0xe0] sm:$0xff]
    %v70 = vld [vmem:[%s0 + $0xe8] sm:$0xff]
    %v71 = vld [vmem:[%s0 + $0xf0] sm:$0xff]
    %v72 = vld [vmem:[%s0 + $0xf8] sm:$0xff]
    %v73 = vld [vmem:[%s0 + $0x100] sm:$0xff]
    %v74 = vld [vmem:[%s0 + $0x108] sm:$0xff]
    %v75 = vld [vmem:[%s0 + $0x110] sm:$0xff]
    %v76 = vld [vmem:[%s0 + $0x118] sm:$0xff]
    %v77 = vld [vmem:[%s0 + $0x120] sm:$0xff]
    %v78 = vld [vmem:[%s0 + $0x128] sm:$0xff]
    %v79 = vld [vmem:[%s0 + $0x130] sm:$0xff]
    %v80 = vld [vmem:[%s0 + $0x138] sm:$0xff]
    %v81 = vld [vmem:[%s0 + $0x140] sm:$0xff]
    %v82 = vld [vmem:[%s0 + $0x148] sm:$0xff]
    %v83 = vld [vmem:[%s0 + $0x150] sm:$0xff]
    %v84 = vld [vmem:[%s0 + $0x158] sm:$0xff]
    %v85 = vld [vmem:[%s0 + $0x160] sm:$0xff]
    %v86 = vld [vmem:[%s0 + $0x168] sm:$0xff]
    %v87 = vld [vmem:[%s0 + $0x170] sm:$0xff]
    %v88 = vld [vmem:[%s0 + $0x178] sm:$0xff]
    %v89 = vld [vmem:[%s0 + $0x180] sm:$0xff]
    %v90 = vld [vmem:[%s0 + $0x188] sm:$0xff]
    %v91 = vld [vmem:[%s0 + $0x190] sm:$0xff]
    %v92 = vld [vmem:[%s0 + $0x198] sm:$0xff]
    %v93 = vld [vmem:[%s0 + $0x1a0] sm:$0xff]
    %v94 = vld [vmem:[%s0 + $0x1a8] sm:$0xff]
    %v95 = vld [vmem:[%s0 + $0x1b0] sm:$0xff]
    %v96 = vld [vmem:[%s0 + $0x1b8] sm:$0xff]
    %v97 = vld [vmem:[%s0 + $0x1c0] sm:$0xff]
    %v98 = vld [vmem:[%s0 + $0x1c8] sm:$0xff]
    %v99 = vld [vmem:[%s0 + $0x1d0] sm:$0xff]
    %v100 = vld [vmem:[%s0 + $0x1d8] sm:$0xff]
    %v101 = vld [vmem:[%s0 + $0x1e0] sm:$0xff]
    %v102 = vld [vmem:[%s0 + $0x1e8] sm:$0xff]
    %v103 = vld [vmem:[%s0 + $0x1f0] sm:$0xff]
    %v104 = vld [vmem:[%s0 + $0x1f8] sm:$0xff]
    %v105 = vld [vmem:[%s0 + $0x200] sm:$0xff]
    %v106 = vld [vmem:[%s0 + $0x208] sm:$0xff]
    %v107 = vld [vmem:[%s0 + $0x210] sm:$0xff]
    %v108 = vld [vmem:[%s0 + $0x218] sm:$0xff]
    %v109 = vld [vmem:[%s0 + $0x220] sm:$0xff]
    %v110 = vld [vmem:[%s0 + $0x228] sm:$0xff]
    %v111 = vld [vmem:[%s0 + $0x230] sm:$0xff]
    %v112 = vld [vmem:[%s0 + $0x238] sm:$0xff]
    %v113 = vld [vmem:[%s0 + $0x240] sm:$0xff]
    %v114 = vld [vmem:[%s0 + $0x248] sm:$0xff]
    %v115 = vld [vmem:[%s0 + $0x250] sm:$0xff]
    %v116 = vld [vmem:[%s0 + $0x258] sm:$0xff]
    %v117 = vld [vmem:[%s0 + $0x260] sm:$0xff]
    %v118 = vld [vmem:[%s0 + $0x268] sm:$0xff]
    %v119 = vld [vmem:[%s0 + $0x270] sm:$0xff]
    %v120 = vld [vmem:[%s0 + $0x278] sm:$0xff]
    %v121 = vld [vmem:[%s0 + $0x280] sm:$0xff]
    %v122 = vld [vmem:[%s0 + $0x288] sm:$0xff]
    %v123 = vld [vmem:[%s0 + $0x290] sm:$0xff]
    %v124 = vld [vmem:[%s0 + $0x298] sm:$0xff]
    %v125 = vld [vmem:[%s0 + $0x2a0] sm:$0xff]
    %v126 = vld [vmem:[%s0 + $0x2a8] sm:$0xff]
    %v127 = vld [vmem:[%s0 + $0x2b0] sm:$0xff]
    %v128 = vld [vmem:[%s0 + $0x2b8] sm:$0xff]
    %v129 = vld [vmem:[%s0 + $0x2c0] sm:$0xff]
    %v130 = vld [vmem:[%s0 + $0x2c8] sm:$0xff]
    %v131 = vld [vmem:[%s0 + $0x2d0] sm:$0xff]
    %v132 = vld [vmem:[%s0 + $0x2d8] sm:$0xff]
    %v133 = vld [vmem:[%s0 + $0x2e0] sm:$0xff]
    %v134 = vld [vmem:[%s0 + $0x2e8] sm:$0xff]
    %v135 = vld [vmem:[%s0 + $0x2f0] sm:$0xff]
    %v136 = vld [vmem:[%s0 + $0x2f8] sm:$0xff]
    %v137 = vld [vmem:[%s0 + $0x300] sm:$0xff]
    %v138 = vld [vmem:[%s0 + $0x308] sm:$0xff]
    %v139 = vld [vmem:[%s0 + $0x310] sm:$0xff]
    %v140 = vld [vmem:[%s0 + $0x318] sm:$0xff]
    %v141 = vld [vmem:[%s0 + $0x320] sm:$0xff]
    %v142 = vld [vmem:[%s0 + $0x328] sm:$0xff]
    %v143 = vld [vmem:[%s0 + $0x330] sm:$0xff]
    %v144 = vld [vmem:[%s0 + $0x338] sm:$0xff]
    %v145 = vld [vmem:[%s0 + $0x340] sm:$0xff]
    %v146 = vld [vmem:[%s0 + $0x348] sm:$0xff]
    %v147 = vld [vmem:[%s0 + $0x350] sm:$0xff]
    %v148 = vld [vmem:[%s0 + $0x358] sm:$0xff]
    %v149 = vld [vmem:[%s0 + $0x360] sm:$0xff]
    %v150 = vld [vmem:[%s0 + $0x368] sm:$0xff]
    %v151 = vld [vmem:[%s0 + $0x370] sm:$0xff]
    %v152 = vld [vmem:[%s0 + $0x378] sm:$0xff]
    %v153 = vld [vmem:[%s0 + $0x380] sm:$0xff]
    %v154 = vld [vmem:[%s0 + $0x388] sm:$0xff]
    %v155 = vld [vmem:[%s0 + $0x390] sm:$0xff]
    %v156 = vld [vmem:[%s0 + $0x398] sm:$0xff]
    %v157 = vld [vmem:[%s0 + $0x3a0] sm:$0xff]
    %v158 = vld [vmem:[%s0 + $0x3a8] sm:$0xff]
    %v159 = vld [vmem:[%s0 + $0x3b0] sm:$0xff]
    %v160 = vld [vmem:[%s0 + $0x3b8] sm:$0xff]
    %v161 = vld [vmem:[%s0 + $0x3c0] sm:$0xff]
    %v162 = vld [vmem:[%s0 + $0x3c8] sm:$0xff]
    %v163 = vld [vmem:[%s0 + $0x3d0] sm:$0xff]
    %v164 = vld [vmem:[%s0 + $0x3d8] sm:$0xff]
    %v165 = vld [vmem:[%s0 + $0x3e0] sm:$0xff]
    %v166 = vld [vmem:[%s0 + $0x3e8] sm:$0xff]
    %v167 = vld [vmem:[%s0 + $0x3f0] sm:$0xff]
    %v168 = vld [vmem:[%s0 + $0x3f8] sm:$0xff]
    %v169 = vld [vmem:[%s0 + $0x400] sm:$0xff]
    %v170 = vld [vmem:[%s0 + $0x408] sm:$0xff]
    %v171 = vld [vmem:[%s0 + $0x410] sm:$0xff]
    %v172 = vld [vmem:[%s0 + $0x418] sm:$0xff]
    %v173 = vld [vmem:[%s0 + $0x420] sm:$0xff]
    %v174 = vld [vmem:[%s0 + $0x428] sm:$0xff]
    %v175 = vld [vmem:[%s0 + $0x430] sm:$0xff]
    %v176 = vld [vmem:[%s0 + $0x438] sm:$0xff]
    %v177 = vld [vmem:[%s0 + $0x440] sm:$0xff]
    %v178 = vld [vmem:[%s0 + $0x448] sm:$0xff]
    %v179 = vld [vmem:[%s0 + $0x450] sm:$0xff]
    %v180 = vld [vmem:[%s0 + $0x458] sm:$0xff]
    %v181 = vld [vmem:[%s0 + $0x460] sm:$0xff]
    %v182 = vld [vmem:[%s0 + $0x468] sm:$0xff]
    %v183 = vld [vmem:[%s0 + $0x470] sm:$0xff]
    %v184 = vld [vmem:[%s0 + $0x478] sm:$0xff]
    %v185 = vld [vmem:[%s0 + $0x480] sm:$0xff]
    %v186 = vld [vmem:[%s0 + $0x488] sm:$0xff]
    %v187 = vld [vmem:[%s0 + $0x490] sm:$0xff]
    %v188 = vld [vmem:[%s0 + $0x498] sm:$0xff]
    %v189 = vld [vmem:[%s0 + $0x4a0] sm:$0xff]
    %v190 = vld [vmem:[%s0 + $0x4a8] sm:$0xff]
    %v191 = vld [vmem:[%s0 + $0x4b0] sm:$0xff]
    %v192 = vld [vmem:[%s0 + $0x4b8] sm:$0xff]
    %v193 = vld [vmem:[%s0 + $0x4c0] sm:$0xff]
    %v194 = vld [vmem:[%s0 + $0x4c8] sm:$0xff]
    %v195 = vld [vmem:[%s0 + $0x4d0] sm:$0xff]
    %v196 = vld [vmem:[%s0 + $0x4d8] sm:$0xff]
    %v197 = vld [vmem:[%s0 + $0x4e0] sm:$0xff]
    %v198 = vld [vmem:[%s0 + $0x4e8] sm:$0xff]
    %v199 = vld [vmem:[%s0 + $0x4f0] sm:$0xff]
    %v200 = vld [vmem:[%s0 + $0x4f8] sm:$0xff]
    %v201 = vld [vmem:[%s0 + $0x500] sm:$0xff]
    %v202 = vld [vmem:[%s0 + $0x508] sm:$0xff]
    %v203 = vld [vmem:[%s0 + $0x510] sm:$0xff]
    %v204 = vld [vmem:[%s0 + $0x518] sm:$0xff]
    %v205 = vld [vmem:[%s0 + $0x520] sm:$0xff]
    %v206 = vld [vmem:[%s0 + $0x528] sm:$0xff]
    %v207 = vld [vmem:[%s0 + $0x530] sm:$0xff]
    %v208 = vld [vmem:[%s0 + $0x538] sm:$0xff]
    %v209 = vld [vmem:[%s0 + $0x540] sm:$0xff]
    %v210 = vld [vmem:[%s0 + $0x548] sm:$0xff]
    %v211 = vld [vmem:[%s0 + $0x550] sm:$0xff]
    %v212 = vld [vmem:[%s0 + $0x558] sm:$0xff]
    %v213 = vld [vmem:[%s0 + $0x560] sm:$0xff]
    %v214 = vld [vmem:[%s0 + $0x568] sm:$0xff]
    %v215 = vld [vmem:[%s0 + $0x570] sm:$0xff]
    %v216 = vld [vmem:[%s0 + $0x578] sm:$0xff]
    %v217 = vld [vmem:[%s0 + $0x580] sm:$0xff]
    %v218 = vld [vmem:[%s0 + $0x588] sm:$0xff]
    %v219 = vld [vmem:[%s0 + $0x590] sm:$0xff]
    %v220 = vld [vmem:[%s0 + $0x598] sm:$0xff]
    %v221 = vld [vmem:[%s0 + $0x5a0] sm:$0xff]
    %v222 = vld [vmem:[%s0 + $0x5a8] sm:$0xff]
    %v223 = vld [vmem:[%s0 + $0x5b0] sm:$0xff]
    %v224 = vld [vmem:[%s0 + $0x5b8] sm:$0xff]
    %v225 = vld [vmem:[%s0 + $0x5c0] sm:$0xff]
    %v226 = vld [vmem:[%s0 + $0x5c8] sm:$0xff]
    %v227 = vld [vmem:[%s0 + $0x5d0] sm:$0xff]
    %v228 = vld [vmem:[%s0 + $0x5d8] sm:$0xff]
    %v229 = vld [vmem:[%s0 + $0x5e0] sm:$0xff]
    %v230 = vld [vmem:[%s0 + $0x5e8] sm:$0xff]
    %v231 = vld [vmem:[%s0 + $0x5f0] sm:$0xff]
    %v232 = vld [vmem:[%s0 + $0x5f8] sm:$0xff]
    %v233 = vld [vmem:[%s0 + $0x600] sm:$0xff]
    %v234 = vld [vmem:[%s0 + $0x608] sm:$0xff]
    %v235 = vld [vmem:[%s0 + $0x610] sm:$0xff]
    %v236 = vld [vmem:[%s0 + $0x618] sm:$0xff]
    %v237 = vld [vmem:[%s0 + $0x620] sm:$0xff]
    %v238 = vld [vmem:[%s0 + $0x628] sm:$0xff]
    %v239 = vld [vmem:[%s0 + $0x630] sm:$0xff]
    %v240 = vld [vmem:[%s0 + $0x638] sm:$0xff]
    %v241 = vld [vmem:[%s0 + $0x640] sm:$0xff]
    %v242 = vld [vmem:[%s0 + $0x648] sm:$0xff]
    %v243 = vld [vmem:[%s0 + $0x650] sm:$0xff]
    %v244 = vld [vmem:[%s0 + $0x658] sm:$0xff]
    %v245 = vld [vmem:[%s0 + $0x660] sm:$0xff]
    %v246 = vld [vmem:[%s0 + $0x668] sm:$0xff]
    %v247 = vld [vmem:[%s0 + $0x670] sm:$0xff]
    %v248 = vld [vmem:[%s0 + $0x678] sm:$0xff]
    %v249 = vld [vmem:[%s0 + $0x680] sm:$0xff]
    %v250 = vld [vmem:[%s0 + $0x688] sm:$0xff]
    %v251 = vld [vmem:[%s0 + $0x690] sm:$0xff]
    %v252 = vld [vmem:[%s0 + $0x698] sm:$0xff]
    %v253 = vld [vmem:[%s0 + $0x6a0] sm:$0xff]
    %v254 = vld [vmem:[%s0 + $0x6a8] sm:$0xff]
    %v255 = vld [vmem:[%s0 + $0x6b0] sm:$0xff]
    %v256 = vld [vmem:[%s0 + $0x6b8] sm:$0xff]
    %v257 = vld [vmem:[%s0 + $0x6c0] sm:$0xff]
    %v258 = vld [vmem:[%s0 + $0x6c8] sm:$0xff]
    %v259 = vld [vmem:[%s0 + $0x6d0] sm:$0xff]
    %v260 = vld [vmem:[%s0 + $0x6d8] sm:$0xff]
    %v261 = vld [vmem:[%s0 + $0x6e0] sm:$0xff]
    %v262 = vld [vmem:[%s0 + $0x6e8] sm:$0xff]
    %v263 = vld [vmem:[%s0 + $0x6f0] sm:$0xff]
    %v264 = vld [vmem:[%s0 + $0x6f8] sm:$0xff]
    %v265 = vld [vmem:[%s0 + $0x700] sm:$0xff]
    %v266 = vld [vmem:[%s0 + $0x708] sm:$0xff]
    %v267 = vld [vmem:[%s0 + $0x710] sm:$0xff]
    %v268 = vld [vmem:[%s0 + $0x718] sm:$0xff]
    %v269 = vld [vmem:[%s0 + $0x720] sm:$0xff]
    %v270 = vld [vmem:[%s0 + $0x728] sm:$0xff]
    %v271 = vld [vmem:[%s0 + $0x730] sm:$0xff]
    %v272 = vld [vmem:[%s0 + $0x738] sm:$0xff]
    %v273 = vld [vmem:[%s0 + $0x740] sm:$0xff]
    %v274 = vld [vmem:[%s0 + $0x748] sm:$0xff]
    %v275 = vld [vmem:[%s0 + $0x750] sm:$0xff]
    %v276 = vld [vmem:[%s0 + $0x758] sm:$0xff]
    %v277 = vld [vmem:[%s0 + $0x760] sm:$0xff]
    %v278 = vld [vmem:[%s0 + $0x768] sm:$0xff]
    %v279 = vld [vmem:[%s0 + $0x770] sm:$0xff]
    %v280 = vld [vmem:[%s0 + $0x778] sm:$0xff]
    %v281 = vld [vmem:[%s0 + $0x780] sm:$0xff]
    %v282 = vld [vmem:[%s0 + $0x788] sm:$0xff]
    %v283 = vld [vmem:[%s0 + $0x790] sm:$0xff]
    %v284 = vld [vmem:[%s0 + $0x798] sm:$0xff]
    %v285 = vld [vmem:[%s0 + $0x7a0] sm:$0xff]
    %v286 = vld [vmem:[%s0 + $0x7a8] sm:$0xff]
    %v287 = vld [vmem:[%s0 + $0x7b0] sm:$0xff]
    %v288 = vld [vmem:[%s0 + $0x7b8] sm:$0xff]
    %v289 = vld [vmem:[%s0 + $0x7c0] sm:$0xff]
    %v290 = vld [vmem:[%s0 + $0x7c8] sm:$0xff]
    %v291 = vld [vmem:[%s0 + $0x7d0] sm:$0xff]
    %v292 = vld [vmem:[%s0 + $0x7d8] sm:$0xff]
    %v293 = vld [vmem:[%s0 + $0x7e0] sm:$0xff]
    %v294 = vld [vmem:[%s0 + $0x7e8] sm:$0xff]
    %v295 = vld [vmem:[%s0 + $0x7f0] sm:$0xff]
    %v296 = vld [vmem:[%s0 + $0x7f8] sm:$0xff]
    %v297 = vld [vmem:[%s0 + $0x800] sm:$0xff]
    %v298 = vld [vmem:[%s0 + $0x808] sm:$0xff]
    %v299 = vld [vmem:[%s0 + $0x810] sm:$0xff]
    %v300 = vld [vmem:[%s0 + $0x818] sm:$0xff]
    %v301 = vld [vmem:[%s0 + $0x820] sm:$0xff]
    %v302 = vld [vmem:[%s0 + $0x828] sm:$0xff]
    %v303 = vld [vmem:[%s0 + $0x830] sm:$0xff]
    %v304 = vld [vmem:[%s0 + $0x838] sm:$0xff]
    %v305 = vld [vmem:[%s0 + $0x840] sm:$0xff]
    %v306 = vld [vmem:[%s0 + $0x848] sm:$0xff]
    %v307 = vld [vmem:[%s0 + $0x850] sm:$0xff]
    %v308 = vld [vmem:[%s0 + $0x858] sm:$0xff]
    %v309 = vld [vmem:[%s0 + $0x860] sm:$0xff]
    %v310 = vld [vmem:[%s0 + $0x868] sm:$0xff]
    %v311 = vld [vmem:[%s0 + $0x870] sm:$0xff]
    %v312 = vld [vmem:[%s0 + $0x878] sm:$0xff]
    %v313 = vld [vmem:[%s0 + $0x880] sm:$0xff]
    %v314 = vld [vmem:[%s0 + $0x888] sm:$0xff]
    %v315 = vld [vmem:[%s0 + $0x890] sm:$0xff]
    %v316 = vld [vmem:[%s0 + $0x898] sm:$0xff]
    %v317 = vld [vmem:[%s0 + $0x8a0] sm:$0xff]
    %v318 = vld [vmem:[%s0 + $0x8a8] sm:$0xff]
    %v319 = vld [vmem:[%s0 + $0x8b0] sm:$0xff]
    %v320 = vld [vmem:[%s0 + $0x8b8] sm:$0xff]
    %v321 = vld [vmem:[%s0 + $0x8c0] sm:$0xff]
    %v322 = vld [vmem:[%s0 + $0x8c8] sm:$0xff]
    %v323 = vld [vmem:[%s0 + $0x8d0] sm:$0xff]
    %v324 = vld [vmem:[%s0 + $0x8d8] sm:$0xff]
    %v325 = vld [vmem:[%s0 + $0x8e0] sm:$0xff]
    %v326 = vld [vmem:[%s0 + $0x8e8] sm:$0xff]
    %v327 = vld [vmem:[%s0 + $0x8f0] sm:$0xff]
    %v328 = vld [vmem:[%s0 + $0x8f8] sm:$0xff]
    %v329 = vld [vmem:[%s0 + $0x900] sm:$0xff]
    %v330 = vld [vmem:[%s0 + $0x908] sm:$0xff]
    %v331 = vld [vmem:[%s0 + $0x910] sm:$0xff]
    %v332 = vld [vmem:[%s0 + $0x918] sm:$0xff]
    %v333 = vld [vmem:[%s0 + $0x920] sm:$0xff]
    %v334 = vld [vmem:[%s0 + $0x928] sm:$0xff]
    %v335 = vld [vmem:[%s0 + $0x930] sm:$0xff]
    %v336 = vld [vmem:[%s0 + $0x938] sm:$0xff]
    %v337 = vld [vmem:[%s0 + $0x940] sm:$0xff]
    %v338 = vld [vmem:[%s0 + $0x948] sm:$0xff]
    %v339 = vld [vmem:[%s0 + $0x950] sm:$0xff]
    %v340 = vld [vmem:[%s0 + $0x958] sm:$0xff]
    %v341 = vld [vmem:[%s0 + $0x960] sm:$0xff]
    %v342 = vld [vmem:[%s0 + $0x968] sm:$0xff]
    %v343 = vld [vmem:[%s0 + $0x970] sm:$0xff]
    %v344 = vld [vmem:[%s0 + $0x978] sm:$0xff]
    %v345 = vld [vmem:[%s0 + $0x980] sm:$0xff]
    %v346 = vld [vmem:[%s0 + $0x988] sm:$0xff]
    %v347 = vld [vmem:[%s0 + $0x990] sm:$0xff]
    %v348 = vld [vmem:[%s0 + $0x998] sm:$0xff]
    %v349 = vld [vmem:[%s0 + $0x9a0] sm:$0xff]
    %v350 = vld [vmem:[%s0 + $0x9a8] sm:$0xff]
    %v351 = vld [vmem:[%s0 + $0x9b0] sm:$0xff]
    %v352 = vld [vmem:[%s0 + $0x9b8] sm:$0xff]
    %v353 = vld [vmem:[%s0 + $0x9c0] sm:$0xff]
    %v354 = vld [vmem:[%s0 + $0x9c8] sm:$0xff]
    %v355 = vld [vmem:[%s0 + $0x9d0] sm:$0xff]
    %v356 = vld [vmem:[%s0 + $0x9d8] sm:$0xff]
    %v357 = vld [vmem:[%s0 + $0x9e0] sm:$0xff]
    %v358 = vld [vmem:[%s0 + $0x9e8] sm:$0xff]
    %v359 = vld [vmem:[%s0 + $0x9f0] sm:$0xff]
    %v360 = vld [vmem:[%s0 + $0x9f8] sm:$0xff]
    %v361 = vld [vmem:[%s0 + $0xa00] sm:$0xff]
    %v362 = vld [vmem:[%s0 + $0xa08] sm:$0xff]
    %v363 = vld [vmem:[%s0 + $0xa10] sm:$0xff]
    %v364 = vld [vmem:[%s0 + $0xa18] sm:$0xff]
    %v365 = vld [vmem:[%s0 + $0xa20] sm:$0xff]
    %v366 = vld [vmem:[%s0 + $0xa28] sm:$0xff]
    %v367 = vld [vmem:[%s0 + $0xa30] sm:$0xff]
    %v368 = vld [vmem:[%s0 + $0xa38] sm:$0xff]
    %v369 = vld [vmem:[%s0 + $0xa40] sm:$0xff]
    %v370 = vld [vmem:[%s0 + $0xa48] sm:$0xff]
    %v371 = vld [vmem:[%s0 + $0xa50] sm:$0xff]
    %v372 = vld [vmem:[%s0 + $0xa58] sm:$0xff]
    %v373 = vld [vmem:[%s0 + $0xa60] sm:$0xff]
    %v374 = vld [vmem:[%s0 + $0xa68] sm:$0xff]
    %v375 = vld [vmem:[%s0 + $0xa70] sm:$0xff]
    %v376 = vld [vmem:[%s0 + $0xa78] sm:$0xff]
    %v377 = vld [vmem:[%s0 + $0xa80] sm:$0xff]
    %v378 = vld [vmem:[%s0 + $0xa88] sm:$0xff]
    %v379 = vld [vmem:[%s0 + $0xa90] sm:$0xff]
    %v380 = vld [vmem:[%s0 + $0xa98] sm:$0xff]
    %v381 = vld [vmem:[%s0 + $0xaa0] sm:$0xff]
    %v382 = vld [vmem:[%s0 + $0xaa8] sm:$0xff]
    %v383 = vld [vmem:[%s0 + $0xab0] sm:$0xff]
    %v384 = vld [vmem:[%s0 + $0xab8] sm:$0xff]
    %v385 = vld [vmem:[%s0 + $0xac0] sm:$0xff]
    %v386 = vld [vmem:[%s0 + $0xac8] sm:$0xff]
    %v387 = vld [vmem:[%s0 + $0xad0] sm:$0xff]
    %v388 = vld [vmem:[%s0 + $0xad8] sm:$0xff]
    %v389 = vld [vmem:[%s0 + $0xae0] sm:$0xff]
    %v390 = vld [vmem:[%s0 + $0xae8] sm:$0xff]
    %v391 = vld [vmem:[%s0 + $0xaf0] sm:$0xff]
    %v392 = vld [vmem:[%s0 + $0xaf8] sm:$0xff]
    %v393 = vld [vmem:[%s0 + $0xb00] sm:$0xff]
    %v394 = vld [vmem:[%s0 + $0xb08] sm:$0xff]
    %v395 = vld [vmem:[%s0 + $0xb10] sm:$0xff]
    %v396 = vld [vmem:[%s0 + $0xb18] sm:$0xff]
    %v397 = vld [vmem:[%s0 + $0xb20] sm:$0xff]
    %v398 = vld [vmem:[%s0 + $0xb28] sm:$0xff]
    %v399 = vld [vmem:[%s0 + $0xb30] sm:$0xff]
    %v400 = vld [vmem:[%s0 + $0xb38] sm:$0xff]
    %v401 = vld [vmem:[%s0 + $0xb40] sm:$0xff]
    %v402 = vld [vmem:[%s0 + $0xb48] sm:$0xff]
    %v403 = vld [vmem:[%s0 + $0xb50] sm:$0xff]
    %v404 = vld [vmem:[%s0 + $0xb58] sm:$0xff]
    %v405 = vld [vmem:[%s0 + $0xb60] sm:$0xff]
    %v406 = vld [vmem:[%s0 + $0xb68] sm:$0xff]
    %v407 = vld [vmem:[%s0 + $0xb70] sm:$0xff]
    %v408 = vld [vmem:[%s0 + $0xb78] sm:$0xff]
    %v409 = vld [vmem:[%s0 + $0xb80] sm:$0xff]
    %v410 = vld [vmem:[%s0 + $0xb88] sm:$0xff]
    %v411 = vld [vmem:[%s0 + $0xb90] sm:$0xff]
    %v412 = vld [vmem:[%s0 + $0xb98] sm:$0xff]
    %v413 = vld [vmem:[%s0 + $0xba0] sm:$0xff]
    %v414 = vld [vmem:[%s0 + $0xba8] sm:$0xff]
    %v415 = vld [vmem:[%s0 + $0xbb0] sm:$0xff]
    %v416 = vld [vmem:[%s0 + $0xbb8] sm:$0xff]
    %v417 = vld [vmem:[%s0 + $0xbc0] sm:$0xff]
    %v418 = vld [vmem:[%s0 + $0xbc8] sm:$0xff]
    %v419 = vld [vmem:[%s0 + $0xbd0] sm:$0xff]
    %v420 = vld [vmem:[%s0 + $0xbd8] sm:$0xff]
    %v421 = vld [vmem:[%s0 + $0xbe0] sm:$0xff]
    %v422 = vld [vmem:[%s0 + $0xbe8] sm:$0xff]
    %v423 = vld [vmem:[%s0 + $0xbf0] sm:$0xff]
    %v424 = vld [vmem:[%s0 + $0xbf8] sm:$0xff]
    %v425 = vld [vmem:[%s0 + $0xc00] sm:$0xff]
    %v426 = vld [vmem:[%s0 + $0xc08] sm:$0xff]
    %v427 = vld [vmem:[%s0 + $0xc10] sm:$0xff]
    %v428 = vld [vmem:[%s0 + $0xc18] sm:$0xff]
    %v429 = vld [vmem:[%s0 + $0xc20] sm:$0xff]
    %v430 = vld [vmem:[%s0 + $0xc28] sm:$0xff]
    %v431 = vld [vmem:[%s0 + $0xc30] sm:$0xff]
    %v432 = vld [vmem:[%s0 + $0xc38] sm:$0xff]
    %v433 = vld [vmem:[%s0 + $0xc40] sm:$0xff]
    %v434 = vld [vmem:[%s0 + $0xc48] sm:$0xff]
    %v435 = vld [vmem:[%s0 + $0xc50] sm:$0xff]
    %v436 = vld [vmem:[%s0 + $0xc58] sm:$0xff]
    %v437 = vld [vmem:[%s0 + $0xc60] sm:$0xff]
    %v438 = vld [vmem:[%s0 + $0xc68] sm:$0xff]
    %v439 = vld [vmem:[%s0 + $0xc70] sm:$0xff]
    %v440 = vld [vmem:[%s0 + $0xc78] sm:$0xff]
    %v441 = vld [vmem:[%s0 + $0xc80] sm:$0xff]
    %v442 = vld [vmem:[%s0 + $0xc88] sm:$0xff]
    %v443 = vld [vmem:[%s0 + $0xc90] sm:$0xff]
    %v444 = vld [vmem:[%s0 + $0xc98] sm:$0xff]
    %v445 = vld [vmem:[%s0 + $0xca0] sm:$0xff]
    %v446 = vld [vmem:[%s0 + $0xca8] sm:$0xff]
    %v447 = vld [vmem:[%s0 + $0xcb0] sm:$0xff]
    %v448 = vld [vmem:[%s0 + $0xcb8] sm:$0xff]
    %v449 = vld [vmem:[%s0 + $0xcc0] sm:$0xff]
    %v450 = vld [vmem:[%s0 + $0xcc8] sm:$0xff]
    %v451 = vld [vmem:[%s0 + $0xcd0] sm:$0xff]
    %v452 = vld [vmem:[%s0 + $0xcd8] sm:$0xff]
    %v453 = vld [vmem:[%s0 + $0xce0] sm:$0xff]
    %v454 = vld [vmem:[%s0 + $0xce8] sm:$0xff]
    %v455 = vld [vmem:[%s0 + $0xcf0] sm:$0xff]
    %v456 = vld [vmem:[%s0 + $0xcf8] sm:$0xff]
    %v457 = vld [vmem:[%s0 + $0xd00] sm:$0xff]
    %v458 = vld [vmem:[%s0 + $0xd08] sm:$0xff]
    %v459 = vld [vmem:[%s0 + $0xd10] sm:$0xff]
    %v460 = vld [vmem:[%s0 + $0xd18] sm:$0xff]
    %v461 = vld [vmem:[%s0 + $0xd20] sm:$0xff]
    %v462 = vld [vmem:[%s0 + $0xd28] sm:$0xff]
    %v463 = vld [vmem:[%s0 + $0xd30] sm:$0xff]
    %v464 = vld [vmem:[%s0 + $0xd38] sm:$0xff]
    %v465 = vld [vmem:[%s0 + $0xd40] sm:$0xff]
    %v466 = vld [vmem:[%s0 + $0xd48] sm:$0xff]
    %v467 = vld [vmem:[%s0 + $0xd50] sm:$0xff]
    %v468 = vld [vmem:[%s0 + $0xd58] sm:$0xff]
    %v469 = vld [vmem:[%s0 + $0xd60] sm:$0xff]
    %v470 = vld [vmem:[%s0 + $0xd68] sm:$0xff]
    %v471 = vld [vmem:[%s0 + $0xd70] sm:$0xff]
    %v472 = vld [vmem:[%s0 + $0xd78] sm:$0xff]
    %v473 = vld [vmem:[%s0 + $0xd80] sm:$0xff]
    %v474 = vld [vmem:[%s0 + $0xd88] sm:$0xff]
    %v475 = vld [vmem:[%s0 + $0xd90] sm:$0xff]
    %v476 = vld [vmem:[%s0 + $0xd98] sm:$0xff]
    %v477 = vld [vmem:[%s0 + $0xda0] sm:$0xff]
    %v478 = vld [vmem:[%s0 + $0xda8] sm:$0xff]
    %v479 = vld [vmem:[%s0 + $0xdb0] sm:$0xff]
    %v480 = vld [vmem:[%s0 + $0xdb8] sm:$0xff]
    %v481 = vld [vmem:[%s0 + $0xdc0] sm:$0xff]
    %v482 = vld [vmem:[%s0 + $0xdc8] sm:$0xff]
    %v483 = vld [vmem:[%s0 + $0xdd0] sm:$0xff]
    %v484 = vld [vmem:[%s0 + $0xdd8] sm:$0xff]
    %v485 = vld [vmem:[%s0 + $0xde0] sm:$0xff]
    %v486 = vld [vmem:[%s0 + $0xde8] sm:$0xff]
    %v487 = vld [vmem:[%s0 + $0xdf0] sm:$0xff]
    %v488 = vld [vmem:[%s0 + $0xdf8] sm:$0xff]
    %v489 = vld [vmem:[%s0 + $0xe00] sm:$0xff]
    %v490 = vld [vmem:[%s0 + $0xe08] sm:$0xff]
    %v491 = vld [vmem:[%s0 + $0xe10] sm:$0xff]
    %v492 = vld [vmem:[%s0 + $0xe18] sm:$0xff]
    %v493 = vld [vmem:[%s0 + $0xe20] sm:$0xff]
    %v494 = vld [vmem:[%s0 + $0xe28] sm:$0xff]
    %v495 = vld [vmem:[%s0 + $0xe30] sm:$0xff]
    %v496 = vld [vmem:[%s0 + $0xe38] sm:$0xff]
    %v497 = vld [vmem:[%s0 + $0xe40] sm:$0xff]
    %v498 = vld [vmem:[%s0 + $0xe48] sm:$0xff]
    %v499 = vld [vmem:[%s0 + $0xe50] sm:$0xff]
    %v500 = vld [vmem:[%s0 + $0xe58] sm:$0xff]
    %v501 = vld [vmem:[%s0 + $0xe60] sm:$0xff]
    %v502 = vld [vmem:[%s0 + $0xe68] sm:$0xff]
    %v503 = vld [vmem:[%s0 + $0xe70] sm:$0xff]
    %v504 = vld [vmem:[%s0 + $0xe78] sm:$0xff]
    %v505 = vld [vmem:[%s0 + $0xe80] sm:$0xff]
    %v506 = vld [vmem:[%s0 + $0xe88] sm:$0xff]
    %v507 = vld [vmem:[%s0 + $0xe90] sm:$0xff]
    %v508 = vld [vmem:[%s0 + $0xe98] sm:$0xff]
    %v509 = vld [vmem:[%s0 + $0xea0] sm:$0xff]
    %v510 = vld [vmem:[%s0 + $0xea8] sm:$0xff]
    %v511 = vld [vmem:[%s0 + $0xeb0] sm:$0xff]
    %v512 = vld [vmem:[%s0 + $0xeb8] sm:$0xff]
    %v513 = vld [vmem:[%s0 + $0xec0] sm:$0xff]
    %v514 = vld [vmem:[%s0 + $0xec8] sm:$0xff]
    %v515 = vld [vmem:[%s0 + $0xed0] sm:$0xff]
    %v516 = vld [vmem:[%s0 + $0xed8] sm:$0xff]
    %v517 = vld [vmem:[%s0 + $0xee0] sm:$0xff]
    %v518 = vld [vmem:[%s0 + $0xee8] sm:$0xff]
    %v519 = vld [vmem:[%s0 + $0xef0] sm:$0xff]
    %v520 = vld [vmem:[%s0 + $0xef8] sm:$0xff]
    %v521 = vld [vmem:[%s0 + $0xf00] sm:$0xff]
    %v522 = vld [vmem:[%s0 + $0xf08] sm:$0xff]
    %v523 = vld [vmem:[%s0 + $0xf10] sm:$0xff]
    %v524 = vld [vmem:[%s0 + $0xf18] sm:$0xff]
    %v525 = vld [vmem:[%s0 + $0xf20] sm:$0xff]
    %v526 = vld [vmem:[%s0 + $0xf28] sm:$0xff]
    %v527 = vld [vmem:[%s0 + $0xf30] sm:$0xff]
    %v528 = vld [vmem:[%s0 + $0xf38] sm:$0xff]
    %v529 = vld [vmem:[%s0 + $0xf40] sm:$0xff]
    %v530 = vld [vmem:[%s0 + $0xf48] sm:$0xff]
    %v531 = vld [vmem:[%s0 + $0xf50] sm:$0xff]
    %v532 = vld [vmem:[%s0 + $0xf58] sm:$0xff]
    %v533 = vld [vmem:[%s0 + $0xf60] sm:$0xff]
    %v534 = vld [vmem:[%s0 + $0xf68] sm:$0xff]
    %v535 = vld [vmem:[%s0 + $0xf70] sm:$0xff]
    %v536 = vld [vmem:[%s0 + $0xf78] sm:$0xff]
    %v537 = vld [vmem:[%s0 + $0xf80] sm:$0xff]
    %v538 = vld [vmem:[%s0 + $0xf88] sm:$0xff]
    %v539 = vld [vmem:[%s0 + $0xf90] sm:$0xff]
    %v540 = vld [vmem:[%s0 + $0xf98] sm:$0xff]
    %v541 = vld [vmem:[%s0 + $0xfa0] sm:$0xff]
    %v542 = vld [vmem:[%s0 + $0xfa8] sm:$0xff]
    %v543 = vld [vmem:[%s0 + $0xfb0] sm:$0xff]
    %v544 = vld [vmem:[%s0 + $0xfb8] sm:$0xff]
    %v545 = vld [vmem:[%s0 + $0xfc0] sm:$0xff]
    %v546 = vld [vmem:[%s0 + $0xfc8] sm:$0xff]
    %v547 = vld [vmem:[%s0 + $0xfd0] sm:$0xff]
    %v548 = vld [vmem:[%s0 + $0xfd8] sm:$0xff]
    %v549 = vld [vmem:[%s0 + $0xfe0] sm:$0xff]
    %v550 = vld [vmem:[%s0 + $0xfe8] sm:$0xff]
    %v551 = vld [vmem:[%s0 + $0xff0] sm:$0xff]
    %v552 = vld [vmem:[%s0 + $0xff8] sm:$0xff]
    %vm553 = vcmask 400384
    %v554 = vsel %vm553, %v41, 0.0
    %555 = vadd.xlane.f32.xlu0 %v554
    %v556 = vpop.xlane.xlu0 %555
    %v557 = vsel %vm553, %v42, 0.0
    %558 = vadd.xlane.f32.xlu0 %v557
    %v559 = vpop.xlane.xlu0 %558
    %v560 = vsel %vm553, %v43, 0.0
    %561 = vadd.xlane.f32.xlu0 %v560
    %v562 = vpop.xlane.xlu0 %561
    %v563 = vsel %vm553, %v44, 0.0
    %564 = vadd.xlane.f32.xlu0 %v563
    %v565 = vpop.xlane.xlu0 %564
    %v566 = vsel %vm553, %v45, 0.0
    %567 = vadd.xlane.f32.xlu0 %v566
    %v568 = vpop.xlane.xlu0 %567
    %v569 = vsel %vm553, %v46, 0.0
    %570 = vadd.xlane.f32.xlu0 %v569
    %v571 = vpop.xlane.xlu0 %570
    %v572 = vsel %vm553, %v47, 0.0
    %573 = vadd.xlane.f32.xlu0 %v572
    %v574 = vpop.xlane.xlu0 %573
    %v575 = vsel %vm553, %v48, 0.0
    %576 = vadd.xlane.f32.xlu0 %v575
    %v577 = vpop.xlane.xlu0 %576
    %v578 = vsel %vm553, %v49, 0.0
    %579 = vadd.xlane.f32.xlu0 %v578
    %v580 = vpop.xlane.xlu0 %579
    %v581 = vsel %vm553, %v50, 0.0
    %582 = vadd.xlane.f32.xlu0 %v581
    %v583 = vpop.xlane.xlu0 %582
    %v584 = vsel %vm553, %v51, 0.0
    %585 = vadd.xlane.f32.xlu0 %v584
    %v586 = vpop.xlane.xlu0 %585
    %v587 = vsel %vm553, %v52, 0.0
    %588 = vadd.xlane.f32.xlu0 %v587
    %v589 = vpop.xlane.xlu0 %588
    %v590 = vsel %vm553, %v53, 0.0
    %591 = vadd.xlane.f32.xlu0 %v590
    %v592 = vpop.xlane.xlu0 %591
    %v593 = vsel %vm553, %v54, 0.0
    %594 = vadd.xlane.f32.xlu0 %v593
    %v595 = vpop.xlane.xlu0 %594
    %v596 = vsel %vm553, %v55, 0.0
    %597 = vadd.xlane.f32.xlu0 %v596
    %v598 = vpop.xlane.xlu0 %597
    %v599 = vsel %vm553, %v56, 0.0
    %600 = vadd.xlane.f32.xlu0 %v599
    %v601 = vpop.xlane.xlu0 %600
    %v602 = vsel %vm553, %v57, 0.0
    %603 = vadd.xlane.f32.xlu0 %v602
    %v604 = vpop.xlane.xlu0 %603
    %v605 = vsel %vm553, %v58, 0.0
    %606 = vadd.xlane.f32.xlu0 %v605
    %v607 = vpop.xlane.xlu0 %606
    %v608 = vsel %vm553, %v59, 0.0
    %609 = vadd.xlane.f32.xlu0 %v608
    %v610 = vpop.xlane.xlu0 %609
    %v611 = vsel %vm553, %v60, 0.0
    %612 = vadd.xlane.f32.xlu0 %v611
    %v613 = vpop.xlane.xlu0 %612
    %v614 = vsel %vm553, %v61, 0.0
    %615 = vadd.xlane.f32.xlu0 %v614
    %v616 = vpop.xlane.xlu0 %615
    %v617 = vsel %vm553, %v62, 0.0
    %618 = vadd.xlane.f32.xlu0 %v617
    %v619 = vpop.xlane.xlu0 %618
    %v620 = vsel %vm553, %v63, 0.0
    %621 = vadd.xlane.f32.xlu0 %v620
    %v622 = vpop.xlane.xlu0 %621
    %v623 = vsel %vm553, %v64, 0.0
    %624 = vadd.xlane.f32.xlu0 %v623
    %v625 = vpop.xlane.xlu0 %624
    %v626 = vsel %vm553, %v65, 0.0
    %627 = vadd.xlane.f32.xlu0 %v626
    %v628 = vpop.xlane.xlu0 %627
    %v629 = vsel %vm553, %v66, 0.0
    %630 = vadd.xlane.f32.xlu0 %v629
    %v631 = vpop.xlane.xlu0 %630
    %v632 = vsel %vm553, %v67, 0.0
    %633 = vadd.xlane.f32.xlu0 %v632
    %v634 = vpop.xlane.xlu0 %633
    %v635 = vsel %vm553, %v68, 0.0
    %636 = vadd.xlane.f32.xlu0 %v635
    %v637 = vpop.xlane.xlu0 %636
    %v638 = vsel %vm553, %v69, 0.0
    %639 = vadd.xlane.f32.xlu0 %v638
    %v640 = vpop.xlane.xlu0 %639
    %v641 = vsel %vm553, %v70, 0.0
    %642 = vadd.xlane.f32.xlu0 %v641
    %v643 = vpop.xlane.xlu0 %642
    %v644 = vsel %vm553, %v71, 0.0
    %645 = vadd.xlane.f32.xlu0 %v644
    %v646 = vpop.xlane.xlu0 %645
    %v647 = vsel %vm553, %v72, 0.0
    %648 = vadd.xlane.f32.xlu0 %v647
    %v649 = vpop.xlane.xlu0 %648
    %v650 = vsel %vm553, %v73, 0.0
    %651 = vadd.xlane.f32.xlu0 %v650
    %v652 = vpop.xlane.xlu0 %651
    %v653 = vsel %vm553, %v74, 0.0
    %654 = vadd.xlane.f32.xlu0 %v653
    %v655 = vpop.xlane.xlu0 %654
    %v656 = vsel %vm553, %v75, 0.0
    %657 = vadd.xlane.f32.xlu0 %v656
    %v658 = vpop.xlane.xlu0 %657
    %v659 = vsel %vm553, %v76, 0.0
    %660 = vadd.xlane.f32.xlu0 %v659
    %v661 = vpop.xlane.xlu0 %660
    %v662 = vsel %vm553, %v77, 0.0
    %663 = vadd.xlane.f32.xlu0 %v662
    %v664 = vpop.xlane.xlu0 %663
    %v665 = vsel %vm553, %v78, 0.0
    %666 = vadd.xlane.f32.xlu0 %v665
    %v667 = vpop.xlane.xlu0 %666
    %v668 = vsel %vm553, %v79, 0.0
    %669 = vadd.xlane.f32.xlu0 %v668
    %v670 = vpop.xlane.xlu0 %669
    %v671 = vsel %vm553, %v80, 0.0
    %672 = vadd.xlane.f32.xlu0 %v671
    %v673 = vpop.xlane.xlu0 %672
    %v674 = vsel %vm553, %v81, 0.0
    %675 = vadd.xlane.f32.xlu0 %v674
    %v676 = vpop.xlane.xlu0 %675
    %v677 = vsel %vm553, %v82, 0.0
    %678 = vadd.xlane.f32.xlu0 %v677
    %v679 = vpop.xlane.xlu0 %678
    %v680 = vsel %vm553, %v83, 0.0
    %681 = vadd.xlane.f32.xlu0 %v680
    %v682 = vpop.xlane.xlu0 %681
    %v683 = vsel %vm553, %v84, 0.0
    %684 = vadd.xlane.f32.xlu0 %v683
    %v685 = vpop.xlane.xlu0 %684
    %v686 = vsel %vm553, %v85, 0.0
    %687 = vadd.xlane.f32.xlu0 %v686
    %v688 = vpop.xlane.xlu0 %687
    %v689 = vsel %vm553, %v86, 0.0
    %690 = vadd.xlane.f32.xlu0 %v689
    %v691 = vpop.xlane.xlu0 %690
    %v692 = vsel %vm553, %v87, 0.0
    %693 = vadd.xlane.f32.xlu0 %v692
    %v694 = vpop.xlane.xlu0 %693
    %v695 = vsel %vm553, %v88, 0.0
    %696 = vadd.xlane.f32.xlu0 %v695
    %v697 = vpop.xlane.xlu0 %696
    %v698 = vsel %vm553, %v89, 0.0
    %699 = vadd.xlane.f32.xlu0 %v698
    %v700 = vpop.xlane.xlu0 %699
    %v701 = vsel %vm553, %v90, 0.0
    %702 = vadd.xlane.f32.xlu0 %v701
    %v703 = vpop.xlane.xlu0 %702
    %v704 = vsel %vm553, %v91, 0.0
    %705 = vadd.xlane.f32.xlu0 %v704
    %v706 = vpop.xlane.xlu0 %705
    %v707 = vsel %vm553, %v92, 0.0
    %708 = vadd.xlane.f32.xlu0 %v707
    %v709 = vpop.xlane.xlu0 %708
    %v710 = vsel %vm553, %v93, 0.0
    %711 = vadd.xlane.f32.xlu0 %v710
    %v712 = vpop.xlane.xlu0 %711
    %v713 = vsel %vm553, %v94, 0.0
    %714 = vadd.xlane.f32.xlu0 %v713
    %v715 = vpop.xlane.xlu0 %714
    %v716 = vsel %vm553, %v95, 0.0
    %717 = vadd.xlane.f32.xlu0 %v716
    %v718 = vpop.xlane.xlu0 %717
    %v719 = vsel %vm553, %v96, 0.0
    %720 = vadd.xlane.f32.xlu0 %v719
    %v721 = vpop.xlane.xlu0 %720
    %v722 = vsel %vm553, %v97, 0.0
    %723 = vadd.xlane.f32.xlu0 %v722
    %v724 = vpop.xlane.xlu0 %723
    %v725 = vsel %vm553, %v98, 0.0
    %726 = vadd.xlane.f32.xlu0 %v725
    %v727 = vpop.xlane.xlu0 %726
    %v728 = vsel %vm553, %v99, 0.0
    %729 = vadd.xlane.f32.xlu0 %v728
    %v730 = vpop.xlane.xlu0 %729
    %v731 = vsel %vm553, %v100, 0.0
    %732 = vadd.xlane.f32.xlu0 %v731
    %v733 = vpop.xlane.xlu0 %732
    %v734 = vsel %vm553, %v101, 0.0
    %735 = vadd.xlane.f32.xlu0 %v734
    %v736 = vpop.xlane.xlu0 %735
    %v737 = vsel %vm553, %v102, 0.0
    %738 = vadd.xlane.f32.xlu0 %v737
    %v739 = vpop.xlane.xlu0 %738
    %v740 = vsel %vm553, %v103, 0.0
    %741 = vadd.xlane.f32.xlu0 %v740
    %v742 = vpop.xlane.xlu0 %741
    %v743 = vsel %vm553, %v104, 0.0
    %744 = vadd.xlane.f32.xlu0 %v743
    %v745 = vpop.xlane.xlu0 %744
    %v746 = vsel %vm553, %v105, 0.0
    %747 = vadd.xlane.f32.xlu0 %v746
    %v748 = vpop.xlane.xlu0 %747
    %v749 = vsel %vm553, %v106, 0.0
    %750 = vadd.xlane.f32.xlu0 %v749
    %v751 = vpop.xlane.xlu0 %750
    %v752 = vsel %vm553, %v107, 0.0
    %753 = vadd.xlane.f32.xlu0 %v752
    %v754 = vpop.xlane.xlu0 %753
    %v755 = vsel %vm553, %v108, 0.0
    %756 = vadd.xlane.f32.xlu0 %v755
    %v757 = vpop.xlane.xlu0 %756
    %v758 = vsel %vm553, %v109, 0.0
    %759 = vadd.xlane.f32.xlu0 %v758
    %v760 = vpop.xlane.xlu0 %759
    %v761 = vsel %vm553, %v110, 0.0
    %762 = vadd.xlane.f32.xlu0 %v761
    %v763 = vpop.xlane.xlu0 %762
    %v764 = vsel %vm553, %v111, 0.0
    %765 = vadd.xlane.f32.xlu0 %v764
    %v766 = vpop.xlane.xlu0 %765
    %v767 = vsel %vm553, %v112, 0.0
    %768 = vadd.xlane.f32.xlu0 %v767
    %v769 = vpop.xlane.xlu0 %768
    %v770 = vsel %vm553, %v113, 0.0
    %771 = vadd.xlane.f32.xlu0 %v770
    %v772 = vpop.xlane.xlu0 %771
    %v773 = vsel %vm553, %v114, 0.0
    %774 = vadd.xlane.f32.xlu0 %v773
    %v775 = vpop.xlane.xlu0 %774
    %v776 = vsel %vm553, %v115, 0.0
    %777 = vadd.xlane.f32.xlu0 %v776
    %v778 = vpop.xlane.xlu0 %777
    %v779 = vsel %vm553, %v116, 0.0
    %780 = vadd.xlane.f32.xlu0 %v779
    %v781 = vpop.xlane.xlu0 %780
    %v782 = vsel %vm553, %v117, 0.0
    %783 = vadd.xlane.f32.xlu0 %v782
    %v784 = vpop.xlane.xlu0 %783
    %v785 = vsel %vm553, %v118, 0.0
    %786 = vadd.xlane.f32.xlu0 %v785
    %v787 = vpop.xlane.xlu0 %786
    %v788 = vsel %vm553, %v119, 0.0
    %789 = vadd.xlane.f32.xlu0 %v788
    %v790 = vpop.xlane.xlu0 %789
    %v791 = vsel %vm553, %v120, 0.0
    %792 = vadd.xlane.f32.xlu0 %v791
    %v793 = vpop.xlane.xlu0 %792
    %v794 = vsel %vm553, %v121, 0.0
    %795 = vadd.xlane.f32.xlu0 %v794
    %v796 = vpop.xlane.xlu0 %795
    %v797 = vsel %vm553, %v122, 0.0
    %798 = vadd.xlane.f32.xlu0 %v797
    %v799 = vpop.xlane.xlu0 %798
    %v800 = vsel %vm553, %v123, 0.0
    %801 = vadd.xlane.f32.xlu0 %v800
    %v802 = vpop.xlane.xlu0 %801
    %v803 = vsel %vm553, %v124, 0.0
    %804 = vadd.xlane.f32.xlu0 %v803
    %v805 = vpop.xlane.xlu0 %804
    %v806 = vsel %vm553, %v125, 0.0
    %807 = vadd.xlane.f32.xlu0 %v806
    %v808 = vpop.xlane.xlu0 %807
    %v809 = vsel %vm553, %v126, 0.0
    %810 = vadd.xlane.f32.xlu0 %v809
    %v811 = vpop.xlane.xlu0 %810
    %v812 = vsel %vm553, %v127, 0.0
    %813 = vadd.xlane.f32.xlu0 %v812
    %v814 = vpop.xlane.xlu0 %813
    %v815 = vsel %vm553, %v128, 0.0
    %816 = vadd.xlane.f32.xlu0 %v815
    %v817 = vpop.xlane.xlu0 %816
    %v818 = vsel %vm553, %v129, 0.0
    %819 = vadd.xlane.f32.xlu0 %v818
    %v820 = vpop.xlane.xlu0 %819
    %v821 = vsel %vm553, %v130, 0.0
    %822 = vadd.xlane.f32.xlu0 %v821
    %v823 = vpop.xlane.xlu0 %822
    %v824 = vsel %vm553, %v131, 0.0
    %825 = vadd.xlane.f32.xlu0 %v824
    %v826 = vpop.xlane.xlu0 %825
    %v827 = vsel %vm553, %v132, 0.0
    %828 = vadd.xlane.f32.xlu0 %v827
    %v829 = vpop.xlane.xlu0 %828
    %v830 = vsel %vm553, %v133, 0.0
    %831 = vadd.xlane.f32.xlu0 %v830
    %v832 = vpop.xlane.xlu0 %831
    %v833 = vsel %vm553, %v134, 0.0
    %834 = vadd.xlane.f32.xlu0 %v833
    %v835 = vpop.xlane.xlu0 %834
    %v836 = vsel %vm553, %v135, 0.0
    %837 = vadd.xlane.f32.xlu0 %v836
    %v838 = vpop.xlane.xlu0 %837
    %v839 = vsel %vm553, %v136, 0.0
    %840 = vadd.xlane.f32.xlu0 %v839
    %v841 = vpop.xlane.xlu0 %840
    %v842 = vsel %vm553, %v137, 0.0
    %843 = vadd.xlane.f32.xlu0 %v842
    %v844 = vpop.xlane.xlu0 %843
    %v845 = vsel %vm553, %v138, 0.0
    %846 = vadd.xlane.f32.xlu0 %v845
    %v847 = vpop.xlane.xlu0 %846
    %v848 = vsel %vm553, %v139, 0.0
    %849 = vadd.xlane.f32.xlu0 %v848
    %v850 = vpop.xlane.xlu0 %849
    %v851 = vsel %vm553, %v140, 0.0
    %852 = vadd.xlane.f32.xlu0 %v851
    %v853 = vpop.xlane.xlu0 %852
    %v854 = vsel %vm553, %v141, 0.0
    %855 = vadd.xlane.f32.xlu0 %v854
    %v856 = vpop.xlane.xlu0 %855
    %v857 = vsel %vm553, %v142, 0.0
    %858 = vadd.xlane.f32.xlu0 %v857
    %v859 = vpop.xlane.xlu0 %858
    %v860 = vsel %vm553, %v143, 0.0
    %861 = vadd.xlane.f32.xlu0 %v860
    %v862 = vpop.xlane.xlu0 %861
    %v863 = vsel %vm553, %v144, 0.0
    %864 = vadd.xlane.f32.xlu0 %v863
    %v865 = vpop.xlane.xlu0 %864
    %v866 = vsel %vm553, %v145, 0.0
    %867 = vadd.xlane.f32.xlu0 %v866
    %v868 = vpop.xlane.xlu0 %867
    %v869 = vsel %vm553, %v146, 0.0
    %870 = vadd.xlane.f32.xlu0 %v869
    %v871 = vpop.xlane.xlu0 %870
    %v872 = vsel %vm553, %v147, 0.0
    %873 = vadd.xlane.f32.xlu0 %v872
    %v874 = vpop.xlane.xlu0 %873
    %v875 = vsel %vm553, %v148, 0.0
    %876 = vadd.xlane.f32.xlu0 %v875
    %v877 = vpop.xlane.xlu0 %876
    %v878 = vsel %vm553, %v149, 0.0
    %879 = vadd.xlane.f32.xlu0 %v878
    %v880 = vpop.xlane.xlu0 %879
    %v881 = vsel %vm553, %v150, 0.0
    %882 = vadd.xlane.f32.xlu0 %v881
    %v883 = vpop.xlane.xlu0 %882
    %v884 = vsel %vm553, %v151, 0.0
    %885 = vadd.xlane.f32.xlu0 %v884
    %v886 = vpop.xlane.xlu0 %885
    %v887 = vsel %vm553, %v152, 0.0
    %888 = vadd.xlane.f32.xlu0 %v887
    %v889 = vpop.xlane.xlu0 %888
    %v890 = vsel %vm553, %v153, 0.0
    %891 = vadd.xlane.f32.xlu0 %v890
    %v892 = vpop.xlane.xlu0 %891
    %v893 = vsel %vm553, %v154, 0.0
    %894 = vadd.xlane.f32.xlu0 %v893
    %v895 = vpop.xlane.xlu0 %894
    %v896 = vsel %vm553, %v155, 0.0
    %897 = vadd.xlane.f32.xlu0 %v896
    %v898 = vpop.xlane.xlu0 %897
    %v899 = vsel %vm553, %v156, 0.0
    %900 = vadd.xlane.f32.xlu0 %v899
    %v901 = vpop.xlane.xlu0 %900
    %v902 = vsel %vm553, %v157, 0.0
    %903 = vadd.xlane.f32.xlu0 %v902
    %v904 = vpop.xlane.xlu0 %903
    %v905 = vsel %vm553, %v158, 0.0
    %906 = vadd.xlane.f32.xlu0 %v905
    %v907 = vpop.xlane.xlu0 %906
    %v908 = vsel %vm553, %v159, 0.0
    %909 = vadd.xlane.f32.xlu0 %v908
    %v910 = vpop.xlane.xlu0 %909
    %v911 = vsel %vm553, %v160, 0.0
    %912 = vadd.xlane.f32.xlu0 %v911
    %v913 = vpop.xlane.xlu0 %912
    %v914 = vsel %vm553, %v161, 0.0
    %915 = vadd.xlane.f32.xlu0 %v914
    %v916 = vpop.xlane.xlu0 %915
    %v917 = vsel %vm553, %v162, 0.0
    %918 = vadd.xlane.f32.xlu0 %v917
    %v919 = vpop.xlane.xlu0 %918
    %v920 = vsel %vm553, %v163, 0.0
    %921 = vadd.xlane.f32.xlu0 %v920
    %v922 = vpop.xlane.xlu0 %921
    %v923 = vsel %vm553, %v164, 0.0
    %924 = vadd.xlane.f32.xlu0 %v923
    %v925 = vpop.xlane.xlu0 %924
    %v926 = vsel %vm553, %v165, 0.0
    %927 = vadd.xlane.f32.xlu0 %v926
    %v928 = vpop.xlane.xlu0 %927
    %v929 = vsel %vm553, %v166, 0.0
    %930 = vadd.xlane.f32.xlu0 %v929
    %v931 = vpop.xlane.xlu0 %930
    %v932 = vsel %vm553, %v167, 0.0
    %933 = vadd.xlane.f32.xlu0 %v932
    %v934 = vpop.xlane.xlu0 %933
    %v935 = vsel %vm553, %v168, 0.0
    %936 = vadd.xlane.f32.xlu0 %v935
    %v937 = vpop.xlane.xlu0 %936
    %v938 = vsel %vm553, %v169, 0.0
    %939 = vadd.xlane.f32.xlu0 %v938
    %v940 = vpop.xlane.xlu0 %939
    %v941 = vsel %vm553, %v170, 0.0
    %942 = vadd.xlane.f32.xlu0 %v941
    %v943 = vpop.xlane.xlu0 %942
    %v944 = vsel %vm553, %v171, 0.0
    %945 = vadd.xlane.f32.xlu0 %v944
    %v946 = vpop.xlane.xlu0 %945
    %v947 = vsel %vm553, %v172, 0.0
    %948 = vadd.xlane.f32.xlu0 %v947
    %v949 = vpop.xlane.xlu0 %948
    %v950 = vsel %vm553, %v173, 0.0
    %951 = vadd.xlane.f32.xlu0 %v950
    %v952 = vpop.xlane.xlu0 %951
    %v953 = vsel %vm553, %v174, 0.0
    %954 = vadd.xlane.f32.xlu0 %v953
    %v955 = vpop.xlane.xlu0 %954
    %v956 = vsel %vm553, %v175, 0.0
    %957 = vadd.xlane.f32.xlu0 %v956
    %v958 = vpop.xlane.xlu0 %957
    %v959 = vsel %vm553, %v176, 0.0
    %960 = vadd.xlane.f32.xlu0 %v959
    %v961 = vpop.xlane.xlu0 %960
    %v962 = vsel %vm553, %v177, 0.0
    %963 = vadd.xlane.f32.xlu0 %v962
    %v964 = vpop.xlane.xlu0 %963
    %v965 = vsel %vm553, %v178, 0.0
    %966 = vadd.xlane.f32.xlu0 %v965
    %v967 = vpop.xlane.xlu0 %966
    %v968 = vsel %vm553, %v179, 0.0
    %969 = vadd.xlane.f32.xlu0 %v968
    %v970 = vpop.xlane.xlu0 %969
    %v971 = vsel %vm553, %v180, 0.0
    %972 = vadd.xlane.f32.xlu0 %v971
    %v973 = vpop.xlane.xlu0 %972
    %v974 = vsel %vm553, %v181, 0.0
    %975 = vadd.xlane.f32.xlu0 %v974
    %v976 = vpop.xlane.xlu0 %975
    %v977 = vsel %vm553, %v182, 0.0
    %978 = vadd.xlane.f32.xlu0 %v977
    %v979 = vpop.xlane.xlu0 %978
    %v980 = vsel %vm553, %v183, 0.0
    %981 = vadd.xlane.f32.xlu0 %v980
    %v982 = vpop.xlane.xlu0 %981
    %v983 = vsel %vm553, %v184, 0.0
    %984 = vadd.xlane.f32.xlu0 %v983
    %v985 = vpop.xlane.xlu0 %984
    %v986 = vsel %vm553, %v185, 0.0
    %987 = vadd.xlane.f32.xlu0 %v986
    %v988 = vpop.xlane.xlu0 %987
    %v989 = vsel %vm553, %v186, 0.0
    %990 = vadd.xlane.f32.xlu0 %v989
    %v991 = vpop.xlane.xlu0 %990
    %v992 = vsel %vm553, %v187, 0.0
    %993 = vadd.xlane.f32.xlu0 %v992
    %v994 = vpop.xlane.xlu0 %993
    %v995 = vsel %vm553, %v188, 0.0
    %996 = vadd.xlane.f32.xlu0 %v995
    %v997 = vpop.xlane.xlu0 %996
    %v998 = vsel %vm553, %v189, 0.0
    %999 = vadd.xlane.f32.xlu0 %v998
    %v1000 = vpop.xlane.xlu0 %999
    %v1001 = vsel %vm553, %v190, 0.0
    %1002 = vadd.xlane.f32.xlu0 %v1001
    %v1003 = vpop.xlane.xlu0 %1002
    %v1004 = vsel %vm553, %v191, 0.0
    %1005 = vadd.xlane.f32.xlu0 %v1004
    %v1006 = vpop.xlane.xlu0 %1005
    %v1007 = vsel %vm553, %v192, 0.0
    %1008 = vadd.xlane.f32.xlu0 %v1007
    %v1009 = vpop.xlane.xlu0 %1008
    %v1010 = vsel %vm553, %v193, 0.0
    %1011 = vadd.xlane.f32.xlu0 %v1010
    %v1012 = vpop.xlane.xlu0 %1011
    %v1013 = vsel %vm553, %v194, 0.0
    %1014 = vadd.xlane.f32.xlu0 %v1013
    %v1015 = vpop.xlane.xlu0 %1014
    %v1016 = vsel %vm553, %v195, 0.0
    %1017 = vadd.xlane.f32.xlu0 %v1016
    %v1018 = vpop.xlane.xlu0 %1017
    %v1019 = vsel %vm553, %v196, 0.0
    %1020 = vadd.xlane.f32.xlu0 %v1019
    %v1021 = vpop.xlane.xlu0 %1020
    %v1022 = vsel %vm553, %v197, 0.0
    %1023 = vadd.xlane.f32.xlu0 %v1022
    %v1024 = vpop.xlane.xlu0 %1023
    %v1025 = vsel %vm553, %v198, 0.0
    %1026 = vadd.xlane.f32.xlu0 %v1025
    %v1027 = vpop.xlane.xlu0 %1026
    %v1028 = vsel %vm553, %v199, 0.0
    %1029 = vadd.xlane.f32.xlu0 %v1028
    %v1030 = vpop.xlane.xlu0 %1029
    %v1031 = vsel %vm553, %v200, 0.0
    %1032 = vadd.xlane.f32.xlu0 %v1031
    %v1033 = vpop.xlane.xlu0 %1032
    %v1034 = vsel %vm553, %v201, 0.0
    %1035 = vadd.xlane.f32.xlu0 %v1034
    %v1036 = vpop.xlane.xlu0 %1035
    %v1037 = vsel %vm553, %v202, 0.0
    %1038 = vadd.xlane.f32.xlu0 %v1037
    %v1039 = vpop.xlane.xlu0 %1038
    %v1040 = vsel %vm553, %v203, 0.0
    %1041 = vadd.xlane.f32.xlu0 %v1040
    %v1042 = vpop.xlane.xlu0 %1041
    %v1043 = vsel %vm553, %v204, 0.0
    %1044 = vadd.xlane.f32.xlu0 %v1043
    %v1045 = vpop.xlane.xlu0 %1044
    %v1046 = vsel %vm553, %v205, 0.0
    %1047 = vadd.xlane.f32.xlu0 %v1046
    %v1048 = vpop.xlane.xlu0 %1047
    %v1049 = vsel %vm553, %v206, 0.0
    %1050 = vadd.xlane.f32.xlu0 %v1049
    %v1051 = vpop.xlane.xlu0 %1050
    %v1052 = vsel %vm553, %v207, 0.0
    %1053 = vadd.xlane.f32.xlu0 %v1052
    %v1054 = vpop.xlane.xlu0 %1053
    %v1055 = vsel %vm553, %v208, 0.0
    %1056 = vadd.xlane.f32.xlu0 %v1055
    %v1057 = vpop.xlane.xlu0 %1056
    %v1058 = vsel %vm553, %v209, 0.0
    %1059 = vadd.xlane.f32.xlu0 %v1058
    %v1060 = vpop.xlane.xlu0 %1059
    %v1061 = vsel %vm553, %v210, 0.0
    %1062 = vadd.xlane.f32.xlu0 %v1061
    %v1063 = vpop.xlane.xlu0 %1062
    %v1064 = vsel %vm553, %v211, 0.0
    %1065 = vadd.xlane.f32.xlu0 %v1064
    %v1066 = vpop.xlane.xlu0 %1065
    %v1067 = vsel %vm553, %v212, 0.0
    %1068 = vadd.xlane.f32.xlu0 %v1067
    %v1069 = vpop.xlane.xlu0 %1068
    %v1070 = vsel %vm553, %v213, 0.0
    %1071 = vadd.xlane.f32.xlu0 %v1070
    %v1072 = vpop.xlane.xlu0 %1071
    %v1073 = vsel %vm553, %v214, 0.0
    %1074 = vadd.xlane.f32.xlu0 %v1073
    %v1075 = vpop.xlane.xlu0 %1074
    %v1076 = vsel %vm553, %v215, 0.0
    %1077 = vadd.xlane.f32.xlu0 %v1076
    %v1078 = vpop.xlane.xlu0 %1077
    %v1079 = vsel %vm553, %v216, 0.0
    %1080 = vadd.xlane.f32.xlu0 %v1079
    %v1081 = vpop.xlane.xlu0 %1080
    %v1082 = vsel %vm553, %v217, 0.0
    %1083 = vadd.xlane.f32.xlu0 %v1082
    %v1084 = vpop.xlane.xlu0 %1083
    %v1085 = vsel %vm553, %v218, 0.0
    %1086 = vadd.xlane.f32.xlu0 %v1085
    %v1087 = vpop.xlane.xlu0 %1086
    %v1088 = vsel %vm553, %v219, 0.0
    %1089 = vadd.xlane.f32.xlu0 %v1088
    %v1090 = vpop.xlane.xlu0 %1089
    %v1091 = vsel %vm553, %v220, 0.0
    %1092 = vadd.xlane.f32.xlu0 %v1091
    %v1093 = vpop.xlane.xlu0 %1092
    %v1094 = vsel %vm553, %v221, 0.0
    %1095 = vadd.xlane.f32.xlu0 %v1094
    %v1096 = vpop.xlane.xlu0 %1095
    %v1097 = vsel %vm553, %v222, 0.0
    %1098 = vadd.xlane.f32.xlu0 %v1097
    %v1099 = vpop.xlane.xlu0 %1098
    %v1100 = vsel %vm553, %v223, 0.0
    %1101 = vadd.xlane.f32.xlu0 %v1100
    %v1102 = vpop.xlane.xlu0 %1101
    %v1103 = vsel %vm553, %v224, 0.0
    %1104 = vadd.xlane.f32.xlu0 %v1103
    %v1105 = vpop.xlane.xlu0 %1104
    %v1106 = vsel %vm553, %v225, 0.0
    %1107 = vadd.xlane.f32.xlu0 %v1106
    %v1108 = vpop.xlane.xlu0 %1107
    %v1109 = vsel %vm553, %v226, 0.0
    %1110 = vadd.xlane.f32.xlu0 %v1109
    %v1111 = vpop.xlane.xlu0 %1110
    %v1112 = vsel %vm553, %v227, 0.0
    %1113 = vadd.xlane.f32.xlu0 %v1112
    %v1114 = vpop.xlane.xlu0 %1113
    %v1115 = vsel %vm553, %v228, 0.0
    %1116 = vadd.xlane.f32.xlu0 %v1115
    %v1117 = vpop.xlane.xlu0 %1116
    %v1118 = vsel %vm553, %v229, 0.0
    %1119 = vadd.xlane.f32.xlu0 %v1118
    %v1120 = vpop.xlane.xlu0 %1119
    %v1121 = vsel %vm553, %v230, 0.0
    %1122 = vadd.xlane.f32.xlu0 %v1121
    %v1123 = vpop.xlane.xlu0 %1122
    %v1124 = vsel %vm553, %v231, 0.0
    %1125 = vadd.xlane.f32.xlu0 %v1124
    %v1126 = vpop.xlane.xlu0 %1125
    %v1127 = vsel %vm553, %v232, 0.0
    %1128 = vadd.xlane.f32.xlu0 %v1127
    %v1129 = vpop.xlane.xlu0 %1128
    %v1130 = vsel %vm553, %v233, 0.0
    %1131 = vadd.xlane.f32.xlu0 %v1130
    %v1132 = vpop.xlane.xlu0 %1131
    %v1133 = vsel %vm553, %v234, 0.0
    %1134 = vadd.xlane.f32.xlu0 %v1133
    %v1135 = vpop.xlane.xlu0 %1134
    %v1136 = vsel %vm553, %v235, 0.0
    %1137 = vadd.xlane.f32.xlu0 %v1136
    %v1138 = vpop.xlane.xlu0 %1137
    %v1139 = vsel %vm553, %v236, 0.0
    %1140 = vadd.xlane.f32.xlu0 %v1139
    %v1141 = vpop.xlane.xlu0 %1140
    %v1142 = vsel %vm553, %v237, 0.0
    %1143 = vadd.xlane.f32.xlu0 %v1142
    %v1144 = vpop.xlane.xlu0 %1143
    %v1145 = vsel %vm553, %v238, 0.0
    %1146 = vadd.xlane.f32.xlu0 %v1145
    %v1147 = vpop.xlane.xlu0 %1146
    %v1148 = vsel %vm553, %v239, 0.0
    %1149 = vadd.xlane.f32.xlu0 %v1148
    %v1150 = vpop.xlane.xlu0 %1149
    %v1151 = vsel %vm553, %v240, 0.0
    %1152 = vadd.xlane.f32.xlu0 %v1151
    %v1153 = vpop.xlane.xlu0 %1152
    %v1154 = vsel %vm553, %v241, 0.0
    %1155 = vadd.xlane.f32.xlu0 %v1154
    %v1156 = vpop.xlane.xlu0 %1155
    %v1157 = vsel %vm553, %v242, 0.0
    %1158 = vadd.xlane.f32.xlu0 %v1157
    %v1159 = vpop.xlane.xlu0 %1158
    %v1160 = vsel %vm553, %v243, 0.0
    %1161 = vadd.xlane.f32.xlu0 %v1160
    %v1162 = vpop.xlane.xlu0 %1161
    %v1163 = vsel %vm553, %v244, 0.0
    %1164 = vadd.xlane.f32.xlu0 %v1163
    %v1165 = vpop.xlane.xlu0 %1164
    %v1166 = vsel %vm553, %v245, 0.0
    %1167 = vadd.xlane.f32.xlu0 %v1166
    %v1168 = vpop.xlane.xlu0 %1167
    %v1169 = vsel %vm553, %v246, 0.0
    %1170 = vadd.xlane.f32.xlu0 %v1169
    %v1171 = vpop.xlane.xlu0 %1170
    %v1172 = vsel %vm553, %v247, 0.0
    %1173 = vadd.xlane.f32.xlu0 %v1172
    %v1174 = vpop.xlane.xlu0 %1173
    %v1175 = vsel %vm553, %v248, 0.0
    %1176 = vadd.xlane.f32.xlu0 %v1175
    %v1177 = vpop.xlane.xlu0 %1176
    %v1178 = vsel %vm553, %v249, 0.0
    %1179 = vadd.xlane.f32.xlu0 %v1178
    %v1180 = vpop.xlane.xlu0 %1179
    %v1181 = vsel %vm553, %v250, 0.0
    %1182 = vadd.xlane.f32.xlu0 %v1181
    %v1183 = vpop.xlane.xlu0 %1182
    %v1184 = vsel %vm553, %v251, 0.0
    %1185 = vadd.xlane.f32.xlu0 %v1184
    %v1186 = vpop.xlane.xlu0 %1185
    %v1187 = vsel %vm553, %v252, 0.0
    %1188 = vadd.xlane.f32.xlu0 %v1187
    %v1189 = vpop.xlane.xlu0 %1188
    %v1190 = vsel %vm553, %v253, 0.0
    %1191 = vadd.xlane.f32.xlu0 %v1190
    %v1192 = vpop.xlane.xlu0 %1191
    %v1193 = vsel %vm553, %v254, 0.0
    %1194 = vadd.xlane.f32.xlu0 %v1193
    %v1195 = vpop.xlane.xlu0 %1194
    %v1196 = vsel %vm553, %v255, 0.0
    %1197 = vadd.xlane.f32.xlu0 %v1196
    %v1198 = vpop.xlane.xlu0 %1197
    %v1199 = vsel %vm553, %v256, 0.0
    %1200 = vadd.xlane.f32.xlu0 %v1199
    %v1201 = vpop.xlane.xlu0 %1200
    %v1202 = vsel %vm553, %v257, 0.0
    %1203 = vadd.xlane.f32.xlu0 %v1202
    %v1204 = vpop.xlane.xlu0 %1203
    %v1205 = vsel %vm553, %v258, 0.0
    %1206 = vadd.xlane.f32.xlu0 %v1205
    %v1207 = vpop.xlane.xlu0 %1206
    %v1208 = vsel %vm553, %v259, 0.0
    %1209 = vadd.xlane.f32.xlu0 %v1208
    %v1210 = vpop.xlane.xlu0 %1209
    %v1211 = vsel %vm553, %v260, 0.0
    %1212 = vadd.xlane.f32.xlu0 %v1211
    %v1213 = vpop.xlane.xlu0 %1212
    %v1214 = vsel %vm553, %v261, 0.0
    %1215 = vadd.xlane.f32.xlu0 %v1214
    %v1216 = vpop.xlane.xlu0 %1215
    %v1217 = vsel %vm553, %v262, 0.0
    %1218 = vadd.xlane.f32.xlu0 %v1217
    %v1219 = vpop.xlane.xlu0 %1218
    %v1220 = vsel %vm553, %v263, 0.0
    %1221 = vadd.xlane.f32.xlu0 %v1220
    %v1222 = vpop.xlane.xlu0 %1221
    %v1223 = vsel %vm553, %v264, 0.0
    %1224 = vadd.xlane.f32.xlu0 %v1223
    %v1225 = vpop.xlane.xlu0 %1224
    %v1226 = vsel %vm553, %v265, 0.0
    %1227 = vadd.xlane.f32.xlu0 %v1226
    %v1228 = vpop.xlane.xlu0 %1227
    %v1229 = vsel %vm553, %v266, 0.0
    %1230 = vadd.xlane.f32.xlu0 %v1229
    %v1231 = vpop.xlane.xlu0 %1230
    %v1232 = vsel %vm553, %v267, 0.0
    %1233 = vadd.xlane.f32.xlu0 %v1232
    %v1234 = vpop.xlane.xlu0 %1233
    %v1235 = vsel %vm553, %v268, 0.0
    %1236 = vadd.xlane.f32.xlu0 %v1235
    %v1237 = vpop.xlane.xlu0 %1236
    %v1238 = vsel %vm553, %v269, 0.0
    %1239 = vadd.xlane.f32.xlu0 %v1238
    %v1240 = vpop.xlane.xlu0 %1239
    %v1241 = vsel %vm553, %v270, 0.0
    %1242 = vadd.xlane.f32.xlu0 %v1241
    %v1243 = vpop.xlane.xlu0 %1242
    %v1244 = vsel %vm553, %v271, 0.0
    %1245 = vadd.xlane.f32.xlu0 %v1244
    %v1246 = vpop.xlane.xlu0 %1245
    %v1247 = vsel %vm553, %v272, 0.0
    %1248 = vadd.xlane.f32.xlu0 %v1247
    %v1249 = vpop.xlane.xlu0 %1248
    %v1250 = vsel %vm553, %v273, 0.0
    %1251 = vadd.xlane.f32.xlu0 %v1250
    %v1252 = vpop.xlane.xlu0 %1251
    %v1253 = vsel %vm553, %v274, 0.0
    %1254 = vadd.xlane.f32.xlu0 %v1253
    %v1255 = vpop.xlane.xlu0 %1254
    %v1256 = vsel %vm553, %v275, 0.0
    %1257 = vadd.xlane.f32.xlu0 %v1256
    %v1258 = vpop.xlane.xlu0 %1257
    %v1259 = vsel %vm553, %v276, 0.0
    %1260 = vadd.xlane.f32.xlu0 %v1259
    %v1261 = vpop.xlane.xlu0 %1260
    %v1262 = vsel %vm553, %v277, 0.0
    %1263 = vadd.xlane.f32.xlu0 %v1262
    %v1264 = vpop.xlane.xlu0 %1263
    %v1265 = vsel %vm553, %v278, 0.0
    %1266 = vadd.xlane.f32.xlu0 %v1265
    %v1267 = vpop.xlane.xlu0 %1266
    %v1268 = vsel %vm553, %v279, 0.0
    %1269 = vadd.xlane.f32.xlu0 %v1268
    %v1270 = vpop.xlane.xlu0 %1269
    %v1271 = vsel %vm553, %v280, 0.0
    %1272 = vadd.xlane.f32.xlu0 %v1271
    %v1273 = vpop.xlane.xlu0 %1272
    %v1274 = vsel %vm553, %v281, 0.0
    %1275 = vadd.xlane.f32.xlu0 %v1274
    %v1276 = vpop.xlane.xlu0 %1275
    %v1277 = vsel %vm553, %v282, 0.0
    %1278 = vadd.xlane.f32.xlu0 %v1277
    %v1279 = vpop.xlane.xlu0 %1278
    %v1280 = vsel %vm553, %v283, 0.0
    %1281 = vadd.xlane.f32.xlu0 %v1280
    %v1282 = vpop.xlane.xlu0 %1281
    %v1283 = vsel %vm553, %v284, 0.0
    %1284 = vadd.xlane.f32.xlu0 %v1283
    %v1285 = vpop.xlane.xlu0 %1284
    %v1286 = vsel %vm553, %v285, 0.0
    %1287 = vadd.xlane.f32.xlu0 %v1286
    %v1288 = vpop.xlane.xlu0 %1287
    %v1289 = vsel %vm553, %v286, 0.0
    %1290 = vadd.xlane.f32.xlu0 %v1289
    %v1291 = vpop.xlane.xlu0 %1290
    %v1292 = vsel %vm553, %v287, 0.0
    %1293 = vadd.xlane.f32.xlu0 %v1292
    %v1294 = vpop.xlane.xlu0 %1293
    %v1295 = vsel %vm553, %v288, 0.0
    %1296 = vadd.xlane.f32.xlu0 %v1295
    %v1297 = vpop.xlane.xlu0 %1296
    %v1298 = vsel %vm553, %v289, 0.0
    %1299 = vadd.xlane.f32.xlu0 %v1298
    %v1300 = vpop.xlane.xlu0 %1299
    %v1301 = vsel %vm553, %v290, 0.0
    %1302 = vadd.xlane.f32.xlu0 %v1301
    %v1303 = vpop.xlane.xlu0 %1302
    %v1304 = vsel %vm553, %v291, 0.0
    %1305 = vadd.xlane.f32.xlu0 %v1304
    %v1306 = vpop.xlane.xlu0 %1305
    %v1307 = vsel %vm553, %v292, 0.0
    %1308 = vadd.xlane.f32.xlu0 %v1307
    %v1309 = vpop.xlane.xlu0 %1308
    %v1310 = vsel %vm553, %v293, 0.0
    %1311 = vadd.xlane.f32.xlu0 %v1310
    %v1312 = vpop.xlane.xlu0 %1311
    %v1313 = vsel %vm553, %v294, 0.0
    %1314 = vadd.xlane.f32.xlu0 %v1313
    %v1315 = vpop.xlane.xlu0 %1314
    %v1316 = vsel %vm553, %v295, 0.0
    %1317 = vadd.xlane.f32.xlu0 %v1316
    %v1318 = vpop.xlane.xlu0 %1317
    %v1319 = vsel %vm553, %v296, 0.0
    %1320 = vadd.xlane.f32.xlu0 %v1319
    %v1321 = vpop.xlane.xlu0 %1320
    %v1322 = vsel %vm553, %v297, 0.0
    %1323 = vadd.xlane.f32.xlu0 %v1322
    %v1324 = vpop.xlane.xlu0 %1323
    %v1325 = vsel %vm553, %v298, 0.0
    %1326 = vadd.xlane.f32.xlu0 %v1325
    %v1327 = vpop.xlane.xlu0 %1326
    %v1328 = vsel %vm553, %v299, 0.0
    %1329 = vadd.xlane.f32.xlu0 %v1328
    %v1330 = vpop.xlane.xlu0 %1329
    %v1331 = vsel %vm553, %v300, 0.0
    %1332 = vadd.xlane.f32.xlu0 %v1331
    %v1333 = vpop.xlane.xlu0 %1332
    %v1334 = vsel %vm553, %v301, 0.0
    %1335 = vadd.xlane.f32.xlu0 %v1334
    %v1336 = vpop.xlane.xlu0 %1335
    %v1337 = vsel %vm553, %v302, 0.0
    %1338 = vadd.xlane.f32.xlu0 %v1337
    %v1339 = vpop.xlane.xlu0 %1338
    %v1340 = vsel %vm553, %v303, 0.0
    %1341 = vadd.xlane.f32.xlu0 %v1340
    %v1342 = vpop.xlane.xlu0 %1341
    %v1343 = vsel %vm553, %v304, 0.0
    %1344 = vadd.xlane.f32.xlu0 %v1343
    %v1345 = vpop.xlane.xlu0 %1344
    %v1346 = vsel %vm553, %v305, 0.0
    %1347 = vadd.xlane.f32.xlu0 %v1346
    %v1348 = vpop.xlane.xlu0 %1347
    %v1349 = vsel %vm553, %v306, 0.0
    %1350 = vadd.xlane.f32.xlu0 %v1349
    %v1351 = vpop.xlane.xlu0 %1350
    %v1352 = vsel %vm553, %v307, 0.0
    %1353 = vadd.xlane.f32.xlu0 %v1352
    %v1354 = vpop.xlane.xlu0 %1353
    %v1355 = vsel %vm553, %v308, 0.0
    %1356 = vadd.xlane.f32.xlu0 %v1355
    %v1357 = vpop.xlane.xlu0 %1356
    %v1358 = vsel %vm553, %v309, 0.0
    %1359 = vadd.xlane.f32.xlu0 %v1358
    %v1360 = vpop.xlane.xlu0 %1359
    %v1361 = vsel %vm553, %v310, 0.0
    %1362 = vadd.xlane.f32.xlu0 %v1361
    %v1363 = vpop.xlane.xlu0 %1362
    %v1364 = vsel %vm553, %v311, 0.0
    %1365 = vadd.xlane.f32.xlu0 %v1364
    %v1366 = vpop.xlane.xlu0 %1365
    %v1367 = vsel %vm553, %v312, 0.0
    %1368 = vadd.xlane.f32.xlu0 %v1367
    %v1369 = vpop.xlane.xlu0 %1368
    %v1370 = vsel %vm553, %v313, 0.0
    %1371 = vadd.xlane.f32.xlu0 %v1370
    %v1372 = vpop.xlane.xlu0 %1371
    %v1373 = vsel %vm553, %v314, 0.0
    %1374 = vadd.xlane.f32.xlu0 %v1373
    %v1375 = vpop.xlane.xlu0 %1374
    %v1376 = vsel %vm553, %v315, 0.0
    %1377 = vadd.xlane.f32.xlu0 %v1376
    %v1378 = vpop.xlane.xlu0 %1377
    %v1379 = vsel %vm553, %v316, 0.0
    %1380 = vadd.xlane.f32.xlu0 %v1379
    %v1381 = vpop.xlane.xlu0 %1380
    %v1382 = vsel %vm553, %v317, 0.0
    %1383 = vadd.xlane.f32.xlu0 %v1382
    %v1384 = vpop.xlane.xlu0 %1383
    %v1385 = vsel %vm553, %v318, 0.0
    %1386 = vadd.xlane.f32.xlu0 %v1385
    %v1387 = vpop.xlane.xlu0 %1386
    %v1388 = vsel %vm553, %v319, 0.0
    %1389 = vadd.xlane.f32.xlu0 %v1388
    %v1390 = vpop.xlane.xlu0 %1389
    %v1391 = vsel %vm553, %v320, 0.0
    %1392 = vadd.xlane.f32.xlu0 %v1391
    %v1393 = vpop.xlane.xlu0 %1392
    %v1394 = vsel %vm553, %v321, 0.0
    %1395 = vadd.xlane.f32.xlu0 %v1394
    %v1396 = vpop.xlane.xlu0 %1395
    %v1397 = vsel %vm553, %v322, 0.0
    %1398 = vadd.xlane.f32.xlu0 %v1397
    %v1399 = vpop.xlane.xlu0 %1398
    %v1400 = vsel %vm553, %v323, 0.0
    %1401 = vadd.xlane.f32.xlu0 %v1400
    %v1402 = vpop.xlane.xlu0 %1401
    %v1403 = vsel %vm553, %v324, 0.0
    %1404 = vadd.xlane.f32.xlu0 %v1403
    %v1405 = vpop.xlane.xlu0 %1404
    %v1406 = vsel %vm553, %v325, 0.0
    %1407 = vadd.xlane.f32.xlu0 %v1406
    %v1408 = vpop.xlane.xlu0 %1407
    %v1409 = vsel %vm553, %v326, 0.0
    %1410 = vadd.xlane.f32.xlu0 %v1409
    %v1411 = vpop.xlane.xlu0 %1410
    %v1412 = vsel %vm553, %v327, 0.0
    %1413 = vadd.xlane.f32.xlu0 %v1412
    %v1414 = vpop.xlane.xlu0 %1413
    %v1415 = vsel %vm553, %v328, 0.0
    %1416 = vadd.xlane.f32.xlu0 %v1415
    %v1417 = vpop.xlane.xlu0 %1416
    %v1418 = vsel %vm553, %v329, 0.0
    %1419 = vadd.xlane.f32.xlu0 %v1418
    %v1420 = vpop.xlane.xlu0 %1419
    %v1421 = vsel %vm553, %v330, 0.0
    %1422 = vadd.xlane.f32.xlu0 %v1421
    %v1423 = vpop.xlane.xlu0 %1422
    %v1424 = vsel %vm553, %v331, 0.0
    %1425 = vadd.xlane.f32.xlu0 %v1424
    %v1426 = vpop.xlane.xlu0 %1425
    %v1427 = vsel %vm553, %v332, 0.0
    %1428 = vadd.xlane.f32.xlu0 %v1427
    %v1429 = vpop.xlane.xlu0 %1428
    %v1430 = vsel %vm553, %v333, 0.0
    %1431 = vadd.xlane.f32.xlu0 %v1430
    %v1432 = vpop.xlane.xlu0 %1431
    %v1433 = vsel %vm553, %v334, 0.0
    %1434 = vadd.xlane.f32.xlu0 %v1433
    %v1435 = vpop.xlane.xlu0 %1434
    %v1436 = vsel %vm553, %v335, 0.0
    %1437 = vadd.xlane.f32.xlu0 %v1436
    %v1438 = vpop.xlane.xlu0 %1437
    %v1439 = vsel %vm553, %v336, 0.0
    %1440 = vadd.xlane.f32.xlu0 %v1439
    %v1441 = vpop.xlane.xlu0 %1440
    %v1442 = vsel %vm553, %v337, 0.0
    %1443 = vadd.xlane.f32.xlu0 %v1442
    %v1444 = vpop.xlane.xlu0 %1443
    %v1445 = vsel %vm553, %v338, 0.0
    %1446 = vadd.xlane.f32.xlu0 %v1445
    %v1447 = vpop.xlane.xlu0 %1446
    %v1448 = vsel %vm553, %v339, 0.0
    %1449 = vadd.xlane.f32.xlu0 %v1448
    %v1450 = vpop.xlane.xlu0 %1449
    %v1451 = vsel %vm553, %v340, 0.0
    %1452 = vadd.xlane.f32.xlu0 %v1451
    %v1453 = vpop.xlane.xlu0 %1452
    %v1454 = vsel %vm553, %v341, 0.0
    %1455 = vadd.xlane.f32.xlu0 %v1454
    %v1456 = vpop.xlane.xlu0 %1455
    %v1457 = vsel %vm553, %v342, 0.0
    %1458 = vadd.xlane.f32.xlu0 %v1457
    %v1459 = vpop.xlane.xlu0 %1458
    %v1460 = vsel %vm553, %v343, 0.0
    %1461 = vadd.xlane.f32.xlu0 %v1460
    %v1462 = vpop.xlane.xlu0 %1461
    %v1463 = vsel %vm553, %v344, 0.0
    %1464 = vadd.xlane.f32.xlu0 %v1463
    %v1465 = vpop.xlane.xlu0 %1464
    %v1466 = vsel %vm553, %v345, 0.0
    %1467 = vadd.xlane.f32.xlu0 %v1466
    %v1468 = vpop.xlane.xlu0 %1467
    %v1469 = vsel %vm553, %v346, 0.0
    %1470 = vadd.xlane.f32.xlu0 %v1469
    %v1471 = vpop.xlane.xlu0 %1470
    %v1472 = vsel %vm553, %v347, 0.0
    %1473 = vadd.xlane.f32.xlu0 %v1472
    %v1474 = vpop.xlane.xlu0 %1473
    %v1475 = vsel %vm553, %v348, 0.0
    %1476 = vadd.xlane.f32.xlu0 %v1475
    %v1477 = vpop.xlane.xlu0 %1476
    %v1478 = vsel %vm553, %v349, 0.0
    %1479 = vadd.xlane.f32.xlu0 %v1478
    %v1480 = vpop.xlane.xlu0 %1479
    %v1481 = vsel %vm553, %v350, 0.0
    %1482 = vadd.xlane.f32.xlu0 %v1481
    %v1483 = vpop.xlane.xlu0 %1482
    %v1484 = vsel %vm553, %v351, 0.0
    %1485 = vadd.xlane.f32.xlu0 %v1484
    %v1486 = vpop.xlane.xlu0 %1485
    %v1487 = vsel %vm553, %v352, 0.0
    %1488 = vadd.xlane.f32.xlu0 %v1487
    %v1489 = vpop.xlane.xlu0 %1488
    %v1490 = vsel %vm553, %v353, 0.0
    %1491 = vadd.xlane.f32.xlu0 %v1490
    %v1492 = vpop.xlane.xlu0 %1491
    %v1493 = vsel %vm553, %v354, 0.0
    %1494 = vadd.xlane.f32.xlu0 %v1493
    %v1495 = vpop.xlane.xlu0 %1494
    %v1496 = vsel %vm553, %v355, 0.0
    %1497 = vadd.xlane.f32.xlu0 %v1496
    %v1498 = vpop.xlane.xlu0 %1497
    %v1499 = vsel %vm553, %v356, 0.0
    %1500 = vadd.xlane.f32.xlu0 %v1499
    %v1501 = vpop.xlane.xlu0 %1500
    %v1502 = vsel %vm553, %v357, 0.0
    %1503 = vadd.xlane.f32.xlu0 %v1502
    %v1504 = vpop.xlane.xlu0 %1503
    %v1505 = vsel %vm553, %v358, 0.0
    %1506 = vadd.xlane.f32.xlu0 %v1505
    %v1507 = vpop.xlane.xlu0 %1506
    %v1508 = vsel %vm553, %v359, 0.0
    %1509 = vadd.xlane.f32.xlu0 %v1508
    %v1510 = vpop.xlane.xlu0 %1509
    %v1511 = vsel %vm553, %v360, 0.0
    %1512 = vadd.xlane.f32.xlu0 %v1511
    %v1513 = vpop.xlane.xlu0 %1512
    %v1514 = vsel %vm553, %v361, 0.0
    %1515 = vadd.xlane.f32.xlu0 %v1514
    %v1516 = vpop.xlane.xlu0 %1515
    %v1517 = vsel %vm553, %v362, 0.0
    %1518 = vadd.xlane.f32.xlu0 %v1517
    %v1519 = vpop.xlane.xlu0 %1518
    %v1520 = vsel %vm553, %v363, 0.0
    %1521 = vadd.xlane.f32.xlu0 %v1520
    %v1522 = vpop.xlane.xlu0 %1521
    %v1523 = vsel %vm553, %v364, 0.0
    %1524 = vadd.xlane.f32.xlu0 %v1523
    %v1525 = vpop.xlane.xlu0 %1524
    %v1526 = vsel %vm553, %v365, 0.0
    %1527 = vadd.xlane.f32.xlu0 %v1526
    %v1528 = vpop.xlane.xlu0 %1527
    %v1529 = vsel %vm553, %v366, 0.0
    %1530 = vadd.xlane.f32.xlu0 %v1529
    %v1531 = vpop.xlane.xlu0 %1530
    %v1532 = vsel %vm553, %v367, 0.0
    %1533 = vadd.xlane.f32.xlu0 %v1532
    %v1534 = vpop.xlane.xlu0 %1533
    %v1535 = vsel %vm553, %v368, 0.0
    %1536 = vadd.xlane.f32.xlu0 %v1535
    %v1537 = vpop.xlane.xlu0 %1536
    %v1538 = vsel %vm553, %v369, 0.0
    %1539 = vadd.xlane.f32.xlu0 %v1538
    %v1540 = vpop.xlane.xlu0 %1539
    %v1541 = vsel %vm553, %v370, 0.0
    %1542 = vadd.xlane.f32.xlu0 %v1541
    %v1543 = vpop.xlane.xlu0 %1542
    %v1544 = vsel %vm553, %v371, 0.0
    %1545 = vadd.xlane.f32.xlu0 %v1544
    %v1546 = vpop.xlane.xlu0 %1545
    %v1547 = vsel %vm553, %v372, 0.0
    %1548 = vadd.xlane.f32.xlu0 %v1547
    %v1549 = vpop.xlane.xlu0 %1548
    %v1550 = vsel %vm553, %v373, 0.0
    %1551 = vadd.xlane.f32.xlu0 %v1550
    %v1552 = vpop.xlane.xlu0 %1551
    %v1553 = vsel %vm553, %v374, 0.0
    %1554 = vadd.xlane.f32.xlu0 %v1553
    %v1555 = vpop.xlane.xlu0 %1554
    %v1556 = vsel %vm553, %v375, 0.0
    %1557 = vadd.xlane.f32.xlu0 %v1556
    %v1558 = vpop.xlane.xlu0 %1557
    %v1559 = vsel %vm553, %v376, 0.0
    %1560 = vadd.xlane.f32.xlu0 %v1559
    %v1561 = vpop.xlane.xlu0 %1560
    %v1562 = vsel %vm553, %v377, 0.0
    %1563 = vadd.xlane.f32.xlu0 %v1562
    %v1564 = vpop.xlane.xlu0 %1563
    %v1565 = vsel %vm553, %v378, 0.0
    %1566 = vadd.xlane.f32.xlu0 %v1565
    %v1567 = vpop.xlane.xlu0 %1566
    %v1568 = vsel %vm553, %v379, 0.0
    %1569 = vadd.xlane.f32.xlu0 %v1568
    %v1570 = vpop.xlane.xlu0 %1569
    %v1571 = vsel %vm553, %v380, 0.0
    %1572 = vadd.xlane.f32.xlu0 %v1571
    %v1573 = vpop.xlane.xlu0 %1572
    %v1574 = vsel %vm553, %v381, 0.0
    %1575 = vadd.xlane.f32.xlu0 %v1574
    %v1576 = vpop.xlane.xlu0 %1575
    %v1577 = vsel %vm553, %v382, 0.0
    %1578 = vadd.xlane.f32.xlu0 %v1577
    %v1579 = vpop.xlane.xlu0 %1578
    %v1580 = vsel %vm553, %v383, 0.0
    %1581 = vadd.xlane.f32.xlu0 %v1580
    %v1582 = vpop.xlane.xlu0 %1581
    %v1583 = vsel %vm553, %v384, 0.0
    %1584 = vadd.xlane.f32.xlu0 %v1583
    %v1585 = vpop.xlane.xlu0 %1584
    %v1586 = vsel %vm553, %v385, 0.0
    %1587 = vadd.xlane.f32.xlu0 %v1586
    %v1588 = vpop.xlane.xlu0 %1587
    %v1589 = vsel %vm553, %v386, 0.0
    %1590 = vadd.xlane.f32.xlu0 %v1589
    %v1591 = vpop.xlane.xlu0 %1590
    %v1592 = vsel %vm553, %v387, 0.0
    %1593 = vadd.xlane.f32.xlu0 %v1592
    %v1594 = vpop.xlane.xlu0 %1593
    %v1595 = vsel %vm553, %v388, 0.0
    %1596 = vadd.xlane.f32.xlu0 %v1595
    %v1597 = vpop.xlane.xlu0 %1596
    %v1598 = vsel %vm553, %v389, 0.0
    %1599 = vadd.xlane.f32.xlu0 %v1598
    %v1600 = vpop.xlane.xlu0 %1599
    %v1601 = vsel %vm553, %v390, 0.0
    %1602 = vadd.xlane.f32.xlu0 %v1601
    %v1603 = vpop.xlane.xlu0 %1602
    %v1604 = vsel %vm553, %v391, 0.0
    %1605 = vadd.xlane.f32.xlu0 %v1604
    %v1606 = vpop.xlane.xlu0 %1605
    %v1607 = vsel %vm553, %v392, 0.0
    %1608 = vadd.xlane.f32.xlu0 %v1607
    %v1609 = vpop.xlane.xlu0 %1608
    %v1610 = vsel %vm553, %v393, 0.0
    %1611 = vadd.xlane.f32.xlu0 %v1610
    %v1612 = vpop.xlane.xlu0 %1611
    %v1613 = vsel %vm553, %v394, 0.0
    %1614 = vadd.xlane.f32.xlu0 %v1613
    %v1615 = vpop.xlane.xlu0 %1614
    %v1616 = vsel %vm553, %v395, 0.0
    %1617 = vadd.xlane.f32.xlu0 %v1616
    %v1618 = vpop.xlane.xlu0 %1617
    %v1619 = vsel %vm553, %v396, 0.0
    %1620 = vadd.xlane.f32.xlu0 %v1619
    %v1621 = vpop.xlane.xlu0 %1620
    %v1622 = vsel %vm553, %v397, 0.0
    %1623 = vadd.xlane.f32.xlu0 %v1622
    %v1624 = vpop.xlane.xlu0 %1623
    %v1625 = vsel %vm553, %v398, 0.0
    %1626 = vadd.xlane.f32.xlu0 %v1625
    %v1627 = vpop.xlane.xlu0 %1626
    %v1628 = vsel %vm553, %v399, 0.0
    %1629 = vadd.xlane.f32.xlu0 %v1628
    %v1630 = vpop.xlane.xlu0 %1629
    %v1631 = vsel %vm553, %v400, 0.0
    %1632 = vadd.xlane.f32.xlu0 %v1631
    %v1633 = vpop.xlane.xlu0 %1632
    %v1634 = vsel %vm553, %v401, 0.0
    %1635 = vadd.xlane.f32.xlu0 %v1634
    %v1636 = vpop.xlane.xlu0 %1635
    %v1637 = vsel %vm553, %v402, 0.0
    %1638 = vadd.xlane.f32.xlu0 %v1637
    %v1639 = vpop.xlane.xlu0 %1638
    %v1640 = vsel %vm553, %v403, 0.0
    %1641 = vadd.xlane.f32.xlu0 %v1640
    %v1642 = vpop.xlane.xlu0 %1641
    %v1643 = vsel %vm553, %v404, 0.0
    %1644 = vadd.xlane.f32.xlu0 %v1643
    %v1645 = vpop.xlane.xlu0 %1644
    %v1646 = vsel %vm553, %v405, 0.0
    %1647 = vadd.xlane.f32.xlu0 %v1646
    %v1648 = vpop.xlane.xlu0 %1647
    %v1649 = vsel %vm553, %v406, 0.0
    %1650 = vadd.xlane.f32.xlu0 %v1649
    %v1651 = vpop.xlane.xlu0 %1650
    %v1652 = vsel %vm553, %v407, 0.0
    %1653 = vadd.xlane.f32.xlu0 %v1652
    %v1654 = vpop.xlane.xlu0 %1653
    %v1655 = vsel %vm553, %v408, 0.0
    %1656 = vadd.xlane.f32.xlu0 %v1655
    %v1657 = vpop.xlane.xlu0 %1656
    %v1658 = vsel %vm553, %v409, 0.0
    %1659 = vadd.xlane.f32.xlu0 %v1658
    %v1660 = vpop.xlane.xlu0 %1659
    %v1661 = vsel %vm553, %v410, 0.0
    %1662 = vadd.xlane.f32.xlu0 %v1661
    %v1663 = vpop.xlane.xlu0 %1662
    %v1664 = vsel %vm553, %v411, 0.0
    %1665 = vadd.xlane.f32.xlu0 %v1664
    %v1666 = vpop.xlane.xlu0 %1665
    %v1667 = vsel %vm553, %v412, 0.0
    %1668 = vadd.xlane.f32.xlu0 %v1667
    %v1669 = vpop.xlane.xlu0 %1668
    %v1670 = vsel %vm553, %v413, 0.0
    %1671 = vadd.xlane.f32.xlu0 %v1670
    %v1672 = vpop.xlane.xlu0 %1671
    %v1673 = vsel %vm553, %v414, 0.0
    %1674 = vadd.xlane.f32.xlu0 %v1673
    %v1675 = vpop.xlane.xlu0 %1674
    %v1676 = vsel %vm553, %v415, 0.0
    %1677 = vadd.xlane.f32.xlu0 %v1676
    %v1678 = vpop.xlane.xlu0 %1677
    %v1679 = vsel %vm553, %v416, 0.0
    %1680 = vadd.xlane.f32.xlu0 %v1679
    %v1681 = vpop.xlane.xlu0 %1680
    %v1682 = vsel %vm553, %v417, 0.0
    %1683 = vadd.xlane.f32.xlu0 %v1682
    %v1684 = vpop.xlane.xlu0 %1683
    %v1685 = vsel %vm553, %v418, 0.0
    %1686 = vadd.xlane.f32.xlu0 %v1685
    %v1687 = vpop.xlane.xlu0 %1686
    %v1688 = vsel %vm553, %v419, 0.0
    %1689 = vadd.xlane.f32.xlu0 %v1688
    %v1690 = vpop.xlane.xlu0 %1689
    %v1691 = vsel %vm553, %v420, 0.0
    %1692 = vadd.xlane.f32.xlu0 %v1691
    %v1693 = vpop.xlane.xlu0 %1692
    %v1694 = vsel %vm553, %v421, 0.0
    %1695 = vadd.xlane.f32.xlu0 %v1694
    %v1696 = vpop.xlane.xlu0 %1695
    %v1697 = vsel %vm553, %v422, 0.0
    %1698 = vadd.xlane.f32.xlu0 %v1697
    %v1699 = vpop.xlane.xlu0 %1698
    %v1700 = vsel %vm553, %v423, 0.0
    %1701 = vadd.xlane.f32.xlu0 %v1700
    %v1702 = vpop.xlane.xlu0 %1701
    %v1703 = vsel %vm553, %v424, 0.0
    %1704 = vadd.xlane.f32.xlu0 %v1703
    %v1705 = vpop.xlane.xlu0 %1704
    %v1706 = vsel %vm553, %v425, 0.0
    %1707 = vadd.xlane.f32.xlu0 %v1706
    %v1708 = vpop.xlane.xlu0 %1707
    %v1709 = vsel %vm553, %v426, 0.0
    %1710 = vadd.xlane.f32.xlu0 %v1709
    %v1711 = vpop.xlane.xlu0 %1710
    %v1712 = vsel %vm553, %v427, 0.0
    %1713 = vadd.xlane.f32.xlu0 %v1712
    %v1714 = vpop.xlane.xlu0 %1713
    %v1715 = vsel %vm553, %v428, 0.0
    %1716 = vadd.xlane.f32.xlu0 %v1715
    %v1717 = vpop.xlane.xlu0 %1716
    %v1718 = vsel %vm553, %v429, 0.0
    %1719 = vadd.xlane.f32.xlu0 %v1718
    %v1720 = vpop.xlane.xlu0 %1719
    %v1721 = vsel %vm553, %v430, 0.0
    %1722 = vadd.xlane.f32.xlu0 %v1721
    %v1723 = vpop.xlane.xlu0 %1722
    %v1724 = vsel %vm553, %v431, 0.0
    %1725 = vadd.xlane.f32.xlu0 %v1724
    %v1726 = vpop.xlane.xlu0 %1725
    %v1727 = vsel %vm553, %v432, 0.0
    %1728 = vadd.xlane.f32.xlu0 %v1727
    %v1729 = vpop.xlane.xlu0 %1728
    %v1730 = vsel %vm553, %v433, 0.0
    %1731 = vadd.xlane.f32.xlu0 %v1730
    %v1732 = vpop.xlane.xlu0 %1731
    %v1733 = vsel %vm553, %v434, 0.0
    %1734 = vadd.xlane.f32.xlu0 %v1733
    %v1735 = vpop.xlane.xlu0 %1734
    %v1736 = vsel %vm553, %v435, 0.0
    %1737 = vadd.xlane.f32.xlu0 %v1736
    %v1738 = vpop.xlane.xlu0 %1737
    %v1739 = vsel %vm553, %v436, 0.0
    %1740 = vadd.xlane.f32.xlu0 %v1739
    %v1741 = vpop.xlane.xlu0 %1740
    %v1742 = vsel %vm553, %v437, 0.0
    %1743 = vadd.xlane.f32.xlu0 %v1742
    %v1744 = vpop.xlane.xlu0 %1743
    %v1745 = vsel %vm553, %v438, 0.0
    %1746 = vadd.xlane.f32.xlu0 %v1745
    %v1747 = vpop.xlane.xlu0 %1746
    %v1748 = vsel %vm553, %v439, 0.0
    %1749 = vadd.xlane.f32.xlu0 %v1748
    %v1750 = vpop.xlane.xlu0 %1749
    %v1751 = vsel %vm553, %v440, 0.0
    %1752 = vadd.xlane.f32.xlu0 %v1751
    %v1753 = vpop.xlane.xlu0 %1752
    %v1754 = vsel %vm553, %v441, 0.0
    %1755 = vadd.xlane.f32.xlu0 %v1754
    %v1756 = vpop.xlane.xlu0 %1755
    %v1757 = vsel %vm553, %v442, 0.0
    %1758 = vadd.xlane.f32.xlu0 %v1757
    %v1759 = vpop.xlane.xlu0 %1758
    %v1760 = vsel %vm553, %v443, 0.0
    %1761 = vadd.xlane.f32.xlu0 %v1760
    %v1762 = vpop.xlane.xlu0 %1761
    %v1763 = vsel %vm553, %v444, 0.0
    %1764 = vadd.xlane.f32.xlu0 %v1763
    %v1765 = vpop.xlane.xlu0 %1764
    %v1766 = vsel %vm553, %v445, 0.0
    %1767 = vadd.xlane.f32.xlu0 %v1766
    %v1768 = vpop.xlane.xlu0 %1767
    %v1769 = vsel %vm553, %v446, 0.0
    %1770 = vadd.xlane.f32.xlu0 %v1769
    %v1771 = vpop.xlane.xlu0 %1770
    %v1772 = vsel %vm553, %v447, 0.0
    %1773 = vadd.xlane.f32.xlu0 %v1772
    %v1774 = vpop.xlane.xlu0 %1773
    %v1775 = vsel %vm553, %v448, 0.0
    %1776 = vadd.xlane.f32.xlu0 %v1775
    %v1777 = vpop.xlane.xlu0 %1776
    %v1778 = vsel %vm553, %v449, 0.0
    %1779 = vadd.xlane.f32.xlu0 %v1778
    %v1780 = vpop.xlane.xlu0 %1779
    %v1781 = vsel %vm553, %v450, 0.0
    %1782 = vadd.xlane.f32.xlu0 %v1781
    %v1783 = vpop.xlane.xlu0 %1782
    %v1784 = vsel %vm553, %v451, 0.0
    %1785 = vadd.xlane.f32.xlu0 %v1784
    %v1786 = vpop.xlane.xlu0 %1785
    %v1787 = vsel %vm553, %v452, 0.0
    %1788 = vadd.xlane.f32.xlu0 %v1787
    %v1789 = vpop.xlane.xlu0 %1788
    %v1790 = vsel %vm553, %v453, 0.0
    %1791 = vadd.xlane.f32.xlu0 %v1790
    %v1792 = vpop.xlane.xlu0 %1791
    %v1793 = vsel %vm553, %v454, 0.0
    %1794 = vadd.xlane.f32.xlu0 %v1793
    %v1795 = vpop.xlane.xlu0 %1794
    %v1796 = vsel %vm553, %v455, 0.0
    %1797 = vadd.xlane.f32.xlu0 %v1796
    %v1798 = vpop.xlane.xlu0 %1797
    %v1799 = vsel %vm553, %v456, 0.0
    %1800 = vadd.xlane.f32.xlu0 %v1799
    %v1801 = vpop.xlane.xlu0 %1800
    %v1802 = vsel %vm553, %v457, 0.0
    %1803 = vadd.xlane.f32.xlu0 %v1802
    %v1804 = vpop.xlane.xlu0 %1803
    %v1805 = vsel %vm553, %v458, 0.0
    %1806 = vadd.xlane.f32.xlu0 %v1805
    %v1807 = vpop.xlane.xlu0 %1806
    %v1808 = vsel %vm553, %v459, 0.0
    %1809 = vadd.xlane.f32.xlu0 %v1808
    %v1810 = vpop.xlane.xlu0 %1809
    %v1811 = vsel %vm553, %v460, 0.0
    %1812 = vadd.xlane.f32.xlu0 %v1811
    %v1813 = vpop.xlane.xlu0 %1812
    %v1814 = vsel %vm553, %v461, 0.0
    %1815 = vadd.xlane.f32.xlu0 %v1814
    %v1816 = vpop.xlane.xlu0 %1815
    %v1817 = vsel %vm553, %v462, 0.0
    %1818 = vadd.xlane.f32.xlu0 %v1817
    %v1819 = vpop.xlane.xlu0 %1818
    %v1820 = vsel %vm553, %v463, 0.0
    %1821 = vadd.xlane.f32.xlu0 %v1820
    %v1822 = vpop.xlane.xlu0 %1821
    %v1823 = vsel %vm553, %v464, 0.0
    %1824 = vadd.xlane.f32.xlu0 %v1823
    %v1825 = vpop.xlane.xlu0 %1824
    %v1826 = vsel %vm553, %v465, 0.0
    %1827 = vadd.xlane.f32.xlu0 %v1826
    %v1828 = vpop.xlane.xlu0 %1827
    %v1829 = vsel %vm553, %v466, 0.0
    %1830 = vadd.xlane.f32.xlu0 %v1829
    %v1831 = vpop.xlane.xlu0 %1830
    %v1832 = vsel %vm553, %v467, 0.0
    %1833 = vadd.xlane.f32.xlu0 %v1832
    %v1834 = vpop.xlane.xlu0 %1833
    %v1835 = vsel %vm553, %v468, 0.0
    %1836 = vadd.xlane.f32.xlu0 %v1835
    %v1837 = vpop.xlane.xlu0 %1836
    %v1838 = vsel %vm553, %v469, 0.0
    %1839 = vadd.xlane.f32.xlu0 %v1838
    %v1840 = vpop.xlane.xlu0 %1839
    %v1841 = vsel %vm553, %v470, 0.0
    %1842 = vadd.xlane.f32.xlu0 %v1841
    %v1843 = vpop.xlane.xlu0 %1842
    %v1844 = vsel %vm553, %v471, 0.0
    %1845 = vadd.xlane.f32.xlu0 %v1844
    %v1846 = vpop.xlane.xlu0 %1845
    %v1847 = vsel %vm553, %v472, 0.0
    %1848 = vadd.xlane.f32.xlu0 %v1847
    %v1849 = vpop.xlane.xlu0 %1848
    %v1850 = vsel %vm553, %v473, 0.0
    %1851 = vadd.xlane.f32.xlu0 %v1850
    %v1852 = vpop.xlane.xlu0 %1851
    %v1853 = vsel %vm553, %v474, 0.0
    %1854 = vadd.xlane.f32.xlu0 %v1853
    %v1855 = vpop.xlane.xlu0 %1854
    %v1856 = vsel %vm553, %v475, 0.0
    %1857 = vadd.xlane.f32.xlu0 %v1856
    %v1858 = vpop.xlane.xlu0 %1857
    %v1859 = vsel %vm553, %v476, 0.0
    %1860 = vadd.xlane.f32.xlu0 %v1859
    %v1861 = vpop.xlane.xlu0 %1860
    %v1862 = vsel %vm553, %v477, 0.0
    %1863 = vadd.xlane.f32.xlu0 %v1862
    %v1864 = vpop.xlane.xlu0 %1863
    %v1865 = vsel %vm553, %v478, 0.0
    %1866 = vadd.xlane.f32.xlu0 %v1865
    %v1867 = vpop.xlane.xlu0 %1866
    %v1868 = vsel %vm553, %v479, 0.0
    %1869 = vadd.xlane.f32.xlu0 %v1868
    %v1870 = vpop.xlane.xlu0 %1869
    %v1871 = vsel %vm553, %v480, 0.0
    %1872 = vadd.xlane.f32.xlu0 %v1871
    %v1873 = vpop.xlane.xlu0 %1872
    %v1874 = vsel %vm553, %v481, 0.0
    %1875 = vadd.xlane.f32.xlu0 %v1874
    %v1876 = vpop.xlane.xlu0 %1875
    %v1877 = vsel %vm553, %v482, 0.0
    %1878 = vadd.xlane.f32.xlu0 %v1877
    %v1879 = vpop.xlane.xlu0 %1878
    %v1880 = vsel %vm553, %v483, 0.0
    %1881 = vadd.xlane.f32.xlu0 %v1880
    %v1882 = vpop.xlane.xlu0 %1881
    %v1883 = vsel %vm553, %v484, 0.0
    %1884 = vadd.xlane.f32.xlu0 %v1883
    %v1885 = vpop.xlane.xlu0 %1884
    %v1886 = vsel %vm553, %v485, 0.0
    %1887 = vadd.xlane.f32.xlu0 %v1886
    %v1888 = vpop.xlane.xlu0 %1887
    %v1889 = vsel %vm553, %v486, 0.0
    %1890 = vadd.xlane.f32.xlu0 %v1889
    %v1891 = vpop.xlane.xlu0 %1890
    %v1892 = vsel %vm553, %v487, 0.0
    %1893 = vadd.xlane.f32.xlu0 %v1892
    %v1894 = vpop.xlane.xlu0 %1893
    %v1895 = vsel %vm553, %v488, 0.0
    %1896 = vadd.xlane.f32.xlu0 %v1895
    %v1897 = vpop.xlane.xlu0 %1896
    %v1898 = vsel %vm553, %v489, 0.0
    %1899 = vadd.xlane.f32.xlu0 %v1898
    %v1900 = vpop.xlane.xlu0 %1899
    %v1901 = vsel %vm553, %v490, 0.0
    %1902 = vadd.xlane.f32.xlu0 %v1901
    %v1903 = vpop.xlane.xlu0 %1902
    %v1904 = vsel %vm553, %v491, 0.0
    %1905 = vadd.xlane.f32.xlu0 %v1904
    %v1906 = vpop.xlane.xlu0 %1905
    %v1907 = vsel %vm553, %v492, 0.0
    %1908 = vadd.xlane.f32.xlu0 %v1907
    %v1909 = vpop.xlane.xlu0 %1908
    %v1910 = vsel %vm553, %v493, 0.0
    %1911 = vadd.xlane.f32.xlu0 %v1910
    %v1912 = vpop.xlane.xlu0 %1911
    %v1913 = vsel %vm553, %v494, 0.0
    %1914 = vadd.xlane.f32.xlu0 %v1913
    %v1915 = vpop.xlane.xlu0 %1914
    %v1916 = vsel %vm553, %v495, 0.0
    %1917 = vadd.xlane.f32.xlu0 %v1916
    %v1918 = vpop.xlane.xlu0 %1917
    %v1919 = vsel %vm553, %v496, 0.0
    %1920 = vadd.xlane.f32.xlu0 %v1919
    %v1921 = vpop.xlane.xlu0 %1920
    %v1922 = vsel %vm553, %v497, 0.0
    %1923 = vadd.xlane.f32.xlu0 %v1922
    %v1924 = vpop.xlane.xlu0 %1923
    %v1925 = vsel %vm553, %v498, 0.0
    %1926 = vadd.xlane.f32.xlu0 %v1925
    %v1927 = vpop.xlane.xlu0 %1926
    %v1928 = vsel %vm553, %v499, 0.0
    %1929 = vadd.xlane.f32.xlu0 %v1928
    %v1930 = vpop.xlane.xlu0 %1929
    %v1931 = vsel %vm553, %v500, 0.0
    %1932 = vadd.xlane.f32.xlu0 %v1931
    %v1933 = vpop.xlane.xlu0 %1932
    %v1934 = vsel %vm553, %v501, 0.0
    %1935 = vadd.xlane.f32.xlu0 %v1934
    %v1936 = vpop.xlane.xlu0 %1935
    %v1937 = vsel %vm553, %v502, 0.0
    %1938 = vadd.xlane.f32.xlu0 %v1937
    %v1939 = vpop.xlane.xlu0 %1938
    %v1940 = vsel %vm553, %v503, 0.0
    %1941 = vadd.xlane.f32.xlu0 %v1940
    %v1942 = vpop.xlane.xlu0 %1941
    %v1943 = vsel %vm553, %v504, 0.0
    %1944 = vadd.xlane.f32.xlu0 %v1943
    %v1945 = vpop.xlane.xlu0 %1944
    %v1946 = vsel %vm553, %v505, 0.0
    %1947 = vadd.xlane.f32.xlu0 %v1946
    %v1948 = vpop.xlane.xlu0 %1947
    %v1949 = vsel %vm553, %v506, 0.0
    %1950 = vadd.xlane.f32.xlu0 %v1949
    %v1951 = vpop.xlane.xlu0 %1950
    %v1952 = vsel %vm553, %v507, 0.0
    %1953 = vadd.xlane.f32.xlu0 %v1952
    %v1954 = vpop.xlane.xlu0 %1953
    %v1955 = vsel %vm553, %v508, 0.0
    %1956 = vadd.xlane.f32.xlu0 %v1955
    %v1957 = vpop.xlane.xlu0 %1956
    %v1958 = vsel %vm553, %v509, 0.0
    %1959 = vadd.xlane.f32.xlu0 %v1958
    %v1960 = vpop.xlane.xlu0 %1959
    %v1961 = vsel %vm553, %v510, 0.0
    %1962 = vadd.xlane.f32.xlu0 %v1961
    %v1963 = vpop.xlane.xlu0 %1962
    %v1964 = vsel %vm553, %v511, 0.0
    %1965 = vadd.xlane.f32.xlu0 %v1964
    %v1966 = vpop.xlane.xlu0 %1965
    %v1967 = vsel %vm553, %v512, 0.0
    %1968 = vadd.xlane.f32.xlu0 %v1967
    %v1969 = vpop.xlane.xlu0 %1968
    %v1970 = vsel %vm553, %v513, 0.0
    %1971 = vadd.xlane.f32.xlu0 %v1970
    %v1972 = vpop.xlane.xlu0 %1971
    %v1973 = vsel %vm553, %v514, 0.0
    %1974 = vadd.xlane.f32.xlu0 %v1973
    %v1975 = vpop.xlane.xlu0 %1974
    %v1976 = vsel %vm553, %v515, 0.0
    %1977 = vadd.xlane.f32.xlu0 %v1976
    %v1978 = vpop.xlane.xlu0 %1977
    %v1979 = vsel %vm553, %v516, 0.0
    %1980 = vadd.xlane.f32.xlu0 %v1979
    %v1981 = vpop.xlane.xlu0 %1980
    %v1982 = vsel %vm553, %v517, 0.0
    %1983 = vadd.xlane.f32.xlu0 %v1982
    %v1984 = vpop.xlane.xlu0 %1983
    %v1985 = vsel %vm553, %v518, 0.0
    %1986 = vadd.xlane.f32.xlu0 %v1985
    %v1987 = vpop.xlane.xlu0 %1986
    %v1988 = vsel %vm553, %v519, 0.0
    %1989 = vadd.xlane.f32.xlu0 %v1988
    %v1990 = vpop.xlane.xlu0 %1989
    %v1991 = vsel %vm553, %v520, 0.0
    %1992 = vadd.xlane.f32.xlu0 %v1991
    %v1993 = vpop.xlane.xlu0 %1992
    %v1994 = vsel %vm553, %v521, 0.0
    %1995 = vadd.xlane.f32.xlu0 %v1994
    %v1996 = vpop.xlane.xlu0 %1995
    %v1997 = vsel %vm553, %v522, 0.0
    %1998 = vadd.xlane.f32.xlu0 %v1997
    %v1999 = vpop.xlane.xlu0 %1998
    %v2000 = vsel %vm553, %v523, 0.0
    %2001 = vadd.xlane.f32.xlu0 %v2000
    %v2002 = vpop.xlane.xlu0 %2001
    %v2003 = vsel %vm553, %v524, 0.0
    %2004 = vadd.xlane.f32.xlu0 %v2003
    %v2005 = vpop.xlane.xlu0 %2004
    %v2006 = vsel %vm553, %v525, 0.0
    %2007 = vadd.xlane.f32.xlu0 %v2006
    %v2008 = vpop.xlane.xlu0 %2007
    %v2009 = vsel %vm553, %v526, 0.0
    %2010 = vadd.xlane.f32.xlu0 %v2009
    %v2011 = vpop.xlane.xlu0 %2010
    %v2012 = vsel %vm553, %v527, 0.0
    %2013 = vadd.xlane.f32.xlu0 %v2012
    %v2014 = vpop.xlane.xlu0 %2013
    %v2015 = vsel %vm553, %v528, 0.0
    %2016 = vadd.xlane.f32.xlu0 %v2015
    %v2017 = vpop.xlane.xlu0 %2016
    %v2018 = vsel %vm553, %v529, 0.0
    %2019 = vadd.xlane.f32.xlu0 %v2018
    %v2020 = vpop.xlane.xlu0 %2019
    %v2021 = vsel %vm553, %v530, 0.0
    %2022 = vadd.xlane.f32.xlu0 %v2021
    %v2023 = vpop.xlane.xlu0 %2022
    %v2024 = vsel %vm553, %v531, 0.0
    %2025 = vadd.xlane.f32.xlu0 %v2024
    %v2026 = vpop.xlane.xlu0 %2025
    %v2027 = vsel %vm553, %v532, 0.0
    %2028 = vadd.xlane.f32.xlu0 %v2027
    %v2029 = vpop.xlane.xlu0 %2028
    %v2030 = vsel %vm553, %v533, 0.0
    %2031 = vadd.xlane.f32.xlu0 %v2030
    %v2032 = vpop.xlane.xlu0 %2031
    %v2033 = vsel %vm553, %v534, 0.0
    %2034 = vadd.xlane.f32.xlu0 %v2033
    %v2035 = vpop.xlane.xlu0 %2034
    %v2036 = vsel %vm553, %v535, 0.0
    %2037 = vadd.xlane.f32.xlu0 %v2036
    %v2038 = vpop.xlane.xlu0 %2037
    %v2039 = vsel %vm553, %v536, 0.0
    %2040 = vadd.xlane.f32.xlu0 %v2039
    %v2041 = vpop.xlane.xlu0 %2040
    %v2042 = vsel %vm553, %v537, 0.0
    %2043 = vadd.xlane.f32.xlu0 %v2042
    %v2044 = vpop.xlane.xlu0 %2043
    %v2045 = vsel %vm553, %v538, 0.0
    %2046 = vadd.xlane.f32.xlu0 %v2045
    %v2047 = vpop.xlane.xlu0 %2046
    %v2048 = vsel %vm553, %v539, 0.0
    %2049 = vadd.xlane.f32.xlu0 %v2048
    %v2050 = vpop.xlane.xlu0 %2049
    %v2051 = vsel %vm553, %v540, 0.0
    %2052 = vadd.xlane.f32.xlu0 %v2051
    %v2053 = vpop.xlane.xlu0 %2052
    %v2054 = vsel %vm553, %v541, 0.0
    %2055 = vadd.xlane.f32.xlu0 %v2054
    %v2056 = vpop.xlane.xlu0 %2055
    %v2057 = vsel %vm553, %v542, 0.0
    %2058 = vadd.xlane.f32.xlu0 %v2057
    %v2059 = vpop.xlane.xlu0 %2058
    %v2060 = vsel %vm553, %v543, 0.0
    %2061 = vadd.xlane.f32.xlu0 %v2060
    %v2062 = vpop.xlane.xlu0 %2061
    %v2063 = vsel %vm553, %v544, 0.0
    %2064 = vadd.xlane.f32.xlu0 %v2063
    %v2065 = vpop.xlane.xlu0 %2064
    %v2066 = vsel %vm553, %v545, 0.0
    %2067 = vadd.xlane.f32.xlu0 %v2066
    %v2068 = vpop.xlane.xlu0 %2067
    %v2069 = vsel %vm553, %v546, 0.0
    %2070 = vadd.xlane.f32.xlu0 %v2069
    %v2071 = vpop.xlane.xlu0 %2070
    %v2072 = vsel %vm553, %v547, 0.0
    %2073 = vadd.xlane.f32.xlu0 %v2072
    %v2074 = vpop.xlane.xlu0 %2073
    %v2075 = vsel %vm553, %v548, 0.0
    %2076 = vadd.xlane.f32.xlu0 %v2075
    %v2077 = vpop.xlane.xlu0 %2076
    %v2078 = vsel %vm553, %v549, 0.0
    %2079 = vadd.xlane.f32.xlu0 %v2078
    %v2080 = vpop.xlane.xlu0 %2079
    %v2081 = vsel %vm553, %v550, 0.0
    %2082 = vadd.xlane.f32.xlu0 %v2081
    %v2083 = vpop.xlane.xlu0 %2082
    %v2084 = vsel %vm553, %v551, 0.0
    %2085 = vadd.xlane.f32.xlu0 %v2084
    %v2086 = vpop.xlane.xlu0 %2085
    %v2087 = vsel %vm553, %v552, 0.0
    %2088 = vadd.xlane.f32.xlu0 %v2087
    %v2089 = vpop.xlane.xlu0 %2088
    %v2090 = vpack.c.bf16 %v559, %v556
    %v2091 = vpack.c.bf16 %v565, %v562
    %v2092 = vpack.c.bf16 %v571, %v568
    %v2093 = vpack.c.bf16 %v577, %v574
    %v2094 = vpack.c.bf16 %v583, %v580
    %v2095 = vpack.c.bf16 %v589, %v586
    %v2096 = vpack.c.bf16 %v595, %v592
    %v2097 = vpack.c.bf16 %v601, %v598
    %v2098 = vpack.c.bf16 %v607, %v604
    %v2099 = vpack.c.bf16 %v613, %v610
    %v2100 = vpack.c.bf16 %v619, %v616
    %v2101 = vpack.c.bf16 %v625, %v622
    %v2102 = vpack.c.bf16 %v631, %v628
    %v2103 = vpack.c.bf16 %v637, %v634
    %v2104 = vpack.c.bf16 %v643, %v640
    %v2105 = vpack.c.bf16 %v649, %v646
    %v2106 = vpack.c.bf16 %v655, %v652
    %v2107 = vpack.c.bf16 %v661, %v658
    %v2108 = vpack.c.bf16 %v667, %v664
    %v2109 = vpack.c.bf16 %v673, %v670
    %v2110 = vpack.c.bf16 %v679, %v676
    %v2111 = vpack.c.bf16 %v685, %v682
    %v2112 = vpack.c.bf16 %v691, %v688
    %v2113 = vpack.c.bf16 %v697, %v694
    %v2114 = vpack.c.bf16 %v703, %v700
    %v2115 = vpack.c.bf16 %v709, %v706
    %v2116 = vpack.c.bf16 %v715, %v712
    %v2117 = vpack.c.bf16 %v721, %v718
    %v2118 = vpack.c.bf16 %v727, %v724
    %v2119 = vpack.c.bf16 %v733, %v730
    %v2120 = vpack.c.bf16 %v739, %v736
    %v2121 = vpack.c.bf16 %v745, %v742
    %v2122 = vpack.c.bf16 %v751, %v748
    %v2123 = vpack.c.bf16 %v757, %v754
    %v2124 = vpack.c.bf16 %v763, %v760
    %v2125 = vpack.c.bf16 %v769, %v766
    %v2126 = vpack.c.bf16 %v775, %v772
    %v2127 = vpack.c.bf16 %v781, %v778
    %v2128 = vpack.c.bf16 %v787, %v784
    %v2129 = vpack.c.bf16 %v793, %v790
    %v2130 = vpack.c.bf16 %v799, %v796
    %v2131 = vpack.c.bf16 %v805, %v802
    %v2132 = vpack.c.bf16 %v811, %v808
    %v2133 = vpack.c.bf16 %v817, %v814
    %v2134 = vpack.c.bf16 %v823, %v820
    %v2135 = vpack.c.bf16 %v829, %v826
    %v2136 = vpack.c.bf16 %v835, %v832
    %v2137 = vpack.c.bf16 %v841, %v838
    %v2138 = vpack.c.bf16 %v847, %v844
    %v2139 = vpack.c.bf16 %v853, %v850
    %v2140 = vpack.c.bf16 %v859, %v856
    %v2141 = vpack.c.bf16 %v865, %v862
    %v2142 = vpack.c.bf16 %v871, %v868
    %v2143 = vpack.c.bf16 %v877, %v874
    %v2144 = vpack.c.bf16 %v883, %v880
    %v2145 = vpack.c.bf16 %v889, %v886
    %v2146 = vpack.c.bf16 %v895, %v892
    %v2147 = vpack.c.bf16 %v901, %v898
    %v2148 = vpack.c.bf16 %v907, %v904
    %v2149 = vpack.c.bf16 %v913, %v910
    %v2150 = vpack.c.bf16 %v919, %v916
    %v2151 = vpack.c.bf16 %v925, %v922
    %v2152 = vpack.c.bf16 %v931, %v928
    %v2153 = vpack.c.bf16 %v937, %v934
    %v2154 = vpack.c.bf16 %v943, %v940
    %v2155 = vpack.c.bf16 %v949, %v946
    %v2156 = vpack.c.bf16 %v955, %v952
    %v2157 = vpack.c.bf16 %v961, %v958
    %v2158 = vpack.c.bf16 %v967, %v964
    %v2159 = vpack.c.bf16 %v973, %v970
    %v2160 = vpack.c.bf16 %v979, %v976
    %v2161 = vpack.c.bf16 %v985, %v982
    %v2162 = vpack.c.bf16 %v991, %v988
    %v2163 = vpack.c.bf16 %v997, %v994
    %v2164 = vpack.c.bf16 %v1003, %v1000
    %v2165 = vpack.c.bf16 %v1009, %v1006
    %v2166 = vpack.c.bf16 %v1015, %v1012
    %v2167 = vpack.c.bf16 %v1021, %v1018
    %v2168 = vpack.c.bf16 %v1027, %v1024
    %v2169 = vpack.c.bf16 %v1033, %v1030
    %v2170 = vpack.c.bf16 %v1039, %v1036
    %v2171 = vpack.c.bf16 %v1045, %v1042
    %v2172 = vpack.c.bf16 %v1051, %v1048
    %v2173 = vpack.c.bf16 %v1057, %v1054
    %v2174 = vpack.c.bf16 %v1063, %v1060
    %v2175 = vpack.c.bf16 %v1069, %v1066
    %v2176 = vpack.c.bf16 %v1075, %v1072
    %v2177 = vpack.c.bf16 %v1081, %v1078
    %v2178 = vpack.c.bf16 %v1087, %v1084
    %v2179 = vpack.c.bf16 %v1093, %v1090
    %v2180 = vpack.c.bf16 %v1099, %v1096
    %v2181 = vpack.c.bf16 %v1105, %v1102
    %v2182 = vpack.c.bf16 %v1111, %v1108
    %v2183 = vpack.c.bf16 %v1117, %v1114
    %v2184 = vpack.c.bf16 %v1123, %v1120
    %v2185 = vpack.c.bf16 %v1129, %v1126
    %v2186 = vpack.c.bf16 %v1135, %v1132
    %v2187 = vpack.c.bf16 %v1141, %v1138
    %v2188 = vpack.c.bf16 %v1147, %v1144
    %v2189 = vpack.c.bf16 %v1153, %v1150
    %v2190 = vpack.c.bf16 %v1159, %v1156
    %v2191 = vpack.c.bf16 %v1165, %v1162
    %v2192 = vpack.c.bf16 %v1171, %v1168
    %v2193 = vpack.c.bf16 %v1177, %v1174
    %v2194 = vpack.c.bf16 %v1183, %v1180
    %v2195 = vpack.c.bf16 %v1189, %v1186
    %v2196 = vpack.c.bf16 %v1195, %v1192
    %v2197 = vpack.c.bf16 %v1201, %v1198
    %v2198 = vpack.c.bf16 %v1207, %v1204
    %v2199 = vpack.c.bf16 %v1213, %v1210
    %v2200 = vpack.c.bf16 %v1219, %v1216
    %v2201 = vpack.c.bf16 %v1225, %v1222
    %v2202 = vpack.c.bf16 %v1231, %v1228
    %v2203 = vpack.c.bf16 %v1237, %v1234
    %v2204 = vpack.c.bf16 %v1243, %v1240
    %v2205 = vpack.c.bf16 %v1249, %v1246
    %v2206 = vpack.c.bf16 %v1255, %v1252
    %v2207 = vpack.c.bf16 %v1261, %v1258
    %v2208 = vpack.c.bf16 %v1267, %v1264
    %v2209 = vpack.c.bf16 %v1273, %v1270
    %v2210 = vpack.c.bf16 %v1279, %v1276
    %v2211 = vpack.c.bf16 %v1285, %v1282
    %v2212 = vpack.c.bf16 %v1291, %v1288
    %v2213 = vpack.c.bf16 %v1297, %v1294
    %v2214 = vpack.c.bf16 %v1303, %v1300
    %v2215 = vpack.c.bf16 %v1309, %v1306
    %v2216 = vpack.c.bf16 %v1315, %v1312
    %v2217 = vpack.c.bf16 %v1321, %v1318
    %v2218 = vpack.c.bf16 %v1327, %v1324
    %v2219 = vpack.c.bf16 %v1333, %v1330
    %v2220 = vpack.c.bf16 %v1339, %v1336
    %v2221 = vpack.c.bf16 %v1345, %v1342
    %v2222 = vpack.c.bf16 %v1351, %v1348
    %v2223 = vpack.c.bf16 %v1357, %v1354
    %v2224 = vpack.c.bf16 %v1363, %v1360
    %v2225 = vpack.c.bf16 %v1369, %v1366
    %v2226 = vpack.c.bf16 %v1375, %v1372
    %v2227 = vpack.c.bf16 %v1381, %v1378
    %v2228 = vpack.c.bf16 %v1387, %v1384
    %v2229 = vpack.c.bf16 %v1393, %v1390
    %v2230 = vpack.c.bf16 %v1399, %v1396
    %v2231 = vpack.c.bf16 %v1405, %v1402
    %v2232 = vpack.c.bf16 %v1411, %v1408
    %v2233 = vpack.c.bf16 %v1417, %v1414
    %v2234 = vpack.c.bf16 %v1423, %v1420
    %v2235 = vpack.c.bf16 %v1429, %v1426
    %v2236 = vpack.c.bf16 %v1435, %v1432
    %v2237 = vpack.c.bf16 %v1441, %v1438
    %v2238 = vpack.c.bf16 %v1447, %v1444
    %v2239 = vpack.c.bf16 %v1453, %v1450
    %v2240 = vpack.c.bf16 %v1459, %v1456
    %v2241 = vpack.c.bf16 %v1465, %v1462
    %v2242 = vpack.c.bf16 %v1471, %v1468
    %v2243 = vpack.c.bf16 %v1477, %v1474
    %v2244 = vpack.c.bf16 %v1483, %v1480
    %v2245 = vpack.c.bf16 %v1489, %v1486
    %v2246 = vpack.c.bf16 %v1495, %v1492
    %v2247 = vpack.c.bf16 %v1501, %v1498
    %v2248 = vpack.c.bf16 %v1507, %v1504
    %v2249 = vpack.c.bf16 %v1513, %v1510
    %v2250 = vpack.c.bf16 %v1519, %v1516
    %v2251 = vpack.c.bf16 %v1525, %v1522
    %v2252 = vpack.c.bf16 %v1531, %v1528
    %v2253 = vpack.c.bf16 %v1537, %v1534
    %v2254 = vpack.c.bf16 %v1543, %v1540
    %v2255 = vpack.c.bf16 %v1549, %v1546
    %v2256 = vpack.c.bf16 %v1555, %v1552
    %v2257 = vpack.c.bf16 %v1561, %v1558
    %v2258 = vpack.c.bf16 %v1567, %v1564
    %v2259 = vpack.c.bf16 %v1573, %v1570
    %v2260 = vpack.c.bf16 %v1579, %v1576
    %v2261 = vpack.c.bf16 %v1585, %v1582
    %v2262 = vpack.c.bf16 %v1591, %v1588
    %v2263 = vpack.c.bf16 %v1597, %v1594
    %v2264 = vpack.c.bf16 %v1603, %v1600
    %v2265 = vpack.c.bf16 %v1609, %v1606
    %v2266 = vpack.c.bf16 %v1615, %v1612
    %v2267 = vpack.c.bf16 %v1621, %v1618
    %v2268 = vpack.c.bf16 %v1627, %v1624
    %v2269 = vpack.c.bf16 %v1633, %v1630
    %v2270 = vpack.c.bf16 %v1639, %v1636
    %v2271 = vpack.c.bf16 %v1645, %v1642
    %v2272 = vpack.c.bf16 %v1651, %v1648
    %v2273 = vpack.c.bf16 %v1657, %v1654
    %v2274 = vpack.c.bf16 %v1663, %v1660
    %v2275 = vpack.c.bf16 %v1669, %v1666
    %v2276 = vpack.c.bf16 %v1675, %v1672
    %v2277 = vpack.c.bf16 %v1681, %v1678
    %v2278 = vpack.c.bf16 %v1687, %v1684
    %v2279 = vpack.c.bf16 %v1693, %v1690
    %v2280 = vpack.c.bf16 %v1699, %v1696
    %v2281 = vpack.c.bf16 %v1705, %v1702
    %v2282 = vpack.c.bf16 %v1711, %v1708
    %v2283 = vpack.c.bf16 %v1717, %v1714
    %v2284 = vpack.c.bf16 %v1723, %v1720
    %v2285 = vpack.c.bf16 %v1729, %v1726
    %v2286 = vpack.c.bf16 %v1735, %v1732
    %v2287 = vpack.c.bf16 %v1741, %v1738
    %v2288 = vpack.c.bf16 %v1747, %v1744
    %v2289 = vpack.c.bf16 %v1753, %v1750
    %v2290 = vpack.c.bf16 %v1759, %v1756
    %v2291 = vpack.c.bf16 %v1765, %v1762
    %v2292 = vpack.c.bf16 %v1771, %v1768
    %v2293 = vpack.c.bf16 %v1777, %v1774
    %v2294 = vpack.c.bf16 %v1783, %v1780
    %v2295 = vpack.c.bf16 %v1789, %v1786
    %v2296 = vpack.c.bf16 %v1795, %v1792
    %v2297 = vpack.c.bf16 %v1801, %v1798
    %v2298 = vpack.c.bf16 %v1807, %v1804
    %v2299 = vpack.c.bf16 %v1813, %v1810
    %v2300 = vpack.c.bf16 %v1819, %v1816
    %v2301 = vpack.c.bf16 %v1825, %v1822
    %v2302 = vpack.c.bf16 %v1831, %v1828
    %v2303 = vpack.c.bf16 %v1837, %v1834
    %v2304 = vpack.c.bf16 %v1843, %v1840
    %v2305 = vpack.c.bf16 %v1849, %v1846
    %v2306 = vpack.c.bf16 %v1855, %v1852
    %v2307 = vpack.c.bf16 %v1861, %v1858
    %v2308 = vpack.c.bf16 %v1867, %v1864
    %v2309 = vpack.c.bf16 %v1873, %v1870
    %v2310 = vpack.c.bf16 %v1879, %v1876
    %v2311 = vpack.c.bf16 %v1885, %v1882
    %v2312 = vpack.c.bf16 %v1891, %v1888
    %v2313 = vpack.c.bf16 %v1897, %v1894
    %v2314 = vpack.c.bf16 %v1903, %v1900
    %v2315 = vpack.c.bf16 %v1909, %v1906
    %v2316 = vpack.c.bf16 %v1915, %v1912
    %v2317 = vpack.c.bf16 %v1921, %v1918
    %v2318 = vpack.c.bf16 %v1927, %v1924
    %v2319 = vpack.c.bf16 %v1933, %v1930
    %v2320 = vpack.c.bf16 %v1939, %v1936
    %v2321 = vpack.c.bf16 %v1945, %v1942
    %v2322 = vpack.c.bf16 %v1951, %v1948
    %v2323 = vpack.c.bf16 %v1957, %v1954
    %v2324 = vpack.c.bf16 %v1963, %v1960
    %v2325 = vpack.c.bf16 %v1969, %v1966
    %v2326 = vpack.c.bf16 %v1975, %v1972
    %v2327 = vpack.c.bf16 %v1981, %v1978
    %v2328 = vpack.c.bf16 %v1987, %v1984
    %v2329 = vpack.c.bf16 %v1993, %v1990
    %v2330 = vpack.c.bf16 %v1999, %v1996
    %v2331 = vpack.c.bf16 %v2005, %v2002
    %v2332 = vpack.c.bf16 %v2011, %v2008
    %v2333 = vpack.c.bf16 %v2017, %v2014
    %v2334 = vpack.c.bf16 %v2023, %v2020
    %v2335 = vpack.c.bf16 %v2029, %v2026
    %v2336 = vpack.c.bf16 %v2035, %v2032
    %v2337 = vpack.c.bf16 %v2041, %v2038
    %v2338 = vpack.c.bf16 %v2047, %v2044
    %v2339 = vpack.c.bf16 %v2053, %v2050
    %v2340 = vpack.c.bf16 %v2059, %v2056
    %v2341 = vpack.c.bf16 %v2065, %v2062
    %v2342 = vpack.c.bf16 %v2071, %v2068
    %v2343 = vpack.c.bf16 %v2077, %v2074
    %v2344 = vpack.c.bf16 %v2083, %v2080
    %v2345 = vpack.c.bf16 %v2089, %v2086
    %v2346 = vld [vmem:[#allocation2] sm:$0xff]
    %v2347 = vld [vmem:[#allocation2 + $0x8] sm:$0xff]
    %v2348 = vld [vmem:[#allocation2 + $0x10] sm:$0xff]
    %v2349 = vld [vmem:[#allocation2 + $0x18] sm:$0xff]
    %v2350 = vld [vmem:[#allocation2 + $0x20] sm:$0xff]
    %v2351 = vld [vmem:[#allocation2 + $0x28] sm:$0xff]
    %v2352 = vld [vmem:[#allocation2 + $0x30] sm:$0xff]
    %v2353 = vld [vmem:[#allocation2 + $0x38] sm:$0xff]
    %v2354 = vld [vmem:[#allocation2 + $0x40] sm:$0xff]
    %v2355 = vld [vmem:[#allocation2 + $0x48] sm:$0xff]
    %v2356 = vld [vmem:[#allocation2 + $0x50] sm:$0xff]
    %v2357 = vld [vmem:[#allocation2 + $0x58] sm:$0xff]
    %v2358 = vld [vmem:[#allocation2 + $0x60] sm:$0xff]
    %v2359 = vld [vmem:[#allocation2 + $0x68] sm:$0xff]
    %v2360 = vld [vmem:[#allocation2 + $0x70] sm:$0xff]
    %v2361 = vld [vmem:[#allocation2 + $0x78] sm:$0xff]
    %v2362 = vld [vmem:[#allocation2 + $0x80] sm:$0xff]
    %v2363 = vld [vmem:[#allocation2 + $0x88] sm:$0xff]
    %v2364 = vld [vmem:[#allocation2 + $0x90] sm:$0xff]
    %v2365 = vld [vmem:[#allocation2 + $0x98] sm:$0xff]
    %v2366 = vld [vmem:[#allocation2 + $0xa0] sm:$0xff]
    %v2367 = vld [vmem:[#allocation2 + $0xa8] sm:$0xff]
    %v2368 = vld [vmem:[#allocation2 + $0xb0] sm:$0xff]
    %v2369 = vld [vmem:[#allocation2 + $0xb8] sm:$0xff]
    %v2370 = vld [vmem:[#allocation2 + $0xc0] sm:$0xff]
    %v2371 = vld [vmem:[#allocation2 + $0xc8] sm:$0xff]
    %v2372 = vld [vmem:[#allocation2 + $0xd0] sm:$0xff]
    %v2373 = vld [vmem:[#allocation2 + $0xd8] sm:$0xff]
    %v2374 = vld [vmem:[#allocation2 + $0xe0] sm:$0xff]
    %v2375 = vld [vmem:[#allocation2 + $0xe8] sm:$0xff]
    %v2376 = vld [vmem:[#allocation2 + $0xf0] sm:$0xff]
    %v2377 = vld [vmem:[#allocation2 + $0xf8] sm:$0xff]
    %v2378 = vld [vmem:[#allocation2 + $0x100] sm:$0xff]
    %v2379 = vld [vmem:[#allocation2 + $0x108] sm:$0xff]
    %v2380 = vld [vmem:[#allocation2 + $0x110] sm:$0xff]
    %v2381 = vld [vmem:[#allocation2 + $0x118] sm:$0xff]
    %v2382 = vld [vmem:[#allocation2 + $0x120] sm:$0xff]
    %v2383 = vld [vmem:[#allocation2 + $0x128] sm:$0xff]
    %v2384 = vld [vmem:[#allocation2 + $0x130] sm:$0xff]
    %v2385 = vld [vmem:[#allocation2 + $0x138] sm:$0xff]
    %v2386 = vld [vmem:[#allocation2 + $0x140] sm:$0xff]
    %v2387 = vld [vmem:[#allocation2 + $0x148] sm:$0xff]
    %v2388 = vld [vmem:[#allocation2 + $0x150] sm:$0xff]
    %v2389 = vld [vmem:[#allocation2 + $0x158] sm:$0xff]
    %v2390 = vld [vmem:[#allocation2 + $0x160] sm:$0xff]
    %v2391 = vld [vmem:[#allocation2 + $0x168] sm:$0xff]
    %v2392 = vld [vmem:[#allocation2 + $0x170] sm:$0xff]
    %v2393 = vld [vmem:[#allocation2 + $0x178] sm:$0xff]
    %v2394 = vld [vmem:[#allocation2 + $0x180] sm:$0xff]
    %v2395 = vld [vmem:[#allocation2 + $0x188] sm:$0xff]
    %v2396 = vld [vmem:[#allocation2 + $0x190] sm:$0xff]
    %v2397 = vld [vmem:[#allocation2 + $0x198] sm:$0xff]
    %v2398 = vld [vmem:[#allocation2 + $0x1a0] sm:$0xff]
    %v2399 = vld [vmem:[#allocation2 + $0x1a8] sm:$0xff]
    %v2400 = vld [vmem:[#allocation2 + $0x1b0] sm:$0xff]
    %v2401 = vld [vmem:[#allocation2 + $0x1b8] sm:$0xff]
    %v2402 = vld [vmem:[#allocation2 + $0x1c0] sm:$0xff]
    %v2403 = vld [vmem:[#allocation2 + $0x1c8] sm:$0xff]
    %v2404 = vld [vmem:[#allocation2 + $0x1d0] sm:$0xff]
    %v2405 = vld [vmem:[#allocation2 + $0x1d8] sm:$0xff]
    %v2406 = vld [vmem:[#allocation2 + $0x1e0] sm:$0xff]
    %v2407 = vld [vmem:[#allocation2 + $0x1e8] sm:$0xff]
    %v2408 = vld [vmem:[#allocation2 + $0x1f0] sm:$0xff]
    %v2409 = vld [vmem:[#allocation2 + $0x1f8] sm:$0xff]
    %v2410 = vld [vmem:[#allocation2 + $0x200] sm:$0xff]
    %v2411 = vld [vmem:[#allocation2 + $0x208] sm:$0xff]
    %v2412 = vld [vmem:[#allocation2 + $0x210] sm:$0xff]
    %v2413 = vld [vmem:[#allocation2 + $0x218] sm:$0xff]
    %v2414 = vld [vmem:[#allocation2 + $0x220] sm:$0xff]
    %v2415 = vld [vmem:[#allocation2 + $0x228] sm:$0xff]
    %v2416 = vld [vmem:[#allocation2 + $0x230] sm:$0xff]
    %v2417 = vld [vmem:[#allocation2 + $0x238] sm:$0xff]
    %v2418 = vld [vmem:[#allocation2 + $0x240] sm:$0xff]
    %v2419 = vld [vmem:[#allocation2 + $0x248] sm:$0xff]
    %v2420 = vld [vmem:[#allocation2 + $0x250] sm:$0xff]
    %v2421 = vld [vmem:[#allocation2 + $0x258] sm:$0xff]
    %v2422 = vld [vmem:[#allocation2 + $0x260] sm:$0xff]
    %v2423 = vld [vmem:[#allocation2 + $0x268] sm:$0xff]
    %v2424 = vld [vmem:[#allocation2 + $0x270] sm:$0xff]
    %v2425 = vld [vmem:[#allocation2 + $0x278] sm:$0xff]
    %v2426 = vld [vmem:[#allocation2 + $0x280] sm:$0xff]
    %v2427 = vld [vmem:[#allocation2 + $0x288] sm:$0xff]
    %v2428 = vld [vmem:[#allocation2 + $0x290] sm:$0xff]
    %v2429 = vld [vmem:[#allocation2 + $0x298] sm:$0xff]
    %v2430 = vld [vmem:[#allocation2 + $0x2a0] sm:$0xff]
    %v2431 = vld [vmem:[#allocation2 + $0x2a8] sm:$0xff]
    %v2432 = vld [vmem:[#allocation2 + $0x2b0] sm:$0xff]
    %v2433 = vld [vmem:[#allocation2 + $0x2b8] sm:$0xff]
    %v2434 = vld [vmem:[#allocation2 + $0x2c0] sm:$0xff]
    %v2435 = vld [vmem:[#allocation2 + $0x2c8] sm:$0xff]
    %v2436 = vld [vmem:[#allocation2 + $0x2d0] sm:$0xff]
    %v2437 = vld [vmem:[#allocation2 + $0x2d8] sm:$0xff]
    %v2438 = vld [vmem:[#allocation2 + $0x2e0] sm:$0xff]
    %v2439 = vld [vmem:[#allocation2 + $0x2e8] sm:$0xff]
    %v2440 = vld [vmem:[#allocation2 + $0x2f0] sm:$0xff]
    %v2441 = vld [vmem:[#allocation2 + $0x2f8] sm:$0xff]
    %v2442 = vld [vmem:[#allocation2 + $0x300] sm:$0xff]
    %v2443 = vld [vmem:[#allocation2 + $0x308] sm:$0xff]
    %v2444 = vld [vmem:[#allocation2 + $0x310] sm:$0xff]
    %v2445 = vld [vmem:[#allocation2 + $0x318] sm:$0xff]
    %v2446 = vld [vmem:[#allocation2 + $0x320] sm:$0xff]
    %v2447 = vld [vmem:[#allocation2 + $0x328] sm:$0xff]
    %v2448 = vld [vmem:[#allocation2 + $0x330] sm:$0xff]
    %v2449 = vld [vmem:[#allocation2 + $0x338] sm:$0xff]
    %v2450 = vld [vmem:[#allocation2 + $0x340] sm:$0xff]
    %v2451 = vld [vmem:[#allocation2 + $0x348] sm:$0xff]
    %v2452 = vld [vmem:[#allocation2 + $0x350] sm:$0xff]
    %v2453 = vld [vmem:[#allocation2 + $0x358] sm:$0xff]
    %v2454 = vld [vmem:[#allocation2 + $0x360] sm:$0xff]
    %v2455 = vld [vmem:[#allocation2 + $0x368] sm:$0xff]
    %v2456 = vld [vmem:[#allocation2 + $0x370] sm:$0xff]
    %v2457 = vld [vmem:[#allocation2 + $0x378] sm:$0xff]
    %v2458 = vld [vmem:[#allocation2 + $0x380] sm:$0xff]
    %v2459 = vld [vmem:[#allocation2 + $0x388] sm:$0xff]
    %v2460 = vld [vmem:[#allocation2 + $0x390] sm:$0xff]
    %v2461 = vld [vmem:[#allocation2 + $0x398] sm:$0xff]
    %v2462 = vld [vmem:[#allocation2 + $0x3a0] sm:$0xff]
    %v2463 = vld [vmem:[#allocation2 + $0x3a8] sm:$0xff]
    %v2464 = vld [vmem:[#allocation2 + $0x3b0] sm:$0xff]
    %v2465 = vld [vmem:[#allocation2 + $0x3b8] sm:$0xff]
    %v2466 = vld [vmem:[#allocation2 + $0x3c0] sm:$0xff]
    %v2467 = vld [vmem:[#allocation2 + $0x3c8] sm:$0xff]
    %v2468 = vld [vmem:[#allocation2 + $0x3d0] sm:$0xff]
    %v2469 = vld [vmem:[#allocation2 + $0x3d8] sm:$0xff]
    %v2470 = vld [vmem:[#allocation2 + $0x3e0] sm:$0xff]
    %v2471 = vld [vmem:[#allocation2 + $0x3e8] sm:$0xff]
    %v2472 = vld [vmem:[#allocation2 + $0x3f0] sm:$0xff]
    %v2473 = vld [vmem:[#allocation2 + $0x3f8] sm:$0xff]
    %v2474 = vld [vmem:[#allocation2 + $0x400] sm:$0xff]
    %v2475 = vld [vmem:[#allocation2 + $0x408] sm:$0xff]
    %v2476 = vld [vmem:[#allocation2 + $0x410] sm:$0xff]
    %v2477 = vld [vmem:[#allocation2 + $0x418] sm:$0xff]
    %v2478 = vld [vmem:[#allocation2 + $0x420] sm:$0xff]
    %v2479 = vld [vmem:[#allocation2 + $0x428] sm:$0xff]
    %v2480 = vld [vmem:[#allocation2 + $0x430] sm:$0xff]
    %v2481 = vld [vmem:[#allocation2 + $0x438] sm:$0xff]
    %v2482 = vld [vmem:[#allocation2 + $0x440] sm:$0xff]
    %v2483 = vld [vmem:[#allocation2 + $0x448] sm:$0xff]
    %v2484 = vld [vmem:[#allocation2 + $0x450] sm:$0xff]
    %v2485 = vld [vmem:[#allocation2 + $0x458] sm:$0xff]
    %v2486 = vld [vmem:[#allocation2 + $0x460] sm:$0xff]
    %v2487 = vld [vmem:[#allocation2 + $0x468] sm:$0xff]
    %v2488 = vld [vmem:[#allocation2 + $0x470] sm:$0xff]
    %v2489 = vld [vmem:[#allocation2 + $0x478] sm:$0xff]
    %v2490 = vld [vmem:[#allocation2 + $0x480] sm:$0xff]
    %v2491 = vld [vmem:[#allocation2 + $0x488] sm:$0xff]
    %v2492 = vld [vmem:[#allocation2 + $0x490] sm:$0xff]
    %v2493 = vld [vmem:[#allocation2 + $0x498] sm:$0xff]
    %v2494 = vld [vmem:[#allocation2 + $0x4a0] sm:$0xff]
    %v2495 = vld [vmem:[#allocation2 + $0x4a8] sm:$0xff]
    %v2496 = vld [vmem:[#allocation2 + $0x4b0] sm:$0xff]
    %v2497 = vld [vmem:[#allocation2 + $0x4b8] sm:$0xff]
    %v2498 = vld [vmem:[#allocation2 + $0x4c0] sm:$0xff]
    %v2499 = vld [vmem:[#allocation2 + $0x4c8] sm:$0xff]
    %v2500 = vld [vmem:[#allocation2 + $0x4d0] sm:$0xff]
    %v2501 = vld [vmem:[#allocation2 + $0x4d8] sm:$0xff]
    %v2502 = vld [vmem:[#allocation2 + $0x4e0] sm:$0xff]
    %v2503 = vld [vmem:[#allocation2 + $0x4e8] sm:$0xff]
    %v2504 = vld [vmem:[#allocation2 + $0x4f0] sm:$0xff]
    %v2505 = vld [vmem:[#allocation2 + $0x4f8] sm:$0xff]
    %v2506 = vld [vmem:[#allocation2 + $0x500] sm:$0xff]
    %v2507 = vld [vmem:[#allocation2 + $0x508] sm:$0xff]
    %v2508 = vld [vmem:[#allocation2 + $0x510] sm:$0xff]
    %v2509 = vld [vmem:[#allocation2 + $0x518] sm:$0xff]
    %v2510 = vld [vmem:[#allocation2 + $0x520] sm:$0xff]
    %v2511 = vld [vmem:[#allocation2 + $0x528] sm:$0xff]
    %v2512 = vld [vmem:[#allocation2 + $0x530] sm:$0xff]
    %v2513 = vld [vmem:[#allocation2 + $0x538] sm:$0xff]
    %v2514 = vld [vmem:[#allocation2 + $0x540] sm:$0xff]
    %v2515 = vld [vmem:[#allocation2 + $0x548] sm:$0xff]
    %v2516 = vld [vmem:[#allocation2 + $0x550] sm:$0xff]
    %v2517 = vld [vmem:[#allocation2 + $0x558] sm:$0xff]
    %v2518 = vld [vmem:[#allocation2 + $0x560] sm:$0xff]
    %v2519 = vld [vmem:[#allocation2 + $0x568] sm:$0xff]
    %v2520 = vld [vmem:[#allocation2 + $0x570] sm:$0xff]
    %v2521 = vld [vmem:[#allocation2 + $0x578] sm:$0xff]
    %v2522 = vld [vmem:[#allocation2 + $0x580] sm:$0xff]
    %v2523 = vld [vmem:[#allocation2 + $0x588] sm:$0xff]
    %v2524 = vld [vmem:[#allocation2 + $0x590] sm:$0xff]
    %v2525 = vld [vmem:[#allocation2 + $0x598] sm:$0xff]
    %v2526 = vld [vmem:[#allocation2 + $0x5a0] sm:$0xff]
    %v2527 = vld [vmem:[#allocation2 + $0x5a8] sm:$0xff]
    %v2528 = vld [vmem:[#allocation2 + $0x5b0] sm:$0xff]
    %v2529 = vld [vmem:[#allocation2 + $0x5b8] sm:$0xff]
    %v2530 = vld [vmem:[#allocation2 + $0x5c0] sm:$0xff]
    %v2531 = vld [vmem:[#allocation2 + $0x5c8] sm:$0xff]
    %v2532 = vld [vmem:[#allocation2 + $0x5d0] sm:$0xff]
    %v2533 = vld [vmem:[#allocation2 + $0x5d8] sm:$0xff]
    %v2534 = vld [vmem:[#allocation2 + $0x5e0] sm:$0xff]
    %v2535 = vld [vmem:[#allocation2 + $0x5e8] sm:$0xff]
    %v2536 = vld [vmem:[#allocation2 + $0x5f0] sm:$0xff]
    %v2537 = vld [vmem:[#allocation2 + $0x5f8] sm:$0xff]
    %v2538 = vld [vmem:[#allocation2 + $0x600] sm:$0xff]
    %v2539 = vld [vmem:[#allocation2 + $0x608] sm:$0xff]
    %v2540 = vld [vmem:[#allocation2 + $0x610] sm:$0xff]
    %v2541 = vld [vmem:[#allocation2 + $0x618] sm:$0xff]
    %v2542 = vld [vmem:[#allocation2 + $0x620] sm:$0xff]
    %v2543 = vld [vmem:[#allocation2 + $0x628] sm:$0xff]
    %v2544 = vld [vmem:[#allocation2 + $0x630] sm:$0xff]
    %v2545 = vld [vmem:[#allocation2 + $0x638] sm:$0xff]
    %v2546 = vld [vmem:[#allocation2 + $0x640] sm:$0xff]
    %v2547 = vld [vmem:[#allocation2 + $0x648] sm:$0xff]
    %v2548 = vld [vmem:[#allocation2 + $0x650] sm:$0xff]
    %v2549 = vld [vmem:[#allocation2 + $0x658] sm:$0xff]
    %v2550 = vld [vmem:[#allocation2 + $0x660] sm:$0xff]
    %v2551 = vld [vmem:[#allocation2 + $0x668] sm:$0xff]
    %v2552 = vld [vmem:[#allocation2 + $0x670] sm:$0xff]
    %v2553 = vld [vmem:[#allocation2 + $0x678] sm:$0xff]
    %v2554 = vld [vmem:[#allocation2 + $0x680] sm:$0xff]
    %v2555 = vld [vmem:[#allocation2 + $0x688] sm:$0xff]
    %v2556 = vld [vmem:[#allocation2 + $0x690] sm:$0xff]
    %v2557 = vld [vmem:[#allocation2 + $0x698] sm:$0xff]
    %v2558 = vld [vmem:[#allocation2 + $0x6a0] sm:$0xff]
    %v2559 = vld [vmem:[#allocation2 + $0x6a8] sm:$0xff]
    %v2560 = vld [vmem:[#allocation2 + $0x6b0] sm:$0xff]
    %v2561 = vld [vmem:[#allocation2 + $0x6b8] sm:$0xff]
    %v2562 = vld [vmem:[#allocation2 + $0x6c0] sm:$0xff]
    %v2563 = vld [vmem:[#allocation2 + $0x6c8] sm:$0xff]
    %v2564 = vld [vmem:[#allocation2 + $0x6d0] sm:$0xff]
    %v2565 = vld [vmem:[#allocation2 + $0x6d8] sm:$0xff]
    %v2566 = vld [vmem:[#allocation2 + $0x6e0] sm:$0xff]
    %v2567 = vld [vmem:[#allocation2 + $0x6e8] sm:$0xff]
    %v2568 = vld [vmem:[#allocation2 + $0x6f0] sm:$0xff]
    %v2569 = vld [vmem:[#allocation2 + $0x6f8] sm:$0xff]
    %v2570 = vld [vmem:[#allocation2 + $0x700] sm:$0xff]
    %v2571 = vld [vmem:[#allocation2 + $0x708] sm:$0xff]
    %v2572 = vld [vmem:[#allocation2 + $0x710] sm:$0xff]
    %v2573 = vld [vmem:[#allocation2 + $0x718] sm:$0xff]
    %v2574 = vld [vmem:[#allocation2 + $0x720] sm:$0xff]
    %v2575 = vld [vmem:[#allocation2 + $0x728] sm:$0xff]
    %v2576 = vld [vmem:[#allocation2 + $0x730] sm:$0xff]
    %v2577 = vld [vmem:[#allocation2 + $0x738] sm:$0xff]
    %v2578 = vld [vmem:[#allocation2 + $0x740] sm:$0xff]
    %v2579 = vld [vmem:[#allocation2 + $0x748] sm:$0xff]
    %v2580 = vld [vmem:[#allocation2 + $0x750] sm:$0xff]
    %v2581 = vld [vmem:[#allocation2 + $0x758] sm:$0xff]
    %v2582 = vld [vmem:[#allocation2 + $0x760] sm:$0xff]
    %v2583 = vld [vmem:[#allocation2 + $0x768] sm:$0xff]
    %v2584 = vld [vmem:[#allocation2 + $0x770] sm:$0xff]
    %v2585 = vld [vmem:[#allocation2 + $0x778] sm:$0xff]
    %v2586 = vld [vmem:[#allocation2 + $0x780] sm:$0xff]
    %v2587 = vld [vmem:[#allocation2 + $0x788] sm:$0xff]
    %v2588 = vld [vmem:[#allocation2 + $0x790] sm:$0xff]
    %v2589 = vld [vmem:[#allocation2 + $0x798] sm:$0xff]
    %v2590 = vld [vmem:[#allocation2 + $0x7a0] sm:$0xff]
    %v2591 = vld [vmem:[#allocation2 + $0x7a8] sm:$0xff]
    %v2592 = vld [vmem:[#allocation2 + $0x7b0] sm:$0xff]
    %v2593 = vld [vmem:[#allocation2 + $0x7b8] sm:$0xff]
    %v2594 = vld [vmem:[#allocation2 + $0x7c0] sm:$0xff]
    %v2595 = vld [vmem:[#allocation2 + $0x7c8] sm:$0xff]
    %v2596 = vld [vmem:[#allocation2 + $0x7d0] sm:$0xff]
    %v2597 = vld [vmem:[#allocation2 + $0x7d8] sm:$0xff]
    %v2598 = vld [vmem:[#allocation2 + $0x7e0] sm:$0xff]
    %v2599 = vld [vmem:[#allocation2 + $0x7e8] sm:$0xff]
    %v2600 = vld [vmem:[#allocation2 + $0x7f0] sm:$0xff]
    %v2601 = vld [vmem:[#allocation2 + $0x7f8] sm:$0xff]
    %v2602 = vld [vmem:[#allocation2 + $0x800] sm:$0xff]
    %v2603 = vld [vmem:[#allocation2 + $0x808] sm:$0xff]
    %v2604 = vld [vmem:[#allocation2 + $0x810] sm:$0xff]
    %v2605 = vld [vmem:[#allocation2 + $0x818] sm:$0xff]
    %v2606 = vld [vmem:[#allocation2 + $0x820] sm:$0xff]
    %v2607 = vld [vmem:[#allocation2 + $0x828] sm:$0xff]
    %v2608 = vld [vmem:[#allocation2 + $0x830] sm:$0xff]
    %v2609 = vld [vmem:[#allocation2 + $0x838] sm:$0xff]
    %v2610 = vld [vmem:[#allocation2 + $0x840] sm:$0xff]
    %v2611 = vld [vmem:[#allocation2 + $0x848] sm:$0xff]
    %v2612 = vld [vmem:[#allocation2 + $0x850] sm:$0xff]
    %v2613 = vld [vmem:[#allocation2 + $0x858] sm:$0xff]
    %v2614 = vld [vmem:[#allocation2 + $0x860] sm:$0xff]
    %v2615 = vld [vmem:[#allocation2 + $0x868] sm:$0xff]
    %v2616 = vld [vmem:[#allocation2 + $0x870] sm:$0xff]
    %v2617 = vld [vmem:[#allocation2 + $0x878] sm:$0xff]
    %v2618 = vld [vmem:[#allocation2 + $0x880] sm:$0xff]
    %v2619 = vld [vmem:[#allocation2 + $0x888] sm:$0xff]
    %v2620 = vld [vmem:[#allocation2 + $0x890] sm:$0xff]
    %v2621 = vld [vmem:[#allocation2 + $0x898] sm:$0xff]
    %v2622 = vld [vmem:[#allocation2 + $0x8a0] sm:$0xff]
    %v2623 = vld [vmem:[#allocation2 + $0x8a8] sm:$0xff]
    %v2624 = vld [vmem:[#allocation2 + $0x8b0] sm:$0xff]
    %v2625 = vld [vmem:[#allocation2 + $0x8b8] sm:$0xff]
    %v2626 = vld [vmem:[#allocation2 + $0x8c0] sm:$0xff]
    %v2627 = vld [vmem:[#allocation2 + $0x8c8] sm:$0xff]
    %v2628 = vld [vmem:[#allocation2 + $0x8d0] sm:$0xff]
    %v2629 = vld [vmem:[#allocation2 + $0x8d8] sm:$0xff]
    %v2630 = vld [vmem:[#allocation2 + $0x8e0] sm:$0xff]
    %v2631 = vld [vmem:[#allocation2 + $0x8e8] sm:$0xff]
    %v2632 = vld [vmem:[#allocation2 + $0x8f0] sm:$0xff]
    %v2633 = vld [vmem:[#allocation2 + $0x8f8] sm:$0xff]
    %v2634 = vld [vmem:[#allocation2 + $0x900] sm:$0xff]
    %v2635 = vld [vmem:[#allocation2 + $0x908] sm:$0xff]
    %v2636 = vld [vmem:[#allocation2 + $0x910] sm:$0xff]
    %v2637 = vld [vmem:[#allocation2 + $0x918] sm:$0xff]
    %v2638 = vld [vmem:[#allocation2 + $0x920] sm:$0xff]
    %v2639 = vld [vmem:[#allocation2 + $0x928] sm:$0xff]
    %v2640 = vld [vmem:[#allocation2 + $0x930] sm:$0xff]
    %v2641 = vld [vmem:[#allocation2 + $0x938] sm:$0xff]
    %v2642 = vld [vmem:[#allocation2 + $0x940] sm:$0xff]
    %v2643 = vld [vmem:[#allocation2 + $0x948] sm:$0xff]
    %v2644 = vld [vmem:[#allocation2 + $0x950] sm:$0xff]
    %v2645 = vld [vmem:[#allocation2 + $0x958] sm:$0xff]
    %v2646 = vld [vmem:[#allocation2 + $0x960] sm:$0xff]
    %v2647 = vld [vmem:[#allocation2 + $0x968] sm:$0xff]
    %v2648 = vld [vmem:[#allocation2 + $0x970] sm:$0xff]
    %v2649 = vld [vmem:[#allocation2 + $0x978] sm:$0xff]
    %v2650 = vld [vmem:[#allocation2 + $0x980] sm:$0xff]
    %v2651 = vld [vmem:[#allocation2 + $0x988] sm:$0xff]
    %v2652 = vld [vmem:[#allocation2 + $0x990] sm:$0xff]
    %v2653 = vld [vmem:[#allocation2 + $0x998] sm:$0xff]
    %v2654 = vld [vmem:[#allocation2 + $0x9a0] sm:$0xff]
    %v2655 = vld [vmem:[#allocation2 + $0x9a8] sm:$0xff]
    %v2656 = vld [vmem:[#allocation2 + $0x9b0] sm:$0xff]
    %v2657 = vld [vmem:[#allocation2 + $0x9b8] sm:$0xff]
    %v2658 = vld [vmem:[#allocation2 + $0x9c0] sm:$0xff]
    %v2659 = vld [vmem:[#allocation2 + $0x9c8] sm:$0xff]
    %v2660 = vld [vmem:[#allocation2 + $0x9d0] sm:$0xff]
    %v2661 = vld [vmem:[#allocation2 + $0x9d8] sm:$0xff]
    %v2662 = vld [vmem:[#allocation2 + $0x9e0] sm:$0xff]
    %v2663 = vld [vmem:[#allocation2 + $0x9e8] sm:$0xff]
    %v2664 = vld [vmem:[#allocation2 + $0x9f0] sm:$0xff]
    %v2665 = vld [vmem:[#allocation2 + $0x9f8] sm:$0xff]
    %v2666 = vld [vmem:[#allocation2 + $0xa00] sm:$0xff]
    %v2667 = vld [vmem:[#allocation2 + $0xa08] sm:$0xff]
    %v2668 = vld [vmem:[#allocation2 + $0xa10] sm:$0xff]
    %v2669 = vld [vmem:[#allocation2 + $0xa18] sm:$0xff]
    %v2670 = vld [vmem:[#allocation2 + $0xa20] sm:$0xff]
    %v2671 = vld [vmem:[#allocation2 + $0xa28] sm:$0xff]
    %v2672 = vld [vmem:[#allocation2 + $0xa30] sm:$0xff]
    %v2673 = vld [vmem:[#allocation2 + $0xa38] sm:$0xff]
    %v2674 = vld [vmem:[#allocation2 + $0xa40] sm:$0xff]
    %v2675 = vld [vmem:[#allocation2 + $0xa48] sm:$0xff]
    %v2676 = vld [vmem:[#allocation2 + $0xa50] sm:$0xff]
    %v2677 = vld [vmem:[#allocation2 + $0xa58] sm:$0xff]
    %v2678 = vld [vmem:[#allocation2 + $0xa60] sm:$0xff]
    %v2679 = vld [vmem:[#allocation2 + $0xa68] sm:$0xff]
    %v2680 = vld [vmem:[#allocation2 + $0xa70] sm:$0xff]
    %v2681 = vld [vmem:[#allocation2 + $0xa78] sm:$0xff]
    %v2682 = vld [vmem:[#allocation2 + $0xa80] sm:$0xff]
    %v2683 = vld [vmem:[#allocation2 + $0xa88] sm:$0xff]
    %v2684 = vld [vmem:[#allocation2 + $0xa90] sm:$0xff]
    %v2685 = vld [vmem:[#allocation2 + $0xa98] sm:$0xff]
    %v2686 = vld [vmem:[#allocation2 + $0xaa0] sm:$0xff]
    %v2687 = vld [vmem:[#allocation2 + $0xaa8] sm:$0xff]
    %v2688 = vld [vmem:[#allocation2 + $0xab0] sm:$0xff]
    %v2689 = vld [vmem:[#allocation2 + $0xab8] sm:$0xff]
    %v2690 = vld [vmem:[#allocation2 + $0xac0] sm:$0xff]
    %v2691 = vld [vmem:[#allocation2 + $0xac8] sm:$0xff]
    %v2692 = vld [vmem:[#allocation2 + $0xad0] sm:$0xff]
    %v2693 = vld [vmem:[#allocation2 + $0xad8] sm:$0xff]
    %v2694 = vld [vmem:[#allocation2 + $0xae0] sm:$0xff]
    %v2695 = vld [vmem:[#allocation2 + $0xae8] sm:$0xff]
    %v2696 = vld [vmem:[#allocation2 + $0xaf0] sm:$0xff]
    %v2697 = vld [vmem:[#allocation2 + $0xaf8] sm:$0xff]
    %v2698 = vld [vmem:[#allocation2 + $0xb00] sm:$0xff]
    %v2699 = vld [vmem:[#allocation2 + $0xb08] sm:$0xff]
    %v2700 = vld [vmem:[#allocation2 + $0xb10] sm:$0xff]
    %v2701 = vld [vmem:[#allocation2 + $0xb18] sm:$0xff]
    %v2702 = vld [vmem:[#allocation2 + $0xb20] sm:$0xff]
    %v2703 = vld [vmem:[#allocation2 + $0xb28] sm:$0xff]
    %v2704 = vld [vmem:[#allocation2 + $0xb30] sm:$0xff]
    %v2705 = vld [vmem:[#allocation2 + $0xb38] sm:$0xff]
    %v2706 = vld [vmem:[#allocation2 + $0xb40] sm:$0xff]
    %v2707 = vld [vmem:[#allocation2 + $0xb48] sm:$0xff]
    %v2708 = vld [vmem:[#allocation2 + $0xb50] sm:$0xff]
    %v2709 = vld [vmem:[#allocation2 + $0xb58] sm:$0xff]
    %v2710 = vld [vmem:[#allocation2 + $0xb60] sm:$0xff]
    %v2711 = vld [vmem:[#allocation2 + $0xb68] sm:$0xff]
    %v2712 = vld [vmem:[#allocation2 + $0xb70] sm:$0xff]
    %v2713 = vld [vmem:[#allocation2 + $0xb78] sm:$0xff]
    %v2714 = vld [vmem:[#allocation2 + $0xb80] sm:$0xff]
    %v2715 = vld [vmem:[#allocation2 + $0xb88] sm:$0xff]
    %v2716 = vld [vmem:[#allocation2 + $0xb90] sm:$0xff]
    %v2717 = vld [vmem:[#allocation2 + $0xb98] sm:$0xff]
    %v2718 = vld [vmem:[#allocation2 + $0xba0] sm:$0xff]
    %v2719 = vld [vmem:[#allocation2 + $0xba8] sm:$0xff]
    %v2720 = vld [vmem:[#allocation2 + $0xbb0] sm:$0xff]
    %v2721 = vld [vmem:[#allocation2 + $0xbb8] sm:$0xff]
    %v2722 = vld [vmem:[#allocation2 + $0xbc0] sm:$0xff]
    %v2723 = vld [vmem:[#allocation2 + $0xbc8] sm:$0xff]
    %v2724 = vld [vmem:[#allocation2 + $0xbd0] sm:$0xff]
    %v2725 = vld [vmem:[#allocation2 + $0xbd8] sm:$0xff]
    %v2726 = vld [vmem:[#allocation2 + $0xbe0] sm:$0xff]
    %v2727 = vld [vmem:[#allocation2 + $0xbe8] sm:$0xff]
    %v2728 = vld [vmem:[#allocation2 + $0xbf0] sm:$0xff]
    %v2729 = vld [vmem:[#allocation2 + $0xbf8] sm:$0xff]
    %v2730 = vld [vmem:[#allocation2 + $0xc00] sm:$0xff]
    %v2731 = vld [vmem:[#allocation2 + $0xc08] sm:$0xff]
    %v2732 = vld [vmem:[#allocation2 + $0xc10] sm:$0xff]
    %v2733 = vld [vmem:[#allocation2 + $0xc18] sm:$0xff]
    %v2734 = vld [vmem:[#allocation2 + $0xc20] sm:$0xff]
    %v2735 = vld [vmem:[#allocation2 + $0xc28] sm:$0xff]
    %v2736 = vld [vmem:[#allocation2 + $0xc30] sm:$0xff]
    %v2737 = vld [vmem:[#allocation2 + $0xc38] sm:$0xff]
    %v2738 = vld [vmem:[#allocation2 + $0xc40] sm:$0xff]
    %v2739 = vld [vmem:[#allocation2 + $0xc48] sm:$0xff]
    %v2740 = vld [vmem:[#allocation2 + $0xc50] sm:$0xff]
    %v2741 = vld [vmem:[#allocation2 + $0xc58] sm:$0xff]
    %v2742 = vld [vmem:[#allocation2 + $0xc60] sm:$0xff]
    %v2743 = vld [vmem:[#allocation2 + $0xc68] sm:$0xff]
    %v2744 = vld [vmem:[#allocation2 + $0xc70] sm:$0xff]
    %v2745 = vld [vmem:[#allocation2 + $0xc78] sm:$0xff]
    %v2746 = vld [vmem:[#allocation2 + $0xc80] sm:$0xff]
    %v2747 = vld [vmem:[#allocation2 + $0xc88] sm:$0xff]
    %v2748 = vld [vmem:[#allocation2 + $0xc90] sm:$0xff]
    %v2749 = vld [vmem:[#allocation2 + $0xc98] sm:$0xff]
    %v2750 = vld [vmem:[#allocation2 + $0xca0] sm:$0xff]
    %v2751 = vld [vmem:[#allocation2 + $0xca8] sm:$0xff]
    %v2752 = vld [vmem:[#allocation2 + $0xcb0] sm:$0xff]
    %v2753 = vld [vmem:[#allocation2 + $0xcb8] sm:$0xff]
    %v2754 = vld [vmem:[#allocation2 + $0xcc0] sm:$0xff]
    %v2755 = vld [vmem:[#allocation2 + $0xcc8] sm:$0xff]
    %v2756 = vld [vmem:[#allocation2 + $0xcd0] sm:$0xff]
    %v2757 = vld [vmem:[#allocation2 + $0xcd8] sm:$0xff]
    %v2758 = vld [vmem:[#allocation2 + $0xce0] sm:$0xff]
    %v2759 = vld [vmem:[#allocation2 + $0xce8] sm:$0xff]
    %v2760 = vld [vmem:[#allocation2 + $0xcf0] sm:$0xff]
    %v2761 = vld [vmem:[#allocation2 + $0xcf8] sm:$0xff]
    %v2762 = vld [vmem:[#allocation2 + $0xd00] sm:$0xff]
    %v2763 = vld [vmem:[#allocation2 + $0xd08] sm:$0xff]
    %v2764 = vld [vmem:[#allocation2 + $0xd10] sm:$0xff]
    %v2765 = vld [vmem:[#allocation2 + $0xd18] sm:$0xff]
    %v2766 = vld [vmem:[#allocation2 + $0xd20] sm:$0xff]
    %v2767 = vld [vmem:[#allocation2 + $0xd28] sm:$0xff]
    %v2768 = vld [vmem:[#allocation2 + $0xd30] sm:$0xff]
    %v2769 = vld [vmem:[#allocation2 + $0xd38] sm:$0xff]
    %v2770 = vld [vmem:[#allocation2 + $0xd40] sm:$0xff]
    %v2771 = vld [vmem:[#allocation2 + $0xd48] sm:$0xff]
    %v2772 = vld [vmem:[#allocation2 + $0xd50] sm:$0xff]
    %v2773 = vld [vmem:[#allocation2 + $0xd58] sm:$0xff]
    %v2774 = vld [vmem:[#allocation2 + $0xd60] sm:$0xff]
    %v2775 = vld [vmem:[#allocation2 + $0xd68] sm:$0xff]
    %v2776 = vld [vmem:[#allocation2 + $0xd70] sm:$0xff]
    %v2777 = vld [vmem:[#allocation2 + $0xd78] sm:$0xff]
    %v2778 = vld [vmem:[#allocation2 + $0xd80] sm:$0xff]
    %v2779 = vld [vmem:[#allocation2 + $0xd88] sm:$0xff]
    %v2780 = vld [vmem:[#allocation2 + $0xd90] sm:$0xff]
    %v2781 = vld [vmem:[#allocation2 + $0xd98] sm:$0xff]
    %v2782 = vld [vmem:[#allocation2 + $0xda0] sm:$0xff]
    %v2783 = vld [vmem:[#allocation2 + $0xda8] sm:$0xff]
    %v2784 = vld [vmem:[#allocation2 + $0xdb0] sm:$0xff]
    %v2785 = vld [vmem:[#allocation2 + $0xdb8] sm:$0xff]
    %v2786 = vld [vmem:[#allocation2 + $0xdc0] sm:$0xff]
    %v2787 = vld [vmem:[#allocation2 + $0xdc8] sm:$0xff]
    %v2788 = vld [vmem:[#allocation2 + $0xdd0] sm:$0xff]
    %v2789 = vld [vmem:[#allocation2 + $0xdd8] sm:$0xff]
    %v2790 = vld [vmem:[#allocation2 + $0xde0] sm:$0xff]
    %v2791 = vld [vmem:[#allocation2 + $0xde8] sm:$0xff]
    %v2792 = vld [vmem:[#allocation2 + $0xdf0] sm:$0xff]
    %v2793 = vld [vmem:[#allocation2 + $0xdf8] sm:$0xff]
    %v2794 = vld [vmem:[#allocation2 + $0xe00] sm:$0xff]
    %v2795 = vld [vmem:[#allocation2 + $0xe08] sm:$0xff]
    %v2796 = vld [vmem:[#allocation2 + $0xe10] sm:$0xff]
    %v2797 = vld [vmem:[#allocation2 + $0xe18] sm:$0xff]
    %v2798 = vld [vmem:[#allocation2 + $0xe20] sm:$0xff]
    %v2799 = vld [vmem:[#allocation2 + $0xe28] sm:$0xff]
    %v2800 = vld [vmem:[#allocation2 + $0xe30] sm:$0xff]
    %v2801 = vld [vmem:[#allocation2 + $0xe38] sm:$0xff]
    %v2802 = vld [vmem:[#allocation2 + $0xe40] sm:$0xff]
    %v2803 = vld [vmem:[#allocation2 + $0xe48] sm:$0xff]
    %v2804 = vld [vmem:[#allocation2 + $0xe50] sm:$0xff]
    %v2805 = vld [vmem:[#allocation2 + $0xe58] sm:$0xff]
    %v2806 = vld [vmem:[#allocation2 + $0xe60] sm:$0xff]
    %v2807 = vld [vmem:[#allocation2 + $0xe68] sm:$0xff]
    %v2808 = vld [vmem:[#allocation2 + $0xe70] sm:$0xff]
    %v2809 = vld [vmem:[#allocation2 + $0xe78] sm:$0xff]
    %v2810 = vld [vmem:[#allocation2 + $0xe80] sm:$0xff]
    %v2811 = vld [vmem:[#allocation2 + $0xe88] sm:$0xff]
    %v2812 = vld [vmem:[#allocation2 + $0xe90] sm:$0xff]
    %v2813 = vld [vmem:[#allocation2 + $0xe98] sm:$0xff]
    %v2814 = vld [vmem:[#allocation2 + $0xea0] sm:$0xff]
    %v2815 = vld [vmem:[#allocation2 + $0xea8] sm:$0xff]
    %v2816 = vld [vmem:[#allocation2 + $0xeb0] sm:$0xff]
    %v2817 = vld [vmem:[#allocation2 + $0xeb8] sm:$0xff]
    %v2818 = vld [vmem:[#allocation2 + $0xec0] sm:$0xff]
    %v2819 = vld [vmem:[#allocation2 + $0xec8] sm:$0xff]
    %v2820 = vld [vmem:[#allocation2 + $0xed0] sm:$0xff]
    %v2821 = vld [vmem:[#allocation2 + $0xed8] sm:$0xff]
    %v2822 = vld [vmem:[#allocation2 + $0xee0] sm:$0xff]
    %v2823 = vld [vmem:[#allocation2 + $0xee8] sm:$0xff]
    %v2824 = vld [vmem:[#allocation2 + $0xef0] sm:$0xff]
    %v2825 = vld [vmem:[#allocation2 + $0xef8] sm:$0xff]
    %v2826 = vld [vmem:[#allocation2 + $0xf00] sm:$0xff]
    %v2827 = vld [vmem:[#allocation2 + $0xf08] sm:$0xff]
    %v2828 = vld [vmem:[#allocation2 + $0xf10] sm:$0xff]
    %v2829 = vld [vmem:[#allocation2 + $0xf18] sm:$0xff]
    %v2830 = vld [vmem:[#allocation2 + $0xf20] sm:$0xff]
    %v2831 = vld [vmem:[#allocation2 + $0xf28] sm:$0xff]
    %v2832 = vld [vmem:[#allocation2 + $0xf30] sm:$0xff]
    %v2833 = vld [vmem:[#allocation2 + $0xf38] sm:$0xff]
    %v2834 = vld [vmem:[#allocation2 + $0xf40] sm:$0xff]
    %v2835 = vld [vmem:[#allocation2 + $0xf48] sm:$0xff]
    %v2836 = vld [vmem:[#allocation2 + $0xf50] sm:$0xff]
    %v2837 = vld [vmem:[#allocation2 + $0xf58] sm:$0xff]
    %v2838 = vld [vmem:[#allocation2 + $0xf60] sm:$0xff]
    %v2839 = vld [vmem:[#allocation2 + $0xf68] sm:$0xff]
    %v2840 = vld [vmem:[#allocation2 + $0xf70] sm:$0xff]
    %v2841 = vld [vmem:[#allocation2 + $0xf78] sm:$0xff]
    %v2842 = vld [vmem:[#allocation2 + $0xf80] sm:$0xff]
    %v2843 = vld [vmem:[#allocation2 + $0xf88] sm:$0xff]
    %v2844 = vld [vmem:[#allocation2 + $0xf90] sm:$0xff]
    %v2845 = vld [vmem:[#allocation2 + $0xf98] sm:$0xff]
    %v2846 = vld [vmem:[#allocation2 + $0xfa0] sm:$0xff]
    %v2847 = vld [vmem:[#allocation2 + $0xfa8] sm:$0xff]
    %v2848 = vld [vmem:[#allocation2 + $0xfb0] sm:$0xff]
    %v2849 = vld [vmem:[#allocation2 + $0xfb8] sm:$0xff]
    %v2850 = vld [vmem:[#allocation2 + $0xfc0] sm:$0xff]
    %v2851 = vld [vmem:[#allocation2 + $0xfc8] sm:$0xff]
    %v2852 = vld [vmem:[#allocation2 + $0xfd0] sm:$0xff]
    %v2853 = vld [vmem:[#allocation2 + $0xfd8] sm:$0xff]
    %v2854 = vld [vmem:[#allocation2 + $0xfe0] sm:$0xff]
    %v2855 = vld [vmem:[#allocation2 + $0xfe8] sm:$0xff]
    %v2856 = vld [vmem:[#allocation2 + $0xff0] sm:$0xff]
    %v2857 = vld [vmem:[#allocation2 + $0xff8] sm:$0xff]
    %v2858 = vld [vmem:[#allocation2 + $0x1000] sm:$0xff]
    %v2859 = vld [vmem:[#allocation2 + $0x1008] sm:$0xff]
    %v2860 = vld [vmem:[#allocation2 + $0x1010] sm:$0xff]
    %v2861 = vld [vmem:[#allocation2 + $0x1018] sm:$0xff]
    %v2862 = vld [vmem:[#allocation2 + $0x1020] sm:$0xff]
    %v2863 = vld [vmem:[#allocation2 + $0x1028] sm:$0xff]
    %v2864 = vld [vmem:[#allocation2 + $0x1030] sm:$0xff]
    %v2865 = vld [vmem:[#allocation2 + $0x1038] sm:$0xff]
    %v2866 = vld [vmem:[#allocation2 + $0x1040] sm:$0xff]
    %v2867 = vld [vmem:[#allocation2 + $0x1048] sm:$0xff]
    %v2868 = vld [vmem:[#allocation2 + $0x1050] sm:$0xff]
    %v2869 = vld [vmem:[#allocation2 + $0x1058] sm:$0xff]
    %v2870 = vld [vmem:[#allocation2 + $0x1060] sm:$0xff]
    %v2871 = vld [vmem:[#allocation2 + $0x1068] sm:$0xff]
    %v2872 = vld [vmem:[#allocation2 + $0x1070] sm:$0xff]
    %v2873 = vld [vmem:[#allocation2 + $0x1078] sm:$0xff]
    %v2874 = vld [vmem:[#allocation2 + $0x1080] sm:$0xff]
    %v2875 = vld [vmem:[#allocation2 + $0x1088] sm:$0xff]
    %v2876 = vld [vmem:[#allocation2 + $0x1090] sm:$0xff]
    %v2877 = vld [vmem:[#allocation2 + $0x1098] sm:$0xff]
    %v2878 = vld [vmem:[#allocation2 + $0x10a0] sm:$0xff]
    %v2879 = vld [vmem:[#allocation2 + $0x10a8] sm:$0xff]
    %v2880 = vld [vmem:[#allocation2 + $0x10b0] sm:$0xff]
    %v2881 = vld [vmem:[#allocation2 + $0x10b8] sm:$0xff]
    %v2882 = vld [vmem:[#allocation2 + $0x10c0] sm:$0xff]
    %v2883 = vld [vmem:[#allocation2 + $0x10c8] sm:$0xff]
    %v2884 = vld [vmem:[#allocation2 + $0x10d0] sm:$0xff]
    %v2885 = vld [vmem:[#allocation2 + $0x10d8] sm:$0xff]
    %v2886 = vld [vmem:[#allocation2 + $0x10e0] sm:$0xff]
    %v2887 = vld [vmem:[#allocation2 + $0x10e8] sm:$0xff]
    %v2888 = vld [vmem:[#allocation2 + $0x10f0] sm:$0xff]
    %v2889 = vld [vmem:[#allocation2 + $0x10f8] sm:$0xff]
    %v2890 = vld [vmem:[#allocation2 + $0x1100] sm:$0xff]
    %v2891 = vld [vmem:[#allocation2 + $0x1108] sm:$0xff]
    %v2892 = vld [vmem:[#allocation2 + $0x1110] sm:$0xff]
    %v2893 = vld [vmem:[#allocation2 + $0x1118] sm:$0xff]
    %v2894 = vld [vmem:[#allocation2 + $0x1120] sm:$0xff]
    %v2895 = vld [vmem:[#allocation2 + $0x1128] sm:$0xff]
    %v2896 = vld [vmem:[#allocation2 + $0x1130] sm:$0xff]
    %v2897 = vld [vmem:[#allocation2 + $0x1138] sm:$0xff]
    %v2898 = vld [vmem:[#allocation2 + $0x1140] sm:$0xff]
    %v2899 = vld [vmem:[#allocation2 + $0x1148] sm:$0xff]
    %v2900 = vld [vmem:[#allocation2 + $0x1150] sm:$0xff]
    %v2901 = vld [vmem:[#allocation2 + $0x1158] sm:$0xff]
    %v2902 = vld [vmem:[#allocation2 + $0x1160] sm:$0xff]
    %v2903 = vld [vmem:[#allocation2 + $0x1168] sm:$0xff]
    %v2904 = vld [vmem:[#allocation2 + $0x1170] sm:$0xff]
    %v2905 = vld [vmem:[#allocation2 + $0x1178] sm:$0xff]
    %v2906 = vld [vmem:[#allocation2 + $0x1180] sm:$0xff]
    %v2907 = vld [vmem:[#allocation2 + $0x1188] sm:$0xff]
    %v2908 = vld [vmem:[#allocation2 + $0x1190] sm:$0xff]
    %v2909 = vld [vmem:[#allocation2 + $0x1198] sm:$0xff]
    %v2910 = vld [vmem:[#allocation2 + $0x11a0] sm:$0xff]
    %v2911 = vld [vmem:[#allocation2 + $0x11a8] sm:$0xff]
    %v2912 = vld [vmem:[#allocation2 + $0x11b0] sm:$0xff]
    %v2913 = vld [vmem:[#allocation2 + $0x11b8] sm:$0xff]
    %v2914 = vld [vmem:[#allocation2 + $0x11c0] sm:$0xff]
    %v2915 = vld [vmem:[#allocation2 + $0x11c8] sm:$0xff]
    %v2916 = vld [vmem:[#allocation2 + $0x11d0] sm:$0xff]
    %v2917 = vld [vmem:[#allocation2 + $0x11d8] sm:$0xff]
    %v2918 = vld [vmem:[#allocation2 + $0x11e0] sm:$0xff]
    %v2919 = vld [vmem:[#allocation2 + $0x11e8] sm:$0xff]
    %v2920 = vld [vmem:[#allocation2 + $0x11f0] sm:$0xff]
    %v2921 = vld [vmem:[#allocation2 + $0x11f8] sm:$0xff]
    %v2922 = vld [vmem:[#allocation2 + $0x1200] sm:$0xff]
    %v2923 = vld [vmem:[#allocation2 + $0x1208] sm:$0xff]
    %v2924 = vld [vmem:[#allocation2 + $0x1210] sm:$0xff]
    %v2925 = vld [vmem:[#allocation2 + $0x1218] sm:$0xff]
    %v2926 = vld [vmem:[#allocation2 + $0x1220] sm:$0xff]
    %v2927 = vld [vmem:[#allocation2 + $0x1228] sm:$0xff]
    %v2928 = vld [vmem:[#allocation2 + $0x1230] sm:$0xff]
    %v2929 = vld [vmem:[#allocation2 + $0x1238] sm:$0xff]
    %v2930 = vld [vmem:[#allocation2 + $0x1240] sm:$0xff]
    %v2931 = vld [vmem:[#allocation2 + $0x1248] sm:$0xff]
    %v2932 = vld [vmem:[#allocation2 + $0x1250] sm:$0xff]
    %v2933 = vld [vmem:[#allocation2 + $0x1258] sm:$0xff]
    %v2934 = vld [vmem:[#allocation2 + $0x1260] sm:$0xff]
    %v2935 = vld [vmem:[#allocation2 + $0x1268] sm:$0xff]
    %v2936 = vld [vmem:[#allocation2 + $0x1270] sm:$0xff]
    %v2937 = vld [vmem:[#allocation2 + $0x1278] sm:$0xff]
    %v2938 = vld [vmem:[#allocation2 + $0x1280] sm:$0xff]
    %v2939 = vld [vmem:[#allocation2 + $0x1288] sm:$0xff]
    %v2940 = vld [vmem:[#allocation2 + $0x1290] sm:$0xff]
    %v2941 = vld [vmem:[#allocation2 + $0x1298] sm:$0xff]
    %v2942 = vld [vmem:[#allocation2 + $0x12a0] sm:$0xff]
    %v2943 = vld [vmem:[#allocation2 + $0x12a8] sm:$0xff]
    %v2944 = vld [vmem:[#allocation2 + $0x12b0] sm:$0xff]
    %v2945 = vld [vmem:[#allocation2 + $0x12b8] sm:$0xff]
    %v2946 = vld [vmem:[#allocation2 + $0x12c0] sm:$0xff]
    %v2947 = vld [vmem:[#allocation2 + $0x12c8] sm:$0xff]
    %v2948 = vld [vmem:[#allocation2 + $0x12d0] sm:$0xff]
    %v2949 = vld [vmem:[#allocation2 + $0x12d8] sm:$0xff]
    %v2950 = vld [vmem:[#allocation2 + $0x12e0] sm:$0xff]
    %v2951 = vld [vmem:[#allocation2 + $0x12e8] sm:$0xff]
    %v2952 = vld [vmem:[#allocation2 + $0x12f0] sm:$0xff]
    %v2953 = vld [vmem:[#allocation2 + $0x12f8] sm:$0xff]
    %v2954 = vld [vmem:[#allocation2 + $0x1300] sm:$0xff]
    %v2955 = vld [vmem:[#allocation2 + $0x1308] sm:$0xff]
    %v2956 = vld [vmem:[#allocation2 + $0x1310] sm:$0xff]
    %v2957 = vld [vmem:[#allocation2 + $0x1318] sm:$0xff]
    %v2958 = vld [vmem:[#allocation2 + $0x1320] sm:$0xff]
    %v2959 = vld [vmem:[#allocation2 + $0x1328] sm:$0xff]
    %v2960 = vld [vmem:[#allocation2 + $0x1330] sm:$0xff]
    %v2961 = vld [vmem:[#allocation2 + $0x1338] sm:$0xff]
    %v2962 = vld [vmem:[#allocation2 + $0x1340] sm:$0xff]
    %v2963 = vld [vmem:[#allocation2 + $0x1348] sm:$0xff]
    %v2964 = vld [vmem:[#allocation2 + $0x1350] sm:$0xff]
    %v2965 = vld [vmem:[#allocation2 + $0x1358] sm:$0xff]
    %v2966 = vld [vmem:[#allocation2 + $0x1360] sm:$0xff]
    %v2967 = vld [vmem:[#allocation2 + $0x1368] sm:$0xff]
    %v2968 = vld [vmem:[#allocation2 + $0x1370] sm:$0xff]
    %v2969 = vld [vmem:[#allocation2 + $0x1378] sm:$0xff]
    %v2970 = vld [vmem:[#allocation2 + $0x1380] sm:$0xff]
    %v2971 = vld [vmem:[#allocation2 + $0x1388] sm:$0xff]
    %v2972 = vld [vmem:[#allocation2 + $0x1390] sm:$0xff]
    %v2973 = vld [vmem:[#allocation2 + $0x1398] sm:$0xff]
    %v2974 = vld [vmem:[#allocation2 + $0x13a0] sm:$0xff]
    %v2975 = vld [vmem:[#allocation2 + $0x13a8] sm:$0xff]
    %v2976 = vld [vmem:[#allocation2 + $0x13b0] sm:$0xff]
    %v2977 = vld [vmem:[#allocation2 + $0x13b8] sm:$0xff]
    %v2978 = vld [vmem:[#allocation2 + $0x13c0] sm:$0xff]
    %v2979 = vld [vmem:[#allocation2 + $0x13c8] sm:$0xff]
    %v2980 = vld [vmem:[#allocation2 + $0x13d0] sm:$0xff]
    %v2981 = vld [vmem:[#allocation2 + $0x13d8] sm:$0xff]
    %v2982 = vld [vmem:[#allocation2 + $0x13e0] sm:$0xff]
    %v2983 = vld [vmem:[#allocation2 + $0x13e8] sm:$0xff]
    %v2984 = vld [vmem:[#allocation2 + $0x13f0] sm:$0xff]
    %v2985 = vld [vmem:[#allocation2 + $0x13f8] sm:$0xff]
    %v2986 = vld [vmem:[#allocation2 + $0x1400] sm:$0xff]
    %v2987 = vld [vmem:[#allocation2 + $0x1408] sm:$0xff]
    %v2988 = vld [vmem:[#allocation2 + $0x1410] sm:$0xff]
    %v2989 = vld [vmem:[#allocation2 + $0x1418] sm:$0xff]
    %v2990 = vld [vmem:[#allocation2 + $0x1420] sm:$0xff]
    %v2991 = vld [vmem:[#allocation2 + $0x1428] sm:$0xff]
    %v2992 = vld [vmem:[#allocation2 + $0x1430] sm:$0xff]
    %v2993 = vld [vmem:[#allocation2 + $0x1438] sm:$0xff]
    %v2994 = vld [vmem:[#allocation2 + $0x1440] sm:$0xff]
    %v2995 = vld [vmem:[#allocation2 + $0x1448] sm:$0xff]
    %v2996 = vld [vmem:[#allocation2 + $0x1450] sm:$0xff]
    %v2997 = vld [vmem:[#allocation2 + $0x1458] sm:$0xff]
    %v2998 = vld [vmem:[#allocation2 + $0x1460] sm:$0xff]
    %v2999 = vld [vmem:[#allocation2 + $0x1468] sm:$0xff]
    %v3000 = vld [vmem:[#allocation2 + $0x1470] sm:$0xff]
    %v3001 = vld [vmem:[#allocation2 + $0x1478] sm:$0xff]
    %v3002 = vld [vmem:[#allocation2 + $0x1480] sm:$0xff]
    %v3003 = vld [vmem:[#allocation2 + $0x1488] sm:$0xff]
    %v3004 = vld [vmem:[#allocation2 + $0x1490] sm:$0xff]
    %v3005 = vld [vmem:[#allocation2 + $0x1498] sm:$0xff]
    %v3006 = vld [vmem:[#allocation2 + $0x14a0] sm:$0xff]
    %v3007 = vld [vmem:[#allocation2 + $0x14a8] sm:$0xff]
    %v3008 = vld [vmem:[#allocation2 + $0x14b0] sm:$0xff]
    %v3009 = vld [vmem:[#allocation2 + $0x14b8] sm:$0xff]
    %v3010 = vld [vmem:[#allocation2 + $0x14c0] sm:$0xff]
    %v3011 = vld [vmem:[#allocation2 + $0x14c8] sm:$0xff]
    %v3012 = vld [vmem:[#allocation2 + $0x14d0] sm:$0xff]
    %v3013 = vld [vmem:[#allocation2 + $0x14d8] sm:$0xff]
    %v3014 = vld [vmem:[#allocation2 + $0x14e0] sm:$0xff]
    %v3015 = vld [vmem:[#allocation2 + $0x14e8] sm:$0xff]
    %v3016 = vld [vmem:[#allocation2 + $0x14f0] sm:$0xff]
    %v3017 = vld [vmem:[#allocation2 + $0x14f8] sm:$0xff]
    %v3018 = vld [vmem:[#allocation2 + $0x1500] sm:$0xff]
    %v3019 = vld [vmem:[#allocation2 + $0x1508] sm:$0xff]
    %v3020 = vld [vmem:[#allocation2 + $0x1510] sm:$0xff]
    %v3021 = vld [vmem:[#allocation2 + $0x1518] sm:$0xff]
    %v3022 = vld [vmem:[#allocation2 + $0x1520] sm:$0xff]
    %v3023 = vld [vmem:[#allocation2 + $0x1528] sm:$0xff]
    %v3024 = vld [vmem:[#allocation2 + $0x1530] sm:$0xff]
    %v3025 = vld [vmem:[#allocation2 + $0x1538] sm:$0xff]
    %v3026 = vld [vmem:[#allocation2 + $0x1540] sm:$0xff]
    %v3027 = vld [vmem:[#allocation2 + $0x1548] sm:$0xff]
    %v3028 = vld [vmem:[#allocation2 + $0x1550] sm:$0xff]
    %v3029 = vld [vmem:[#allocation2 + $0x1558] sm:$0xff]
    %v3030 = vld [vmem:[#allocation2 + $0x1560] sm:$0xff]
    %v3031 = vld [vmem:[#allocation2 + $0x1568] sm:$0xff]
    %v3032 = vld [vmem:[#allocation2 + $0x1570] sm:$0xff]
    %v3033 = vld [vmem:[#allocation2 + $0x1578] sm:$0xff]
    %v3034 = vld [vmem:[#allocation2 + $0x1580] sm:$0xff]
    %v3035 = vld [vmem:[#allocation2 + $0x1588] sm:$0xff]
    %v3036 = vld [vmem:[#allocation2 + $0x1590] sm:$0xff]
    %v3037 = vld [vmem:[#allocation2 + $0x1598] sm:$0xff]
    %v3038 = vld [vmem:[#allocation2 + $0x15a0] sm:$0xff]
    %v3039 = vld [vmem:[#allocation2 + $0x15a8] sm:$0xff]
    %v3040 = vld [vmem:[#allocation2 + $0x15b0] sm:$0xff]
    %v3041 = vld [vmem:[#allocation2 + $0x15b8] sm:$0xff]
    %v3042 = vld [vmem:[#allocation2 + $0x15c0] sm:$0xff]
    %v3043 = vld [vmem:[#allocation2 + $0x15c8] sm:$0xff]
    %v3044 = vld [vmem:[#allocation2 + $0x15d0] sm:$0xff]
    %v3045 = vld [vmem:[#allocation2 + $0x15d8] sm:$0xff]
    %v3046 = vld [vmem:[#allocation2 + $0x15e0] sm:$0xff]
    %v3047 = vld [vmem:[#allocation2 + $0x15e8] sm:$0xff]
    %v3048 = vld [vmem:[#allocation2 + $0x15f0] sm:$0xff]
    %v3049 = vld [vmem:[#allocation2 + $0x15f8] sm:$0xff]
    %v3050 = vld [vmem:[#allocation2 + $0x1600] sm:$0xff]
    %v3051 = vld [vmem:[#allocation2 + $0x1608] sm:$0xff]
    %v3052 = vld [vmem:[#allocation2 + $0x1610] sm:$0xff]
    %v3053 = vld [vmem:[#allocation2 + $0x1618] sm:$0xff]
    %v3054 = vld [vmem:[#allocation2 + $0x1620] sm:$0xff]
    %v3055 = vld [vmem:[#allocation2 + $0x1628] sm:$0xff]
    %v3056 = vld [vmem:[#allocation2 + $0x1630] sm:$0xff]
    %v3057 = vld [vmem:[#allocation2 + $0x1638] sm:$0xff]
    %v3058 = vld [vmem:[#allocation2 + $0x1640] sm:$0xff]
    %v3059 = vld [vmem:[#allocation2 + $0x1648] sm:$0xff]
    %v3060 = vld [vmem:[#allocation2 + $0x1650] sm:$0xff]
    %v3061 = vld [vmem:[#allocation2 + $0x1658] sm:$0xff]
    %v3062 = vld [vmem:[#allocation2 + $0x1660] sm:$0xff]
    %v3063 = vld [vmem:[#allocation2 + $0x1668] sm:$0xff]
    %v3064 = vld [vmem:[#allocation2 + $0x1670] sm:$0xff]
    %v3065 = vld [vmem:[#allocation2 + $0x1678] sm:$0xff]
    %v3066 = vld [vmem:[#allocation2 + $0x1680] sm:$0xff]
    %v3067 = vld [vmem:[#allocation2 + $0x1688] sm:$0xff]
    %v3068 = vld [vmem:[#allocation2 + $0x1690] sm:$0xff]
    %v3069 = vld [vmem:[#allocation2 + $0x1698] sm:$0xff]
    %v3070 = vld [vmem:[#allocation2 + $0x16a0] sm:$0xff]
    %v3071 = vld [vmem:[#allocation2 + $0x16a8] sm:$0xff]
    %v3072 = vld [vmem:[#allocation2 + $0x16b0] sm:$0xff]
    %v3073 = vld [vmem:[#allocation2 + $0x16b8] sm:$0xff]
    %v3074 = vld [vmem:[#allocation2 + $0x16c0] sm:$0xff]
    %v3075 = vld [vmem:[#allocation2 + $0x16c8] sm:$0xff]
    %v3076 = vld [vmem:[#allocation2 + $0x16d0] sm:$0xff]
    %v3077 = vld [vmem:[#allocation2 + $0x16d8] sm:$0xff]
    %v3078 = vld [vmem:[#allocation2 + $0x16e0] sm:$0xff]
    %v3079 = vld [vmem:[#allocation2 + $0x16e8] sm:$0xff]
    %v3080 = vld [vmem:[#allocation2 + $0x16f0] sm:$0xff]
    %v3081 = vld [vmem:[#allocation2 + $0x16f8] sm:$0xff]
    %v3082 = vld [vmem:[#allocation2 + $0x1700] sm:$0xff]
    %v3083 = vld [vmem:[#allocation2 + $0x1708] sm:$0xff]
    %v3084 = vld [vmem:[#allocation2 + $0x1710] sm:$0xff]
    %v3085 = vld [vmem:[#allocation2 + $0x1718] sm:$0xff]
    %v3086 = vld [vmem:[#allocation2 + $0x1720] sm:$0xff]
    %v3087 = vld [vmem:[#allocation2 + $0x1728] sm:$0xff]
    %v3088 = vld [vmem:[#allocation2 + $0x1730] sm:$0xff]
    %v3089 = vld [vmem:[#allocation2 + $0x1738] sm:$0xff]
    %v3090 = vld [vmem:[#allocation2 + $0x1740] sm:$0xff]
    %v3091 = vld [vmem:[#allocation2 + $0x1748] sm:$0xff]
    %v3092 = vld [vmem:[#allocation2 + $0x1750] sm:$0xff]
    %v3093 = vld [vmem:[#allocation2 + $0x1758] sm:$0xff]
    %v3094 = vld [vmem:[#allocation2 + $0x1760] sm:$0xff]
    %v3095 = vld [vmem:[#allocation2 + $0x1768] sm:$0xff]
    %v3096 = vld [vmem:[#allocation2 + $0x1770] sm:$0xff]
    %v3097 = vld [vmem:[#allocation2 + $0x1778] sm:$0xff]
    %v3098 = vld [vmem:[#allocation2 + $0x1780] sm:$0xff]
    %v3099 = vld [vmem:[#allocation2 + $0x1788] sm:$0xff]
    %v3100 = vld [vmem:[#allocation2 + $0x1790] sm:$0xff]
    %v3101 = vld [vmem:[#allocation2 + $0x1798] sm:$0xff]
    %v3102 = vld [vmem:[#allocation2 + $0x17a0] sm:$0xff]
    %v3103 = vld [vmem:[#allocation2 + $0x17a8] sm:$0xff]
    %v3104 = vld [vmem:[#allocation2 + $0x17b0] sm:$0xff]
    %v3105 = vld [vmem:[#allocation2 + $0x17b8] sm:$0xff]
    %v3106 = vld [vmem:[#allocation2 + $0x17c0] sm:$0xff]
    %v3107 = vld [vmem:[#allocation2 + $0x17c8] sm:$0xff]
    %v3108 = vld [vmem:[#allocation2 + $0x17d0] sm:$0xff]
    %v3109 = vld [vmem:[#allocation2 + $0x17d8] sm:$0xff]
    %v3110 = vld [vmem:[#allocation2 + $0x17e0] sm:$0xff]
    %v3111 = vld [vmem:[#allocation2 + $0x17e8] sm:$0xff]
    %v3112 = vld [vmem:[#allocation2 + $0x17f0] sm:$0xff]
    %v3113 = vld [vmem:[#allocation2 + $0x17f8] sm:$0xff]
    %v3114 = vld [vmem:[#allocation2 + $0x1800] sm:$0xff]
    %v3115 = vld [vmem:[#allocation2 + $0x1808] sm:$0xff]
    %v3116 = vld [vmem:[#allocation2 + $0x1810] sm:$0xff]
    %v3117 = vld [vmem:[#allocation2 + $0x1818] sm:$0xff]
    %v3118 = vld [vmem:[#allocation2 + $0x1820] sm:$0xff]
    %v3119 = vld [vmem:[#allocation2 + $0x1828] sm:$0xff]
    %v3120 = vld [vmem:[#allocation2 + $0x1830] sm:$0xff]
    %v3121 = vld [vmem:[#allocation2 + $0x1838] sm:$0xff]
    %v3122 = vld [vmem:[#allocation2 + $0x1840] sm:$0xff]
    %v3123 = vld [vmem:[#allocation2 + $0x1848] sm:$0xff]
    %v3124 = vld [vmem:[#allocation2 + $0x1850] sm:$0xff]
    %v3125 = vld [vmem:[#allocation2 + $0x1858] sm:$0xff]
    %v3126 = vld [vmem:[#allocation2 + $0x1860] sm:$0xff]
    %v3127 = vld [vmem:[#allocation2 + $0x1868] sm:$0xff]
    %v3128 = vld [vmem:[#allocation2 + $0x1870] sm:$0xff]
    %v3129 = vld [vmem:[#allocation2 + $0x1878] sm:$0xff]
    %v3130 = vld [vmem:[#allocation2 + $0x1880] sm:$0xff]
    %v3131 = vld [vmem:[#allocation2 + $0x1888] sm:$0xff]
    %v3132 = vld [vmem:[#allocation2 + $0x1890] sm:$0xff]
    %v3133 = vld [vmem:[#allocation2 + $0x1898] sm:$0xff]
    %v3134 = vld [vmem:[#allocation2 + $0x18a0] sm:$0xff]
    %v3135 = vld [vmem:[#allocation2 + $0x18a8] sm:$0xff]
    %v3136 = vld [vmem:[#allocation2 + $0x18b0] sm:$0xff]
    %v3137 = vld [vmem:[#allocation2 + $0x18b8] sm:$0xff]
    %v3138 = vld [vmem:[#allocation2 + $0x18c0] sm:$0xff]
    %v3139 = vld [vmem:[#allocation2 + $0x18c8] sm:$0xff]
    %v3140 = vld [vmem:[#allocation2 + $0x18d0] sm:$0xff]
    %v3141 = vld [vmem:[#allocation2 + $0x18d8] sm:$0xff]
    %v3142 = vld [vmem:[#allocation2 + $0x18e0] sm:$0xff]
    %v3143 = vld [vmem:[#allocation2 + $0x18e8] sm:$0xff]
    %v3144 = vld [vmem:[#allocation2 + $0x18f0] sm:$0xff]
    %v3145 = vld [vmem:[#allocation2 + $0x18f8] sm:$0xff]
    %v3146 = vld [vmem:[#allocation2 + $0x1900] sm:$0xff]
    %v3147 = vld [vmem:[#allocation2 + $0x1908] sm:$0xff]
    %v3148 = vld [vmem:[#allocation2 + $0x1910] sm:$0xff]
    %v3149 = vld [vmem:[#allocation2 + $0x1918] sm:$0xff]
    %v3150 = vld [vmem:[#allocation2 + $0x1920] sm:$0xff]
    %v3151 = vld [vmem:[#allocation2 + $0x1928] sm:$0xff]
    %v3152 = vld [vmem:[#allocation2 + $0x1930] sm:$0xff]
    %v3153 = vld [vmem:[#allocation2 + $0x1938] sm:$0xff]
    %v3154 = vld [vmem:[#allocation2 + $0x1940] sm:$0xff]
    %v3155 = vld [vmem:[#allocation2 + $0x1948] sm:$0xff]
    %v3156 = vld [vmem:[#allocation2 + $0x1950] sm:$0xff]
    %v3157 = vld [vmem:[#allocation2 + $0x1958] sm:$0xff]
    %v3158 = vld [vmem:[#allocation2 + $0x1960] sm:$0xff]
    %v3159 = vld [vmem:[#allocation2 + $0x1968] sm:$0xff]
    %v3160 = vld [vmem:[#allocation2 + $0x1970] sm:$0xff]
    %v3161 = vld [vmem:[#allocation2 + $0x1978] sm:$0xff]
    %v3162 = vld [vmem:[#allocation2 + $0x1980] sm:$0xff]
    %v3163 = vld [vmem:[#allocation2 + $0x1988] sm:$0xff]
    %v3164 = vld [vmem:[#allocation2 + $0x1990] sm:$0xff]
    %v3165 = vld [vmem:[#allocation2 + $0x1998] sm:$0xff]
    %v3166 = vld [vmem:[#allocation2 + $0x19a0] sm:$0xff]
    %v3167 = vld [vmem:[#allocation2 + $0x19a8] sm:$0xff]
    %v3168 = vld [vmem:[#allocation2 + $0x19b0] sm:$0xff]
    %v3169 = vld [vmem:[#allocation2 + $0x19b8] sm:$0xff]
    %v3170 = vld [vmem:[#allocation2 + $0x19c0] sm:$0xff]
    %v3171 = vld [vmem:[#allocation2 + $0x19c8] sm:$0xff]
    %v3172 = vld [vmem:[#allocation2 + $0x19d0] sm:$0xff]
    %v3173 = vld [vmem:[#allocation2 + $0x19d8] sm:$0xff]
    %v3174 = vld [vmem:[#allocation2 + $0x19e0] sm:$0xff]
    %v3175 = vld [vmem:[#allocation2 + $0x19e8] sm:$0xff]
    %v3176 = vld [vmem:[#allocation2 + $0x19f0] sm:$0xff]
    %v3177 = vld [vmem:[#allocation2 + $0x19f8] sm:$0xff]
    %v3178 = vld [vmem:[#allocation2 + $0x1a00] sm:$0xff]
    %v3179 = vld [vmem:[#allocation2 + $0x1a08] sm:$0xff]
    %v3180 = vld [vmem:[#allocation2 + $0x1a10] sm:$0xff]
    %v3181 = vld [vmem:[#allocation2 + $0x1a18] sm:$0xff]
    %v3182 = vld [vmem:[#allocation2 + $0x1a20] sm:$0xff]
    %v3183 = vld [vmem:[#allocation2 + $0x1a28] sm:$0xff]
    %v3184 = vld [vmem:[#allocation2 + $0x1a30] sm:$0xff]
    %v3185 = vld [vmem:[#allocation2 + $0x1a38] sm:$0xff]
    %v3186 = vld [vmem:[#allocation2 + $0x1a40] sm:$0xff]
    %v3187 = vld [vmem:[#allocation2 + $0x1a48] sm:$0xff]
    %v3188 = vld [vmem:[#allocation2 + $0x1a50] sm:$0xff]
    %v3189 = vld [vmem:[#allocation2 + $0x1a58] sm:$0xff]
    %v3190 = vld [vmem:[#allocation2 + $0x1a60] sm:$0xff]
    %v3191 = vld [vmem:[#allocation2 + $0x1a68] sm:$0xff]
    %v3192 = vld [vmem:[#allocation2 + $0x1a70] sm:$0xff]
    %v3193 = vld [vmem:[#allocation2 + $0x1a78] sm:$0xff]
    %v3194 = vld [vmem:[#allocation2 + $0x1a80] sm:$0xff]
    %v3195 = vld [vmem:[#allocation2 + $0x1a88] sm:$0xff]
    %v3196 = vld [vmem:[#allocation2 + $0x1a90] sm:$0xff]
    %v3197 = vld [vmem:[#allocation2 + $0x1a98] sm:$0xff]
    %v3198 = vld [vmem:[#allocation2 + $0x1aa0] sm:$0xff]
    %v3199 = vld [vmem:[#allocation2 + $0x1aa8] sm:$0xff]
    %v3200 = vld [vmem:[#allocation2 + $0x1ab0] sm:$0xff]
    %v3201 = vld [vmem:[#allocation2 + $0x1ab8] sm:$0xff]
    %v3202 = vld [vmem:[#allocation2 + $0x1ac0] sm:$0xff]
    %v3203 = vld [vmem:[#allocation2 + $0x1ac8] sm:$0xff]
    %v3204 = vld [vmem:[#allocation2 + $0x1ad0] sm:$0xff]
    %v3205 = vld [vmem:[#allocation2 + $0x1ad8] sm:$0xff]
    %v3206 = vld [vmem:[#allocation2 + $0x1ae0] sm:$0xff]
    %v3207 = vld [vmem:[#allocation2 + $0x1ae8] sm:$0xff]
    %v3208 = vld [vmem:[#allocation2 + $0x1af0] sm:$0xff]
    %v3209 = vld [vmem:[#allocation2 + $0x1af8] sm:$0xff]
    %v3210 = vld [vmem:[#allocation2 + $0x1b00] sm:$0xff]
    %v3211 = vld [vmem:[#allocation2 + $0x1b08] sm:$0xff]
    %v3212 = vld [vmem:[#allocation2 + $0x1b10] sm:$0xff]
    %v3213 = vld [vmem:[#allocation2 + $0x1b18] sm:$0xff]
    %v3214 = vld [vmem:[#allocation2 + $0x1b20] sm:$0xff]
    %v3215 = vld [vmem:[#allocation2 + $0x1b28] sm:$0xff]
    %v3216 = vld [vmem:[#allocation2 + $0x1b30] sm:$0xff]
    %v3217 = vld [vmem:[#allocation2 + $0x1b38] sm:$0xff]
    %v3218 = vld [vmem:[#allocation2 + $0x1b40] sm:$0xff]
    %v3219 = vld [vmem:[#allocation2 + $0x1b48] sm:$0xff]
    %v3220 = vld [vmem:[#allocation2 + $0x1b50] sm:$0xff]
    %v3221 = vld [vmem:[#allocation2 + $0x1b58] sm:$0xff]
    %v3222 = vld [vmem:[#allocation2 + $0x1b60] sm:$0xff]
    %v3223 = vld [vmem:[#allocation2 + $0x1b68] sm:$0xff]
    %v3224 = vld [vmem:[#allocation2 + $0x1b70] sm:$0xff]
    %v3225 = vld [vmem:[#allocation2 + $0x1b78] sm:$0xff]
    %v3226 = vld [vmem:[#allocation2 + $0x1b80] sm:$0xff]
    %v3227 = vld [vmem:[#allocation2 + $0x1b88] sm:$0xff]
    %v3228 = vld [vmem:[#allocation2 + $0x1b90] sm:$0xff]
    %v3229 = vld [vmem:[#allocation2 + $0x1b98] sm:$0xff]
    %v3230 = vld [vmem:[#allocation2 + $0x1ba0] sm:$0xff]
    %v3231 = vld [vmem:[#allocation2 + $0x1ba8] sm:$0xff]
    %v3232 = vld [vmem:[#allocation2 + $0x1bb0] sm:$0xff]
    %v3233 = vld [vmem:[#allocation2 + $0x1bb8] sm:$0xff]
    %v3234 = vld [vmem:[#allocation2 + $0x1bc0] sm:$0xff]
    %v3235 = vld [vmem:[#allocation2 + $0x1bc8] sm:$0xff]
    %v3236 = vld [vmem:[#allocation2 + $0x1bd0] sm:$0xff]
    %v3237 = vld [vmem:[#allocation2 + $0x1bd8] sm:$0xff]
    %v3238 = vld [vmem:[#allocation2 + $0x1be0] sm:$0xff]
    %v3239 = vld [vmem:[#allocation2 + $0x1be8] sm:$0xff]
    %v3240 = vld [vmem:[#allocation2 + $0x1bf0] sm:$0xff]
    %v3241 = vld [vmem:[#allocation2 + $0x1bf8] sm:$0xff]
    %v3242 = vld [vmem:[#allocation2 + $0x1c00] sm:$0xff]
    %v3243 = vld [vmem:[#allocation2 + $0x1c08] sm:$0xff]
    %v3244 = vld [vmem:[#allocation2 + $0x1c10] sm:$0xff]
    %v3245 = vld [vmem:[#allocation2 + $0x1c18] sm:$0xff]
    %v3246 = vld [vmem:[#allocation2 + $0x1c20] sm:$0xff]
    %v3247 = vld [vmem:[#allocation2 + $0x1c28] sm:$0xff]
    %v3248 = vld [vmem:[#allocation2 + $0x1c30] sm:$0xff]
    %v3249 = vld [vmem:[#allocation2 + $0x1c38] sm:$0xff]
    %v3250 = vld [vmem:[#allocation2 + $0x1c40] sm:$0xff]
    %v3251 = vld [vmem:[#allocation2 + $0x1c48] sm:$0xff]
    %v3252 = vld [vmem:[#allocation2 + $0x1c50] sm:$0xff]
    %v3253 = vld [vmem:[#allocation2 + $0x1c58] sm:$0xff]
    %v3254 = vld [vmem:[#allocation2 + $0x1c60] sm:$0xff]
    %v3255 = vld [vmem:[#allocation2 + $0x1c68] sm:$0xff]
    %v3256 = vld [vmem:[#allocation2 + $0x1c70] sm:$0xff]
    %v3257 = vld [vmem:[#allocation2 + $0x1c78] sm:$0xff]
    %v3258 = vld [vmem:[#allocation2 + $0x1c80] sm:$0xff]
    %v3259 = vld [vmem:[#allocation2 + $0x1c88] sm:$0xff]
    %v3260 = vld [vmem:[#allocation2 + $0x1c90] sm:$0xff]
    %v3261 = vld [vmem:[#allocation2 + $0x1c98] sm:$0xff]
    %v3262 = vld [vmem:[#allocation2 + $0x1ca0] sm:$0xff]
    %v3263 = vld [vmem:[#allocation2 + $0x1ca8] sm:$0xff]
    %v3264 = vld [vmem:[#allocation2 + $0x1cb0] sm:$0xff]
    %v3265 = vld [vmem:[#allocation2 + $0x1cb8] sm:$0xff]
    %v3266 = vld [vmem:[#allocation2 + $0x1cc0] sm:$0xff]
    %v3267 = vld [vmem:[#allocation2 + $0x1cc8] sm:$0xff]
    %v3268 = vld [vmem:[#allocation2 + $0x1cd0] sm:$0xff]
    %v3269 = vld [vmem:[#allocation2 + $0x1cd8] sm:$0xff]
    %v3270 = vld [vmem:[#allocation2 + $0x1ce0] sm:$0xff]
    %v3271 = vld [vmem:[#allocation2 + $0x1ce8] sm:$0xff]
    %v3272 = vld [vmem:[#allocation2 + $0x1cf0] sm:$0xff]
    %v3273 = vld [vmem:[#allocation2 + $0x1cf8] sm:$0xff]
    %v3274 = vld [vmem:[#allocation2 + $0x1d00] sm:$0xff]
    %v3275 = vld [vmem:[#allocation2 + $0x1d08] sm:$0xff]
    %v3276 = vld [vmem:[#allocation2 + $0x1d10] sm:$0xff]
    %v3277 = vld [vmem:[#allocation2 + $0x1d18] sm:$0xff]
    %v3278 = vld [vmem:[#allocation2 + $0x1d20] sm:$0xff]
    %v3279 = vld [vmem:[#allocation2 + $0x1d28] sm:$0xff]
    %v3280 = vld [vmem:[#allocation2 + $0x1d30] sm:$0xff]
    %v3281 = vld [vmem:[#allocation2 + $0x1d38] sm:$0xff]
    %v3282 = vld [vmem:[#allocation2 + $0x1d40] sm:$0xff]
    %v3283 = vld [vmem:[#allocation2 + $0x1d48] sm:$0xff]
    %v3284 = vld [vmem:[#allocation2 + $0x1d50] sm:$0xff]
    %v3285 = vld [vmem:[#allocation2 + $0x1d58] sm:$0xff]
    %v3286 = vld [vmem:[#allocation2 + $0x1d60] sm:$0xff]
    %v3287 = vld [vmem:[#allocation2 + $0x1d68] sm:$0xff]
    %v3288 = vld [vmem:[#allocation2 + $0x1d70] sm:$0xff]
    %v3289 = vld [vmem:[#allocation2 + $0x1d78] sm:$0xff]
    %v3290 = vld [vmem:[#allocation2 + $0x1d80] sm:$0xff]
    %v3291 = vld [vmem:[#allocation2 + $0x1d88] sm:$0xff]
    %v3292 = vld [vmem:[#allocation2 + $0x1d90] sm:$0xff]
    %v3293 = vld [vmem:[#allocation2 + $0x1d98] sm:$0xff]
    %v3294 = vld [vmem:[#allocation2 + $0x1da0] sm:$0xff]
    %v3295 = vld [vmem:[#allocation2 + $0x1da8] sm:$0xff]
    %v3296 = vld [vmem:[#allocation2 + $0x1db0] sm:$0xff]
    %v3297 = vld [vmem:[#allocation2 + $0x1db8] sm:$0xff]
    %v3298 = vld [vmem:[#allocation2 + $0x1dc0] sm:$0xff]
    %v3299 = vld [vmem:[#allocation2 + $0x1dc8] sm:$0xff]
    %v3300 = vld [vmem:[#allocation2 + $0x1dd0] sm:$0xff]
    %v3301 = vld [vmem:[#allocation2 + $0x1dd8] sm:$0xff]
    %v3302 = vld [vmem:[#allocation2 + $0x1de0] sm:$0xff]
    %v3303 = vld [vmem:[#allocation2 + $0x1de8] sm:$0xff]
    %v3304 = vld [vmem:[#allocation2 + $0x1df0] sm:$0xff]
    %v3305 = vld [vmem:[#allocation2 + $0x1df8] sm:$0xff]
    %v3306 = vld [vmem:[#allocation2 + $0x1e00] sm:$0xff]
    %v3307 = vld [vmem:[#allocation2 + $0x1e08] sm:$0xff]
    %v3308 = vld [vmem:[#allocation2 + $0x1e10] sm:$0xff]
    %v3309 = vld [vmem:[#allocation2 + $0x1e18] sm:$0xff]
    %v3310 = vld [vmem:[#allocation2 + $0x1e20] sm:$0xff]
    %v3311 = vld [vmem:[#allocation2 + $0x1e28] sm:$0xff]
    %v3312 = vld [vmem:[#allocation2 + $0x1e30] sm:$0xff]
    %v3313 = vld [vmem:[#allocation2 + $0x1e38] sm:$0xff]
    %v3314 = vld [vmem:[#allocation2 + $0x1e40] sm:$0xff]
    %v3315 = vld [vmem:[#allocation2 + $0x1e48] sm:$0xff]
    %v3316 = vld [vmem:[#allocation2 + $0x1e50] sm:$0xff]
    %v3317 = vld [vmem:[#allocation2 + $0x1e58] sm:$0xff]
    %v3318 = vld [vmem:[#allocation2 + $0x1e60] sm:$0xff]
    %v3319 = vld [vmem:[#allocation2 + $0x1e68] sm:$0xff]
    %v3320 = vld [vmem:[#allocation2 + $0x1e70] sm:$0xff]
    %v3321 = vld [vmem:[#allocation2 + $0x1e78] sm:$0xff]
    %v3322 = vld [vmem:[#allocation2 + $0x1e80] sm:$0xff]
    %v3323 = vld [vmem:[#allocation2 + $0x1e88] sm:$0xff]
    %v3324 = vld [vmem:[#allocation2 + $0x1e90] sm:$0xff]
    %v3325 = vld [vmem:[#allocation2 + $0x1e98] sm:$0xff]
    %v3326 = vld [vmem:[#allocation2 + $0x1ea0] sm:$0xff]
    %v3327 = vld [vmem:[#allocation2 + $0x1ea8] sm:$0xff]
    %v3328 = vld [vmem:[#allocation2 + $0x1eb0] sm:$0xff]
    %v3329 = vld [vmem:[#allocation2 + $0x1eb8] sm:$0xff]
    %v3330 = vld [vmem:[#allocation2 + $0x1ec0] sm:$0xff]
    %v3331 = vld [vmem:[#allocation2 + $0x1ec8] sm:$0xff]
    %v3332 = vld [vmem:[#allocation2 + $0x1ed0] sm:$0xff]
    %v3333 = vld [vmem:[#allocation2 + $0x1ed8] sm:$0xff]
    %v3334 = vld [vmem:[#allocation2 + $0x1ee0] sm:$0xff]
    %v3335 = vld [vmem:[#allocation2 + $0x1ee8] sm:$0xff]
    %v3336 = vld [vmem:[#allocation2 + $0x1ef0] sm:$0xff]
    %v3337 = vld [vmem:[#allocation2 + $0x1ef8] sm:$0xff]
    %v3338 = vld [vmem:[#allocation2 + $0x1f00] sm:$0xff]
    %v3339 = vld [vmem:[#allocation2 + $0x1f08] sm:$0xff]
    %v3340 = vld [vmem:[#allocation2 + $0x1f10] sm:$0xff]
    %v3341 = vld [vmem:[#allocation2 + $0x1f18] sm:$0xff]
    %v3342 = vld [vmem:[#allocation2 + $0x1f20] sm:$0xff]
    %v3343 = vld [vmem:[#allocation2 + $0x1f28] sm:$0xff]
    %v3344 = vld [vmem:[#allocation2 + $0x1f30] sm:$0xff]
    %v3345 = vld [vmem:[#allocation2 + $0x1f38] sm:$0xff]
    %v3346 = vld [vmem:[#allocation2 + $0x1f40] sm:$0xff]
    %v3347 = vld [vmem:[#allocation2 + $0x1f48] sm:$0xff]
    %v3348 = vld [vmem:[#allocation2 + $0x1f50] sm:$0xff]
    %v3349 = vld [vmem:[#allocation2 + $0x1f58] sm:$0xff]
    %v3350 = vld [vmem:[#allocation2 + $0x1f60] sm:$0xff]
    %v3351 = vld [vmem:[#allocation2 + $0x1f68] sm:$0xff]
    %v3352 = vld [vmem:[#allocation2 + $0x1f70] sm:$0xff]
    %v3353 = vld [vmem:[#allocation2 + $0x1f78] sm:$0xff]
    %v3354 = vld [vmem:[#allocation2 + $0x1f80] sm:$0xff]
    %v3355 = vld [vmem:[#allocation2 + $0x1f88] sm:$0xff]
    %v3356 = vld [vmem:[#allocation2 + $0x1f90] sm:$0xff]
    %v3357 = vld [vmem:[#allocation2 + $0x1f98] sm:$0xff]
    %v3358 = vld [vmem:[#allocation2 + $0x1fa0] sm:$0xff]
    %v3359 = vld [vmem:[#allocation2 + $0x1fa8] sm:$0xff]
    %v3360 = vld [vmem:[#allocation2 + $0x1fb0] sm:$0xff]
    %v3361 = vld [vmem:[#allocation2 + $0x1fb8] sm:$0xff]
    %v3362 = vld [vmem:[#allocation2 + $0x1fc0] sm:$0xff]
    %v3363 = vld [vmem:[#allocation2 + $0x1fc8] sm:$0xff]
    %v3364 = vld [vmem:[#allocation2 + $0x1fd0] sm:$0xff]
    %v3365 = vld [vmem:[#allocation2 + $0x1fd8] sm:$0xff]
    %v3366 = vld [vmem:[#allocation2 + $0x1fe0] sm:$0xff]
    %v3367 = vld [vmem:[#allocation2 + $0x1fe8] sm:$0xff]
    %v3368 = vld [vmem:[#allocation2 + $0x1ff0] sm:$0xff]
    %v3369 = vld [vmem:[#allocation2 + $0x1ff8] sm:$0xff]
    %v3370 = vld [vmem:[#allocation5] sm:$0xff]
    %v3372 = vlaneseq
    %v3373 = vshrl.u32 %v3372, 7
    %v3374 = vsub.s32 0, %v3373
    %v3375 = vrot.slane %v3370, %v3374
    %v3376 = vlaneseq
    %v3377 = vshrl.u32 %v3376, 7
    %v3378 = vsub.s32 1, %v3377
    %v3379 = vrot.slane %v3370, %v3378
    %v3380 = vlaneseq
    %v3381 = vshrl.u32 %v3380, 7
    %v3382 = vsub.s32 2, %v3381
    %v3383 = vrot.slane %v3370, %v3382
    %v3384 = vlaneseq
    %v3385 = vshrl.u32 %v3384, 7
    %v3386 = vsub.s32 3, %v3385
    %v3387 = vrot.slane %v3370, %v3386
    %v3388 = vlaneseq
    %v3389 = vshrl.u32 %v3388, 7
    %v3390 = vsub.s32 4, %v3389
    %v3391 = vrot.slane %v3370, %v3390
    %v3392 = vlaneseq
    %v3393 = vshrl.u32 %v3392, 7
    %v3394 = vsub.s32 5, %v3393
    %v3395 = vrot.slane %v3370, %v3394
    %v3396 = vlaneseq
    %v3397 = vshrl.u32 %v3396, 7
    %v3398 = vsub.s32 6, %v3397
    %v3399 = vrot.slane %v3370, %v3398
    %v3400 = vlaneseq
    %v3401 = vshrl.u32 %v3400, 7
    %v3402 = vsub.s32 7, %v3401
    %v3403 = vrot.slane %v3370, %v3402
    %v3668 = vunpack.c.l.b16 %v2090
    %v3669 = vunpack.c.h.b16 %v2090
    %v3670 = vunpack.c.l.b16 %v2091
    %v3671 = vunpack.c.h.b16 %v2091
    %v3672 = vunpack.c.l.b16 %v2092
    %v3673 = vunpack.c.h.b16 %v2092
    %v3674 = vunpack.c.l.b16 %v2093
    %v3675 = vunpack.c.h.b16 %v2093
    %v3676 = vunpack.c.l.b16 %v2094
    %v3677 = vunpack.c.h.b16 %v2094
    %v3678 = vunpack.c.l.b16 %v2095
    %v3679 = vunpack.c.h.b16 %v2095
    %v3680 = vunpack.c.l.b16 %v2096
    %v3681 = vunpack.c.h.b16 %v2096
    %v3682 = vunpack.c.l.b16 %v2097
    %v3683 = vunpack.c.h.b16 %v2097
    %v3684 = vunpack.c.l.b16 %v2098
    %v3685 = vunpack.c.h.b16 %v2098
    %v3686 = vunpack.c.l.b16 %v2099
    %v3687 = vunpack.c.h.b16 %v2099
    %v3688 = vunpack.c.l.b16 %v2100
    %v3689 = vunpack.c.h.b16 %v2100
    %v3690 = vunpack.c.l.b16 %v2101
    %v3691 = vunpack.c.h.b16 %v2101
    %v3692 = vunpack.c.l.b16 %v2102
    %v3693 = vunpack.c.h.b16 %v2102
    %v3694 = vunpack.c.l.b16 %v2103
    %v3695 = vunpack.c.h.b16 %v2103
    %v3696 = vunpack.c.l.b16 %v2104
    %v3697 = vunpack.c.h.b16 %v2104
    %v3698 = vunpack.c.l.b16 %v2105
    %v3699 = vunpack.c.h.b16 %v2105
    %v3700 = vunpack.c.l.b16 %v2106
    %v3701 = vunpack.c.h.b16 %v2106
    %v3702 = vunpack.c.l.b16 %v2107
    %v3703 = vunpack.c.h.b16 %v2107
    %v3704 = vunpack.c.l.b16 %v2108
    %v3705 = vunpack.c.h.b16 %v2108
    %v3706 = vunpack.c.l.b16 %v2109
    %v3707 = vunpack.c.h.b16 %v2109
    %v3708 = vunpack.c.l.b16 %v2110
    %v3709 = vunpack.c.h.b16 %v2110
    %v3710 = vunpack.c.l.b16 %v2111
    %v3711 = vunpack.c.h.b16 %v2111
    %v3712 = vunpack.c.l.b16 %v2112
    %v3713 = vunpack.c.h.b16 %v2112
    %v3714 = vunpack.c.l.b16 %v2113
    %v3715 = vunpack.c.h.b16 %v2113
    %v3716 = vunpack.c.l.b16 %v2114
    %v3717 = vunpack.c.h.b16 %v2114
    %v3718 = vunpack.c.l.b16 %v2115
    %v3719 = vunpack.c.h.b16 %v2115
    %v3720 = vunpack.c.l.b16 %v2116
    %v3721 = vunpack.c.h.b16 %v2116
    %v3722 = vunpack.c.l.b16 %v2117
    %v3723 = vunpack.c.h.b16 %v2117
    %v3724 = vunpack.c.l.b16 %v2118
    %v3725 = vunpack.c.h.b16 %v2118
    %v3726 = vunpack.c.l.b16 %v2119
    %v3727 = vunpack.c.h.b16 %v2119
    %v3728 = vunpack.c.l.b16 %v2120
    %v3729 = vunpack.c.h.b16 %v2120
    %v3730 = vunpack.c.l.b16 %v2121
    %v3731 = vunpack.c.h.b16 %v2121
    %v3732 = vunpack.c.l.b16 %v2122
    %v3733 = vunpack.c.h.b16 %v2122
    %v3734 = vunpack.c.l.b16 %v2123
    %v3735 = vunpack.c.h.b16 %v2123
    %v3736 = vunpack.c.l.b16 %v2124
    %v3737 = vunpack.c.h.b16 %v2124
    %v3738 = vunpack.c.l.b16 %v2125
    %v3739 = vunpack.c.h.b16 %v2125
    %v3740 = vunpack.c.l.b16 %v2126
    %v3741 = vunpack.c.h.b16 %v2126
    %v3742 = vunpack.c.l.b16 %v2127
    %v3743 = vunpack.c.h.b16 %v2127
    %v3744 = vunpack.c.l.b16 %v2128
    %v3745 = vunpack.c.h.b16 %v2128
    %v3746 = vunpack.c.l.b16 %v2129
    %v3747 = vunpack.c.h.b16 %v2129
    %v3748 = vunpack.c.l.b16 %v2130
    %v3749 = vunpack.c.h.b16 %v2130
    %v3750 = vunpack.c.l.b16 %v2131
    %v3751 = vunpack.c.h.b16 %v2131
    %v3752 = vunpack.c.l.b16 %v2132
    %v3753 = vunpack.c.h.b16 %v2132
    %v3754 = vunpack.c.l.b16 %v2133
    %v3755 = vunpack.c.h.b16 %v2133
    %v3756 = vunpack.c.l.b16 %v2134
    %v3757 = vunpack.c.h.b16 %v2134
    %v3758 = vunpack.c.l.b16 %v2135
    %v3759 = vunpack.c.h.b16 %v2135
    %v3760 = vunpack.c.l.b16 %v2136
    %v3761 = vunpack.c.h.b16 %v2136
    %v3762 = vunpack.c.l.b16 %v2137
    %v3763 = vunpack.c.h.b16 %v2137
    %v3764 = vunpack.c.l.b16 %v2138
    %v3765 = vunpack.c.h.b16 %v2138
    %v3766 = vunpack.c.l.b16 %v2139
    %v3767 = vunpack.c.h.b16 %v2139
    %v3768 = vunpack.c.l.b16 %v2140
    %v3769 = vunpack.c.h.b16 %v2140
    %v3770 = vunpack.c.l.b16 %v2141
    %v3771 = vunpack.c.h.b16 %v2141
    %v3772 = vunpack.c.l.b16 %v2142
    %v3773 = vunpack.c.h.b16 %v2142
    %v3774 = vunpack.c.l.b16 %v2143
    %v3775 = vunpack.c.h.b16 %v2143
    %v3776 = vunpack.c.l.b16 %v2144
    %v3777 = vunpack.c.h.b16 %v2144
    %v3778 = vunpack.c.l.b16 %v2145
    %v3779 = vunpack.c.h.b16 %v2145
    %v3780 = vunpack.c.l.b16 %v2146
    %v3781 = vunpack.c.h.b16 %v2146
    %v3782 = vunpack.c.l.b16 %v2147
    %v3783 = vunpack.c.h.b16 %v2147
    %v3784 = vunpack.c.l.b16 %v2148
    %v3785 = vunpack.c.h.b16 %v2148
    %v3786 = vunpack.c.l.b16 %v2149
    %v3787 = vunpack.c.h.b16 %v2149
    %v3788 = vunpack.c.l.b16 %v2150
    %v3789 = vunpack.c.h.b16 %v2150
    %v3790 = vunpack.c.l.b16 %v2151
    %v3791 = vunpack.c.h.b16 %v2151
    %v3792 = vunpack.c.l.b16 %v2152
    %v3793 = vunpack.c.h.b16 %v2152
    %v3794 = vunpack.c.l.b16 %v2153
    %v3795 = vunpack.c.h.b16 %v2153
    %v3796 = vunpack.c.l.b16 %v2154
    %v3797 = vunpack.c.h.b16 %v2154
    %v3798 = vunpack.c.l.b16 %v2155
    %v3799 = vunpack.c.h.b16 %v2155
    %v3800 = vunpack.c.l.b16 %v2156
    %v3801 = vunpack.c.h.b16 %v2156
    %v3802 = vunpack.c.l.b16 %v2157
    %v3803 = vunpack.c.h.b16 %v2157
    %v3804 = vunpack.c.l.b16 %v2158
    %v3805 = vunpack.c.h.b16 %v2158
    %v3806 = vunpack.c.l.b16 %v2159
    %v3807 = vunpack.c.h.b16 %v2159
    %v3808 = vunpack.c.l.b16 %v2160
    %v3809 = vunpack.c.h.b16 %v2160
    %v3810 = vunpack.c.l.b16 %v2161
    %v3811 = vunpack.c.h.b16 %v2161
    %v3812 = vunpack.c.l.b16 %v2162
    %v3813 = vunpack.c.h.b16 %v2162
    %v3814 = vunpack.c.l.b16 %v2163
    %v3815 = vunpack.c.h.b16 %v2163
    %v3816 = vunpack.c.l.b16 %v2164
    %v3817 = vunpack.c.h.b16 %v2164
    %v3818 = vunpack.c.l.b16 %v2165
    %v3819 = vunpack.c.h.b16 %v2165
    %v3820 = vunpack.c.l.b16 %v2166
    %v3821 = vunpack.c.h.b16 %v2166
    %v3822 = vunpack.c.l.b16 %v2167
    %v3823 = vunpack.c.h.b16 %v2167
    %v3824 = vunpack.c.l.b16 %v2168
    %v3825 = vunpack.c.h.b16 %v2168
    %v3826 = vunpack.c.l.b16 %v2169
    %v3827 = vunpack.c.h.b16 %v2169
    %v3828 = vunpack.c.l.b16 %v2170
    %v3829 = vunpack.c.h.b16 %v2170
    %v3830 = vunpack.c.l.b16 %v2171
    %v3831 = vunpack.c.h.b16 %v2171
    %v3832 = vunpack.c.l.b16 %v2172
    %v3833 = vunpack.c.h.b16 %v2172
    %v3834 = vunpack.c.l.b16 %v2173
    %v3835 = vunpack.c.h.b16 %v2173
    %v3836 = vunpack.c.l.b16 %v2174
    %v3837 = vunpack.c.h.b16 %v2174
    %v3838 = vunpack.c.l.b16 %v2175
    %v3839 = vunpack.c.h.b16 %v2175
    %v3840 = vunpack.c.l.b16 %v2176
    %v3841 = vunpack.c.h.b16 %v2176
    %v3842 = vunpack.c.l.b16 %v2177
    %v3843 = vunpack.c.h.b16 %v2177
    %v3844 = vunpack.c.l.b16 %v2178
    %v3845 = vunpack.c.h.b16 %v2178
    %v3846 = vunpack.c.l.b16 %v2179
    %v3847 = vunpack.c.h.b16 %v2179
    %v3848 = vunpack.c.l.b16 %v2180
    %v3849 = vunpack.c.h.b16 %v2180
    %v3850 = vunpack.c.l.b16 %v2181
    %v3851 = vunpack.c.h.b16 %v2181
    %v3852 = vunpack.c.l.b16 %v2182
    %v3853 = vunpack.c.h.b16 %v2182
    %v3854 = vunpack.c.l.b16 %v2183
    %v3855 = vunpack.c.h.b16 %v2183
    %v3856 = vunpack.c.l.b16 %v2184
    %v3857 = vunpack.c.h.b16 %v2184
    %v3858 = vunpack.c.l.b16 %v2185
    %v3859 = vunpack.c.h.b16 %v2185
    %v3860 = vunpack.c.l.b16 %v2186
    %v3861 = vunpack.c.h.b16 %v2186
    %v3862 = vunpack.c.l.b16 %v2187
    %v3863 = vunpack.c.h.b16 %v2187
    %v3864 = vunpack.c.l.b16 %v2188
    %v3865 = vunpack.c.h.b16 %v2188
    %v3866 = vunpack.c.l.b16 %v2189
    %v3867 = vunpack.c.h.b16 %v2189
    %v3868 = vunpack.c.l.b16 %v2190
    %v3869 = vunpack.c.h.b16 %v2190
    %v3870 = vunpack.c.l.b16 %v2191
    %v3871 = vunpack.c.h.b16 %v2191
    %v3872 = vunpack.c.l.b16 %v2192
    %v3873 = vunpack.c.h.b16 %v2192
    %v3874 = vunpack.c.l.b16 %v2193
    %v3875 = vunpack.c.h.b16 %v2193
    %v3876 = vunpack.c.l.b16 %v2194
    %v3877 = vunpack.c.h.b16 %v2194
    %v3878 = vunpack.c.l.b16 %v2195
    %v3879 = vunpack.c.h.b16 %v2195
    %v3880 = vunpack.c.l.b16 %v2196
    %v3881 = vunpack.c.h.b16 %v2196
    %v3882 = vunpack.c.l.b16 %v2197
    %v3883 = vunpack.c.h.b16 %v2197
    %v3884 = vunpack.c.l.b16 %v2198
    %v3885 = vunpack.c.h.b16 %v2198
    %v3886 = vunpack.c.l.b16 %v2199
    %v3887 = vunpack.c.h.b16 %v2199
    %v3888 = vunpack.c.l.b16 %v2200
    %v3889 = vunpack.c.h.b16 %v2200
    %v3890 = vunpack.c.l.b16 %v2201
    %v3891 = vunpack.c.h.b16 %v2201
    %v3892 = vunpack.c.l.b16 %v2202
    %v3893 = vunpack.c.h.b16 %v2202
    %v3894 = vunpack.c.l.b16 %v2203
    %v3895 = vunpack.c.h.b16 %v2203
    %v3896 = vunpack.c.l.b16 %v2204
    %v3897 = vunpack.c.h.b16 %v2204
    %v3898 = vunpack.c.l.b16 %v2205
    %v3899 = vunpack.c.h.b16 %v2205
    %v3900 = vunpack.c.l.b16 %v2206
    %v3901 = vunpack.c.h.b16 %v2206
    %v3902 = vunpack.c.l.b16 %v2207
    %v3903 = vunpack.c.h.b16 %v2207
    %v3904 = vunpack.c.l.b16 %v2208
    %v3905 = vunpack.c.h.b16 %v2208
    %v3906 = vunpack.c.l.b16 %v2209
    %v3907 = vunpack.c.h.b16 %v2209
    %v3908 = vunpack.c.l.b16 %v2210
    %v3909 = vunpack.c.h.b16 %v2210
    %v3910 = vunpack.c.l.b16 %v2211
    %v3911 = vunpack.c.h.b16 %v2211
    %v3912 = vunpack.c.l.b16 %v2212
    %v3913 = vunpack.c.h.b16 %v2212
    %v3914 = vunpack.c.l.b16 %v2213
    %v3915 = vunpack.c.h.b16 %v2213
    %v3916 = vunpack.c.l.b16 %v2214
    %v3917 = vunpack.c.h.b16 %v2214
    %v3918 = vunpack.c.l.b16 %v2215
    %v3919 = vunpack.c.h.b16 %v2215
    %v3920 = vunpack.c.l.b16 %v2216
    %v3921 = vunpack.c.h.b16 %v2216
    %v3922 = vunpack.c.l.b16 %v2217
    %v3923 = vunpack.c.h.b16 %v2217
    %v3924 = vunpack.c.l.b16 %v2218
    %v3925 = vunpack.c.h.b16 %v2218
    %v3926 = vunpack.c.l.b16 %v2219
    %v3927 = vunpack.c.h.b16 %v2219
    %v3928 = vunpack.c.l.b16 %v2220
    %v3929 = vunpack.c.h.b16 %v2220
    %v3930 = vunpack.c.l.b16 %v2221
    %v3931 = vunpack.c.h.b16 %v2221
    %v3932 = vunpack.c.l.b16 %v2222
    %v3933 = vunpack.c.h.b16 %v2222
    %v3934 = vunpack.c.l.b16 %v2223
    %v3935 = vunpack.c.h.b16 %v2223
    %v3936 = vunpack.c.l.b16 %v2224
    %v3937 = vunpack.c.h.b16 %v2224
    %v3938 = vunpack.c.l.b16 %v2225
    %v3939 = vunpack.c.h.b16 %v2225
    %v3940 = vunpack.c.l.b16 %v2226
    %v3941 = vunpack.c.h.b16 %v2226
    %v3942 = vunpack.c.l.b16 %v2227
    %v3943 = vunpack.c.h.b16 %v2227
    %v3944 = vunpack.c.l.b16 %v2228
    %v3945 = vunpack.c.h.b16 %v2228
    %v3946 = vunpack.c.l.b16 %v2229
    %v3947 = vunpack.c.h.b16 %v2229
    %v3948 = vunpack.c.l.b16 %v2230
    %v3949 = vunpack.c.h.b16 %v2230
    %v3950 = vunpack.c.l.b16 %v2231
    %v3951 = vunpack.c.h.b16 %v2231
    %v3952 = vunpack.c.l.b16 %v2232
    %v3953 = vunpack.c.h.b16 %v2232
    %v3954 = vunpack.c.l.b16 %v2233
    %v3955 = vunpack.c.h.b16 %v2233
    %v3956 = vunpack.c.l.b16 %v2234
    %v3957 = vunpack.c.h.b16 %v2234
    %v3958 = vunpack.c.l.b16 %v2235
    %v3959 = vunpack.c.h.b16 %v2235
    %v3960 = vunpack.c.l.b16 %v2236
    %v3961 = vunpack.c.h.b16 %v2236
    %v3962 = vunpack.c.l.b16 %v2237
    %v3963 = vunpack.c.h.b16 %v2237
    %v3964 = vunpack.c.l.b16 %v2238
    %v3965 = vunpack.c.h.b16 %v2238
    %v3966 = vunpack.c.l.b16 %v2239
    %v3967 = vunpack.c.h.b16 %v2239
    %v3968 = vunpack.c.l.b16 %v2240
    %v3969 = vunpack.c.h.b16 %v2240
    %v3970 = vunpack.c.l.b16 %v2241
    %v3971 = vunpack.c.h.b16 %v2241
    %v3972 = vunpack.c.l.b16 %v2242
    %v3973 = vunpack.c.h.b16 %v2242
    %v3974 = vunpack.c.l.b16 %v2243
    %v3975 = vunpack.c.h.b16 %v2243
    %v3976 = vunpack.c.l.b16 %v2244
    %v3977 = vunpack.c.h.b16 %v2244
    %v3978 = vunpack.c.l.b16 %v2245
    %v3979 = vunpack.c.h.b16 %v2245
    %v3980 = vunpack.c.l.b16 %v2246
    %v3981 = vunpack.c.h.b16 %v2246
    %v3982 = vunpack.c.l.b16 %v2247
    %v3983 = vunpack.c.h.b16 %v2247
    %v3984 = vunpack.c.l.b16 %v2248
    %v3985 = vunpack.c.h.b16 %v2248
    %v3986 = vunpack.c.l.b16 %v2249
    %v3987 = vunpack.c.h.b16 %v2249
    %v3988 = vunpack.c.l.b16 %v2250
    %v3989 = vunpack.c.h.b16 %v2250
    %v3990 = vunpack.c.l.b16 %v2251
    %v3991 = vunpack.c.h.b16 %v2251
    %v3992 = vunpack.c.l.b16 %v2252
    %v3993 = vunpack.c.h.b16 %v2252
    %v3994 = vunpack.c.l.b16 %v2253
    %v3995 = vunpack.c.h.b16 %v2253
    %v3996 = vunpack.c.l.b16 %v2254
    %v3997 = vunpack.c.h.b16 %v2254
    %v3998 = vunpack.c.l.b16 %v2255
    %v3999 = vunpack.c.h.b16 %v2255
    %v4000 = vunpack.c.l.b16 %v2256
    %v4001 = vunpack.c.h.b16 %v2256
    %v4002 = vunpack.c.l.b16 %v2257
    %v4003 = vunpack.c.h.b16 %v2257
    %v4004 = vunpack.c.l.b16 %v2258
    %v4005 = vunpack.c.h.b16 %v2258
    %v4006 = vunpack.c.l.b16 %v2259
    %v4007 = vunpack.c.h.b16 %v2259
    %v4008 = vunpack.c.l.b16 %v2260
    %v4009 = vunpack.c.h.b16 %v2260
    %v4010 = vunpack.c.l.b16 %v2261
    %v4011 = vunpack.c.h.b16 %v2261
    %v4012 = vunpack.c.l.b16 %v2262
    %v4013 = vunpack.c.h.b16 %v2262
    %v4014 = vunpack.c.l.b16 %v2263
    %v4015 = vunpack.c.h.b16 %v2263
    %v4016 = vunpack.c.l.b16 %v2264
    %v4017 = vunpack.c.h.b16 %v2264
    %v4018 = vunpack.c.l.b16 %v2265
    %v4019 = vunpack.c.h.b16 %v2265
    %v4020 = vunpack.c.l.b16 %v2266
    %v4021 = vunpack.c.h.b16 %v2266
    %v4022 = vunpack.c.l.b16 %v2267
    %v4023 = vunpack.c.h.b16 %v2267
    %v4024 = vunpack.c.l.b16 %v2268
    %v4025 = vunpack.c.h.b16 %v2268
    %v4026 = vunpack.c.l.b16 %v2269
    %v4027 = vunpack.c.h.b16 %v2269
    %v4028 = vunpack.c.l.b16 %v2270
    %v4029 = vunpack.c.h.b16 %v2270
    %v4030 = vunpack.c.l.b16 %v2271
    %v4031 = vunpack.c.h.b16 %v2271
    %v4032 = vunpack.c.l.b16 %v2272
    %v4033 = vunpack.c.h.b16 %v2272
    %v4034 = vunpack.c.l.b16 %v2273
    %v4035 = vunpack.c.h.b16 %v2273
    %v4036 = vunpack.c.l.b16 %v2274
    %v4037 = vunpack.c.h.b16 %v2274
    %v4038 = vunpack.c.l.b16 %v2275
    %v4039 = vunpack.c.h.b16 %v2275
    %v4040 = vunpack.c.l.b16 %v2276
    %v4041 = vunpack.c.h.b16 %v2276
    %v4042 = vunpack.c.l.b16 %v2277
    %v4043 = vunpack.c.h.b16 %v2277
    %v4044 = vunpack.c.l.b16 %v2278
    %v4045 = vunpack.c.h.b16 %v2278
    %v4046 = vunpack.c.l.b16 %v2279
    %v4047 = vunpack.c.h.b16 %v2279
    %v4048 = vunpack.c.l.b16 %v2280
    %v4049 = vunpack.c.h.b16 %v2280
    %v4050 = vunpack.c.l.b16 %v2281
    %v4051 = vunpack.c.h.b16 %v2281
    %v4052 = vunpack.c.l.b16 %v2282
    %v4053 = vunpack.c.h.b16 %v2282
    %v4054 = vunpack.c.l.b16 %v2283
    %v4055 = vunpack.c.h.b16 %v2283
    %v4056 = vunpack.c.l.b16 %v2284
    %v4057 = vunpack.c.h.b16 %v2284
    %v4058 = vunpack.c.l.b16 %v2285
    %v4059 = vunpack.c.h.b16 %v2285
    %v4060 = vunpack.c.l.b16 %v2286
    %v4061 = vunpack.c.h.b16 %v2286
    %v4062 = vunpack.c.l.b16 %v2287
    %v4063 = vunpack.c.h.b16 %v2287
    %v4064 = vunpack.c.l.b16 %v2288
    %v4065 = vunpack.c.h.b16 %v2288
    %v4066 = vunpack.c.l.b16 %v2289
    %v4067 = vunpack.c.h.b16 %v2289
    %v4068 = vunpack.c.l.b16 %v2290
    %v4069 = vunpack.c.h.b16 %v2290
    %v4070 = vunpack.c.l.b16 %v2291
    %v4071 = vunpack.c.h.b16 %v2291
    %v4072 = vunpack.c.l.b16 %v2292
    %v4073 = vunpack.c.h.b16 %v2292
    %v4074 = vunpack.c.l.b16 %v2293
    %v4075 = vunpack.c.h.b16 %v2293
    %v4076 = vunpack.c.l.b16 %v2294
    %v4077 = vunpack.c.h.b16 %v2294
    %v4078 = vunpack.c.l.b16 %v2295
    %v4079 = vunpack.c.h.b16 %v2295
    %v4080 = vunpack.c.l.b16 %v2296
    %v4081 = vunpack.c.h.b16 %v2296
    %v4082 = vunpack.c.l.b16 %v2297
    %v4083 = vunpack.c.h.b16 %v2297
    %v4084 = vunpack.c.l.b16 %v2298
    %v4085 = vunpack.c.h.b16 %v2298
    %v4086 = vunpack.c.l.b16 %v2299
    %v4087 = vunpack.c.h.b16 %v2299
    %v4088 = vunpack.c.l.b16 %v2300
    %v4089 = vunpack.c.h.b16 %v2300
    %v4090 = vunpack.c.l.b16 %v2301
    %v4091 = vunpack.c.h.b16 %v2301
    %v4092 = vunpack.c.l.b16 %v2302
    %v4093 = vunpack.c.h.b16 %v2302
    %v4094 = vunpack.c.l.b16 %v2303
    %v4095 = vunpack.c.h.b16 %v2303
    %v4096 = vunpack.c.l.b16 %v2304
    %v4097 = vunpack.c.h.b16 %v2304
    %v4098 = vunpack.c.l.b16 %v2305
    %v4099 = vunpack.c.h.b16 %v2305
    %v4100 = vunpack.c.l.b16 %v2306
    %v4101 = vunpack.c.h.b16 %v2306
    %v4102 = vunpack.c.l.b16 %v2307
    %v4103 = vunpack.c.h.b16 %v2307
    %v4104 = vunpack.c.l.b16 %v2308
    %v4105 = vunpack.c.h.b16 %v2308
    %v4106 = vunpack.c.l.b16 %v2309
    %v4107 = vunpack.c.h.b16 %v2309
    %v4108 = vunpack.c.l.b16 %v2310
    %v4109 = vunpack.c.h.b16 %v2310
    %v4110 = vunpack.c.l.b16 %v2311
    %v4111 = vunpack.c.h.b16 %v2311
    %v4112 = vunpack.c.l.b16 %v2312
    %v4113 = vunpack.c.h.b16 %v2312
    %v4114 = vunpack.c.l.b16 %v2313
    %v4115 = vunpack.c.h.b16 %v2313
    %v4116 = vunpack.c.l.b16 %v2314
    %v4117 = vunpack.c.h.b16 %v2314
    %v4118 = vunpack.c.l.b16 %v2315
    %v4119 = vunpack.c.h.b16 %v2315
    %v4120 = vunpack.c.l.b16 %v2316
    %v4121 = vunpack.c.h.b16 %v2316
    %v4122 = vunpack.c.l.b16 %v2317
    %v4123 = vunpack.c.h.b16 %v2317
    %v4124 = vunpack.c.l.b16 %v2318
    %v4125 = vunpack.c.h.b16 %v2318
    %v4126 = vunpack.c.l.b16 %v2319
    %v4127 = vunpack.c.h.b16 %v2319
    %v4128 = vunpack.c.l.b16 %v2320
    %v4129 = vunpack.c.h.b16 %v2320
    %v4130 = vunpack.c.l.b16 %v2321
    %v4131 = vunpack.c.h.b16 %v2321
    %v4132 = vunpack.c.l.b16 %v2322
    %v4133 = vunpack.c.h.b16 %v2322
    %v4134 = vunpack.c.l.b16 %v2323
    %v4135 = vunpack.c.h.b16 %v2323
    %v4136 = vunpack.c.l.b16 %v2324
    %v4137 = vunpack.c.h.b16 %v2324
    %v4138 = vunpack.c.l.b16 %v2325
    %v4139 = vunpack.c.h.b16 %v2325
    %v4140 = vunpack.c.l.b16 %v2326
    %v4141 = vunpack.c.h.b16 %v2326
    %v4142 = vunpack.c.l.b16 %v2327
    %v4143 = vunpack.c.h.b16 %v2327
    %v4144 = vunpack.c.l.b16 %v2328
    %v4145 = vunpack.c.h.b16 %v2328
    %v4146 = vunpack.c.l.b16 %v2329
    %v4147 = vunpack.c.h.b16 %v2329
    %v4148 = vunpack.c.l.b16 %v2330
    %v4149 = vunpack.c.h.b16 %v2330
    %v4150 = vunpack.c.l.b16 %v2331
    %v4151 = vunpack.c.h.b16 %v2331
    %v4152 = vunpack.c.l.b16 %v2332
    %v4153 = vunpack.c.h.b16 %v2332
    %v4154 = vunpack.c.l.b16 %v2333
    %v4155 = vunpack.c.h.b16 %v2333
    %v4156 = vunpack.c.l.b16 %v2334
    %v4157 = vunpack.c.h.b16 %v2334
    %v4158 = vunpack.c.l.b16 %v2335
    %v4159 = vunpack.c.h.b16 %v2335
    %v4160 = vunpack.c.l.b16 %v2336
    %v4161 = vunpack.c.h.b16 %v2336
    %v4162 = vunpack.c.l.b16 %v2337
    %v4163 = vunpack.c.h.b16 %v2337
    %v4164 = vunpack.c.l.b16 %v2338
    %v4165 = vunpack.c.h.b16 %v2338
    %v4166 = vunpack.c.l.b16 %v2339
    %v4167 = vunpack.c.h.b16 %v2339
    %v4168 = vunpack.c.l.b16 %v2340
    %v4169 = vunpack.c.h.b16 %v2340
    %v4170 = vunpack.c.l.b16 %v2341
    %v4171 = vunpack.c.h.b16 %v2341
    %v4172 = vunpack.c.l.b16 %v2342
    %v4173 = vunpack.c.h.b16 %v2342
    %v4174 = vunpack.c.l.b16 %v2343
    %v4175 = vunpack.c.h.b16 %v2343
    %v4176 = vunpack.c.l.b16 %v2344
    %v4177 = vunpack.c.h.b16 %v2344
    %v4178 = vunpack.c.l.b16 %v2345
    %v4179 = vunpack.c.h.b16 %v2345
    %v4180 = vlaneseq
    %v4181 = vand.u32 %v4180, 127
    %v4182 = vlaneseq
    %v4183 = vshrl.u32 %v4182, 7
    %v4184 = vsub.s32 %v4181, %v4183
    %v4185 = vrot.slane %v3668, %v4184
    %v4186 = vadd.s32 %v4181, 4294967288
    %v4187 = vlaneseq
    %v4188 = vshrl.u32 %v4187, 7
    %v4189 = vsub.s32 %v4186, %v4188
    %v4190 = vrot.slane %v3669, %v4189
    %vm4191 = vcmask 130112
    %v4192 = vsel %vm4191, %v4190, %v4185
    %v4193 = vadd.s32 %v4181, 4294967280
    %v4194 = vlaneseq
    %v4195 = vshrl.u32 %v4194, 7
    %v4196 = vsub.s32 %v4193, %v4195
    %v4197 = vrot.slane %v3670, %v4196
    %vm4198 = vcmask 195712
    %v4199 = vsel %vm4198, %v4197, %v4192
    %v4200 = vadd.s32 %v4181, 4294967272
    %v4201 = vlaneseq
    %v4202 = vshrl.u32 %v4201, 7
    %v4203 = vsub.s32 %v4200, %v4202
    %v4204 = vrot.slane %v3671, %v4203
    %vm4205 = vcmask 261312
    %v4206 = vsel %vm4205, %v4204, %v4199
    %v4207 = vadd.s32 %v4181, 4294967264
    %v4208 = vlaneseq
    %v4209 = vshrl.u32 %v4208, 7
    %v4210 = vsub.s32 %v4207, %v4209
    %v4211 = vrot.slane %v3672, %v4210
    %vm4212 = vcmask 326912
    %v4213 = vsel %vm4212, %v4211, %v4206
    %v4214 = vadd.s32 %v4181, 4294967256
    %v4215 = vlaneseq
    %v4216 = vshrl.u32 %v4215, 7
    %v4217 = vsub.s32 %v4214, %v4216
    %v4218 = vrot.slane %v3673, %v4217
    %vm4219 = vcmask 392512
    %v4220 = vsel %vm4219, %v4218, %v4213
    %v4221 = vadd.s32 %v4181, 4294967248
    %v4222 = vlaneseq
    %v4223 = vshrl.u32 %v4222, 7
    %v4224 = vsub.s32 %v4221, %v4223
    %v4225 = vrot.slane %v3674, %v4224
    %vm4226 = vcmask 458112
    %v4227 = vsel %vm4226, %v4225, %v4220
    %v4228 = vadd.s32 %v4181, 4294967240
    %v4229 = vlaneseq
    %v4230 = vshrl.u32 %v4229, 7
    %v4231 = vsub.s32 %v4228, %v4230
    %v4232 = vrot.slane %v3675, %v4231
    %vm4233 = vcmask 523712
    %v4234 = vsel %vm4233, %v4232, %v4227
    %v4235 = vadd.s32 %v4181, 4294967232
    %v4236 = vlaneseq
    %v4237 = vshrl.u32 %v4236, 7
    %v4238 = vsub.s32 %v4235, %v4237
    %v4239 = vrot.slane %v3676, %v4238
    %vm4240 = vcmask 589312
    %v4241 = vsel %vm4240, %v4239, %v4234
    %v4242 = vadd.s32 %v4181, 4294967224
    %v4243 = vlaneseq
    %v4244 = vshrl.u32 %v4243, 7
    %v4245 = vsub.s32 %v4242, %v4244
    %v4246 = vrot.slane %v3677, %v4245
    %vm4247 = vcmask 654912
    %v4248 = vsel %vm4247, %v4246, %v4241
    %v4249 = vadd.s32 %v4181, 4294967216
    %v4250 = vlaneseq
    %v4251 = vshrl.u32 %v4250, 7
    %v4252 = vsub.s32 %v4249, %v4251
    %v4253 = vrot.slane %v3678, %v4252
    %vm4254 = vcmask 720512
    %v4255 = vsel %vm4254, %v4253, %v4248
    %v4256 = vadd.s32 %v4181, 4294967208
    %v4257 = vlaneseq
    %v4258 = vshrl.u32 %v4257, 7
    %v4259 = vsub.s32 %v4256, %v4258
    %v4260 = vrot.slane %v3679, %v4259
    %vm4261 = vcmask 786112
    %v4262 = vsel %vm4261, %v4260, %v4255
    %v4263 = vadd.s32 %v4181, 4294967200
    %v4264 = vlaneseq
    %v4265 = vshrl.u32 %v4264, 7
    %v4266 = vsub.s32 %v4263, %v4265
    %v4267 = vrot.slane %v3680, %v4266
    %vm4268 = vcmask 851712
    %v4269 = vsel %vm4268, %v4267, %v4262
    %v4270 = vadd.s32 %v4181, 4294967192
    %v4271 = vlaneseq
    %v4272 = vshrl.u32 %v4271, 7
    %v4273 = vsub.s32 %v4270, %v4272
    %v4274 = vrot.slane %v3681, %v4273
    %vm4275 = vcmask 917312
    %v4276 = vsel %vm4275, %v4274, %v4269
    %v4277 = vadd.s32 %v4181, 4294967184
    %v4278 = vlaneseq
    %v4279 = vshrl.u32 %v4278, 7
    %v4280 = vsub.s32 %v4277, %v4279
    %v4281 = vrot.slane %v3682, %v4280
    %vm4282 = vcmask 982912
    %v4283 = vsel %vm4282, %v4281, %v4276
    %v4284 = vadd.s32 %v4181, 4294967176
    %v4285 = vlaneseq
    %v4286 = vshrl.u32 %v4285, 7
    %v4287 = vsub.s32 %v4284, %v4286
    %v4288 = vrot.slane %v3683, %v4287
    %vm4289 = vcmask 1048512
    %v4290 = vsel %vm4289, %v4288, %v4283
    %v4291 = vlaneseq
    %v4292 = vshrl.u32 %v4291, 7
    %v4293 = vsub.s32 %v4181, %v4292
    %v4294 = vrot.slane %v3684, %v4293
    %v4295 = vlaneseq
    %v4296 = vshrl.u32 %v4295, 7
    %v4297 = vsub.s32 %v4186, %v4296
    %v4298 = vrot.slane %v3685, %v4297
    %v4299 = vsel %vm4191, %v4298, %v4294
    %v4300 = vlaneseq
    %v4301 = vshrl.u32 %v4300, 7
    %v4302 = vsub.s32 %v4193, %v4301
    %v4303 = vrot.slane %v3686, %v4302
    %v4304 = vsel %vm4198, %v4303, %v4299
    %v4305 = vlaneseq
    %v4306 = vshrl.u32 %v4305, 7
    %v4307 = vsub.s32 %v4200, %v4306
    %v4308 = vrot.slane %v3687, %v4307
    %v4309 = vsel %vm4205, %v4308, %v4304
    %v4310 = vlaneseq
    %v4311 = vshrl.u32 %v4310, 7
    %v4312 = vsub.s32 %v4207, %v4311
    %v4313 = vrot.slane %v3688, %v4312
    %v4314 = vsel %vm4212, %v4313, %v4309
    %v4315 = vlaneseq
    %v4316 = vshrl.u32 %v4315, 7
    %v4317 = vsub.s32 %v4214, %v4316
    %v4318 = vrot.slane %v3689, %v4317
    %v4319 = vsel %vm4219, %v4318, %v4314
    %v4320 = vlaneseq
    %v4321 = vshrl.u32 %v4320, 7
    %v4322 = vsub.s32 %v4221, %v4321
    %v4323 = vrot.slane %v3690, %v4322
    %v4324 = vsel %vm4226, %v4323, %v4319
    %v4325 = vlaneseq
    %v4326 = vshrl.u32 %v4325, 7
    %v4327 = vsub.s32 %v4228, %v4326
    %v4328 = vrot.slane %v3691, %v4327
    %v4329 = vsel %vm4233, %v4328, %v4324
    %v4330 = vlaneseq
    %v4331 = vshrl.u32 %v4330, 7
    %v4332 = vsub.s32 %v4235, %v4331
    %v4333 = vrot.slane %v3692, %v4332
    %v4334 = vsel %vm4240, %v4333, %v4329
    %v4335 = vlaneseq
    %v4336 = vshrl.u32 %v4335, 7
    %v4337 = vsub.s32 %v4242, %v4336
    %v4338 = vrot.slane %v3693, %v4337
    %v4339 = vsel %vm4247, %v4338, %v4334
    %v4340 = vlaneseq
    %v4341 = vshrl.u32 %v4340, 7
    %v4342 = vsub.s32 %v4249, %v4341
    %v4343 = vrot.slane %v3694, %v4342
    %v4344 = vsel %vm4254, %v4343, %v4339
    %v4345 = vlaneseq
    %v4346 = vshrl.u32 %v4345, 7
    %v4347 = vsub.s32 %v4256, %v4346
    %v4348 = vrot.slane %v3695, %v4347
    %v4349 = vsel %vm4261, %v4348, %v4344
    %v4350 = vlaneseq
    %v4351 = vshrl.u32 %v4350, 7
    %v4352 = vsub.s32 %v4263, %v4351
    %v4353 = vrot.slane %v3696, %v4352
    %v4354 = vsel %vm4268, %v4353, %v4349
    %v4355 = vlaneseq
    %v4356 = vshrl.u32 %v4355, 7
    %v4357 = vsub.s32 %v4270, %v4356
    %v4358 = vrot.slane %v3697, %v4357
    %v4359 = vsel %vm4275, %v4358, %v4354
    %v4360 = vlaneseq
    %v4361 = vshrl.u32 %v4360, 7
    %v4362 = vsub.s32 %v4277, %v4361
    %v4363 = vrot.slane %v3698, %v4362
    %v4364 = vsel %vm4282, %v4363, %v4359
    %v4365 = vlaneseq
    %v4366 = vshrl.u32 %v4365, 7
    %v4367 = vsub.s32 %v4284, %v4366
    %v4368 = vrot.slane %v3699, %v4367
    %v4369 = vsel %vm4289, %v4368, %v4364
    %v4370 = vlaneseq
    %v4371 = vshrl.u32 %v4370, 7
    %v4372 = vsub.s32 %v4181, %v4371
    %v4373 = vrot.slane %v3700, %v4372
    %v4374 = vlaneseq
    %v4375 = vshrl.u32 %v4374, 7
    %v4376 = vsub.s32 %v4186, %v4375
    %v4377 = vrot.slane %v3701, %v4376
    %v4378 = vsel %vm4191, %v4377, %v4373
    %v4379 = vlaneseq
    %v4380 = vshrl.u32 %v4379, 7
    %v4381 = vsub.s32 %v4193, %v4380
    %v4382 = vrot.slane %v3702, %v4381
    %v4383 = vsel %vm4198, %v4382, %v4378
    %v4384 = vlaneseq
    %v4385 = vshrl.u32 %v4384, 7
    %v4386 = vsub.s32 %v4200, %v4385
    %v4387 = vrot.slane %v3703, %v4386
    %v4388 = vsel %vm4205, %v4387, %v4383
    %v4389 = vlaneseq
    %v4390 = vshrl.u32 %v4389, 7
    %v4391 = vsub.s32 %v4207, %v4390
    %v4392 = vrot.slane %v3704, %v4391
    %v4393 = vsel %vm4212, %v4392, %v4388
    %v4394 = vlaneseq
    %v4395 = vshrl.u32 %v4394, 7
    %v4396 = vsub.s32 %v4214, %v4395
    %v4397 = vrot.slane %v3705, %v4396
    %v4398 = vsel %vm4219, %v4397, %v4393
    %v4399 = vlaneseq
    %v4400 = vshrl.u32 %v4399, 7
    %v4401 = vsub.s32 %v4221, %v4400
    %v4402 = vrot.slane %v3706, %v4401
    %v4403 = vsel %vm4226, %v4402, %v4398
    %v4404 = vlaneseq
    %v4405 = vshrl.u32 %v4404, 7
    %v4406 = vsub.s32 %v4228, %v4405
    %v4407 = vrot.slane %v3707, %v4406
    %v4408 = vsel %vm4233, %v4407, %v4403
    %v4409 = vlaneseq
    %v4410 = vshrl.u32 %v4409, 7
    %v4411 = vsub.s32 %v4235, %v4410
    %v4412 = vrot.slane %v3708, %v4411
    %v4413 = vsel %vm4240, %v4412, %v4408
    %v4414 = vlaneseq
    %v4415 = vshrl.u32 %v4414, 7
    %v4416 = vsub.s32 %v4242, %v4415
    %v4417 = vrot.slane %v3709, %v4416
    %v4418 = vsel %vm4247, %v4417, %v4413
    %v4419 = vlaneseq
    %v4420 = vshrl.u32 %v4419, 7
    %v4421 = vsub.s32 %v4249, %v4420
    %v4422 = vrot.slane %v3710, %v4421
    %v4423 = vsel %vm4254, %v4422, %v4418
    %v4424 = vlaneseq
    %v4425 = vshrl.u32 %v4424, 7
    %v4426 = vsub.s32 %v4256, %v4425
    %v4427 = vrot.slane %v3711, %v4426
    %v4428 = vsel %vm4261, %v4427, %v4423
    %v4429 = vlaneseq
    %v4430 = vshrl.u32 %v4429, 7
    %v4431 = vsub.s32 %v4263, %v4430
    %v4432 = vrot.slane %v3712, %v4431
    %v4433 = vsel %vm4268, %v4432, %v4428
    %v4434 = vlaneseq
    %v4435 = vshrl.u32 %v4434, 7
    %v4436 = vsub.s32 %v4270, %v4435
    %v4437 = vrot.slane %v3713, %v4436
    %v4438 = vsel %vm4275, %v4437, %v4433
    %v4439 = vlaneseq
    %v4440 = vshrl.u32 %v4439, 7
    %v4441 = vsub.s32 %v4277, %v4440
    %v4442 = vrot.slane %v3714, %v4441
    %v4443 = vsel %vm4282, %v4442, %v4438
    %v4444 = vlaneseq
    %v4445 = vshrl.u32 %v4444, 7
    %v4446 = vsub.s32 %v4284, %v4445
    %v4447 = vrot.slane %v3715, %v4446
    %v4448 = vsel %vm4289, %v4447, %v4443
    %v4449 = vlaneseq
    %v4450 = vshrl.u32 %v4449, 7
    %v4451 = vsub.s32 %v4181, %v4450
    %v4452 = vrot.slane %v3716, %v4451
    %v4453 = vlaneseq
    %v4454 = vshrl.u32 %v4453, 7
    %v4455 = vsub.s32 %v4186, %v4454
    %v4456 = vrot.slane %v3717, %v4455
    %v4457 = vsel %vm4191, %v4456, %v4452
    %v4458 = vlaneseq
    %v4459 = vshrl.u32 %v4458, 7
    %v4460 = vsub.s32 %v4193, %v4459
    %v4461 = vrot.slane %v3718, %v4460
    %v4462 = vsel %vm4198, %v4461, %v4457
    %v4463 = vlaneseq
    %v4464 = vshrl.u32 %v4463, 7
    %v4465 = vsub.s32 %v4200, %v4464
    %v4466 = vrot.slane %v3719, %v4465
    %v4467 = vsel %vm4205, %v4466, %v4462
    %v4468 = vlaneseq
    %v4469 = vshrl.u32 %v4468, 7
    %v4470 = vsub.s32 %v4207, %v4469
    %v4471 = vrot.slane %v3720, %v4470
    %v4472 = vsel %vm4212, %v4471, %v4467
    %v4473 = vlaneseq
    %v4474 = vshrl.u32 %v4473, 7
    %v4475 = vsub.s32 %v4214, %v4474
    %v4476 = vrot.slane %v3721, %v4475
    %v4477 = vsel %vm4219, %v4476, %v4472
    %v4478 = vlaneseq
    %v4479 = vshrl.u32 %v4478, 7
    %v4480 = vsub.s32 %v4221, %v4479
    %v4481 = vrot.slane %v3722, %v4480
    %v4482 = vsel %vm4226, %v4481, %v4477
    %v4483 = vlaneseq
    %v4484 = vshrl.u32 %v4483, 7
    %v4485 = vsub.s32 %v4228, %v4484
    %v4486 = vrot.slane %v3723, %v4485
    %v4487 = vsel %vm4233, %v4486, %v4482
    %v4488 = vlaneseq
    %v4489 = vshrl.u32 %v4488, 7
    %v4490 = vsub.s32 %v4235, %v4489
    %v4491 = vrot.slane %v3724, %v4490
    %v4492 = vsel %vm4240, %v4491, %v4487
    %v4493 = vlaneseq
    %v4494 = vshrl.u32 %v4493, 7
    %v4495 = vsub.s32 %v4242, %v4494
    %v4496 = vrot.slane %v3725, %v4495
    %v4497 = vsel %vm4247, %v4496, %v4492
    %v4498 = vlaneseq
    %v4499 = vshrl.u32 %v4498, 7
    %v4500 = vsub.s32 %v4249, %v4499
    %v4501 = vrot.slane %v3726, %v4500
    %v4502 = vsel %vm4254, %v4501, %v4497
    %v4503 = vlaneseq
    %v4504 = vshrl.u32 %v4503, 7
    %v4505 = vsub.s32 %v4256, %v4504
    %v4506 = vrot.slane %v3727, %v4505
    %v4507 = vsel %vm4261, %v4506, %v4502
    %v4508 = vlaneseq
    %v4509 = vshrl.u32 %v4508, 7
    %v4510 = vsub.s32 %v4263, %v4509
    %v4511 = vrot.slane %v3728, %v4510
    %v4512 = vsel %vm4268, %v4511, %v4507
    %v4513 = vlaneseq
    %v4514 = vshrl.u32 %v4513, 7
    %v4515 = vsub.s32 %v4270, %v4514
    %v4516 = vrot.slane %v3729, %v4515
    %v4517 = vsel %vm4275, %v4516, %v4512
    %v4518 = vlaneseq
    %v4519 = vshrl.u32 %v4518, 7
    %v4520 = vsub.s32 %v4277, %v4519
    %v4521 = vrot.slane %v3730, %v4520
    %v4522 = vsel %vm4282, %v4521, %v4517
    %v4523 = vlaneseq
    %v4524 = vshrl.u32 %v4523, 7
    %v4525 = vsub.s32 %v4284, %v4524
    %v4526 = vrot.slane %v3731, %v4525
    %v4527 = vsel %vm4289, %v4526, %v4522
    %v4528 = vlaneseq
    %v4529 = vshrl.u32 %v4528, 7
    %v4530 = vsub.s32 %v4181, %v4529
    %v4531 = vrot.slane %v3732, %v4530
    %v4532 = vlaneseq
    %v4533 = vshrl.u32 %v4532, 7
    %v4534 = vsub.s32 %v4186, %v4533
    %v4535 = vrot.slane %v3733, %v4534
    %v4536 = vsel %vm4191, %v4535, %v4531
    %v4537 = vlaneseq
    %v4538 = vshrl.u32 %v4537, 7
    %v4539 = vsub.s32 %v4193, %v4538
    %v4540 = vrot.slane %v3734, %v4539
    %v4541 = vsel %vm4198, %v4540, %v4536
    %v4542 = vlaneseq
    %v4543 = vshrl.u32 %v4542, 7
    %v4544 = vsub.s32 %v4200, %v4543
    %v4545 = vrot.slane %v3735, %v4544
    %v4546 = vsel %vm4205, %v4545, %v4541
    %v4547 = vlaneseq
    %v4548 = vshrl.u32 %v4547, 7
    %v4549 = vsub.s32 %v4207, %v4548
    %v4550 = vrot.slane %v3736, %v4549
    %v4551 = vsel %vm4212, %v4550, %v4546
    %v4552 = vlaneseq
    %v4553 = vshrl.u32 %v4552, 7
    %v4554 = vsub.s32 %v4214, %v4553
    %v4555 = vrot.slane %v3737, %v4554
    %v4556 = vsel %vm4219, %v4555, %v4551
    %v4557 = vlaneseq
    %v4558 = vshrl.u32 %v4557, 7
    %v4559 = vsub.s32 %v4221, %v4558
    %v4560 = vrot.slane %v3738, %v4559
    %v4561 = vsel %vm4226, %v4560, %v4556
    %v4562 = vlaneseq
    %v4563 = vshrl.u32 %v4562, 7
    %v4564 = vsub.s32 %v4228, %v4563
    %v4565 = vrot.slane %v3739, %v4564
    %v4566 = vsel %vm4233, %v4565, %v4561
    %v4567 = vlaneseq
    %v4568 = vshrl.u32 %v4567, 7
    %v4569 = vsub.s32 %v4235, %v4568
    %v4570 = vrot.slane %v3740, %v4569
    %v4571 = vsel %vm4240, %v4570, %v4566
    %v4572 = vlaneseq
    %v4573 = vshrl.u32 %v4572, 7
    %v4574 = vsub.s32 %v4242, %v4573
    %v4575 = vrot.slane %v3741, %v4574
    %v4576 = vsel %vm4247, %v4575, %v4571
    %v4577 = vlaneseq
    %v4578 = vshrl.u32 %v4577, 7
    %v4579 = vsub.s32 %v4249, %v4578
    %v4580 = vrot.slane %v3742, %v4579
    %v4581 = vsel %vm4254, %v4580, %v4576
    %v4582 = vlaneseq
    %v4583 = vshrl.u32 %v4582, 7
    %v4584 = vsub.s32 %v4256, %v4583
    %v4585 = vrot.slane %v3743, %v4584
    %v4586 = vsel %vm4261, %v4585, %v4581
    %v4587 = vlaneseq
    %v4588 = vshrl.u32 %v4587, 7
    %v4589 = vsub.s32 %v4263, %v4588
    %v4590 = vrot.slane %v3744, %v4589
    %v4591 = vsel %vm4268, %v4590, %v4586
    %v4592 = vlaneseq
    %v4593 = vshrl.u32 %v4592, 7
    %v4594 = vsub.s32 %v4270, %v4593
    %v4595 = vrot.slane %v3745, %v4594
    %v4596 = vsel %vm4275, %v4595, %v4591
    %v4597 = vlaneseq
    %v4598 = vshrl.u32 %v4597, 7
    %v4599 = vsub.s32 %v4277, %v4598
    %v4600 = vrot.slane %v3746, %v4599
    %v4601 = vsel %vm4282, %v4600, %v4596
    %v4602 = vlaneseq
    %v4603 = vshrl.u32 %v4602, 7
    %v4604 = vsub.s32 %v4284, %v4603
    %v4605 = vrot.slane %v3747, %v4604
    %v4606 = vsel %vm4289, %v4605, %v4601
    %v4607 = vlaneseq
    %v4608 = vshrl.u32 %v4607, 7
    %v4609 = vsub.s32 %v4181, %v4608
    %v4610 = vrot.slane %v3748, %v4609
    %v4611 = vlaneseq
    %v4612 = vshrl.u32 %v4611, 7
    %v4613 = vsub.s32 %v4186, %v4612
    %v4614 = vrot.slane %v3749, %v4613
    %v4615 = vsel %vm4191, %v4614, %v4610
    %v4616 = vlaneseq
    %v4617 = vshrl.u32 %v4616, 7
    %v4618 = vsub.s32 %v4193, %v4617
    %v4619 = vrot.slane %v3750, %v4618
    %v4620 = vsel %vm4198, %v4619, %v4615
    %v4621 = vlaneseq
    %v4622 = vshrl.u32 %v4621, 7
    %v4623 = vsub.s32 %v4200, %v4622
    %v4624 = vrot.slane %v3751, %v4623
    %v4625 = vsel %vm4205, %v4624, %v4620
    %v4626 = vlaneseq
    %v4627 = vshrl.u32 %v4626, 7
    %v4628 = vsub.s32 %v4207, %v4627
    %v4629 = vrot.slane %v3752, %v4628
    %v4630 = vsel %vm4212, %v4629, %v4625
    %v4631 = vlaneseq
    %v4632 = vshrl.u32 %v4631, 7
    %v4633 = vsub.s32 %v4214, %v4632
    %v4634 = vrot.slane %v3753, %v4633
    %v4635 = vsel %vm4219, %v4634, %v4630
    %v4636 = vlaneseq
    %v4637 = vshrl.u32 %v4636, 7
    %v4638 = vsub.s32 %v4221, %v4637
    %v4639 = vrot.slane %v3754, %v4638
    %v4640 = vsel %vm4226, %v4639, %v4635
    %v4641 = vlaneseq
    %v4642 = vshrl.u32 %v4641, 7
    %v4643 = vsub.s32 %v4228, %v4642
    %v4644 = vrot.slane %v3755, %v4643
    %v4645 = vsel %vm4233, %v4644, %v4640
    %v4646 = vlaneseq
    %v4647 = vshrl.u32 %v4646, 7
    %v4648 = vsub.s32 %v4235, %v4647
    %v4649 = vrot.slane %v3756, %v4648
    %v4650 = vsel %vm4240, %v4649, %v4645
    %v4651 = vlaneseq
    %v4652 = vshrl.u32 %v4651, 7
    %v4653 = vsub.s32 %v4242, %v4652
    %v4654 = vrot.slane %v3757, %v4653
    %v4655 = vsel %vm4247, %v4654, %v4650
    %v4656 = vlaneseq
    %v4657 = vshrl.u32 %v4656, 7
    %v4658 = vsub.s32 %v4249, %v4657
    %v4659 = vrot.slane %v3758, %v4658
    %v4660 = vsel %vm4254, %v4659, %v4655
    %v4661 = vlaneseq
    %v4662 = vshrl.u32 %v4661, 7
    %v4663 = vsub.s32 %v4256, %v4662
    %v4664 = vrot.slane %v3759, %v4663
    %v4665 = vsel %vm4261, %v4664, %v4660
    %v4666 = vlaneseq
    %v4667 = vshrl.u32 %v4666, 7
    %v4668 = vsub.s32 %v4263, %v4667
    %v4669 = vrot.slane %v3760, %v4668
    %v4670 = vsel %vm4268, %v4669, %v4665
    %v4671 = vlaneseq
    %v4672 = vshrl.u32 %v4671, 7
    %v4673 = vsub.s32 %v4270, %v4672
    %v4674 = vrot.slane %v3761, %v4673
    %v4675 = vsel %vm4275, %v4674, %v4670
    %v4676 = vlaneseq
    %v4677 = vshrl.u32 %v4676, 7
    %v4678 = vsub.s32 %v4277, %v4677
    %v4679 = vrot.slane %v3762, %v4678
    %v4680 = vsel %vm4282, %v4679, %v4675
    %v4681 = vlaneseq
    %v4682 = vshrl.u32 %v4681, 7
    %v4683 = vsub.s32 %v4284, %v4682
    %v4684 = vrot.slane %v3763, %v4683
    %v4685 = vsel %vm4289, %v4684, %v4680
    %v4686 = vlaneseq
    %v4687 = vshrl.u32 %v4686, 7
    %v4688 = vsub.s32 %v4181, %v4687
    %v4689 = vrot.slane %v3764, %v4688
    %v4690 = vlaneseq
    %v4691 = vshrl.u32 %v4690, 7
    %v4692 = vsub.s32 %v4186, %v4691
    %v4693 = vrot.slane %v3765, %v4692
    %v4694 = vsel %vm4191, %v4693, %v4689
    %v4695 = vlaneseq
    %v4696 = vshrl.u32 %v4695, 7
    %v4697 = vsub.s32 %v4193, %v4696
    %v4698 = vrot.slane %v3766, %v4697
    %v4699 = vsel %vm4198, %v4698, %v4694
    %v4700 = vlaneseq
    %v4701 = vshrl.u32 %v4700, 7
    %v4702 = vsub.s32 %v4200, %v4701
    %v4703 = vrot.slane %v3767, %v4702
    %v4704 = vsel %vm4205, %v4703, %v4699
    %v4705 = vlaneseq
    %v4706 = vshrl.u32 %v4705, 7
    %v4707 = vsub.s32 %v4207, %v4706
    %v4708 = vrot.slane %v3768, %v4707
    %v4709 = vsel %vm4212, %v4708, %v4704
    %v4710 = vlaneseq
    %v4711 = vshrl.u32 %v4710, 7
    %v4712 = vsub.s32 %v4214, %v4711
    %v4713 = vrot.slane %v3769, %v4712
    %v4714 = vsel %vm4219, %v4713, %v4709
    %v4715 = vlaneseq
    %v4716 = vshrl.u32 %v4715, 7
    %v4717 = vsub.s32 %v4221, %v4716
    %v4718 = vrot.slane %v3770, %v4717
    %v4719 = vsel %vm4226, %v4718, %v4714
    %v4720 = vlaneseq
    %v4721 = vshrl.u32 %v4720, 7
    %v4722 = vsub.s32 %v4228, %v4721
    %v4723 = vrot.slane %v3771, %v4722
    %v4724 = vsel %vm4233, %v4723, %v4719
    %v4725 = vlaneseq
    %v4726 = vshrl.u32 %v4725, 7
    %v4727 = vsub.s32 %v4235, %v4726
    %v4728 = vrot.slane %v3772, %v4727
    %v4729 = vsel %vm4240, %v4728, %v4724
    %v4730 = vlaneseq
    %v4731 = vshrl.u32 %v4730, 7
    %v4732 = vsub.s32 %v4242, %v4731
    %v4733 = vrot.slane %v3773, %v4732
    %v4734 = vsel %vm4247, %v4733, %v4729
    %v4735 = vlaneseq
    %v4736 = vshrl.u32 %v4735, 7
    %v4737 = vsub.s32 %v4249, %v4736
    %v4738 = vrot.slane %v3774, %v4737
    %v4739 = vsel %vm4254, %v4738, %v4734
    %v4740 = vlaneseq
    %v4741 = vshrl.u32 %v4740, 7
    %v4742 = vsub.s32 %v4256, %v4741
    %v4743 = vrot.slane %v3775, %v4742
    %v4744 = vsel %vm4261, %v4743, %v4739
    %v4745 = vlaneseq
    %v4746 = vshrl.u32 %v4745, 7
    %v4747 = vsub.s32 %v4263, %v4746
    %v4748 = vrot.slane %v3776, %v4747
    %v4749 = vsel %vm4268, %v4748, %v4744
    %v4750 = vlaneseq
    %v4751 = vshrl.u32 %v4750, 7
    %v4752 = vsub.s32 %v4270, %v4751
    %v4753 = vrot.slane %v3777, %v4752
    %v4754 = vsel %vm4275, %v4753, %v4749
    %v4755 = vlaneseq
    %v4756 = vshrl.u32 %v4755, 7
    %v4757 = vsub.s32 %v4277, %v4756
    %v4758 = vrot.slane %v3778, %v4757
    %v4759 = vsel %vm4282, %v4758, %v4754
    %v4760 = vlaneseq
    %v4761 = vshrl.u32 %v4760, 7
    %v4762 = vsub.s32 %v4284, %v4761
    %v4763 = vrot.slane %v3779, %v4762
    %v4764 = vsel %vm4289, %v4763, %v4759
    %v4765 = vlaneseq
    %v4766 = vshrl.u32 %v4765, 7
    %v4767 = vsub.s32 %v4181, %v4766
    %v4768 = vrot.slane %v3780, %v4767
    %v4769 = vlaneseq
    %v4770 = vshrl.u32 %v4769, 7
    %v4771 = vsub.s32 %v4186, %v4770
    %v4772 = vrot.slane %v3781, %v4771
    %v4773 = vsel %vm4191, %v4772, %v4768
    %v4774 = vlaneseq
    %v4775 = vshrl.u32 %v4774, 7
    %v4776 = vsub.s32 %v4193, %v4775
    %v4777 = vrot.slane %v3782, %v4776
    %v4778 = vsel %vm4198, %v4777, %v4773
    %v4779 = vlaneseq
    %v4780 = vshrl.u32 %v4779, 7
    %v4781 = vsub.s32 %v4200, %v4780
    %v4782 = vrot.slane %v3783, %v4781
    %v4783 = vsel %vm4205, %v4782, %v4778
    %v4784 = vlaneseq
    %v4785 = vshrl.u32 %v4784, 7
    %v4786 = vsub.s32 %v4207, %v4785
    %v4787 = vrot.slane %v3784, %v4786
    %v4788 = vsel %vm4212, %v4787, %v4783
    %v4789 = vlaneseq
    %v4790 = vshrl.u32 %v4789, 7
    %v4791 = vsub.s32 %v4214, %v4790
    %v4792 = vrot.slane %v3785, %v4791
    %v4793 = vsel %vm4219, %v4792, %v4788
    %v4794 = vlaneseq
    %v4795 = vshrl.u32 %v4794, 7
    %v4796 = vsub.s32 %v4221, %v4795
    %v4797 = vrot.slane %v3786, %v4796
    %v4798 = vsel %vm4226, %v4797, %v4793
    %v4799 = vlaneseq
    %v4800 = vshrl.u32 %v4799, 7
    %v4801 = vsub.s32 %v4228, %v4800
    %v4802 = vrot.slane %v3787, %v4801
    %v4803 = vsel %vm4233, %v4802, %v4798
    %v4804 = vlaneseq
    %v4805 = vshrl.u32 %v4804, 7
    %v4806 = vsub.s32 %v4235, %v4805
    %v4807 = vrot.slane %v3788, %v4806
    %v4808 = vsel %vm4240, %v4807, %v4803
    %v4809 = vlaneseq
    %v4810 = vshrl.u32 %v4809, 7
    %v4811 = vsub.s32 %v4242, %v4810
    %v4812 = vrot.slane %v3789, %v4811
    %v4813 = vsel %vm4247, %v4812, %v4808
    %v4814 = vlaneseq
    %v4815 = vshrl.u32 %v4814, 7
    %v4816 = vsub.s32 %v4249, %v4815
    %v4817 = vrot.slane %v3790, %v4816
    %v4818 = vsel %vm4254, %v4817, %v4813
    %v4819 = vlaneseq
    %v4820 = vshrl.u32 %v4819, 7
    %v4821 = vsub.s32 %v4256, %v4820
    %v4822 = vrot.slane %v3791, %v4821
    %v4823 = vsel %vm4261, %v4822, %v4818
    %v4824 = vlaneseq
    %v4825 = vshrl.u32 %v4824, 7
    %v4826 = vsub.s32 %v4263, %v4825
    %v4827 = vrot.slane %v3792, %v4826
    %v4828 = vsel %vm4268, %v4827, %v4823
    %v4829 = vlaneseq
    %v4830 = vshrl.u32 %v4829, 7
    %v4831 = vsub.s32 %v4270, %v4830
    %v4832 = vrot.slane %v3793, %v4831
    %v4833 = vsel %vm4275, %v4832, %v4828
    %v4834 = vlaneseq
    %v4835 = vshrl.u32 %v4834, 7
    %v4836 = vsub.s32 %v4277, %v4835
    %v4837 = vrot.slane %v3794, %v4836
    %v4838 = vsel %vm4282, %v4837, %v4833
    %v4839 = vlaneseq
    %v4840 = vshrl.u32 %v4839, 7
    %v4841 = vsub.s32 %v4284, %v4840
    %v4842 = vrot.slane %v3795, %v4841
    %v4843 = vsel %vm4289, %v4842, %v4838
    %v4844 = vlaneseq
    %v4845 = vshrl.u32 %v4844, 7
    %v4846 = vsub.s32 %v4181, %v4845
    %v4847 = vrot.slane %v3796, %v4846
    %v4848 = vlaneseq
    %v4849 = vshrl.u32 %v4848, 7
    %v4850 = vsub.s32 %v4186, %v4849
    %v4851 = vrot.slane %v3797, %v4850
    %v4852 = vsel %vm4191, %v4851, %v4847
    %v4853 = vlaneseq
    %v4854 = vshrl.u32 %v4853, 7
    %v4855 = vsub.s32 %v4193, %v4854
    %v4856 = vrot.slane %v3798, %v4855
    %v4857 = vsel %vm4198, %v4856, %v4852
    %v4858 = vlaneseq
    %v4859 = vshrl.u32 %v4858, 7
    %v4860 = vsub.s32 %v4200, %v4859
    %v4861 = vrot.slane %v3799, %v4860
    %v4862 = vsel %vm4205, %v4861, %v4857
    %v4863 = vlaneseq
    %v4864 = vshrl.u32 %v4863, 7
    %v4865 = vsub.s32 %v4207, %v4864
    %v4866 = vrot.slane %v3800, %v4865
    %v4867 = vsel %vm4212, %v4866, %v4862
    %v4868 = vlaneseq
    %v4869 = vshrl.u32 %v4868, 7
    %v4870 = vsub.s32 %v4214, %v4869
    %v4871 = vrot.slane %v3801, %v4870
    %v4872 = vsel %vm4219, %v4871, %v4867
    %v4873 = vlaneseq
    %v4874 = vshrl.u32 %v4873, 7
    %v4875 = vsub.s32 %v4221, %v4874
    %v4876 = vrot.slane %v3802, %v4875
    %v4877 = vsel %vm4226, %v4876, %v4872
    %v4878 = vlaneseq
    %v4879 = vshrl.u32 %v4878, 7
    %v4880 = vsub.s32 %v4228, %v4879
    %v4881 = vrot.slane %v3803, %v4880
    %v4882 = vsel %vm4233, %v4881, %v4877
    %v4883 = vlaneseq
    %v4884 = vshrl.u32 %v4883, 7
    %v4885 = vsub.s32 %v4235, %v4884
    %v4886 = vrot.slane %v3804, %v4885
    %v4887 = vsel %vm4240, %v4886, %v4882
    %v4888 = vlaneseq
    %v4889 = vshrl.u32 %v4888, 7
    %v4890 = vsub.s32 %v4242, %v4889
    %v4891 = vrot.slane %v3805, %v4890
    %v4892 = vsel %vm4247, %v4891, %v4887
    %v4893 = vlaneseq
    %v4894 = vshrl.u32 %v4893, 7
    %v4895 = vsub.s32 %v4249, %v4894
    %v4896 = vrot.slane %v3806, %v4895
    %v4897 = vsel %vm4254, %v4896, %v4892
    %v4898 = vlaneseq
    %v4899 = vshrl.u32 %v4898, 7
    %v4900 = vsub.s32 %v4256, %v4899
    %v4901 = vrot.slane %v3807, %v4900
    %v4902 = vsel %vm4261, %v4901, %v4897
    %v4903 = vlaneseq
    %v4904 = vshrl.u32 %v4903, 7
    %v4905 = vsub.s32 %v4263, %v4904
    %v4906 = vrot.slane %v3808, %v4905
    %v4907 = vsel %vm4268, %v4906, %v4902
    %v4908 = vlaneseq
    %v4909 = vshrl.u32 %v4908, 7
    %v4910 = vsub.s32 %v4270, %v4909
    %v4911 = vrot.slane %v3809, %v4910
    %v4912 = vsel %vm4275, %v4911, %v4907
    %v4913 = vlaneseq
    %v4914 = vshrl.u32 %v4913, 7
    %v4915 = vsub.s32 %v4277, %v4914
    %v4916 = vrot.slane %v3810, %v4915
    %v4917 = vsel %vm4282, %v4916, %v4912
    %v4918 = vlaneseq
    %v4919 = vshrl.u32 %v4918, 7
    %v4920 = vsub.s32 %v4284, %v4919
    %v4921 = vrot.slane %v3811, %v4920
    %v4922 = vsel %vm4289, %v4921, %v4917
    %v4923 = vlaneseq
    %v4924 = vshrl.u32 %v4923, 7
    %v4925 = vsub.s32 %v4181, %v4924
    %v4926 = vrot.slane %v3812, %v4925
    %v4927 = vlaneseq
    %v4928 = vshrl.u32 %v4927, 7
    %v4929 = vsub.s32 %v4186, %v4928
    %v4930 = vrot.slane %v3813, %v4929
    %v4931 = vsel %vm4191, %v4930, %v4926
    %v4932 = vlaneseq
    %v4933 = vshrl.u32 %v4932, 7
    %v4934 = vsub.s32 %v4193, %v4933
    %v4935 = vrot.slane %v3814, %v4934
    %v4936 = vsel %vm4198, %v4935, %v4931
    %v4937 = vlaneseq
    %v4938 = vshrl.u32 %v4937, 7
    %v4939 = vsub.s32 %v4200, %v4938
    %v4940 = vrot.slane %v3815, %v4939
    %v4941 = vsel %vm4205, %v4940, %v4936
    %v4942 = vlaneseq
    %v4943 = vshrl.u32 %v4942, 7
    %v4944 = vsub.s32 %v4207, %v4943
    %v4945 = vrot.slane %v3816, %v4944
    %v4946 = vsel %vm4212, %v4945, %v4941
    %v4947 = vlaneseq
    %v4948 = vshrl.u32 %v4947, 7
    %v4949 = vsub.s32 %v4214, %v4948
    %v4950 = vrot.slane %v3817, %v4949
    %v4951 = vsel %vm4219, %v4950, %v4946
    %v4952 = vlaneseq
    %v4953 = vshrl.u32 %v4952, 7
    %v4954 = vsub.s32 %v4221, %v4953
    %v4955 = vrot.slane %v3818, %v4954
    %v4956 = vsel %vm4226, %v4955, %v4951
    %v4957 = vlaneseq
    %v4958 = vshrl.u32 %v4957, 7
    %v4959 = vsub.s32 %v4228, %v4958
    %v4960 = vrot.slane %v3819, %v4959
    %v4961 = vsel %vm4233, %v4960, %v4956
    %v4962 = vlaneseq
    %v4963 = vshrl.u32 %v4962, 7
    %v4964 = vsub.s32 %v4235, %v4963
    %v4965 = vrot.slane %v3820, %v4964
    %v4966 = vsel %vm4240, %v4965, %v4961
    %v4967 = vlaneseq
    %v4968 = vshrl.u32 %v4967, 7
    %v4969 = vsub.s32 %v4242, %v4968
    %v4970 = vrot.slane %v3821, %v4969
    %v4971 = vsel %vm4247, %v4970, %v4966
    %v4972 = vlaneseq
    %v4973 = vshrl.u32 %v4972, 7
    %v4974 = vsub.s32 %v4249, %v4973
    %v4975 = vrot.slane %v3822, %v4974
    %v4976 = vsel %vm4254, %v4975, %v4971
    %v4977 = vlaneseq
    %v4978 = vshrl.u32 %v4977, 7
    %v4979 = vsub.s32 %v4256, %v4978
    %v4980 = vrot.slane %v3823, %v4979
    %v4981 = vsel %vm4261, %v4980, %v4976
    %v4982 = vlaneseq
    %v4983 = vshrl.u32 %v4982, 7
    %v4984 = vsub.s32 %v4263, %v4983
    %v4985 = vrot.slane %v3824, %v4984
    %v4986 = vsel %vm4268, %v4985, %v4981
    %v4987 = vlaneseq
    %v4988 = vshrl.u32 %v4987, 7
    %v4989 = vsub.s32 %v4270, %v4988
    %v4990 = vrot.slane %v3825, %v4989
    %v4991 = vsel %vm4275, %v4990, %v4986
    %v4992 = vlaneseq
    %v4993 = vshrl.u32 %v4992, 7
    %v4994 = vsub.s32 %v4277, %v4993
    %v4995 = vrot.slane %v3826, %v4994
    %v4996 = vsel %vm4282, %v4995, %v4991
    %v4997 = vlaneseq
    %v4998 = vshrl.u32 %v4997, 7
    %v4999 = vsub.s32 %v4284, %v4998
    %v5000 = vrot.slane %v3827, %v4999
    %v5001 = vsel %vm4289, %v5000, %v4996
    %v5002 = vlaneseq
    %v5003 = vshrl.u32 %v5002, 7
    %v5004 = vsub.s32 %v4181, %v5003
    %v5005 = vrot.slane %v3828, %v5004
    %v5006 = vlaneseq
    %v5007 = vshrl.u32 %v5006, 7
    %v5008 = vsub.s32 %v4186, %v5007
    %v5009 = vrot.slane %v3829, %v5008
    %v5010 = vsel %vm4191, %v5009, %v5005
    %v5011 = vlaneseq
    %v5012 = vshrl.u32 %v5011, 7
    %v5013 = vsub.s32 %v4193, %v5012
    %v5014 = vrot.slane %v3830, %v5013
    %v5015 = vsel %vm4198, %v5014, %v5010
    %v5016 = vlaneseq
    %v5017 = vshrl.u32 %v5016, 7
    %v5018 = vsub.s32 %v4200, %v5017
    %v5019 = vrot.slane %v3831, %v5018
    %v5020 = vsel %vm4205, %v5019, %v5015
    %v5021 = vlaneseq
    %v5022 = vshrl.u32 %v5021, 7
    %v5023 = vsub.s32 %v4207, %v5022
    %v5024 = vrot.slane %v3832, %v5023
    %v5025 = vsel %vm4212, %v5024, %v5020
    %v5026 = vlaneseq
    %v5027 = vshrl.u32 %v5026, 7
    %v5028 = vsub.s32 %v4214, %v5027
    %v5029 = vrot.slane %v3833, %v5028
    %v5030 = vsel %vm4219, %v5029, %v5025
    %v5031 = vlaneseq
    %v5032 = vshrl.u32 %v5031, 7
    %v5033 = vsub.s32 %v4221, %v5032
    %v5034 = vrot.slane %v3834, %v5033
    %v5035 = vsel %vm4226, %v5034, %v5030
    %v5036 = vlaneseq
    %v5037 = vshrl.u32 %v5036, 7
    %v5038 = vsub.s32 %v4228, %v5037
    %v5039 = vrot.slane %v3835, %v5038
    %v5040 = vsel %vm4233, %v5039, %v5035
    %v5041 = vlaneseq
    %v5042 = vshrl.u32 %v5041, 7
    %v5043 = vsub.s32 %v4235, %v5042
    %v5044 = vrot.slane %v3836, %v5043
    %v5045 = vsel %vm4240, %v5044, %v5040
    %v5046 = vlaneseq
    %v5047 = vshrl.u32 %v5046, 7
    %v5048 = vsub.s32 %v4242, %v5047
    %v5049 = vrot.slane %v3837, %v5048
    %v5050 = vsel %vm4247, %v5049, %v5045
    %v5051 = vlaneseq
    %v5052 = vshrl.u32 %v5051, 7
    %v5053 = vsub.s32 %v4249, %v5052
    %v5054 = vrot.slane %v3838, %v5053
    %v5055 = vsel %vm4254, %v5054, %v5050
    %v5056 = vlaneseq
    %v5057 = vshrl.u32 %v5056, 7
    %v5058 = vsub.s32 %v4256, %v5057
    %v5059 = vrot.slane %v3839, %v5058
    %v5060 = vsel %vm4261, %v5059, %v5055
    %v5061 = vlaneseq
    %v5062 = vshrl.u32 %v5061, 7
    %v5063 = vsub.s32 %v4263, %v5062
    %v5064 = vrot.slane %v3840, %v5063
    %v5065 = vsel %vm4268, %v5064, %v5060
    %v5066 = vlaneseq
    %v5067 = vshrl.u32 %v5066, 7
    %v5068 = vsub.s32 %v4270, %v5067
    %v5069 = vrot.slane %v3841, %v5068
    %v5070 = vsel %vm4275, %v5069, %v5065
    %v5071 = vlaneseq
    %v5072 = vshrl.u32 %v5071, 7
    %v5073 = vsub.s32 %v4277, %v5072
    %v5074 = vrot.slane %v3842, %v5073
    %v5075 = vsel %vm4282, %v5074, %v5070
    %v5076 = vlaneseq
    %v5077 = vshrl.u32 %v5076, 7
    %v5078 = vsub.s32 %v4284, %v5077
    %v5079 = vrot.slane %v3843, %v5078
    %v5080 = vsel %vm4289, %v5079, %v5075
    %v5081 = vlaneseq
    %v5082 = vshrl.u32 %v5081, 7
    %v5083 = vsub.s32 %v4181, %v5082
    %v5084 = vrot.slane %v3844, %v5083
    %v5085 = vlaneseq
    %v5086 = vshrl.u32 %v5085, 7
    %v5087 = vsub.s32 %v4186, %v5086
    %v5088 = vrot.slane %v3845, %v5087
    %v5089 = vsel %vm4191, %v5088, %v5084
    %v5090 = vlaneseq
    %v5091 = vshrl.u32 %v5090, 7
    %v5092 = vsub.s32 %v4193, %v5091
    %v5093 = vrot.slane %v3846, %v5092
    %v5094 = vsel %vm4198, %v5093, %v5089
    %v5095 = vlaneseq
    %v5096 = vshrl.u32 %v5095, 7
    %v5097 = vsub.s32 %v4200, %v5096
    %v5098 = vrot.slane %v3847, %v5097
    %v5099 = vsel %vm4205, %v5098, %v5094
    %v5100 = vlaneseq
    %v5101 = vshrl.u32 %v5100, 7
    %v5102 = vsub.s32 %v4207, %v5101
    %v5103 = vrot.slane %v3848, %v5102
    %v5104 = vsel %vm4212, %v5103, %v5099
    %v5105 = vlaneseq
    %v5106 = vshrl.u32 %v5105, 7
    %v5107 = vsub.s32 %v4214, %v5106
    %v5108 = vrot.slane %v3849, %v5107
    %v5109 = vsel %vm4219, %v5108, %v5104
    %v5110 = vlaneseq
    %v5111 = vshrl.u32 %v5110, 7
    %v5112 = vsub.s32 %v4221, %v5111
    %v5113 = vrot.slane %v3850, %v5112
    %v5114 = vsel %vm4226, %v5113, %v5109
    %v5115 = vlaneseq
    %v5116 = vshrl.u32 %v5115, 7
    %v5117 = vsub.s32 %v4228, %v5116
    %v5118 = vrot.slane %v3851, %v5117
    %v5119 = vsel %vm4233, %v5118, %v5114
    %v5120 = vlaneseq
    %v5121 = vshrl.u32 %v5120, 7
    %v5122 = vsub.s32 %v4235, %v5121
    %v5123 = vrot.slane %v3852, %v5122
    %v5124 = vsel %vm4240, %v5123, %v5119
    %v5125 = vlaneseq
    %v5126 = vshrl.u32 %v5125, 7
    %v5127 = vsub.s32 %v4242, %v5126
    %v5128 = vrot.slane %v3853, %v5127
    %v5129 = vsel %vm4247, %v5128, %v5124
    %v5130 = vlaneseq
    %v5131 = vshrl.u32 %v5130, 7
    %v5132 = vsub.s32 %v4249, %v5131
    %v5133 = vrot.slane %v3854, %v5132
    %v5134 = vsel %vm4254, %v5133, %v5129
    %v5135 = vlaneseq
    %v5136 = vshrl.u32 %v5135, 7
    %v5137 = vsub.s32 %v4256, %v5136
    %v5138 = vrot.slane %v3855, %v5137
    %v5139 = vsel %vm4261, %v5138, %v5134
    %v5140 = vlaneseq
    %v5141 = vshrl.u32 %v5140, 7
    %v5142 = vsub.s32 %v4263, %v5141
    %v5143 = vrot.slane %v3856, %v5142
    %v5144 = vsel %vm4268, %v5143, %v5139
    %v5145 = vlaneseq
    %v5146 = vshrl.u32 %v5145, 7
    %v5147 = vsub.s32 %v4270, %v5146
    %v5148 = vrot.slane %v3857, %v5147
    %v5149 = vsel %vm4275, %v5148, %v5144
    %v5150 = vlaneseq
    %v5151 = vshrl.u32 %v5150, 7
    %v5152 = vsub.s32 %v4277, %v5151
    %v5153 = vrot.slane %v3858, %v5152
    %v5154 = vsel %vm4282, %v5153, %v5149
    %v5155 = vlaneseq
    %v5156 = vshrl.u32 %v5155, 7
    %v5157 = vsub.s32 %v4284, %v5156
    %v5158 = vrot.slane %v3859, %v5157
    %v5159 = vsel %vm4289, %v5158, %v5154
    %v5160 = vlaneseq
    %v5161 = vshrl.u32 %v5160, 7
    %v5162 = vsub.s32 %v4181, %v5161
    %v5163 = vrot.slane %v3860, %v5162
    %v5164 = vlaneseq
    %v5165 = vshrl.u32 %v5164, 7
    %v5166 = vsub.s32 %v4186, %v5165
    %v5167 = vrot.slane %v3861, %v5166
    %v5168 = vsel %vm4191, %v5167, %v5163
    %v5169 = vlaneseq
    %v5170 = vshrl.u32 %v5169, 7
    %v5171 = vsub.s32 %v4193, %v5170
    %v5172 = vrot.slane %v3862, %v5171
    %v5173 = vsel %vm4198, %v5172, %v5168
    %v5174 = vlaneseq
    %v5175 = vshrl.u32 %v5174, 7
    %v5176 = vsub.s32 %v4200, %v5175
    %v5177 = vrot.slane %v3863, %v5176
    %v5178 = vsel %vm4205, %v5177, %v5173
    %v5179 = vlaneseq
    %v5180 = vshrl.u32 %v5179, 7
    %v5181 = vsub.s32 %v4207, %v5180
    %v5182 = vrot.slane %v3864, %v5181
    %v5183 = vsel %vm4212, %v5182, %v5178
    %v5184 = vlaneseq
    %v5185 = vshrl.u32 %v5184, 7
    %v5186 = vsub.s32 %v4214, %v5185
    %v5187 = vrot.slane %v3865, %v5186
    %v5188 = vsel %vm4219, %v5187, %v5183
    %v5189 = vlaneseq
    %v5190 = vshrl.u32 %v5189, 7
    %v5191 = vsub.s32 %v4221, %v5190
    %v5192 = vrot.slane %v3866, %v5191
    %v5193 = vsel %vm4226, %v5192, %v5188
    %v5194 = vlaneseq
    %v5195 = vshrl.u32 %v5194, 7
    %v5196 = vsub.s32 %v4228, %v5195
    %v5197 = vrot.slane %v3867, %v5196
    %v5198 = vsel %vm4233, %v5197, %v5193
    %v5199 = vlaneseq
    %v5200 = vshrl.u32 %v5199, 7
    %v5201 = vsub.s32 %v4235, %v5200
    %v5202 = vrot.slane %v3868, %v5201
    %v5203 = vsel %vm4240, %v5202, %v5198
    %v5204 = vlaneseq
    %v5205 = vshrl.u32 %v5204, 7
    %v5206 = vsub.s32 %v4242, %v5205
    %v5207 = vrot.slane %v3869, %v5206
    %v5208 = vsel %vm4247, %v5207, %v5203
    %v5209 = vlaneseq
    %v5210 = vshrl.u32 %v5209, 7
    %v5211 = vsub.s32 %v4249, %v5210
    %v5212 = vrot.slane %v3870, %v5211
    %v5213 = vsel %vm4254, %v5212, %v5208
    %v5214 = vlaneseq
    %v5215 = vshrl.u32 %v5214, 7
    %v5216 = vsub.s32 %v4256, %v5215
    %v5217 = vrot.slane %v3871, %v5216
    %v5218 = vsel %vm4261, %v5217, %v5213
    %v5219 = vlaneseq
    %v5220 = vshrl.u32 %v5219, 7
    %v5221 = vsub.s32 %v4263, %v5220
    %v5222 = vrot.slane %v3872, %v5221
    %v5223 = vsel %vm4268, %v5222, %v5218
    %v5224 = vlaneseq
    %v5225 = vshrl.u32 %v5224, 7
    %v5226 = vsub.s32 %v4270, %v5225
    %v5227 = vrot.slane %v3873, %v5226
    %v5228 = vsel %vm4275, %v5227, %v5223
    %v5229 = vlaneseq
    %v5230 = vshrl.u32 %v5229, 7
    %v5231 = vsub.s32 %v4277, %v5230
    %v5232 = vrot.slane %v3874, %v5231
    %v5233 = vsel %vm4282, %v5232, %v5228
    %v5234 = vlaneseq
    %v5235 = vshrl.u32 %v5234, 7
    %v5236 = vsub.s32 %v4284, %v5235
    %v5237 = vrot.slane %v3875, %v5236
    %v5238 = vsel %vm4289, %v5237, %v5233
    %v5239 = vlaneseq
    %v5240 = vshrl.u32 %v5239, 7
    %v5241 = vsub.s32 %v4181, %v5240
    %v5242 = vrot.slane %v3876, %v5241
    %v5243 = vlaneseq
    %v5244 = vshrl.u32 %v5243, 7
    %v5245 = vsub.s32 %v4186, %v5244
    %v5246 = vrot.slane %v3877, %v5245
    %v5247 = vsel %vm4191, %v5246, %v5242
    %v5248 = vlaneseq
    %v5249 = vshrl.u32 %v5248, 7
    %v5250 = vsub.s32 %v4193, %v5249
    %v5251 = vrot.slane %v3878, %v5250
    %v5252 = vsel %vm4198, %v5251, %v5247
    %v5253 = vlaneseq
    %v5254 = vshrl.u32 %v5253, 7
    %v5255 = vsub.s32 %v4200, %v5254
    %v5256 = vrot.slane %v3879, %v5255
    %v5257 = vsel %vm4205, %v5256, %v5252
    %v5258 = vlaneseq
    %v5259 = vshrl.u32 %v5258, 7
    %v5260 = vsub.s32 %v4207, %v5259
    %v5261 = vrot.slane %v3880, %v5260
    %v5262 = vsel %vm4212, %v5261, %v5257
    %v5263 = vlaneseq
    %v5264 = vshrl.u32 %v5263, 7
    %v5265 = vsub.s32 %v4214, %v5264
    %v5266 = vrot.slane %v3881, %v5265
    %v5267 = vsel %vm4219, %v5266, %v5262
    %v5268 = vlaneseq
    %v5269 = vshrl.u32 %v5268, 7
    %v5270 = vsub.s32 %v4221, %v5269
    %v5271 = vrot.slane %v3882, %v5270
    %v5272 = vsel %vm4226, %v5271, %v5267
    %v5273 = vlaneseq
    %v5274 = vshrl.u32 %v5273, 7
    %v5275 = vsub.s32 %v4228, %v5274
    %v5276 = vrot.slane %v3883, %v5275
    %v5277 = vsel %vm4233, %v5276, %v5272
    %v5278 = vlaneseq
    %v5279 = vshrl.u32 %v5278, 7
    %v5280 = vsub.s32 %v4235, %v5279
    %v5281 = vrot.slane %v3884, %v5280
    %v5282 = vsel %vm4240, %v5281, %v5277
    %v5283 = vlaneseq
    %v5284 = vshrl.u32 %v5283, 7
    %v5285 = vsub.s32 %v4242, %v5284
    %v5286 = vrot.slane %v3885, %v5285
    %v5287 = vsel %vm4247, %v5286, %v5282
    %v5288 = vlaneseq
    %v5289 = vshrl.u32 %v5288, 7
    %v5290 = vsub.s32 %v4249, %v5289
    %v5291 = vrot.slane %v3886, %v5290
    %v5292 = vsel %vm4254, %v5291, %v5287
    %v5293 = vlaneseq
    %v5294 = vshrl.u32 %v5293, 7
    %v5295 = vsub.s32 %v4256, %v5294
    %v5296 = vrot.slane %v3887, %v5295
    %v5297 = vsel %vm4261, %v5296, %v5292
    %v5298 = vlaneseq
    %v5299 = vshrl.u32 %v5298, 7
    %v5300 = vsub.s32 %v4263, %v5299
    %v5301 = vrot.slane %v3888, %v5300
    %v5302 = vsel %vm4268, %v5301, %v5297
    %v5303 = vlaneseq
    %v5304 = vshrl.u32 %v5303, 7
    %v5305 = vsub.s32 %v4270, %v5304
    %v5306 = vrot.slane %v3889, %v5305
    %v5307 = vsel %vm4275, %v5306, %v5302
    %v5308 = vlaneseq
    %v5309 = vshrl.u32 %v5308, 7
    %v5310 = vsub.s32 %v4277, %v5309
    %v5311 = vrot.slane %v3890, %v5310
    %v5312 = vsel %vm4282, %v5311, %v5307
    %v5313 = vlaneseq
    %v5314 = vshrl.u32 %v5313, 7
    %v5315 = vsub.s32 %v4284, %v5314
    %v5316 = vrot.slane %v3891, %v5315
    %v5317 = vsel %vm4289, %v5316, %v5312
    %v5318 = vlaneseq
    %v5319 = vshrl.u32 %v5318, 7
    %v5320 = vsub.s32 %v4181, %v5319
    %v5321 = vrot.slane %v3892, %v5320
    %v5322 = vlaneseq
    %v5323 = vshrl.u32 %v5322, 7
    %v5324 = vsub.s32 %v4186, %v5323
    %v5325 = vrot.slane %v3893, %v5324
    %v5326 = vsel %vm4191, %v5325, %v5321
    %v5327 = vlaneseq
    %v5328 = vshrl.u32 %v5327, 7
    %v5329 = vsub.s32 %v4193, %v5328
    %v5330 = vrot.slane %v3894, %v5329
    %v5331 = vsel %vm4198, %v5330, %v5326
    %v5332 = vlaneseq
    %v5333 = vshrl.u32 %v5332, 7
    %v5334 = vsub.s32 %v4200, %v5333
    %v5335 = vrot.slane %v3895, %v5334
    %v5336 = vsel %vm4205, %v5335, %v5331
    %v5337 = vlaneseq
    %v5338 = vshrl.u32 %v5337, 7
    %v5339 = vsub.s32 %v4207, %v5338
    %v5340 = vrot.slane %v3896, %v5339
    %v5341 = vsel %vm4212, %v5340, %v5336
    %v5342 = vlaneseq
    %v5343 = vshrl.u32 %v5342, 7
    %v5344 = vsub.s32 %v4214, %v5343
    %v5345 = vrot.slane %v3897, %v5344
    %v5346 = vsel %vm4219, %v5345, %v5341
    %v5347 = vlaneseq
    %v5348 = vshrl.u32 %v5347, 7
    %v5349 = vsub.s32 %v4221, %v5348
    %v5350 = vrot.slane %v3898, %v5349
    %v5351 = vsel %vm4226, %v5350, %v5346
    %v5352 = vlaneseq
    %v5353 = vshrl.u32 %v5352, 7
    %v5354 = vsub.s32 %v4228, %v5353
    %v5355 = vrot.slane %v3899, %v5354
    %v5356 = vsel %vm4233, %v5355, %v5351
    %v5357 = vlaneseq
    %v5358 = vshrl.u32 %v5357, 7
    %v5359 = vsub.s32 %v4235, %v5358
    %v5360 = vrot.slane %v3900, %v5359
    %v5361 = vsel %vm4240, %v5360, %v5356
    %v5362 = vlaneseq
    %v5363 = vshrl.u32 %v5362, 7
    %v5364 = vsub.s32 %v4242, %v5363
    %v5365 = vrot.slane %v3901, %v5364
    %v5366 = vsel %vm4247, %v5365, %v5361
    %v5367 = vlaneseq
    %v5368 = vshrl.u32 %v5367, 7
    %v5369 = vsub.s32 %v4249, %v5368
    %v5370 = vrot.slane %v3902, %v5369
    %v5371 = vsel %vm4254, %v5370, %v5366
    %v5372 = vlaneseq
    %v5373 = vshrl.u32 %v5372, 7
    %v5374 = vsub.s32 %v4256, %v5373
    %v5375 = vrot.slane %v3903, %v5374
    %v5376 = vsel %vm4261, %v5375, %v5371
    %v5377 = vlaneseq
    %v5378 = vshrl.u32 %v5377, 7
    %v5379 = vsub.s32 %v4263, %v5378
    %v5380 = vrot.slane %v3904, %v5379
    %v5381 = vsel %vm4268, %v5380, %v5376
    %v5382 = vlaneseq
    %v5383 = vshrl.u32 %v5382, 7
    %v5384 = vsub.s32 %v4270, %v5383
    %v5385 = vrot.slane %v3905, %v5384
    %v5386 = vsel %vm4275, %v5385, %v5381
    %v5387 = vlaneseq
    %v5388 = vshrl.u32 %v5387, 7
    %v5389 = vsub.s32 %v4277, %v5388
    %v5390 = vrot.slane %v3906, %v5389
    %v5391 = vsel %vm4282, %v5390, %v5386
    %v5392 = vlaneseq
    %v5393 = vshrl.u32 %v5392, 7
    %v5394 = vsub.s32 %v4284, %v5393
    %v5395 = vrot.slane %v3907, %v5394
    %v5396 = vsel %vm4289, %v5395, %v5391
    %v5397 = vlaneseq
    %v5398 = vshrl.u32 %v5397, 7
    %v5399 = vsub.s32 %v4181, %v5398
    %v5400 = vrot.slane %v3908, %v5399
    %v5401 = vlaneseq
    %v5402 = vshrl.u32 %v5401, 7
    %v5403 = vsub.s32 %v4186, %v5402
    %v5404 = vrot.slane %v3909, %v5403
    %v5405 = vsel %vm4191, %v5404, %v5400
    %v5406 = vlaneseq
    %v5407 = vshrl.u32 %v5406, 7
    %v5408 = vsub.s32 %v4193, %v5407
    %v5409 = vrot.slane %v3910, %v5408
    %v5410 = vsel %vm4198, %v5409, %v5405
    %v5411 = vlaneseq
    %v5412 = vshrl.u32 %v5411, 7
    %v5413 = vsub.s32 %v4200, %v5412
    %v5414 = vrot.slane %v3911, %v5413
    %v5415 = vsel %vm4205, %v5414, %v5410
    %v5416 = vlaneseq
    %v5417 = vshrl.u32 %v5416, 7
    %v5418 = vsub.s32 %v4207, %v5417
    %v5419 = vrot.slane %v3912, %v5418
    %v5420 = vsel %vm4212, %v5419, %v5415
    %v5421 = vlaneseq
    %v5422 = vshrl.u32 %v5421, 7
    %v5423 = vsub.s32 %v4214, %v5422
    %v5424 = vrot.slane %v3913, %v5423
    %v5425 = vsel %vm4219, %v5424, %v5420
    %v5426 = vlaneseq
    %v5427 = vshrl.u32 %v5426, 7
    %v5428 = vsub.s32 %v4221, %v5427
    %v5429 = vrot.slane %v3914, %v5428
    %v5430 = vsel %vm4226, %v5429, %v5425
    %v5431 = vlaneseq
    %v5432 = vshrl.u32 %v5431, 7
    %v5433 = vsub.s32 %v4228, %v5432
    %v5434 = vrot.slane %v3915, %v5433
    %v5435 = vsel %vm4233, %v5434, %v5430
    %v5436 = vlaneseq
    %v5437 = vshrl.u32 %v5436, 7
    %v5438 = vsub.s32 %v4235, %v5437
    %v5439 = vrot.slane %v3916, %v5438
    %v5440 = vsel %vm4240, %v5439, %v5435
    %v5441 = vlaneseq
    %v5442 = vshrl.u32 %v5441, 7
    %v5443 = vsub.s32 %v4242, %v5442
    %v5444 = vrot.slane %v3917, %v5443
    %v5445 = vsel %vm4247, %v5444, %v5440
    %v5446 = vlaneseq
    %v5447 = vshrl.u32 %v5446, 7
    %v5448 = vsub.s32 %v4249, %v5447
    %v5449 = vrot.slane %v3918, %v5448
    %v5450 = vsel %vm4254, %v5449, %v5445
    %v5451 = vlaneseq
    %v5452 = vshrl.u32 %v5451, 7
    %v5453 = vsub.s32 %v4256, %v5452
    %v5454 = vrot.slane %v3919, %v5453
    %v5455 = vsel %vm4261, %v5454, %v5450
    %v5456 = vlaneseq
    %v5457 = vshrl.u32 %v5456, 7
    %v5458 = vsub.s32 %v4263, %v5457
    %v5459 = vrot.slane %v3920, %v5458
    %v5460 = vsel %vm4268, %v5459, %v5455
    %v5461 = vlaneseq
    %v5462 = vshrl.u32 %v5461, 7
    %v5463 = vsub.s32 %v4270, %v5462
    %v5464 = vrot.slane %v3921, %v5463
    %v5465 = vsel %vm4275, %v5464, %v5460
    %v5466 = vlaneseq
    %v5467 = vshrl.u32 %v5466, 7
    %v5468 = vsub.s32 %v4277, %v5467
    %v5469 = vrot.slane %v3922, %v5468
    %v5470 = vsel %vm4282, %v5469, %v5465
    %v5471 = vlaneseq
    %v5472 = vshrl.u32 %v5471, 7
    %v5473 = vsub.s32 %v4284, %v5472
    %v5474 = vrot.slane %v3923, %v5473
    %v5475 = vsel %vm4289, %v5474, %v5470
    %v5476 = vlaneseq
    %v5477 = vshrl.u32 %v5476, 7
    %v5478 = vsub.s32 %v4181, %v5477
    %v5479 = vrot.slane %v3924, %v5478
    %v5480 = vlaneseq
    %v5481 = vshrl.u32 %v5480, 7
    %v5482 = vsub.s32 %v4186, %v5481
    %v5483 = vrot.slane %v3925, %v5482
    %v5484 = vsel %vm4191, %v5483, %v5479
    %v5485 = vlaneseq
    %v5486 = vshrl.u32 %v5485, 7
    %v5487 = vsub.s32 %v4193, %v5486
    %v5488 = vrot.slane %v3926, %v5487
    %v5489 = vsel %vm4198, %v5488, %v5484
    %v5490 = vlaneseq
    %v5491 = vshrl.u32 %v5490, 7
    %v5492 = vsub.s32 %v4200, %v5491
    %v5493 = vrot.slane %v3927, %v5492
    %v5494 = vsel %vm4205, %v5493, %v5489
    %v5495 = vlaneseq
    %v5496 = vshrl.u32 %v5495, 7
    %v5497 = vsub.s32 %v4207, %v5496
    %v5498 = vrot.slane %v3928, %v5497
    %v5499 = vsel %vm4212, %v5498, %v5494
    %v5500 = vlaneseq
    %v5501 = vshrl.u32 %v5500, 7
    %v5502 = vsub.s32 %v4214, %v5501
    %v5503 = vrot.slane %v3929, %v5502
    %v5504 = vsel %vm4219, %v5503, %v5499
    %v5505 = vlaneseq
    %v5506 = vshrl.u32 %v5505, 7
    %v5507 = vsub.s32 %v4221, %v5506
    %v5508 = vrot.slane %v3930, %v5507
    %v5509 = vsel %vm4226, %v5508, %v5504
    %v5510 = vlaneseq
    %v5511 = vshrl.u32 %v5510, 7
    %v5512 = vsub.s32 %v4228, %v5511
    %v5513 = vrot.slane %v3931, %v5512
    %v5514 = vsel %vm4233, %v5513, %v5509
    %v5515 = vlaneseq
    %v5516 = vshrl.u32 %v5515, 7
    %v5517 = vsub.s32 %v4235, %v5516
    %v5518 = vrot.slane %v3932, %v5517
    %v5519 = vsel %vm4240, %v5518, %v5514
    %v5520 = vlaneseq
    %v5521 = vshrl.u32 %v5520, 7
    %v5522 = vsub.s32 %v4242, %v5521
    %v5523 = vrot.slane %v3933, %v5522
    %v5524 = vsel %vm4247, %v5523, %v5519
    %v5525 = vlaneseq
    %v5526 = vshrl.u32 %v5525, 7
    %v5527 = vsub.s32 %v4249, %v5526
    %v5528 = vrot.slane %v3934, %v5527
    %v5529 = vsel %vm4254, %v5528, %v5524
    %v5530 = vlaneseq
    %v5531 = vshrl.u32 %v5530, 7
    %v5532 = vsub.s32 %v4256, %v5531
    %v5533 = vrot.slane %v3935, %v5532
    %v5534 = vsel %vm4261, %v5533, %v5529
    %v5535 = vlaneseq
    %v5536 = vshrl.u32 %v5535, 7
    %v5537 = vsub.s32 %v4263, %v5536
    %v5538 = vrot.slane %v3936, %v5537
    %v5539 = vsel %vm4268, %v5538, %v5534
    %v5540 = vlaneseq
    %v5541 = vshrl.u32 %v5540, 7
    %v5542 = vsub.s32 %v4270, %v5541
    %v5543 = vrot.slane %v3937, %v5542
    %v5544 = vsel %vm4275, %v5543, %v5539
    %v5545 = vlaneseq
    %v5546 = vshrl.u32 %v5545, 7
    %v5547 = vsub.s32 %v4277, %v5546
    %v5548 = vrot.slane %v3938, %v5547
    %v5549 = vsel %vm4282, %v5548, %v5544
    %v5550 = vlaneseq
    %v5551 = vshrl.u32 %v5550, 7
    %v5552 = vsub.s32 %v4284, %v5551
    %v5553 = vrot.slane %v3939, %v5552
    %v5554 = vsel %vm4289, %v5553, %v5549
    %v5555 = vlaneseq
    %v5556 = vshrl.u32 %v5555, 7
    %v5557 = vsub.s32 %v4181, %v5556
    %v5558 = vrot.slane %v3940, %v5557
    %v5559 = vlaneseq
    %v5560 = vshrl.u32 %v5559, 7
    %v5561 = vsub.s32 %v4186, %v5560
    %v5562 = vrot.slane %v3941, %v5561
    %v5563 = vsel %vm4191, %v5562, %v5558
    %v5564 = vlaneseq
    %v5565 = vshrl.u32 %v5564, 7
    %v5566 = vsub.s32 %v4193, %v5565
    %v5567 = vrot.slane %v3942, %v5566
    %v5568 = vsel %vm4198, %v5567, %v5563
    %v5569 = vlaneseq
    %v5570 = vshrl.u32 %v5569, 7
    %v5571 = vsub.s32 %v4200, %v5570
    %v5572 = vrot.slane %v3943, %v5571
    %v5573 = vsel %vm4205, %v5572, %v5568
    %v5574 = vlaneseq
    %v5575 = vshrl.u32 %v5574, 7
    %v5576 = vsub.s32 %v4207, %v5575
    %v5577 = vrot.slane %v3944, %v5576
    %v5578 = vsel %vm4212, %v5577, %v5573
    %v5579 = vlaneseq
    %v5580 = vshrl.u32 %v5579, 7
    %v5581 = vsub.s32 %v4214, %v5580
    %v5582 = vrot.slane %v3945, %v5581
    %v5583 = vsel %vm4219, %v5582, %v5578
    %v5584 = vlaneseq
    %v5585 = vshrl.u32 %v5584, 7
    %v5586 = vsub.s32 %v4221, %v5585
    %v5587 = vrot.slane %v3946, %v5586
    %v5588 = vsel %vm4226, %v5587, %v5583
    %v5589 = vlaneseq
    %v5590 = vshrl.u32 %v5589, 7
    %v5591 = vsub.s32 %v4228, %v5590
    %v5592 = vrot.slane %v3947, %v5591
    %v5593 = vsel %vm4233, %v5592, %v5588
    %v5594 = vlaneseq
    %v5595 = vshrl.u32 %v5594, 7
    %v5596 = vsub.s32 %v4235, %v5595
    %v5597 = vrot.slane %v3948, %v5596
    %v5598 = vsel %vm4240, %v5597, %v5593
    %v5599 = vlaneseq
    %v5600 = vshrl.u32 %v5599, 7
    %v5601 = vsub.s32 %v4242, %v5600
    %v5602 = vrot.slane %v3949, %v5601
    %v5603 = vsel %vm4247, %v5602, %v5598
    %v5604 = vlaneseq
    %v5605 = vshrl.u32 %v5604, 7
    %v5606 = vsub.s32 %v4249, %v5605
    %v5607 = vrot.slane %v3950, %v5606
    %v5608 = vsel %vm4254, %v5607, %v5603
    %v5609 = vlaneseq
    %v5610 = vshrl.u32 %v5609, 7
    %v5611 = vsub.s32 %v4256, %v5610
    %v5612 = vrot.slane %v3951, %v5611
    %v5613 = vsel %vm4261, %v5612, %v5608
    %v5614 = vlaneseq
    %v5615 = vshrl.u32 %v5614, 7
    %v5616 = vsub.s32 %v4263, %v5615
    %v5617 = vrot.slane %v3952, %v5616
    %v5618 = vsel %vm4268, %v5617, %v5613
    %v5619 = vlaneseq
    %v5620 = vshrl.u32 %v5619, 7
    %v5621 = vsub.s32 %v4270, %v5620
    %v5622 = vrot.slane %v3953, %v5621
    %v5623 = vsel %vm4275, %v5622, %v5618
    %v5624 = vlaneseq
    %v5625 = vshrl.u32 %v5624, 7
    %v5626 = vsub.s32 %v4277, %v5625
    %v5627 = vrot.slane %v3954, %v5626
    %v5628 = vsel %vm4282, %v5627, %v5623
    %v5629 = vlaneseq
    %v5630 = vshrl.u32 %v5629, 7
    %v5631 = vsub.s32 %v4284, %v5630
    %v5632 = vrot.slane %v3955, %v5631
    %v5633 = vsel %vm4289, %v5632, %v5628
    %v5634 = vlaneseq
    %v5635 = vshrl.u32 %v5634, 7
    %v5636 = vsub.s32 %v4181, %v5635
    %v5637 = vrot.slane %v3956, %v5636
    %v5638 = vlaneseq
    %v5639 = vshrl.u32 %v5638, 7
    %v5640 = vsub.s32 %v4186, %v5639
    %v5641 = vrot.slane %v3957, %v5640
    %v5642 = vsel %vm4191, %v5641, %v5637
    %v5643 = vlaneseq
    %v5644 = vshrl.u32 %v5643, 7
    %v5645 = vsub.s32 %v4193, %v5644
    %v5646 = vrot.slane %v3958, %v5645
    %v5647 = vsel %vm4198, %v5646, %v5642
    %v5648 = vlaneseq
    %v5649 = vshrl.u32 %v5648, 7
    %v5650 = vsub.s32 %v4200, %v5649
    %v5651 = vrot.slane %v3959, %v5650
    %v5652 = vsel %vm4205, %v5651, %v5647
    %v5653 = vlaneseq
    %v5654 = vshrl.u32 %v5653, 7
    %v5655 = vsub.s32 %v4207, %v5654
    %v5656 = vrot.slane %v3960, %v5655
    %v5657 = vsel %vm4212, %v5656, %v5652
    %v5658 = vlaneseq
    %v5659 = vshrl.u32 %v5658, 7
    %v5660 = vsub.s32 %v4214, %v5659
    %v5661 = vrot.slane %v3961, %v5660
    %v5662 = vsel %vm4219, %v5661, %v5657
    %v5663 = vlaneseq
    %v5664 = vshrl.u32 %v5663, 7
    %v5665 = vsub.s32 %v4221, %v5664
    %v5666 = vrot.slane %v3962, %v5665
    %v5667 = vsel %vm4226, %v5666, %v5662
    %v5668 = vlaneseq
    %v5669 = vshrl.u32 %v5668, 7
    %v5670 = vsub.s32 %v4228, %v5669
    %v5671 = vrot.slane %v3963, %v5670
    %v5672 = vsel %vm4233, %v5671, %v5667
    %v5673 = vlaneseq
    %v5674 = vshrl.u32 %v5673, 7
    %v5675 = vsub.s32 %v4235, %v5674
    %v5676 = vrot.slane %v3964, %v5675
    %v5677 = vsel %vm4240, %v5676, %v5672
    %v5678 = vlaneseq
    %v5679 = vshrl.u32 %v5678, 7
    %v5680 = vsub.s32 %v4242, %v5679
    %v5681 = vrot.slane %v3965, %v5680
    %v5682 = vsel %vm4247, %v5681, %v5677
    %v5683 = vlaneseq
    %v5684 = vshrl.u32 %v5683, 7
    %v5685 = vsub.s32 %v4249, %v5684
    %v5686 = vrot.slane %v3966, %v5685
    %v5687 = vsel %vm4254, %v5686, %v5682
    %v5688 = vlaneseq
    %v5689 = vshrl.u32 %v5688, 7
    %v5690 = vsub.s32 %v4256, %v5689
    %v5691 = vrot.slane %v3967, %v5690
    %v5692 = vsel %vm4261, %v5691, %v5687
    %v5693 = vlaneseq
    %v5694 = vshrl.u32 %v5693, 7
    %v5695 = vsub.s32 %v4263, %v5694
    %v5696 = vrot.slane %v3968, %v5695
    %v5697 = vsel %vm4268, %v5696, %v5692
    %v5698 = vlaneseq
    %v5699 = vshrl.u32 %v5698, 7
    %v5700 = vsub.s32 %v4270, %v5699
    %v5701 = vrot.slane %v3969, %v5700
    %v5702 = vsel %vm4275, %v5701, %v5697
    %v5703 = vlaneseq
    %v5704 = vshrl.u32 %v5703, 7
    %v5705 = vsub.s32 %v4277, %v5704
    %v5706 = vrot.slane %v3970, %v5705
    %v5707 = vsel %vm4282, %v5706, %v5702
    %v5708 = vlaneseq
    %v5709 = vshrl.u32 %v5708, 7
    %v5710 = vsub.s32 %v4284, %v5709
    %v5711 = vrot.slane %v3971, %v5710
    %v5712 = vsel %vm4289, %v5711, %v5707
    %v5713 = vlaneseq
    %v5714 = vshrl.u32 %v5713, 7
    %v5715 = vsub.s32 %v4181, %v5714
    %v5716 = vrot.slane %v3972, %v5715
    %v5717 = vlaneseq
    %v5718 = vshrl.u32 %v5717, 7
    %v5719 = vsub.s32 %v4186, %v5718
    %v5720 = vrot.slane %v3973, %v5719
    %v5721 = vsel %vm4191, %v5720, %v5716
    %v5722 = vlaneseq
    %v5723 = vshrl.u32 %v5722, 7
    %v5724 = vsub.s32 %v4193, %v5723
    %v5725 = vrot.slane %v3974, %v5724
    %v5726 = vsel %vm4198, %v5725, %v5721
    %v5727 = vlaneseq
    %v5728 = vshrl.u32 %v5727, 7
    %v5729 = vsub.s32 %v4200, %v5728
    %v5730 = vrot.slane %v3975, %v5729
    %v5731 = vsel %vm4205, %v5730, %v5726
    %v5732 = vlaneseq
    %v5733 = vshrl.u32 %v5732, 7
    %v5734 = vsub.s32 %v4207, %v5733
    %v5735 = vrot.slane %v3976, %v5734
    %v5736 = vsel %vm4212, %v5735, %v5731
    %v5737 = vlaneseq
    %v5738 = vshrl.u32 %v5737, 7
    %v5739 = vsub.s32 %v4214, %v5738
    %v5740 = vrot.slane %v3977, %v5739
    %v5741 = vsel %vm4219, %v5740, %v5736
    %v5742 = vlaneseq
    %v5743 = vshrl.u32 %v5742, 7
    %v5744 = vsub.s32 %v4221, %v5743
    %v5745 = vrot.slane %v3978, %v5744
    %v5746 = vsel %vm4226, %v5745, %v5741
    %v5747 = vlaneseq
    %v5748 = vshrl.u32 %v5747, 7
    %v5749 = vsub.s32 %v4228, %v5748
    %v5750 = vrot.slane %v3979, %v5749
    %v5751 = vsel %vm4233, %v5750, %v5746
    %v5752 = vlaneseq
    %v5753 = vshrl.u32 %v5752, 7
    %v5754 = vsub.s32 %v4235, %v5753
    %v5755 = vrot.slane %v3980, %v5754
    %v5756 = vsel %vm4240, %v5755, %v5751
    %v5757 = vlaneseq
    %v5758 = vshrl.u32 %v5757, 7
    %v5759 = vsub.s32 %v4242, %v5758
    %v5760 = vrot.slane %v3981, %v5759
    %v5761 = vsel %vm4247, %v5760, %v5756
    %v5762 = vlaneseq
    %v5763 = vshrl.u32 %v5762, 7
    %v5764 = vsub.s32 %v4249, %v5763
    %v5765 = vrot.slane %v3982, %v5764
    %v5766 = vsel %vm4254, %v5765, %v5761
    %v5767 = vlaneseq
    %v5768 = vshrl.u32 %v5767, 7
    %v5769 = vsub.s32 %v4256, %v5768
    %v5770 = vrot.slane %v3983, %v5769
    %v5771 = vsel %vm4261, %v5770, %v5766
    %v5772 = vlaneseq
    %v5773 = vshrl.u32 %v5772, 7
    %v5774 = vsub.s32 %v4263, %v5773
    %v5775 = vrot.slane %v3984, %v5774
    %v5776 = vsel %vm4268, %v5775, %v5771
    %v5777 = vlaneseq
    %v5778 = vshrl.u32 %v5777, 7
    %v5779 = vsub.s32 %v4270, %v5778
    %v5780 = vrot.slane %v3985, %v5779
    %v5781 = vsel %vm4275, %v5780, %v5776
    %v5782 = vlaneseq
    %v5783 = vshrl.u32 %v5782, 7
    %v5784 = vsub.s32 %v4277, %v5783
    %v5785 = vrot.slane %v3986, %v5784
    %v5786 = vsel %vm4282, %v5785, %v5781
    %v5787 = vlaneseq
    %v5788 = vshrl.u32 %v5787, 7
    %v5789 = vsub.s32 %v4284, %v5788
    %v5790 = vrot.slane %v3987, %v5789
    %v5791 = vsel %vm4289, %v5790, %v5786
    %v5792 = vlaneseq
    %v5793 = vshrl.u32 %v5792, 7
    %v5794 = vsub.s32 %v4181, %v5793
    %v5795 = vrot.slane %v3988, %v5794
    %v5796 = vlaneseq
    %v5797 = vshrl.u32 %v5796, 7
    %v5798 = vsub.s32 %v4186, %v5797
    %v5799 = vrot.slane %v3989, %v5798
    %v5800 = vsel %vm4191, %v5799, %v5795
    %v5801 = vlaneseq
    %v5802 = vshrl.u32 %v5801, 7
    %v5803 = vsub.s32 %v4193, %v5802
    %v5804 = vrot.slane %v3990, %v5803
    %v5805 = vsel %vm4198, %v5804, %v5800
    %v5806 = vlaneseq
    %v5807 = vshrl.u32 %v5806, 7
    %v5808 = vsub.s32 %v4200, %v5807
    %v5809 = vrot.slane %v3991, %v5808
    %v5810 = vsel %vm4205, %v5809, %v5805
    %v5811 = vlaneseq
    %v5812 = vshrl.u32 %v5811, 7
    %v5813 = vsub.s32 %v4207, %v5812
    %v5814 = vrot.slane %v3992, %v5813
    %v5815 = vsel %vm4212, %v5814, %v5810
    %v5816 = vlaneseq
    %v5817 = vshrl.u32 %v5816, 7
    %v5818 = vsub.s32 %v4214, %v5817
    %v5819 = vrot.slane %v3993, %v5818
    %v5820 = vsel %vm4219, %v5819, %v5815
    %v5821 = vlaneseq
    %v5822 = vshrl.u32 %v5821, 7
    %v5823 = vsub.s32 %v4221, %v5822
    %v5824 = vrot.slane %v3994, %v5823
    %v5825 = vsel %vm4226, %v5824, %v5820
    %v5826 = vlaneseq
    %v5827 = vshrl.u32 %v5826, 7
    %v5828 = vsub.s32 %v4228, %v5827
    %v5829 = vrot.slane %v3995, %v5828
    %v5830 = vsel %vm4233, %v5829, %v5825
    %v5831 = vlaneseq
    %v5832 = vshrl.u32 %v5831, 7
    %v5833 = vsub.s32 %v4235, %v5832
    %v5834 = vrot.slane %v3996, %v5833
    %v5835 = vsel %vm4240, %v5834, %v5830
    %v5836 = vlaneseq
    %v5837 = vshrl.u32 %v5836, 7
    %v5838 = vsub.s32 %v4242, %v5837
    %v5839 = vrot.slane %v3997, %v5838
    %v5840 = vsel %vm4247, %v5839, %v5835
    %v5841 = vlaneseq
    %v5842 = vshrl.u32 %v5841, 7
    %v5843 = vsub.s32 %v4249, %v5842
    %v5844 = vrot.slane %v3998, %v5843
    %v5845 = vsel %vm4254, %v5844, %v5840
    %v5846 = vlaneseq
    %v5847 = vshrl.u32 %v5846, 7
    %v5848 = vsub.s32 %v4256, %v5847
    %v5849 = vrot.slane %v3999, %v5848
    %v5850 = vsel %vm4261, %v5849, %v5845
    %v5851 = vlaneseq
    %v5852 = vshrl.u32 %v5851, 7
    %v5853 = vsub.s32 %v4263, %v5852
    %v5854 = vrot.slane %v4000, %v5853
    %v5855 = vsel %vm4268, %v5854, %v5850
    %v5856 = vlaneseq
    %v5857 = vshrl.u32 %v5856, 7
    %v5858 = vsub.s32 %v4270, %v5857
    %v5859 = vrot.slane %v4001, %v5858
    %v5860 = vsel %vm4275, %v5859, %v5855
    %v5861 = vlaneseq
    %v5862 = vshrl.u32 %v5861, 7
    %v5863 = vsub.s32 %v4277, %v5862
    %v5864 = vrot.slane %v4002, %v5863
    %v5865 = vsel %vm4282, %v5864, %v5860
    %v5866 = vlaneseq
    %v5867 = vshrl.u32 %v5866, 7
    %v5868 = vsub.s32 %v4284, %v5867
    %v5869 = vrot.slane %v4003, %v5868
    %v5870 = vsel %vm4289, %v5869, %v5865
    %v5871 = vlaneseq
    %v5872 = vshrl.u32 %v5871, 7
    %v5873 = vsub.s32 %v4181, %v5872
    %v5874 = vrot.slane %v4004, %v5873
    %v5875 = vlaneseq
    %v5876 = vshrl.u32 %v5875, 7
    %v5877 = vsub.s32 %v4186, %v5876
    %v5878 = vrot.slane %v4005, %v5877
    %v5879 = vsel %vm4191, %v5878, %v5874
    %v5880 = vlaneseq
    %v5881 = vshrl.u32 %v5880, 7
    %v5882 = vsub.s32 %v4193, %v5881
    %v5883 = vrot.slane %v4006, %v5882
    %v5884 = vsel %vm4198, %v5883, %v5879
    %v5885 = vlaneseq
    %v5886 = vshrl.u32 %v5885, 7
    %v5887 = vsub.s32 %v4200, %v5886
    %v5888 = vrot.slane %v4007, %v5887
    %v5889 = vsel %vm4205, %v5888, %v5884
    %v5890 = vlaneseq
    %v5891 = vshrl.u32 %v5890, 7
    %v5892 = vsub.s32 %v4207, %v5891
    %v5893 = vrot.slane %v4008, %v5892
    %v5894 = vsel %vm4212, %v5893, %v5889
    %v5895 = vlaneseq
    %v5896 = vshrl.u32 %v5895, 7
    %v5897 = vsub.s32 %v4214, %v5896
    %v5898 = vrot.slane %v4009, %v5897
    %v5899 = vsel %vm4219, %v5898, %v5894
    %v5900 = vlaneseq
    %v5901 = vshrl.u32 %v5900, 7
    %v5902 = vsub.s32 %v4221, %v5901
    %v5903 = vrot.slane %v4010, %v5902
    %v5904 = vsel %vm4226, %v5903, %v5899
    %v5905 = vlaneseq
    %v5906 = vshrl.u32 %v5905, 7
    %v5907 = vsub.s32 %v4228, %v5906
    %v5908 = vrot.slane %v4011, %v5907
    %v5909 = vsel %vm4233, %v5908, %v5904
    %v5910 = vlaneseq
    %v5911 = vshrl.u32 %v5910, 7
    %v5912 = vsub.s32 %v4235, %v5911
    %v5913 = vrot.slane %v4012, %v5912
    %v5914 = vsel %vm4240, %v5913, %v5909
    %v5915 = vlaneseq
    %v5916 = vshrl.u32 %v5915, 7
    %v5917 = vsub.s32 %v4242, %v5916
    %v5918 = vrot.slane %v4013, %v5917
    %v5919 = vsel %vm4247, %v5918, %v5914
    %v5920 = vlaneseq
    %v5921 = vshrl.u32 %v5920, 7
    %v5922 = vsub.s32 %v4249, %v5921
    %v5923 = vrot.slane %v4014, %v5922
    %v5924 = vsel %vm4254, %v5923, %v5919
    %v5925 = vlaneseq
    %v5926 = vshrl.u32 %v5925, 7
    %v5927 = vsub.s32 %v4256, %v5926
    %v5928 = vrot.slane %v4015, %v5927
    %v5929 = vsel %vm4261, %v5928, %v5924
    %v5930 = vlaneseq
    %v5931 = vshrl.u32 %v5930, 7
    %v5932 = vsub.s32 %v4263, %v5931
    %v5933 = vrot.slane %v4016, %v5932
    %v5934 = vsel %vm4268, %v5933, %v5929
    %v5935 = vlaneseq
    %v5936 = vshrl.u32 %v5935, 7
    %v5937 = vsub.s32 %v4270, %v5936
    %v5938 = vrot.slane %v4017, %v5937
    %v5939 = vsel %vm4275, %v5938, %v5934
    %v5940 = vlaneseq
    %v5941 = vshrl.u32 %v5940, 7
    %v5942 = vsub.s32 %v4277, %v5941
    %v5943 = vrot.slane %v4018, %v5942
    %v5944 = vsel %vm4282, %v5943, %v5939
    %v5945 = vlaneseq
    %v5946 = vshrl.u32 %v5945, 7
    %v5947 = vsub.s32 %v4284, %v5946
    %v5948 = vrot.slane %v4019, %v5947
    %v5949 = vsel %vm4289, %v5948, %v5944
    %v5950 = vlaneseq
    %v5951 = vshrl.u32 %v5950, 7
    %v5952 = vsub.s32 %v4181, %v5951
    %v5953 = vrot.slane %v4020, %v5952
    %v5954 = vlaneseq
    %v5955 = vshrl.u32 %v5954, 7
    %v5956 = vsub.s32 %v4186, %v5955
    %v5957 = vrot.slane %v4021, %v5956
    %v5958 = vsel %vm4191, %v5957, %v5953
    %v5959 = vlaneseq
    %v5960 = vshrl.u32 %v5959, 7
    %v5961 = vsub.s32 %v4193, %v5960
    %v5962 = vrot.slane %v4022, %v5961
    %v5963 = vsel %vm4198, %v5962, %v5958
    %v5964 = vlaneseq
    %v5965 = vshrl.u32 %v5964, 7
    %v5966 = vsub.s32 %v4200, %v5965
    %v5967 = vrot.slane %v4023, %v5966
    %v5968 = vsel %vm4205, %v5967, %v5963
    %v5969 = vlaneseq
    %v5970 = vshrl.u32 %v5969, 7
    %v5971 = vsub.s32 %v4207, %v5970
    %v5972 = vrot.slane %v4024, %v5971
    %v5973 = vsel %vm4212, %v5972, %v5968
    %v5974 = vlaneseq
    %v5975 = vshrl.u32 %v5974, 7
    %v5976 = vsub.s32 %v4214, %v5975
    %v5977 = vrot.slane %v4025, %v5976
    %v5978 = vsel %vm4219, %v5977, %v5973
    %v5979 = vlaneseq
    %v5980 = vshrl.u32 %v5979, 7
    %v5981 = vsub.s32 %v4221, %v5980
    %v5982 = vrot.slane %v4026, %v5981
    %v5983 = vsel %vm4226, %v5982, %v5978
    %v5984 = vlaneseq
    %v5985 = vshrl.u32 %v5984, 7
    %v5986 = vsub.s32 %v4228, %v5985
    %v5987 = vrot.slane %v4027, %v5986
    %v5988 = vsel %vm4233, %v5987, %v5983
    %v5989 = vlaneseq
    %v5990 = vshrl.u32 %v5989, 7
    %v5991 = vsub.s32 %v4235, %v5990
    %v5992 = vrot.slane %v4028, %v5991
    %v5993 = vsel %vm4240, %v5992, %v5988
    %v5994 = vlaneseq
    %v5995 = vshrl.u32 %v5994, 7
    %v5996 = vsub.s32 %v4242, %v5995
    %v5997 = vrot.slane %v4029, %v5996
    %v5998 = vsel %vm4247, %v5997, %v5993
    %v5999 = vlaneseq
    %v6000 = vshrl.u32 %v5999, 7
    %v6001 = vsub.s32 %v4249, %v6000
    %v6002 = vrot.slane %v4030, %v6001
    %v6003 = vsel %vm4254, %v6002, %v5998
    %v6004 = vlaneseq
    %v6005 = vshrl.u32 %v6004, 7
    %v6006 = vsub.s32 %v4256, %v6005
    %v6007 = vrot.slane %v4031, %v6006
    %v6008 = vsel %vm4261, %v6007, %v6003
    %v6009 = vlaneseq
    %v6010 = vshrl.u32 %v6009, 7
    %v6011 = vsub.s32 %v4263, %v6010
    %v6012 = vrot.slane %v4032, %v6011
    %v6013 = vsel %vm4268, %v6012, %v6008
    %v6014 = vlaneseq
    %v6015 = vshrl.u32 %v6014, 7
    %v6016 = vsub.s32 %v4270, %v6015
    %v6017 = vrot.slane %v4033, %v6016
    %v6018 = vsel %vm4275, %v6017, %v6013
    %v6019 = vlaneseq
    %v6020 = vshrl.u32 %v6019, 7
    %v6021 = vsub.s32 %v4277, %v6020
    %v6022 = vrot.slane %v4034, %v6021
    %v6023 = vsel %vm4282, %v6022, %v6018
    %v6024 = vlaneseq
    %v6025 = vshrl.u32 %v6024, 7
    %v6026 = vsub.s32 %v4284, %v6025
    %v6027 = vrot.slane %v4035, %v6026
    %v6028 = vsel %vm4289, %v6027, %v6023
    %v6029 = vlaneseq
    %v6030 = vshrl.u32 %v6029, 7
    %v6031 = vsub.s32 %v4181, %v6030
    %v6032 = vrot.slane %v4036, %v6031
    %v6033 = vlaneseq
    %v6034 = vshrl.u32 %v6033, 7
    %v6035 = vsub.s32 %v4186, %v6034
    %v6036 = vrot.slane %v4037, %v6035
    %v6037 = vsel %vm4191, %v6036, %v6032
    %v6038 = vlaneseq
    %v6039 = vshrl.u32 %v6038, 7
    %v6040 = vsub.s32 %v4193, %v6039
    %v6041 = vrot.slane %v4038, %v6040
    %v6042 = vsel %vm4198, %v6041, %v6037
    %v6043 = vlaneseq
    %v6044 = vshrl.u32 %v6043, 7
    %v6045 = vsub.s32 %v4200, %v6044
    %v6046 = vrot.slane %v4039, %v6045
    %v6047 = vsel %vm4205, %v6046, %v6042
    %v6048 = vlaneseq
    %v6049 = vshrl.u32 %v6048, 7
    %v6050 = vsub.s32 %v4207, %v6049
    %v6051 = vrot.slane %v4040, %v6050
    %v6052 = vsel %vm4212, %v6051, %v6047
    %v6053 = vlaneseq
    %v6054 = vshrl.u32 %v6053, 7
    %v6055 = vsub.s32 %v4214, %v6054
    %v6056 = vrot.slane %v4041, %v6055
    %v6057 = vsel %vm4219, %v6056, %v6052
    %v6058 = vlaneseq
    %v6059 = vshrl.u32 %v6058, 7
    %v6060 = vsub.s32 %v4221, %v6059
    %v6061 = vrot.slane %v4042, %v6060
    %v6062 = vsel %vm4226, %v6061, %v6057
    %v6063 = vlaneseq
    %v6064 = vshrl.u32 %v6063, 7
    %v6065 = vsub.s32 %v4228, %v6064
    %v6066 = vrot.slane %v4043, %v6065
    %v6067 = vsel %vm4233, %v6066, %v6062
    %v6068 = vlaneseq
    %v6069 = vshrl.u32 %v6068, 7
    %v6070 = vsub.s32 %v4235, %v6069
    %v6071 = vrot.slane %v4044, %v6070
    %v6072 = vsel %vm4240, %v6071, %v6067
    %v6073 = vlaneseq
    %v6074 = vshrl.u32 %v6073, 7
    %v6075 = vsub.s32 %v4242, %v6074
    %v6076 = vrot.slane %v4045, %v6075
    %v6077 = vsel %vm4247, %v6076, %v6072
    %v6078 = vlaneseq
    %v6079 = vshrl.u32 %v6078, 7
    %v6080 = vsub.s32 %v4249, %v6079
    %v6081 = vrot.slane %v4046, %v6080
    %v6082 = vsel %vm4254, %v6081, %v6077
    %v6083 = vlaneseq
    %v6084 = vshrl.u32 %v6083, 7
    %v6085 = vsub.s32 %v4256, %v6084
    %v6086 = vrot.slane %v4047, %v6085
    %v6087 = vsel %vm4261, %v6086, %v6082
    %v6088 = vlaneseq
    %v6089 = vshrl.u32 %v6088, 7
    %v6090 = vsub.s32 %v4263, %v6089
    %v6091 = vrot.slane %v4048, %v6090
    %v6092 = vsel %vm4268, %v6091, %v6087
    %v6093 = vlaneseq
    %v6094 = vshrl.u32 %v6093, 7
    %v6095 = vsub.s32 %v4270, %v6094
    %v6096 = vrot.slane %v4049, %v6095
    %v6097 = vsel %vm4275, %v6096, %v6092
    %v6098 = vlaneseq
    %v6099 = vshrl.u32 %v6098, 7
    %v6100 = vsub.s32 %v4277, %v6099
    %v6101 = vrot.slane %v4050, %v6100
    %v6102 = vsel %vm4282, %v6101, %v6097
    %v6103 = vlaneseq
    %v6104 = vshrl.u32 %v6103, 7
    %v6105 = vsub.s32 %v4284, %v6104
    %v6106 = vrot.slane %v4051, %v6105
    %v6107 = vsel %vm4289, %v6106, %v6102
    %v6108 = vlaneseq
    %v6109 = vshrl.u32 %v6108, 7
    %v6110 = vsub.s32 %v4181, %v6109
    %v6111 = vrot.slane %v4052, %v6110
    %v6112 = vlaneseq
    %v6113 = vshrl.u32 %v6112, 7
    %v6114 = vsub.s32 %v4186, %v6113
    %v6115 = vrot.slane %v4053, %v6114
    %v6116 = vsel %vm4191, %v6115, %v6111
    %v6117 = vlaneseq
    %v6118 = vshrl.u32 %v6117, 7
    %v6119 = vsub.s32 %v4193, %v6118
    %v6120 = vrot.slane %v4054, %v6119
    %v6121 = vsel %vm4198, %v6120, %v6116
    %v6122 = vlaneseq
    %v6123 = vshrl.u32 %v6122, 7
    %v6124 = vsub.s32 %v4200, %v6123
    %v6125 = vrot.slane %v4055, %v6124
    %v6126 = vsel %vm4205, %v6125, %v6121
    %v6127 = vlaneseq
    %v6128 = vshrl.u32 %v6127, 7
    %v6129 = vsub.s32 %v4207, %v6128
    %v6130 = vrot.slane %v4056, %v6129
    %v6131 = vsel %vm4212, %v6130, %v6126
    %v6132 = vlaneseq
    %v6133 = vshrl.u32 %v6132, 7
    %v6134 = vsub.s32 %v4214, %v6133
    %v6135 = vrot.slane %v4057, %v6134
    %v6136 = vsel %vm4219, %v6135, %v6131
    %v6137 = vlaneseq
    %v6138 = vshrl.u32 %v6137, 7
    %v6139 = vsub.s32 %v4221, %v6138
    %v6140 = vrot.slane %v4058, %v6139
    %v6141 = vsel %vm4226, %v6140, %v6136
    %v6142 = vlaneseq
    %v6143 = vshrl.u32 %v6142, 7
    %v6144 = vsub.s32 %v4228, %v6143
    %v6145 = vrot.slane %v4059, %v6144
    %v6146 = vsel %vm4233, %v6145, %v6141
    %v6147 = vlaneseq
    %v6148 = vshrl.u32 %v6147, 7
    %v6149 = vsub.s32 %v4235, %v6148
    %v6150 = vrot.slane %v4060, %v6149
    %v6151 = vsel %vm4240, %v6150, %v6146
    %v6152 = vlaneseq
    %v6153 = vshrl.u32 %v6152, 7
    %v6154 = vsub.s32 %v4242, %v6153
    %v6155 = vrot.slane %v4061, %v6154
    %v6156 = vsel %vm4247, %v6155, %v6151
    %v6157 = vlaneseq
    %v6158 = vshrl.u32 %v6157, 7
    %v6159 = vsub.s32 %v4249, %v6158
    %v6160 = vrot.slane %v4062, %v6159
    %v6161 = vsel %vm4254, %v6160, %v6156
    %v6162 = vlaneseq
    %v6163 = vshrl.u32 %v6162, 7
    %v6164 = vsub.s32 %v4256, %v6163
    %v6165 = vrot.slane %v4063, %v6164
    %v6166 = vsel %vm4261, %v6165, %v6161
    %v6167 = vlaneseq
    %v6168 = vshrl.u32 %v6167, 7
    %v6169 = vsub.s32 %v4263, %v6168
    %v6170 = vrot.slane %v4064, %v6169
    %v6171 = vsel %vm4268, %v6170, %v6166
    %v6172 = vlaneseq
    %v6173 = vshrl.u32 %v6172, 7
    %v6174 = vsub.s32 %v4270, %v6173
    %v6175 = vrot.slane %v4065, %v6174
    %v6176 = vsel %vm4275, %v6175, %v6171
    %v6177 = vlaneseq
    %v6178 = vshrl.u32 %v6177, 7
    %v6179 = vsub.s32 %v4277, %v6178
    %v6180 = vrot.slane %v4066, %v6179
    %v6181 = vsel %vm4282, %v6180, %v6176
    %v6182 = vlaneseq
    %v6183 = vshrl.u32 %v6182, 7
    %v6184 = vsub.s32 %v4284, %v6183
    %v6185 = vrot.slane %v4067, %v6184
    %v6186 = vsel %vm4289, %v6185, %v6181
    %v6187 = vlaneseq
    %v6188 = vshrl.u32 %v6187, 7
    %v6189 = vsub.s32 %v4181, %v6188
    %v6190 = vrot.slane %v4068, %v6189
    %v6191 = vlaneseq
    %v6192 = vshrl.u32 %v6191, 7
    %v6193 = vsub.s32 %v4186, %v6192
    %v6194 = vrot.slane %v4069, %v6193
    %v6195 = vsel %vm4191, %v6194, %v6190
    %v6196 = vlaneseq
    %v6197 = vshrl.u32 %v6196, 7
    %v6198 = vsub.s32 %v4193, %v6197
    %v6199 = vrot.slane %v4070, %v6198
    %v6200 = vsel %vm4198, %v6199, %v6195
    %v6201 = vlaneseq
    %v6202 = vshrl.u32 %v6201, 7
    %v6203 = vsub.s32 %v4200, %v6202
    %v6204 = vrot.slane %v4071, %v6203
    %v6205 = vsel %vm4205, %v6204, %v6200
    %v6206 = vlaneseq
    %v6207 = vshrl.u32 %v6206, 7
    %v6208 = vsub.s32 %v4207, %v6207
    %v6209 = vrot.slane %v4072, %v6208
    %v6210 = vsel %vm4212, %v6209, %v6205
    %v6211 = vlaneseq
    %v6212 = vshrl.u32 %v6211, 7
    %v6213 = vsub.s32 %v4214, %v6212
    %v6214 = vrot.slane %v4073, %v6213
    %v6215 = vsel %vm4219, %v6214, %v6210
    %v6216 = vlaneseq
    %v6217 = vshrl.u32 %v6216, 7
    %v6218 = vsub.s32 %v4221, %v6217
    %v6219 = vrot.slane %v4074, %v6218
    %v6220 = vsel %vm4226, %v6219, %v6215
    %v6221 = vlaneseq
    %v6222 = vshrl.u32 %v6221, 7
    %v6223 = vsub.s32 %v4228, %v6222
    %v6224 = vrot.slane %v4075, %v6223
    %v6225 = vsel %vm4233, %v6224, %v6220
    %v6226 = vlaneseq
    %v6227 = vshrl.u32 %v6226, 7
    %v6228 = vsub.s32 %v4235, %v6227
    %v6229 = vrot.slane %v4076, %v6228
    %v6230 = vsel %vm4240, %v6229, %v6225
    %v6231 = vlaneseq
    %v6232 = vshrl.u32 %v6231, 7
    %v6233 = vsub.s32 %v4242, %v6232
    %v6234 = vrot.slane %v4077, %v6233
    %v6235 = vsel %vm4247, %v6234, %v6230
    %v6236 = vlaneseq
    %v6237 = vshrl.u32 %v6236, 7
    %v6238 = vsub.s32 %v4249, %v6237
    %v6239 = vrot.slane %v4078, %v6238
    %v6240 = vsel %vm4254, %v6239, %v6235
    %v6241 = vlaneseq
    %v6242 = vshrl.u32 %v6241, 7
    %v6243 = vsub.s32 %v4256, %v6242
    %v6244 = vrot.slane %v4079, %v6243
    %v6245 = vsel %vm4261, %v6244, %v6240
    %v6246 = vlaneseq
    %v6247 = vshrl.u32 %v6246, 7
    %v6248 = vsub.s32 %v4263, %v6247
    %v6249 = vrot.slane %v4080, %v6248
    %v6250 = vsel %vm4268, %v6249, %v6245
    %v6251 = vlaneseq
    %v6252 = vshrl.u32 %v6251, 7
    %v6253 = vsub.s32 %v4270, %v6252
    %v6254 = vrot.slane %v4081, %v6253
    %v6255 = vsel %vm4275, %v6254, %v6250
    %v6256 = vlaneseq
    %v6257 = vshrl.u32 %v6256, 7
    %v6258 = vsub.s32 %v4277, %v6257
    %v6259 = vrot.slane %v4082, %v6258
    %v6260 = vsel %vm4282, %v6259, %v6255
    %v6261 = vlaneseq
    %v6262 = vshrl.u32 %v6261, 7
    %v6263 = vsub.s32 %v4284, %v6262
    %v6264 = vrot.slane %v4083, %v6263
    %v6265 = vsel %vm4289, %v6264, %v6260
    %v6266 = vlaneseq
    %v6267 = vshrl.u32 %v6266, 7
    %v6268 = vsub.s32 %v4181, %v6267
    %v6269 = vrot.slane %v4084, %v6268
    %v6270 = vlaneseq
    %v6271 = vshrl.u32 %v6270, 7
    %v6272 = vsub.s32 %v4186, %v6271
    %v6273 = vrot.slane %v4085, %v6272
    %v6274 = vsel %vm4191, %v6273, %v6269
    %v6275 = vlaneseq
    %v6276 = vshrl.u32 %v6275, 7
    %v6277 = vsub.s32 %v4193, %v6276
    %v6278 = vrot.slane %v4086, %v6277
    %v6279 = vsel %vm4198, %v6278, %v6274
    %v6280 = vlaneseq
    %v6281 = vshrl.u32 %v6280, 7
    %v6282 = vsub.s32 %v4200, %v6281
    %v6283 = vrot.slane %v4087, %v6282
    %v6284 = vsel %vm4205, %v6283, %v6279
    %v6285 = vlaneseq
    %v6286 = vshrl.u32 %v6285, 7
    %v6287 = vsub.s32 %v4207, %v6286
    %v6288 = vrot.slane %v4088, %v6287
    %v6289 = vsel %vm4212, %v6288, %v6284
    %v6290 = vlaneseq
    %v6291 = vshrl.u32 %v6290, 7
    %v6292 = vsub.s32 %v4214, %v6291
    %v6293 = vrot.slane %v4089, %v6292
    %v6294 = vsel %vm4219, %v6293, %v6289
    %v6295 = vlaneseq
    %v6296 = vshrl.u32 %v6295, 7
    %v6297 = vsub.s32 %v4221, %v6296
    %v6298 = vrot.slane %v4090, %v6297
    %v6299 = vsel %vm4226, %v6298, %v6294
    %v6300 = vlaneseq
    %v6301 = vshrl.u32 %v6300, 7
    %v6302 = vsub.s32 %v4228, %v6301
    %v6303 = vrot.slane %v4091, %v6302
    %v6304 = vsel %vm4233, %v6303, %v6299
    %v6305 = vlaneseq
    %v6306 = vshrl.u32 %v6305, 7
    %v6307 = vsub.s32 %v4235, %v6306
    %v6308 = vrot.slane %v4092, %v6307
    %v6309 = vsel %vm4240, %v6308, %v6304
    %v6310 = vlaneseq
    %v6311 = vshrl.u32 %v6310, 7
    %v6312 = vsub.s32 %v4242, %v6311
    %v6313 = vrot.slane %v4093, %v6312
    %v6314 = vsel %vm4247, %v6313, %v6309
    %v6315 = vlaneseq
    %v6316 = vshrl.u32 %v6315, 7
    %v6317 = vsub.s32 %v4249, %v6316
    %v6318 = vrot.slane %v4094, %v6317
    %v6319 = vsel %vm4254, %v6318, %v6314
    %v6320 = vlaneseq
    %v6321 = vshrl.u32 %v6320, 7
    %v6322 = vsub.s32 %v4256, %v6321
    %v6323 = vrot.slane %v4095, %v6322
    %v6324 = vsel %vm4261, %v6323, %v6319
    %v6325 = vlaneseq
    %v6326 = vshrl.u32 %v6325, 7
    %v6327 = vsub.s32 %v4263, %v6326
    %v6328 = vrot.slane %v4096, %v6327
    %v6329 = vsel %vm4268, %v6328, %v6324
    %v6330 = vlaneseq
    %v6331 = vshrl.u32 %v6330, 7
    %v6332 = vsub.s32 %v4270, %v6331
    %v6333 = vrot.slane %v4097, %v6332
    %v6334 = vsel %vm4275, %v6333, %v6329
    %v6335 = vlaneseq
    %v6336 = vshrl.u32 %v6335, 7
    %v6337 = vsub.s32 %v4277, %v6336
    %v6338 = vrot.slane %v4098, %v6337
    %v6339 = vsel %vm4282, %v6338, %v6334
    %v6340 = vlaneseq
    %v6341 = vshrl.u32 %v6340, 7
    %v6342 = vsub.s32 %v4284, %v6341
    %v6343 = vrot.slane %v4099, %v6342
    %v6344 = vsel %vm4289, %v6343, %v6339
    %v6345 = vlaneseq
    %v6346 = vshrl.u32 %v6345, 7
    %v6347 = vsub.s32 %v4181, %v6346
    %v6348 = vrot.slane %v4100, %v6347
    %v6349 = vlaneseq
    %v6350 = vshrl.u32 %v6349, 7
    %v6351 = vsub.s32 %v4186, %v6350
    %v6352 = vrot.slane %v4101, %v6351
    %v6353 = vsel %vm4191, %v6352, %v6348
    %v6354 = vlaneseq
    %v6355 = vshrl.u32 %v6354, 7
    %v6356 = vsub.s32 %v4193, %v6355
    %v6357 = vrot.slane %v4102, %v6356
    %v6358 = vsel %vm4198, %v6357, %v6353
    %v6359 = vlaneseq
    %v6360 = vshrl.u32 %v6359, 7
    %v6361 = vsub.s32 %v4200, %v6360
    %v6362 = vrot.slane %v4103, %v6361
    %v6363 = vsel %vm4205, %v6362, %v6358
    %v6364 = vlaneseq
    %v6365 = vshrl.u32 %v6364, 7
    %v6366 = vsub.s32 %v4207, %v6365
    %v6367 = vrot.slane %v4104, %v6366
    %v6368 = vsel %vm4212, %v6367, %v6363
    %v6369 = vlaneseq
    %v6370 = vshrl.u32 %v6369, 7
    %v6371 = vsub.s32 %v4214, %v6370
    %v6372 = vrot.slane %v4105, %v6371
    %v6373 = vsel %vm4219, %v6372, %v6368
    %v6374 = vlaneseq
    %v6375 = vshrl.u32 %v6374, 7
    %v6376 = vsub.s32 %v4221, %v6375
    %v6377 = vrot.slane %v4106, %v6376
    %v6378 = vsel %vm4226, %v6377, %v6373
    %v6379 = vlaneseq
    %v6380 = vshrl.u32 %v6379, 7
    %v6381 = vsub.s32 %v4228, %v6380
    %v6382 = vrot.slane %v4107, %v6381
    %v6383 = vsel %vm4233, %v6382, %v6378
    %v6384 = vlaneseq
    %v6385 = vshrl.u32 %v6384, 7
    %v6386 = vsub.s32 %v4235, %v6385
    %v6387 = vrot.slane %v4108, %v6386
    %v6388 = vsel %vm4240, %v6387, %v6383
    %v6389 = vlaneseq
    %v6390 = vshrl.u32 %v6389, 7
    %v6391 = vsub.s32 %v4242, %v6390
    %v6392 = vrot.slane %v4109, %v6391
    %v6393 = vsel %vm4247, %v6392, %v6388
    %v6394 = vlaneseq
    %v6395 = vshrl.u32 %v6394, 7
    %v6396 = vsub.s32 %v4249, %v6395
    %v6397 = vrot.slane %v4110, %v6396
    %v6398 = vsel %vm4254, %v6397, %v6393
    %v6399 = vlaneseq
    %v6400 = vshrl.u32 %v6399, 7
    %v6401 = vsub.s32 %v4256, %v6400
    %v6402 = vrot.slane %v4111, %v6401
    %v6403 = vsel %vm4261, %v6402, %v6398
    %v6404 = vlaneseq
    %v6405 = vshrl.u32 %v6404, 7
    %v6406 = vsub.s32 %v4263, %v6405
    %v6407 = vrot.slane %v4112, %v6406
    %v6408 = vsel %vm4268, %v6407, %v6403
    %v6409 = vlaneseq
    %v6410 = vshrl.u32 %v6409, 7
    %v6411 = vsub.s32 %v4270, %v6410
    %v6412 = vrot.slane %v4113, %v6411
    %v6413 = vsel %vm4275, %v6412, %v6408
    %v6414 = vlaneseq
    %v6415 = vshrl.u32 %v6414, 7
    %v6416 = vsub.s32 %v4277, %v6415
    %v6417 = vrot.slane %v4114, %v6416
    %v6418 = vsel %vm4282, %v6417, %v6413
    %v6419 = vlaneseq
    %v6420 = vshrl.u32 %v6419, 7
    %v6421 = vsub.s32 %v4284, %v6420
    %v6422 = vrot.slane %v4115, %v6421
    %v6423 = vsel %vm4289, %v6422, %v6418
    %v6424 = vlaneseq
    %v6425 = vshrl.u32 %v6424, 7
    %v6426 = vsub.s32 %v4181, %v6425
    %v6427 = vrot.slane %v4116, %v6426
    %v6428 = vlaneseq
    %v6429 = vshrl.u32 %v6428, 7
    %v6430 = vsub.s32 %v4186, %v6429
    %v6431 = vrot.slane %v4117, %v6430
    %v6432 = vsel %vm4191, %v6431, %v6427
    %v6433 = vlaneseq
    %v6434 = vshrl.u32 %v6433, 7
    %v6435 = vsub.s32 %v4193, %v6434
    %v6436 = vrot.slane %v4118, %v6435
    %v6437 = vsel %vm4198, %v6436, %v6432
    %v6438 = vlaneseq
    %v6439 = vshrl.u32 %v6438, 7
    %v6440 = vsub.s32 %v4200, %v6439
    %v6441 = vrot.slane %v4119, %v6440
    %v6442 = vsel %vm4205, %v6441, %v6437
    %v6443 = vlaneseq
    %v6444 = vshrl.u32 %v6443, 7
    %v6445 = vsub.s32 %v4207, %v6444
    %v6446 = vrot.slane %v4120, %v6445
    %v6447 = vsel %vm4212, %v6446, %v6442
    %v6448 = vlaneseq
    %v6449 = vshrl.u32 %v6448, 7
    %v6450 = vsub.s32 %v4214, %v6449
    %v6451 = vrot.slane %v4121, %v6450
    %v6452 = vsel %vm4219, %v6451, %v6447
    %v6453 = vlaneseq
    %v6454 = vshrl.u32 %v6453, 7
    %v6455 = vsub.s32 %v4221, %v6454
    %v6456 = vrot.slane %v4122, %v6455
    %v6457 = vsel %vm4226, %v6456, %v6452
    %v6458 = vlaneseq
    %v6459 = vshrl.u32 %v6458, 7
    %v6460 = vsub.s32 %v4228, %v6459
    %v6461 = vrot.slane %v4123, %v6460
    %v6462 = vsel %vm4233, %v6461, %v6457
    %v6463 = vlaneseq
    %v6464 = vshrl.u32 %v6463, 7
    %v6465 = vsub.s32 %v4235, %v6464
    %v6466 = vrot.slane %v4124, %v6465
    %v6467 = vsel %vm4240, %v6466, %v6462
    %v6468 = vlaneseq
    %v6469 = vshrl.u32 %v6468, 7
    %v6470 = vsub.s32 %v4242, %v6469
    %v6471 = vrot.slane %v4125, %v6470
    %v6472 = vsel %vm4247, %v6471, %v6467
    %v6473 = vlaneseq
    %v6474 = vshrl.u32 %v6473, 7
    %v6475 = vsub.s32 %v4249, %v6474
    %v6476 = vrot.slane %v4126, %v6475
    %v6477 = vsel %vm4254, %v6476, %v6472
    %v6478 = vlaneseq
    %v6479 = vshrl.u32 %v6478, 7
    %v6480 = vsub.s32 %v4256, %v6479
    %v6481 = vrot.slane %v4127, %v6480
    %v6482 = vsel %vm4261, %v6481, %v6477
    %v6483 = vlaneseq
    %v6484 = vshrl.u32 %v6483, 7
    %v6485 = vsub.s32 %v4263, %v6484
    %v6486 = vrot.slane %v4128, %v6485
    %v6487 = vsel %vm4268, %v6486, %v6482
    %v6488 = vlaneseq
    %v6489 = vshrl.u32 %v6488, 7
    %v6490 = vsub.s32 %v4270, %v6489
    %v6491 = vrot.slane %v4129, %v6490
    %v6492 = vsel %vm4275, %v6491, %v6487
    %v6493 = vlaneseq
    %v6494 = vshrl.u32 %v6493, 7
    %v6495 = vsub.s32 %v4277, %v6494
    %v6496 = vrot.slane %v4130, %v6495
    %v6497 = vsel %vm4282, %v6496, %v6492
    %v6498 = vlaneseq
    %v6499 = vshrl.u32 %v6498, 7
    %v6500 = vsub.s32 %v4284, %v6499
    %v6501 = vrot.slane %v4131, %v6500
    %v6502 = vsel %vm4289, %v6501, %v6497
    %v6503 = vlaneseq
    %v6504 = vshrl.u32 %v6503, 7
    %v6505 = vsub.s32 %v4181, %v6504
    %v6506 = vrot.slane %v4132, %v6505
    %v6507 = vlaneseq
    %v6508 = vshrl.u32 %v6507, 7
    %v6509 = vsub.s32 %v4186, %v6508
    %v6510 = vrot.slane %v4133, %v6509
    %v6511 = vsel %vm4191, %v6510, %v6506
    %v6512 = vlaneseq
    %v6513 = vshrl.u32 %v6512, 7
    %v6514 = vsub.s32 %v4193, %v6513
    %v6515 = vrot.slane %v4134, %v6514
    %v6516 = vsel %vm4198, %v6515, %v6511
    %v6517 = vlaneseq
    %v6518 = vshrl.u32 %v6517, 7
    %v6519 = vsub.s32 %v4200, %v6518
    %v6520 = vrot.slane %v4135, %v6519
    %v6521 = vsel %vm4205, %v6520, %v6516
    %v6522 = vlaneseq
    %v6523 = vshrl.u32 %v6522, 7
    %v6524 = vsub.s32 %v4207, %v6523
    %v6525 = vrot.slane %v4136, %v6524
    %v6526 = vsel %vm4212, %v6525, %v6521
    %v6527 = vlaneseq
    %v6528 = vshrl.u32 %v6527, 7
    %v6529 = vsub.s32 %v4214, %v6528
    %v6530 = vrot.slane %v4137, %v6529
    %v6531 = vsel %vm4219, %v6530, %v6526
    %v6532 = vlaneseq
    %v6533 = vshrl.u32 %v6532, 7
    %v6534 = vsub.s32 %v4221, %v6533
    %v6535 = vrot.slane %v4138, %v6534
    %v6536 = vsel %vm4226, %v6535, %v6531
    %v6537 = vlaneseq
    %v6538 = vshrl.u32 %v6537, 7
    %v6539 = vsub.s32 %v4228, %v6538
    %v6540 = vrot.slane %v4139, %v6539
    %v6541 = vsel %vm4233, %v6540, %v6536
    %v6542 = vlaneseq
    %v6543 = vshrl.u32 %v6542, 7
    %v6544 = vsub.s32 %v4235, %v6543
    %v6545 = vrot.slane %v4140, %v6544
    %v6546 = vsel %vm4240, %v6545, %v6541
    %v6547 = vlaneseq
    %v6548 = vshrl.u32 %v6547, 7
    %v6549 = vsub.s32 %v4242, %v6548
    %v6550 = vrot.slane %v4141, %v6549
    %v6551 = vsel %vm4247, %v6550, %v6546
    %v6552 = vlaneseq
    %v6553 = vshrl.u32 %v6552, 7
    %v6554 = vsub.s32 %v4249, %v6553
    %v6555 = vrot.slane %v4142, %v6554
    %v6556 = vsel %vm4254, %v6555, %v6551
    %v6557 = vlaneseq
    %v6558 = vshrl.u32 %v6557, 7
    %v6559 = vsub.s32 %v4256, %v6558
    %v6560 = vrot.slane %v4143, %v6559
    %v6561 = vsel %vm4261, %v6560, %v6556
    %v6562 = vlaneseq
    %v6563 = vshrl.u32 %v6562, 7
    %v6564 = vsub.s32 %v4263, %v6563
    %v6565 = vrot.slane %v4144, %v6564
    %v6566 = vsel %vm4268, %v6565, %v6561
    %v6567 = vlaneseq
    %v6568 = vshrl.u32 %v6567, 7
    %v6569 = vsub.s32 %v4270, %v6568
    %v6570 = vrot.slane %v4145, %v6569
    %v6571 = vsel %vm4275, %v6570, %v6566
    %v6572 = vlaneseq
    %v6573 = vshrl.u32 %v6572, 7
    %v6574 = vsub.s32 %v4277, %v6573
    %v6575 = vrot.slane %v4146, %v6574
    %v6576 = vsel %vm4282, %v6575, %v6571
    %v6577 = vlaneseq
    %v6578 = vshrl.u32 %v6577, 7
    %v6579 = vsub.s32 %v4284, %v6578
    %v6580 = vrot.slane %v4147, %v6579
    %v6581 = vsel %vm4289, %v6580, %v6576
    %v6582 = vlaneseq
    %v6583 = vshrl.u32 %v6582, 7
    %v6584 = vsub.s32 %v4181, %v6583
    %v6585 = vrot.slane %v4148, %v6584
    %v6586 = vlaneseq
    %v6587 = vshrl.u32 %v6586, 7
    %v6588 = vsub.s32 %v4186, %v6587
    %v6589 = vrot.slane %v4149, %v6588
    %v6590 = vsel %vm4191, %v6589, %v6585
    %v6591 = vlaneseq
    %v6592 = vshrl.u32 %v6591, 7
    %v6593 = vsub.s32 %v4193, %v6592
    %v6594 = vrot.slane %v4150, %v6593
    %v6595 = vsel %vm4198, %v6594, %v6590
    %v6596 = vlaneseq
    %v6597 = vshrl.u32 %v6596, 7
    %v6598 = vsub.s32 %v4200, %v6597
    %v6599 = vrot.slane %v4151, %v6598
    %v6600 = vsel %vm4205, %v6599, %v6595
    %v6601 = vlaneseq
    %v6602 = vshrl.u32 %v6601, 7
    %v6603 = vsub.s32 %v4207, %v6602
    %v6604 = vrot.slane %v4152, %v6603
    %v6605 = vsel %vm4212, %v6604, %v6600
    %v6606 = vlaneseq
    %v6607 = vshrl.u32 %v6606, 7
    %v6608 = vsub.s32 %v4214, %v6607
    %v6609 = vrot.slane %v4153, %v6608
    %v6610 = vsel %vm4219, %v6609, %v6605
    %v6611 = vlaneseq
    %v6612 = vshrl.u32 %v6611, 7
    %v6613 = vsub.s32 %v4221, %v6612
    %v6614 = vrot.slane %v4154, %v6613
    %v6615 = vsel %vm4226, %v6614, %v6610
    %v6616 = vlaneseq
    %v6617 = vshrl.u32 %v6616, 7
    %v6618 = vsub.s32 %v4228, %v6617
    %v6619 = vrot.slane %v4155, %v6618
    %v6620 = vsel %vm4233, %v6619, %v6615
    %v6621 = vlaneseq
    %v6622 = vshrl.u32 %v6621, 7
    %v6623 = vsub.s32 %v4235, %v6622
    %v6624 = vrot.slane %v4156, %v6623
    %v6625 = vsel %vm4240, %v6624, %v6620
    %v6626 = vlaneseq
    %v6627 = vshrl.u32 %v6626, 7
    %v6628 = vsub.s32 %v4242, %v6627
    %v6629 = vrot.slane %v4157, %v6628
    %v6630 = vsel %vm4247, %v6629, %v6625
    %v6631 = vlaneseq
    %v6632 = vshrl.u32 %v6631, 7
    %v6633 = vsub.s32 %v4249, %v6632
    %v6634 = vrot.slane %v4158, %v6633
    %v6635 = vsel %vm4254, %v6634, %v6630
    %v6636 = vlaneseq
    %v6637 = vshrl.u32 %v6636, 7
    %v6638 = vsub.s32 %v4256, %v6637
    %v6639 = vrot.slane %v4159, %v6638
    %v6640 = vsel %vm4261, %v6639, %v6635
    %v6641 = vlaneseq
    %v6642 = vshrl.u32 %v6641, 7
    %v6643 = vsub.s32 %v4263, %v6642
    %v6644 = vrot.slane %v4160, %v6643
    %v6645 = vsel %vm4268, %v6644, %v6640
    %v6646 = vlaneseq
    %v6647 = vshrl.u32 %v6646, 7
    %v6648 = vsub.s32 %v4270, %v6647
    %v6649 = vrot.slane %v4161, %v6648
    %v6650 = vsel %vm4275, %v6649, %v6645
    %v6651 = vlaneseq
    %v6652 = vshrl.u32 %v6651, 7
    %v6653 = vsub.s32 %v4277, %v6652
    %v6654 = vrot.slane %v4162, %v6653
    %v6655 = vsel %vm4282, %v6654, %v6650
    %v6656 = vlaneseq
    %v6657 = vshrl.u32 %v6656, 7
    %v6658 = vsub.s32 %v4284, %v6657
    %v6659 = vrot.slane %v4163, %v6658
    %v6660 = vsel %vm4289, %v6659, %v6655
    %v6661 = vlaneseq
    %v6662 = vshrl.u32 %v6661, 7
    %v6663 = vsub.s32 %v4181, %v6662
    %v6664 = vrot.slane %v4164, %v6663
    %v6665 = vlaneseq
    %v6666 = vshrl.u32 %v6665, 7
    %v6667 = vsub.s32 %v4186, %v6666
    %v6668 = vrot.slane %v4165, %v6667
    %v6669 = vsel %vm4191, %v6668, %v6664
    %v6670 = vlaneseq
    %v6671 = vshrl.u32 %v6670, 7
    %v6672 = vsub.s32 %v4193, %v6671
    %v6673 = vrot.slane %v4166, %v6672
    %v6674 = vsel %vm4198, %v6673, %v6669
    %v6675 = vlaneseq
    %v6676 = vshrl.u32 %v6675, 7
    %v6677 = vsub.s32 %v4200, %v6676
    %v6678 = vrot.slane %v4167, %v6677
    %v6679 = vsel %vm4205, %v6678, %v6674
    %v6680 = vlaneseq
    %v6681 = vshrl.u32 %v6680, 7
    %v6682 = vsub.s32 %v4207, %v6681
    %v6683 = vrot.slane %v4168, %v6682
    %v6684 = vsel %vm4212, %v6683, %v6679
    %v6685 = vlaneseq
    %v6686 = vshrl.u32 %v6685, 7
    %v6687 = vsub.s32 %v4214, %v6686
    %v6688 = vrot.slane %v4169, %v6687
    %v6689 = vsel %vm4219, %v6688, %v6684
    %v6690 = vlaneseq
    %v6691 = vshrl.u32 %v6690, 7
    %v6692 = vsub.s32 %v4221, %v6691
    %v6693 = vrot.slane %v4170, %v6692
    %v6694 = vsel %vm4226, %v6693, %v6689
    %v6695 = vlaneseq
    %v6696 = vshrl.u32 %v6695, 7
    %v6697 = vsub.s32 %v4228, %v6696
    %v6698 = vrot.slane %v4171, %v6697
    %v6699 = vsel %vm4233, %v6698, %v6694
    %v6700 = vlaneseq
    %v6701 = vshrl.u32 %v6700, 7
    %v6702 = vsub.s32 %v4235, %v6701
    %v6703 = vrot.slane %v4172, %v6702
    %v6704 = vsel %vm4240, %v6703, %v6699
    %v6705 = vlaneseq
    %v6706 = vshrl.u32 %v6705, 7
    %v6707 = vsub.s32 %v4242, %v6706
    %v6708 = vrot.slane %v4173, %v6707
    %v6709 = vsel %vm4247, %v6708, %v6704
    %v6710 = vlaneseq
    %v6711 = vshrl.u32 %v6710, 7
    %v6712 = vsub.s32 %v4249, %v6711
    %v6713 = vrot.slane %v4174, %v6712
    %v6714 = vsel %vm4254, %v6713, %v6709
    %v6715 = vlaneseq
    %v6716 = vshrl.u32 %v6715, 7
    %v6717 = vsub.s32 %v4256, %v6716
    %v6718 = vrot.slane %v4175, %v6717
    %v6719 = vsel %vm4261, %v6718, %v6714
    %v6720 = vlaneseq
    %v6721 = vshrl.u32 %v6720, 7
    %v6722 = vsub.s32 %v4263, %v6721
    %v6723 = vrot.slane %v4176, %v6722
    %v6724 = vsel %vm4268, %v6723, %v6719
    %v6725 = vlaneseq
    %v6726 = vshrl.u32 %v6725, 7
    %v6727 = vsub.s32 %v4270, %v6726
    %v6728 = vrot.slane %v4177, %v6727
    %v6729 = vsel %vm4275, %v6728, %v6724
    %v6730 = vlaneseq
    %v6731 = vshrl.u32 %v6730, 7
    %v6732 = vsub.s32 %v4277, %v6731
    %v6733 = vrot.slane %v4178, %v6732
    %v6734 = vsel %vm4282, %v6733, %v6729
    %v6735 = vlaneseq
    %v6736 = vshrl.u32 %v6735, 7
    %v6737 = vsub.s32 %v4284, %v6736
    %v6738 = vrot.slane %v4179, %v6737
    %v6739 = vsel %vm4289, %v6738, %v6734
    %vm6740 = vcmask 1041409
    %v6741 = vsel %vm6740, %v5554, %v4290
    %v6742 = vsel %vm6740, %v5633, %v4369
    %v6743 = vsel %vm6740, %v5712, %v4448
    %v6744 = vsel %vm6740, %v5791, %v4527
    %v6745 = vsel %vm6740, %v5870, %v4606
    %v6746 = vsel %vm6740, %v5949, %v4685
    %v6747 = vsel %vm6740, %v6028, %v4764
    %v6748 = vsel %vm6740, %v6107, %v4843
    %v6749 = vsel %vm6740, %v6186, %v4922
    %v6750 = vsel %vm6740, %v6265, %v5001
    %v6751 = vsel %vm6740, %v6344, %v5080
    %v6752 = vsel %vm6740, %v6423, %v5159
    %v6753 = vsel %vm6740, %v6502, %v5238
    %v6754 = vsel %vm6740, %v6581, %v5317
    %v6755 = vsel %vm6740, %v6660, %v5396
    %v6756 = vsel %vm6740, %v6739, %v5475
    %v6757 = vpack.c.b16 %v6741, %v6741
    %v6758 = vpack.c.b16 %v6742, %v6742
    %v6759 = vpack.c.b16 %v6743, %v6743
    %v6760 = vpack.c.b16 %v6744, %v6744
    %v6761 = vpack.c.b16 %v6745, %v6745
    %v6762 = vpack.c.b16 %v6746, %v6746
    %v6763 = vpack.c.b16 %v6747, %v6747
    %v6764 = vpack.c.b16 %v6748, %v6748
    %v6765 = vpack.c.b16 %v6749, %v6749
    %v6766 = vpack.c.b16 %v6750, %v6750
    %v6767 = vpack.c.b16 %v6751, %v6751
    %v6768 = vpack.c.b16 %v6752, %v6752
    %v6769 = vpack.c.b16 %v6753, %v6753
    %v6770 = vpack.c.b16 %v6754, %v6754
    %v6771 = vpack.c.b16 %v6755, %v6755
    %v6772 = vpack.c.b16 %v6756, %v6756
    %v7813 = vunpack.c.l.b16 %v2346
    %v7814 = vunpack.c.h.b16 %v2346
    %v7815 = vunpack.c.l.b16 %v2347
    %v7816 = vunpack.c.h.b16 %v2347
    %v7817 = vunpack.c.l.b16 %v2348
    %v7818 = vunpack.c.h.b16 %v2348
    %v7819 = vunpack.c.l.b16 %v2349
    %v7820 = vunpack.c.h.b16 %v2349
    %v7821 = vunpack.c.l.b16 %v2350
    %v7822 = vunpack.c.h.b16 %v2350
    %v7823 = vunpack.c.l.b16 %v2351
    %v7824 = vunpack.c.h.b16 %v2351
    %v7825 = vunpack.c.l.b16 %v2352
    %v7826 = vunpack.c.h.b16 %v2352
    %v7827 = vunpack.c.l.b16 %v2353
    %v7828 = vunpack.c.h.b16 %v2353
    %v7829 = vunpack.c.l.b16 %v2354
    %v7830 = vunpack.c.h.b16 %v2354
    %v7831 = vunpack.c.l.b16 %v2355
    %v7832 = vunpack.c.h.b16 %v2355
    %v7833 = vunpack.c.l.b16 %v2356
    %v7834 = vunpack.c.h.b16 %v2356
    %v7835 = vunpack.c.l.b16 %v2357
    %v7836 = vunpack.c.h.b16 %v2357
    %v7837 = vunpack.c.l.b16 %v2358
    %v7838 = vunpack.c.h.b16 %v2358
    %v7839 = vunpack.c.l.b16 %v2359
    %v7840 = vunpack.c.h.b16 %v2359
    %v7841 = vunpack.c.l.b16 %v2360
    %v7842 = vunpack.c.h.b16 %v2360
    %v7843 = vunpack.c.l.b16 %v2361
    %v7844 = vunpack.c.h.b16 %v2361
    %v7845 = vunpack.c.l.b16 %v2362
    %v7846 = vunpack.c.h.b16 %v2362
    %v7847 = vunpack.c.l.b16 %v2363
    %v7848 = vunpack.c.h.b16 %v2363
    %v7849 = vunpack.c.l.b16 %v2364
    %v7850 = vunpack.c.h.b16 %v2364
    %v7851 = vunpack.c.l.b16 %v2365
    %v7852 = vunpack.c.h.b16 %v2365
    %v7853 = vunpack.c.l.b16 %v2366
    %v7854 = vunpack.c.h.b16 %v2366
    %v7855 = vunpack.c.l.b16 %v2367
    %v7856 = vunpack.c.h.b16 %v2367
    %v7857 = vunpack.c.l.b16 %v2368
    %v7858 = vunpack.c.h.b16 %v2368
    %v7859 = vunpack.c.l.b16 %v2369
    %v7860 = vunpack.c.h.b16 %v2369
    %v7861 = vunpack.c.l.b16 %v2370
    %v7862 = vunpack.c.h.b16 %v2370
    %v7863 = vunpack.c.l.b16 %v2371
    %v7864 = vunpack.c.h.b16 %v2371
    %v7865 = vunpack.c.l.b16 %v2372
    %v7866 = vunpack.c.h.b16 %v2372
    %v7867 = vunpack.c.l.b16 %v2373
    %v7868 = vunpack.c.h.b16 %v2373
    %v7869 = vunpack.c.l.b16 %v2374
    %v7870 = vunpack.c.h.b16 %v2374
    %v7871 = vunpack.c.l.b16 %v2375
    %v7872 = vunpack.c.h.b16 %v2375
    %v7873 = vunpack.c.l.b16 %v2376
    %v7874 = vunpack.c.h.b16 %v2376
    %v7875 = vunpack.c.l.b16 %v2377
    %v7876 = vunpack.c.h.b16 %v2377
    %v7877 = vunpack.c.l.b16 %v2378
    %v7878 = vunpack.c.h.b16 %v2378
    %v7879 = vunpack.c.l.b16 %v2379
    %v7880 = vunpack.c.h.b16 %v2379
    %v7881 = vunpack.c.l.b16 %v2380
    %v7882 = vunpack.c.h.b16 %v2380
    %v7883 = vunpack.c.l.b16 %v2381
    %v7884 = vunpack.c.h.b16 %v2381
    %v7885 = vunpack.c.l.b16 %v2382
    %v7886 = vunpack.c.h.b16 %v2382
    %v7887 = vunpack.c.l.b16 %v2383
    %v7888 = vunpack.c.h.b16 %v2383
    %v7889 = vunpack.c.l.b16 %v2384
    %v7890 = vunpack.c.h.b16 %v2384
    %v7891 = vunpack.c.l.b16 %v2385
    %v7892 = vunpack.c.h.b16 %v2385
    %v7893 = vunpack.c.l.b16 %v2386
    %v7894 = vunpack.c.h.b16 %v2386
    %v7895 = vunpack.c.l.b16 %v2387
    %v7896 = vunpack.c.h.b16 %v2387
    %v7897 = vunpack.c.l.b16 %v2388
    %v7898 = vunpack.c.h.b16 %v2388
    %v7899 = vunpack.c.l.b16 %v2389
    %v7900 = vunpack.c.h.b16 %v2389
    %v7901 = vunpack.c.l.b16 %v2390
    %v7902 = vunpack.c.h.b16 %v2390
    %v7903 = vunpack.c.l.b16 %v2391
    %v7904 = vunpack.c.h.b16 %v2391
    %v7905 = vunpack.c.l.b16 %v2392
    %v7906 = vunpack.c.h.b16 %v2392
    %v7907 = vunpack.c.l.b16 %v2393
    %v7908 = vunpack.c.h.b16 %v2393
    %v7909 = vunpack.c.l.b16 %v2394
    %v7910 = vunpack.c.h.b16 %v2394
    %v7911 = vunpack.c.l.b16 %v2395
    %v7912 = vunpack.c.h.b16 %v2395
    %v7913 = vunpack.c.l.b16 %v2396
    %v7914 = vunpack.c.h.b16 %v2396
    %v7915 = vunpack.c.l.b16 %v2397
    %v7916 = vunpack.c.h.b16 %v2397
    %v7917 = vunpack.c.l.b16 %v2398
    %v7918 = vunpack.c.h.b16 %v2398
    %v7919 = vunpack.c.l.b16 %v2399
    %v7920 = vunpack.c.h.b16 %v2399
    %v7921 = vunpack.c.l.b16 %v2400
    %v7922 = vunpack.c.h.b16 %v2400
    %v7923 = vunpack.c.l.b16 %v2401
    %v7924 = vunpack.c.h.b16 %v2401
    %v7925 = vunpack.c.l.b16 %v2402
    %v7926 = vunpack.c.h.b16 %v2402
    %v7927 = vunpack.c.l.b16 %v2403
    %v7928 = vunpack.c.h.b16 %v2403
    %v7929 = vunpack.c.l.b16 %v2404
    %v7930 = vunpack.c.h.b16 %v2404
    %v7931 = vunpack.c.l.b16 %v2405
    %v7932 = vunpack.c.h.b16 %v2405
    %v7933 = vunpack.c.l.b16 %v2406
    %v7934 = vunpack.c.h.b16 %v2406
    %v7935 = vunpack.c.l.b16 %v2407
    %v7936 = vunpack.c.h.b16 %v2407
    %v7937 = vunpack.c.l.b16 %v2408
    %v7938 = vunpack.c.h.b16 %v2408
    %v7939 = vunpack.c.l.b16 %v2409
    %v7940 = vunpack.c.h.b16 %v2409
    %v7941 = vunpack.c.l.b16 %v2410
    %v7942 = vunpack.c.h.b16 %v2410
    %v7943 = vunpack.c.l.b16 %v2411
    %v7944 = vunpack.c.h.b16 %v2411
    %v7945 = vunpack.c.l.b16 %v2412
    %v7946 = vunpack.c.h.b16 %v2412
    %v7947 = vunpack.c.l.b16 %v2413
    %v7948 = vunpack.c.h.b16 %v2413
    %v7949 = vunpack.c.l.b16 %v2414
    %v7950 = vunpack.c.h.b16 %v2414
    %v7951 = vunpack.c.l.b16 %v2415
    %v7952 = vunpack.c.h.b16 %v2415
    %v7953 = vunpack.c.l.b16 %v2416
    %v7954 = vunpack.c.h.b16 %v2416
    %v7955 = vunpack.c.l.b16 %v2417
    %v7956 = vunpack.c.h.b16 %v2417
    %v7957 = vunpack.c.l.b16 %v2418
    %v7958 = vunpack.c.h.b16 %v2418
    %v7959 = vunpack.c.l.b16 %v2419
    %v7960 = vunpack.c.h.b16 %v2419
    %v7961 = vunpack.c.l.b16 %v2420
    %v7962 = vunpack.c.h.b16 %v2420
    %v7963 = vunpack.c.l.b16 %v2421
    %v7964 = vunpack.c.h.b16 %v2421
    %v7965 = vunpack.c.l.b16 %v2422
    %v7966 = vunpack.c.h.b16 %v2422
    %v7967 = vunpack.c.l.b16 %v2423
    %v7968 = vunpack.c.h.b16 %v2423
    %v7969 = vunpack.c.l.b16 %v2424
    %v7970 = vunpack.c.h.b16 %v2424
    %v7971 = vunpack.c.l.b16 %v2425
    %v7972 = vunpack.c.h.b16 %v2425
    %v7973 = vunpack.c.l.b16 %v2426
    %v7974 = vunpack.c.h.b16 %v2426
    %v7975 = vunpack.c.l.b16 %v2427
    %v7976 = vunpack.c.h.b16 %v2427
    %v7977 = vunpack.c.l.b16 %v2428
    %v7978 = vunpack.c.h.b16 %v2428
    %v7979 = vunpack.c.l.b16 %v2429
    %v7980 = vunpack.c.h.b16 %v2429
    %v7981 = vunpack.c.l.b16 %v2430
    %v7982 = vunpack.c.h.b16 %v2430
    %v7983 = vunpack.c.l.b16 %v2431
    %v7984 = vunpack.c.h.b16 %v2431
    %v7985 = vunpack.c.l.b16 %v2432
    %v7986 = vunpack.c.h.b16 %v2432
    %v7987 = vunpack.c.l.b16 %v2433
    %v7988 = vunpack.c.h.b16 %v2433
    %v7989 = vunpack.c.l.b16 %v2434
    %v7990 = vunpack.c.h.b16 %v2434
    %v7991 = vunpack.c.l.b16 %v2435
    %v7992 = vunpack.c.h.b16 %v2435
    %v7993 = vunpack.c.l.b16 %v2436
    %v7994 = vunpack.c.h.b16 %v2436
    %v7995 = vunpack.c.l.b16 %v2437
    %v7996 = vunpack.c.h.b16 %v2437
    %v7997 = vunpack.c.l.b16 %v2438
    %v7998 = vunpack.c.h.b16 %v2438
    %v7999 = vunpack.c.l.b16 %v2439
    %v8000 = vunpack.c.h.b16 %v2439
    %v8001 = vunpack.c.l.b16 %v2440
    %v8002 = vunpack.c.h.b16 %v2440
    %v8003 = vunpack.c.l.b16 %v2441
    %v8004 = vunpack.c.h.b16 %v2441
    %v8005 = vunpack.c.l.b16 %v2442
    %v8006 = vunpack.c.h.b16 %v2442
    %v8007 = vunpack.c.l.b16 %v2443
    %v8008 = vunpack.c.h.b16 %v2443
    %v8009 = vunpack.c.l.b16 %v2444
    %v8010 = vunpack.c.h.b16 %v2444
    %v8011 = vunpack.c.l.b16 %v2445
    %v8012 = vunpack.c.h.b16 %v2445
    %v8013 = vunpack.c.l.b16 %v2446
    %v8014 = vunpack.c.h.b16 %v2446
    %v8015 = vunpack.c.l.b16 %v2447
    %v8016 = vunpack.c.h.b16 %v2447
    %v8017 = vunpack.c.l.b16 %v2448
    %v8018 = vunpack.c.h.b16 %v2448
    %v8019 = vunpack.c.l.b16 %v2449
    %v8020 = vunpack.c.h.b16 %v2449
    %v8021 = vunpack.c.l.b16 %v2450
    %v8022 = vunpack.c.h.b16 %v2450
    %v8023 = vunpack.c.l.b16 %v2451
    %v8024 = vunpack.c.h.b16 %v2451
    %v8025 = vunpack.c.l.b16 %v2452
    %v8026 = vunpack.c.h.b16 %v2452
    %v8027 = vunpack.c.l.b16 %v2453
    %v8028 = vunpack.c.h.b16 %v2453
    %v8029 = vunpack.c.l.b16 %v2454
    %v8030 = vunpack.c.h.b16 %v2454
    %v8031 = vunpack.c.l.b16 %v2455
    %v8032 = vunpack.c.h.b16 %v2455
    %v8033 = vunpack.c.l.b16 %v2456
    %v8034 = vunpack.c.h.b16 %v2456
    %v8035 = vunpack.c.l.b16 %v2457
    %v8036 = vunpack.c.h.b16 %v2457
    %v8037 = vunpack.c.l.b16 %v2458
    %v8038 = vunpack.c.h.b16 %v2458
    %v8039 = vunpack.c.l.b16 %v2459
    %v8040 = vunpack.c.h.b16 %v2459
    %v8041 = vunpack.c.l.b16 %v2460
    %v8042 = vunpack.c.h.b16 %v2460
    %v8043 = vunpack.c.l.b16 %v2461
    %v8044 = vunpack.c.h.b16 %v2461
    %v8045 = vunpack.c.l.b16 %v2462
    %v8046 = vunpack.c.h.b16 %v2462
    %v8047 = vunpack.c.l.b16 %v2463
    %v8048 = vunpack.c.h.b16 %v2463
    %v8049 = vunpack.c.l.b16 %v2464
    %v8050 = vunpack.c.h.b16 %v2464
    %v8051 = vunpack.c.l.b16 %v2465
    %v8052 = vunpack.c.h.b16 %v2465
    %v8053 = vunpack.c.l.b16 %v2466
    %v8054 = vunpack.c.h.b16 %v2466
    %v8055 = vunpack.c.l.b16 %v2467
    %v8056 = vunpack.c.h.b16 %v2467
    %v8057 = vunpack.c.l.b16 %v2468
    %v8058 = vunpack.c.h.b16 %v2468
    %v8059 = vunpack.c.l.b16 %v2469
    %v8060 = vunpack.c.h.b16 %v2469
    %v8061 = vunpack.c.l.b16 %v2470
    %v8062 = vunpack.c.h.b16 %v2470
    %v8063 = vunpack.c.l.b16 %v2471
    %v8064 = vunpack.c.h.b16 %v2471
    %v8065 = vunpack.c.l.b16 %v2472
    %v8066 = vunpack.c.h.b16 %v2472
    %v8067 = vunpack.c.l.b16 %v2473
    %v8068 = vunpack.c.h.b16 %v2473
    %v8069 = vunpack.c.l.b16 %v2474
    %v8070 = vunpack.c.h.b16 %v2474
    %v8071 = vunpack.c.l.b16 %v2475
    %v8072 = vunpack.c.h.b16 %v2475
    %v8073 = vunpack.c.l.b16 %v2476
    %v8074 = vunpack.c.h.b16 %v2476
    %v8075 = vunpack.c.l.b16 %v2477
    %v8076 = vunpack.c.h.b16 %v2477
    %v8077 = vunpack.c.l.b16 %v2478
    %v8078 = vunpack.c.h.b16 %v2478
    %v8079 = vunpack.c.l.b16 %v2479
    %v8080 = vunpack.c.h.b16 %v2479
    %v8081 = vunpack.c.l.b16 %v2480
    %v8082 = vunpack.c.h.b16 %v2480
    %v8083 = vunpack.c.l.b16 %v2481
    %v8084 = vunpack.c.h.b16 %v2481
    %v8085 = vunpack.c.l.b16 %v2482
    %v8086 = vunpack.c.h.b16 %v2482
    %v8087 = vunpack.c.l.b16 %v2483
    %v8088 = vunpack.c.h.b16 %v2483
    %v8089 = vunpack.c.l.b16 %v2484
    %v8090 = vunpack.c.h.b16 %v2484
    %v8091 = vunpack.c.l.b16 %v2485
    %v8092 = vunpack.c.h.b16 %v2485
    %v8093 = vunpack.c.l.b16 %v2486
    %v8094 = vunpack.c.h.b16 %v2486
    %v8095 = vunpack.c.l.b16 %v2487
    %v8096 = vunpack.c.h.b16 %v2487
    %v8097 = vunpack.c.l.b16 %v2488
    %v8098 = vunpack.c.h.b16 %v2488
    %v8099 = vunpack.c.l.b16 %v2489
    %v8100 = vunpack.c.h.b16 %v2489
    %v8101 = vunpack.c.l.b16 %v2490
    %v8102 = vunpack.c.h.b16 %v2490
    %v8103 = vunpack.c.l.b16 %v2491
    %v8104 = vunpack.c.h.b16 %v2491
    %v8105 = vunpack.c.l.b16 %v2492
    %v8106 = vunpack.c.h.b16 %v2492
    %v8107 = vunpack.c.l.b16 %v2493
    %v8108 = vunpack.c.h.b16 %v2493
    %v8109 = vunpack.c.l.b16 %v2494
    %v8110 = vunpack.c.h.b16 %v2494
    %v8111 = vunpack.c.l.b16 %v2495
    %v8112 = vunpack.c.h.b16 %v2495
    %v8113 = vunpack.c.l.b16 %v2496
    %v8114 = vunpack.c.h.b16 %v2496
    %v8115 = vunpack.c.l.b16 %v2497
    %v8116 = vunpack.c.h.b16 %v2497
    %v8117 = vunpack.c.l.b16 %v2498
    %v8118 = vunpack.c.h.b16 %v2498
    %v8119 = vunpack.c.l.b16 %v2499
    %v8120 = vunpack.c.h.b16 %v2499
    %v8121 = vunpack.c.l.b16 %v2500
    %v8122 = vunpack.c.h.b16 %v2500
    %v8123 = vunpack.c.l.b16 %v2501
    %v8124 = vunpack.c.h.b16 %v2501
    %v8125 = vunpack.c.l.b16 %v2502
    %v8126 = vunpack.c.h.b16 %v2502
    %v8127 = vunpack.c.l.b16 %v2503
    %v8128 = vunpack.c.h.b16 %v2503
    %v8129 = vunpack.c.l.b16 %v2504
    %v8130 = vunpack.c.h.b16 %v2504
    %v8131 = vunpack.c.l.b16 %v2505
    %v8132 = vunpack.c.h.b16 %v2505
    %v8133 = vunpack.c.l.b16 %v2506
    %v8134 = vunpack.c.h.b16 %v2506
    %v8135 = vunpack.c.l.b16 %v2507
    %v8136 = vunpack.c.h.b16 %v2507
    %v8137 = vunpack.c.l.b16 %v2508
    %v8138 = vunpack.c.h.b16 %v2508
    %v8139 = vunpack.c.l.b16 %v2509
    %v8140 = vunpack.c.h.b16 %v2509
    %v8141 = vunpack.c.l.b16 %v2510
    %v8142 = vunpack.c.h.b16 %v2510
    %v8143 = vunpack.c.l.b16 %v2511
    %v8144 = vunpack.c.h.b16 %v2511
    %v8145 = vunpack.c.l.b16 %v2512
    %v8146 = vunpack.c.h.b16 %v2512
    %v8147 = vunpack.c.l.b16 %v2513
    %v8148 = vunpack.c.h.b16 %v2513
    %v8149 = vunpack.c.l.b16 %v2514
    %v8150 = vunpack.c.h.b16 %v2514
    %v8151 = vunpack.c.l.b16 %v2515
    %v8152 = vunpack.c.h.b16 %v2515
    %v8153 = vunpack.c.l.b16 %v2516
    %v8154 = vunpack.c.h.b16 %v2516
    %v8155 = vunpack.c.l.b16 %v2517
    %v8156 = vunpack.c.h.b16 %v2517
    %v8157 = vunpack.c.l.b16 %v2518
    %v8158 = vunpack.c.h.b16 %v2518
    %v8159 = vunpack.c.l.b16 %v2519
    %v8160 = vunpack.c.h.b16 %v2519
    %v8161 = vunpack.c.l.b16 %v2520
    %v8162 = vunpack.c.h.b16 %v2520
    %v8163 = vunpack.c.l.b16 %v2521
    %v8164 = vunpack.c.h.b16 %v2521
    %v8165 = vunpack.c.l.b16 %v2522
    %v8166 = vunpack.c.h.b16 %v2522
    %v8167 = vunpack.c.l.b16 %v2523
    %v8168 = vunpack.c.h.b16 %v2523
    %v8169 = vunpack.c.l.b16 %v2524
    %v8170 = vunpack.c.h.b16 %v2524
    %v8171 = vunpack.c.l.b16 %v2525
    %v8172 = vunpack.c.h.b16 %v2525
    %v8173 = vunpack.c.l.b16 %v2526
    %v8174 = vunpack.c.h.b16 %v2526
    %v8175 = vunpack.c.l.b16 %v2527
    %v8176 = vunpack.c.h.b16 %v2527
    %v8177 = vunpack.c.l.b16 %v2528
    %v8178 = vunpack.c.h.b16 %v2528
    %v8179 = vunpack.c.l.b16 %v2529
    %v8180 = vunpack.c.h.b16 %v2529
    %v8181 = vunpack.c.l.b16 %v2530
    %v8182 = vunpack.c.h.b16 %v2530
    %v8183 = vunpack.c.l.b16 %v2531
    %v8184 = vunpack.c.h.b16 %v2531
    %v8185 = vunpack.c.l.b16 %v2532
    %v8186 = vunpack.c.h.b16 %v2532
    %v8187 = vunpack.c.l.b16 %v2533
    %v8188 = vunpack.c.h.b16 %v2533
    %v8189 = vunpack.c.l.b16 %v2534
    %v8190 = vunpack.c.h.b16 %v2534
    %v8191 = vunpack.c.l.b16 %v2535
    %v8192 = vunpack.c.h.b16 %v2535
    %v8193 = vunpack.c.l.b16 %v2536
    %v8194 = vunpack.c.h.b16 %v2536
    %v8195 = vunpack.c.l.b16 %v2537
    %v8196 = vunpack.c.h.b16 %v2537
    %v8197 = vunpack.c.l.b16 %v2538
    %v8198 = vunpack.c.h.b16 %v2538
    %v8199 = vunpack.c.l.b16 %v2539
    %v8200 = vunpack.c.h.b16 %v2539
    %v8201 = vunpack.c.l.b16 %v2540
    %v8202 = vunpack.c.h.b16 %v2540
    %v8203 = vunpack.c.l.b16 %v2541
    %v8204 = vunpack.c.h.b16 %v2541
    %v8205 = vunpack.c.l.b16 %v2542
    %v8206 = vunpack.c.h.b16 %v2542
    %v8207 = vunpack.c.l.b16 %v2543
    %v8208 = vunpack.c.h.b16 %v2543
    %v8209 = vunpack.c.l.b16 %v2544
    %v8210 = vunpack.c.h.b16 %v2544
    %v8211 = vunpack.c.l.b16 %v2545
    %v8212 = vunpack.c.h.b16 %v2545
    %v8213 = vunpack.c.l.b16 %v2546
    %v8214 = vunpack.c.h.b16 %v2546
    %v8215 = vunpack.c.l.b16 %v2547
    %v8216 = vunpack.c.h.b16 %v2547
    %v8217 = vunpack.c.l.b16 %v2548
    %v8218 = vunpack.c.h.b16 %v2548
    %v8219 = vunpack.c.l.b16 %v2549
    %v8220 = vunpack.c.h.b16 %v2549
    %v8221 = vunpack.c.l.b16 %v2550
    %v8222 = vunpack.c.h.b16 %v2550
    %v8223 = vunpack.c.l.b16 %v2551
    %v8224 = vunpack.c.h.b16 %v2551
    %v8225 = vunpack.c.l.b16 %v2552
    %v8226 = vunpack.c.h.b16 %v2552
    %v8227 = vunpack.c.l.b16 %v2553
    %v8228 = vunpack.c.h.b16 %v2553
    %v8229 = vunpack.c.l.b16 %v2554
    %v8230 = vunpack.c.h.b16 %v2554
    %v8231 = vunpack.c.l.b16 %v2555
    %v8232 = vunpack.c.h.b16 %v2555
    %v8233 = vunpack.c.l.b16 %v2556
    %v8234 = vunpack.c.h.b16 %v2556
    %v8235 = vunpack.c.l.b16 %v2557
    %v8236 = vunpack.c.h.b16 %v2557
    %v8237 = vunpack.c.l.b16 %v2558
    %v8238 = vunpack.c.h.b16 %v2558
    %v8239 = vunpack.c.l.b16 %v2559
    %v8240 = vunpack.c.h.b16 %v2559
    %v8241 = vunpack.c.l.b16 %v2560
    %v8242 = vunpack.c.h.b16 %v2560
    %v8243 = vunpack.c.l.b16 %v2561
    %v8244 = vunpack.c.h.b16 %v2561
    %v8245 = vunpack.c.l.b16 %v2562
    %v8246 = vunpack.c.h.b16 %v2562
    %v8247 = vunpack.c.l.b16 %v2563
    %v8248 = vunpack.c.h.b16 %v2563
    %v8249 = vunpack.c.l.b16 %v2564
    %v8250 = vunpack.c.h.b16 %v2564
    %v8251 = vunpack.c.l.b16 %v2565
    %v8252 = vunpack.c.h.b16 %v2565
    %v8253 = vunpack.c.l.b16 %v2566
    %v8254 = vunpack.c.h.b16 %v2566
    %v8255 = vunpack.c.l.b16 %v2567
    %v8256 = vunpack.c.h.b16 %v2567
    %v8257 = vunpack.c.l.b16 %v2568
    %v8258 = vunpack.c.h.b16 %v2568
    %v8259 = vunpack.c.l.b16 %v2569
    %v8260 = vunpack.c.h.b16 %v2569
    %v8261 = vunpack.c.l.b16 %v2570
    %v8262 = vunpack.c.h.b16 %v2570
    %v8263 = vunpack.c.l.b16 %v2571
    %v8264 = vunpack.c.h.b16 %v2571
    %v8265 = vunpack.c.l.b16 %v2572
    %v8266 = vunpack.c.h.b16 %v2572
    %v8267 = vunpack.c.l.b16 %v2573
    %v8268 = vunpack.c.h.b16 %v2573
    %v8269 = vunpack.c.l.b16 %v2574
    %v8270 = vunpack.c.h.b16 %v2574
    %v8271 = vunpack.c.l.b16 %v2575
    %v8272 = vunpack.c.h.b16 %v2575
    %v8273 = vunpack.c.l.b16 %v2576
    %v8274 = vunpack.c.h.b16 %v2576
    %v8275 = vunpack.c.l.b16 %v2577
    %v8276 = vunpack.c.h.b16 %v2577
    %v8277 = vunpack.c.l.b16 %v2578
    %v8278 = vunpack.c.h.b16 %v2578
    %v8279 = vunpack.c.l.b16 %v2579
    %v8280 = vunpack.c.h.b16 %v2579
    %v8281 = vunpack.c.l.b16 %v2580
    %v8282 = vunpack.c.h.b16 %v2580
    %v8283 = vunpack.c.l.b16 %v2581
    %v8284 = vunpack.c.h.b16 %v2581
    %v8285 = vunpack.c.l.b16 %v2582
    %v8286 = vunpack.c.h.b16 %v2582
    %v8287 = vunpack.c.l.b16 %v2583
    %v8288 = vunpack.c.h.b16 %v2583
    %v8289 = vunpack.c.l.b16 %v2584
    %v8290 = vunpack.c.h.b16 %v2584
    %v8291 = vunpack.c.l.b16 %v2585
    %v8292 = vunpack.c.h.b16 %v2585
    %v8293 = vunpack.c.l.b16 %v2586
    %v8294 = vunpack.c.h.b16 %v2586
    %v8295 = vunpack.c.l.b16 %v2587
    %v8296 = vunpack.c.h.b16 %v2587
    %v8297 = vunpack.c.l.b16 %v2588
    %v8298 = vunpack.c.h.b16 %v2588
    %v8299 = vunpack.c.l.b16 %v2589
    %v8300 = vunpack.c.h.b16 %v2589
    %v8301 = vunpack.c.l.b16 %v2590
    %v8302 = vunpack.c.h.b16 %v2590
    %v8303 = vunpack.c.l.b16 %v2591
    %v8304 = vunpack.c.h.b16 %v2591
    %v8305 = vunpack.c.l.b16 %v2592
    %v8306 = vunpack.c.h.b16 %v2592
    %v8307 = vunpack.c.l.b16 %v2593
    %v8308 = vunpack.c.h.b16 %v2593
    %v8309 = vunpack.c.l.b16 %v2594
    %v8310 = vunpack.c.h.b16 %v2594
    %v8311 = vunpack.c.l.b16 %v2595
    %v8312 = vunpack.c.h.b16 %v2595
    %v8313 = vunpack.c.l.b16 %v2596
    %v8314 = vunpack.c.h.b16 %v2596
    %v8315 = vunpack.c.l.b16 %v2597
    %v8316 = vunpack.c.h.b16 %v2597
    %v8317 = vunpack.c.l.b16 %v2598
    %v8318 = vunpack.c.h.b16 %v2598
    %v8319 = vunpack.c.l.b16 %v2599
    %v8320 = vunpack.c.h.b16 %v2599
    %v8321 = vunpack.c.l.b16 %v2600
    %v8322 = vunpack.c.h.b16 %v2600
    %v8323 = vunpack.c.l.b16 %v2601
    %v8324 = vunpack.c.h.b16 %v2601
    %v8325 = vunpack.c.l.b16 %v2602
    %v8326 = vunpack.c.h.b16 %v2602
    %v8327 = vunpack.c.l.b16 %v2603
    %v8328 = vunpack.c.h.b16 %v2603
    %v8329 = vunpack.c.l.b16 %v2604
    %v8330 = vunpack.c.h.b16 %v2604
    %v8331 = vunpack.c.l.b16 %v2605
    %v8332 = vunpack.c.h.b16 %v2605
    %v8333 = vunpack.c.l.b16 %v2606
    %v8334 = vunpack.c.h.b16 %v2606
    %v8335 = vunpack.c.l.b16 %v2607
    %v8336 = vunpack.c.h.b16 %v2607
    %v8337 = vunpack.c.l.b16 %v2608
    %v8338 = vunpack.c.h.b16 %v2608
    %v8339 = vunpack.c.l.b16 %v2609
    %v8340 = vunpack.c.h.b16 %v2609
    %v8341 = vunpack.c.l.b16 %v2610
    %v8342 = vunpack.c.h.b16 %v2610
    %v8343 = vunpack.c.l.b16 %v2611
    %v8344 = vunpack.c.h.b16 %v2611
    %v8345 = vunpack.c.l.b16 %v2612
    %v8346 = vunpack.c.h.b16 %v2612
    %v8347 = vunpack.c.l.b16 %v2613
    %v8348 = vunpack.c.h.b16 %v2613
    %v8349 = vunpack.c.l.b16 %v2614
    %v8350 = vunpack.c.h.b16 %v2614
    %v8351 = vunpack.c.l.b16 %v2615
    %v8352 = vunpack.c.h.b16 %v2615
    %v8353 = vunpack.c.l.b16 %v2616
    %v8354 = vunpack.c.h.b16 %v2616
    %v8355 = vunpack.c.l.b16 %v2617
    %v8356 = vunpack.c.h.b16 %v2617
    %v8357 = vunpack.c.l.b16 %v2618
    %v8358 = vunpack.c.h.b16 %v2618
    %v8359 = vunpack.c.l.b16 %v2619
    %v8360 = vunpack.c.h.b16 %v2619
    %v8361 = vunpack.c.l.b16 %v2620
    %v8362 = vunpack.c.h.b16 %v2620
    %v8363 = vunpack.c.l.b16 %v2621
    %v8364 = vunpack.c.h.b16 %v2621
    %v8365 = vunpack.c.l.b16 %v2622
    %v8366 = vunpack.c.h.b16 %v2622
    %v8367 = vunpack.c.l.b16 %v2623
    %v8368 = vunpack.c.h.b16 %v2623
    %v8369 = vunpack.c.l.b16 %v2624
    %v8370 = vunpack.c.h.b16 %v2624
    %v8371 = vunpack.c.l.b16 %v2625
    %v8372 = vunpack.c.h.b16 %v2625
    %v8373 = vunpack.c.l.b16 %v2626
    %v8374 = vunpack.c.h.b16 %v2626
    %v8375 = vunpack.c.l.b16 %v2627
    %v8376 = vunpack.c.h.b16 %v2627
    %v8377 = vunpack.c.l.b16 %v2628
    %v8378 = vunpack.c.h.b16 %v2628
    %v8379 = vunpack.c.l.b16 %v2629
    %v8380 = vunpack.c.h.b16 %v2629
    %v8381 = vunpack.c.l.b16 %v2630
    %v8382 = vunpack.c.h.b16 %v2630
    %v8383 = vunpack.c.l.b16 %v2631
    %v8384 = vunpack.c.h.b16 %v2631
    %v8385 = vunpack.c.l.b16 %v2632
    %v8386 = vunpack.c.h.b16 %v2632
    %v8387 = vunpack.c.l.b16 %v2633
    %v8388 = vunpack.c.h.b16 %v2633
    %v8389 = vunpack.c.l.b16 %v2634
    %v8390 = vunpack.c.h.b16 %v2634
    %v8391 = vunpack.c.l.b16 %v2635
    %v8392 = vunpack.c.h.b16 %v2635
    %v8393 = vunpack.c.l.b16 %v2636
    %v8394 = vunpack.c.h.b16 %v2636
    %v8395 = vunpack.c.l.b16 %v2637
    %v8396 = vunpack.c.h.b16 %v2637
    %v8397 = vunpack.c.l.b16 %v2638
    %v8398 = vunpack.c.h.b16 %v2638
    %v8399 = vunpack.c.l.b16 %v2639
    %v8400 = vunpack.c.h.b16 %v2639
    %v8401 = vunpack.c.l.b16 %v2640
    %v8402 = vunpack.c.h.b16 %v2640
    %v8403 = vunpack.c.l.b16 %v2641
    %v8404 = vunpack.c.h.b16 %v2641
    %v8405 = vunpack.c.l.b16 %v2642
    %v8406 = vunpack.c.h.b16 %v2642
    %v8407 = vunpack.c.l.b16 %v2643
    %v8408 = vunpack.c.h.b16 %v2643
    %v8409 = vunpack.c.l.b16 %v2644
    %v8410 = vunpack.c.h.b16 %v2644
    %v8411 = vunpack.c.l.b16 %v2645
    %v8412 = vunpack.c.h.b16 %v2645
    %v8413 = vunpack.c.l.b16 %v2646
    %v8414 = vunpack.c.h.b16 %v2646
    %v8415 = vunpack.c.l.b16 %v2647
    %v8416 = vunpack.c.h.b16 %v2647
    %v8417 = vunpack.c.l.b16 %v2648
    %v8418 = vunpack.c.h.b16 %v2648
    %v8419 = vunpack.c.l.b16 %v2649
    %v8420 = vunpack.c.h.b16 %v2649
    %v8421 = vunpack.c.l.b16 %v2650
    %v8422 = vunpack.c.h.b16 %v2650
    %v8423 = vunpack.c.l.b16 %v2651
    %v8424 = vunpack.c.h.b16 %v2651
    %v8425 = vunpack.c.l.b16 %v2652
    %v8426 = vunpack.c.h.b16 %v2652
    %v8427 = vunpack.c.l.b16 %v2653
    %v8428 = vunpack.c.h.b16 %v2653
    %v8429 = vunpack.c.l.b16 %v2654
    %v8430 = vunpack.c.h.b16 %v2654
    %v8431 = vunpack.c.l.b16 %v2655
    %v8432 = vunpack.c.h.b16 %v2655
    %v8433 = vunpack.c.l.b16 %v2656
    %v8434 = vunpack.c.h.b16 %v2656
    %v8435 = vunpack.c.l.b16 %v2657
    %v8436 = vunpack.c.h.b16 %v2657
    %v8437 = vunpack.c.l.b16 %v2658
    %v8438 = vunpack.c.h.b16 %v2658
    %v8439 = vunpack.c.l.b16 %v2659
    %v8440 = vunpack.c.h.b16 %v2659
    %v8441 = vunpack.c.l.b16 %v2660
    %v8442 = vunpack.c.h.b16 %v2660
    %v8443 = vunpack.c.l.b16 %v2661
    %v8444 = vunpack.c.h.b16 %v2661
    %v8445 = vunpack.c.l.b16 %v2662
    %v8446 = vunpack.c.h.b16 %v2662
    %v8447 = vunpack.c.l.b16 %v2663
    %v8448 = vunpack.c.h.b16 %v2663
    %v8449 = vunpack.c.l.b16 %v2664
    %v8450 = vunpack.c.h.b16 %v2664
    %v8451 = vunpack.c.l.b16 %v2665
    %v8452 = vunpack.c.h.b16 %v2665
    %v8453 = vunpack.c.l.b16 %v2666
    %v8454 = vunpack.c.h.b16 %v2666
    %v8455 = vunpack.c.l.b16 %v2667
    %v8456 = vunpack.c.h.b16 %v2667
    %v8457 = vunpack.c.l.b16 %v2668
    %v8458 = vunpack.c.h.b16 %v2668
    %v8459 = vunpack.c.l.b16 %v2669
    %v8460 = vunpack.c.h.b16 %v2669
    %v8461 = vunpack.c.l.b16 %v2670
    %v8462 = vunpack.c.h.b16 %v2670
    %v8463 = vunpack.c.l.b16 %v2671
    %v8464 = vunpack.c.h.b16 %v2671
    %v8465 = vunpack.c.l.b16 %v2672
    %v8466 = vunpack.c.h.b16 %v2672
    %v8467 = vunpack.c.l.b16 %v2673
    %v8468 = vunpack.c.h.b16 %v2673
    %v8469 = vunpack.c.l.b16 %v2674
    %v8470 = vunpack.c.h.b16 %v2674
    %v8471 = vunpack.c.l.b16 %v2675
    %v8472 = vunpack.c.h.b16 %v2675
    %v8473 = vunpack.c.l.b16 %v2676
    %v8474 = vunpack.c.h.b16 %v2676
    %v8475 = vunpack.c.l.b16 %v2677
    %v8476 = vunpack.c.h.b16 %v2677
    %v8477 = vunpack.c.l.b16 %v2678
    %v8478 = vunpack.c.h.b16 %v2678
    %v8479 = vunpack.c.l.b16 %v2679
    %v8480 = vunpack.c.h.b16 %v2679
    %v8481 = vunpack.c.l.b16 %v2680
    %v8482 = vunpack.c.h.b16 %v2680
    %v8483 = vunpack.c.l.b16 %v2681
    %v8484 = vunpack.c.h.b16 %v2681
    %v8485 = vunpack.c.l.b16 %v2682
    %v8486 = vunpack.c.h.b16 %v2682
    %v8487 = vunpack.c.l.b16 %v2683
    %v8488 = vunpack.c.h.b16 %v2683
    %v8489 = vunpack.c.l.b16 %v2684
    %v8490 = vunpack.c.h.b16 %v2684
    %v8491 = vunpack.c.l.b16 %v2685
    %v8492 = vunpack.c.h.b16 %v2685
    %v8493 = vunpack.c.l.b16 %v2686
    %v8494 = vunpack.c.h.b16 %v2686
    %v8495 = vunpack.c.l.b16 %v2687
    %v8496 = vunpack.c.h.b16 %v2687
    %v8497 = vunpack.c.l.b16 %v2688
    %v8498 = vunpack.c.h.b16 %v2688
    %v8499 = vunpack.c.l.b16 %v2689
    %v8500 = vunpack.c.h.b16 %v2689
    %v8501 = vunpack.c.l.b16 %v2690
    %v8502 = vunpack.c.h.b16 %v2690
    %v8503 = vunpack.c.l.b16 %v2691
    %v8504 = vunpack.c.h.b16 %v2691
    %v8505 = vunpack.c.l.b16 %v2692
    %v8506 = vunpack.c.h.b16 %v2692
    %v8507 = vunpack.c.l.b16 %v2693
    %v8508 = vunpack.c.h.b16 %v2693
    %v8509 = vunpack.c.l.b16 %v2694
    %v8510 = vunpack.c.h.b16 %v2694
    %v8511 = vunpack.c.l.b16 %v2695
    %v8512 = vunpack.c.h.b16 %v2695
    %v8513 = vunpack.c.l.b16 %v2696
    %v8514 = vunpack.c.h.b16 %v2696
    %v8515 = vunpack.c.l.b16 %v2697
    %v8516 = vunpack.c.h.b16 %v2697
    %v8517 = vunpack.c.l.b16 %v2698
    %v8518 = vunpack.c.h.b16 %v2698
    %v8519 = vunpack.c.l.b16 %v2699
    %v8520 = vunpack.c.h.b16 %v2699
    %v8521 = vunpack.c.l.b16 %v2700
    %v8522 = vunpack.c.h.b16 %v2700
    %v8523 = vunpack.c.l.b16 %v2701
    %v8524 = vunpack.c.h.b16 %v2701
    %v8525 = vunpack.c.l.b16 %v2702
    %v8526 = vunpack.c.h.b16 %v2702
    %v8527 = vunpack.c.l.b16 %v2703
    %v8528 = vunpack.c.h.b16 %v2703
    %v8529 = vunpack.c.l.b16 %v2704
    %v8530 = vunpack.c.h.b16 %v2704
    %v8531 = vunpack.c.l.b16 %v2705
    %v8532 = vunpack.c.h.b16 %v2705
    %v8533 = vunpack.c.l.b16 %v2706
    %v8534 = vunpack.c.h.b16 %v2706
    %v8535 = vunpack.c.l.b16 %v2707
    %v8536 = vunpack.c.h.b16 %v2707
    %v8537 = vunpack.c.l.b16 %v2708
    %v8538 = vunpack.c.h.b16 %v2708
    %v8539 = vunpack.c.l.b16 %v2709
    %v8540 = vunpack.c.h.b16 %v2709
    %v8541 = vunpack.c.l.b16 %v2710
    %v8542 = vunpack.c.h.b16 %v2710
    %v8543 = vunpack.c.l.b16 %v2711
    %v8544 = vunpack.c.h.b16 %v2711
    %v8545 = vunpack.c.l.b16 %v2712
    %v8546 = vunpack.c.h.b16 %v2712
    %v8547 = vunpack.c.l.b16 %v2713
    %v8548 = vunpack.c.h.b16 %v2713
    %v8549 = vunpack.c.l.b16 %v2714
    %v8550 = vunpack.c.h.b16 %v2714
    %v8551 = vunpack.c.l.b16 %v2715
    %v8552 = vunpack.c.h.b16 %v2715
    %v8553 = vunpack.c.l.b16 %v2716
    %v8554 = vunpack.c.h.b16 %v2716
    %v8555 = vunpack.c.l.b16 %v2717
    %v8556 = vunpack.c.h.b16 %v2717
    %v8557 = vunpack.c.l.b16 %v2718
    %v8558 = vunpack.c.h.b16 %v2718
    %v8559 = vunpack.c.l.b16 %v2719
    %v8560 = vunpack.c.h.b16 %v2719
    %v8561 = vunpack.c.l.b16 %v2720
    %v8562 = vunpack.c.h.b16 %v2720
    %v8563 = vunpack.c.l.b16 %v2721
    %v8564 = vunpack.c.h.b16 %v2721
    %v8565 = vunpack.c.l.b16 %v2722
    %v8566 = vunpack.c.h.b16 %v2722
    %v8567 = vunpack.c.l.b16 %v2723
    %v8568 = vunpack.c.h.b16 %v2723
    %v8569 = vunpack.c.l.b16 %v2724
    %v8570 = vunpack.c.h.b16 %v2724
    %v8571 = vunpack.c.l.b16 %v2725
    %v8572 = vunpack.c.h.b16 %v2725
    %v8573 = vunpack.c.l.b16 %v2726
    %v8574 = vunpack.c.h.b16 %v2726
    %v8575 = vunpack.c.l.b16 %v2727
    %v8576 = vunpack.c.h.b16 %v2727
    %v8577 = vunpack.c.l.b16 %v2728
    %v8578 = vunpack.c.h.b16 %v2728
    %v8579 = vunpack.c.l.b16 %v2729
    %v8580 = vunpack.c.h.b16 %v2729
    %v8581 = vunpack.c.l.b16 %v2730
    %v8582 = vunpack.c.h.b16 %v2730
    %v8583 = vunpack.c.l.b16 %v2731
    %v8584 = vunpack.c.h.b16 %v2731
    %v8585 = vunpack.c.l.b16 %v2732
    %v8586 = vunpack.c.h.b16 %v2732
    %v8587 = vunpack.c.l.b16 %v2733
    %v8588 = vunpack.c.h.b16 %v2733
    %v8589 = vunpack.c.l.b16 %v2734
    %v8590 = vunpack.c.h.b16 %v2734
    %v8591 = vunpack.c.l.b16 %v2735
    %v8592 = vunpack.c.h.b16 %v2735
    %v8593 = vunpack.c.l.b16 %v2736
    %v8594 = vunpack.c.h.b16 %v2736
    %v8595 = vunpack.c.l.b16 %v2737
    %v8596 = vunpack.c.h.b16 %v2737
    %v8597 = vunpack.c.l.b16 %v2738
    %v8598 = vunpack.c.h.b16 %v2738
    %v8599 = vunpack.c.l.b16 %v2739
    %v8600 = vunpack.c.h.b16 %v2739
    %v8601 = vunpack.c.l.b16 %v2740
    %v8602 = vunpack.c.h.b16 %v2740
    %v8603 = vunpack.c.l.b16 %v2741
    %v8604 = vunpack.c.h.b16 %v2741
    %v8605 = vunpack.c.l.b16 %v2742
    %v8606 = vunpack.c.h.b16 %v2742
    %v8607 = vunpack.c.l.b16 %v2743
    %v8608 = vunpack.c.h.b16 %v2743
    %v8609 = vunpack.c.l.b16 %v2744
    %v8610 = vunpack.c.h.b16 %v2744
    %v8611 = vunpack.c.l.b16 %v2745
    %v8612 = vunpack.c.h.b16 %v2745
    %v8613 = vunpack.c.l.b16 %v2746
    %v8614 = vunpack.c.h.b16 %v2746
    %v8615 = vunpack.c.l.b16 %v2747
    %v8616 = vunpack.c.h.b16 %v2747
    %v8617 = vunpack.c.l.b16 %v2748
    %v8618 = vunpack.c.h.b16 %v2748
    %v8619 = vunpack.c.l.b16 %v2749
    %v8620 = vunpack.c.h.b16 %v2749
    %v8621 = vunpack.c.l.b16 %v2750
    %v8622 = vunpack.c.h.b16 %v2750
    %v8623 = vunpack.c.l.b16 %v2751
    %v8624 = vunpack.c.h.b16 %v2751
    %v8625 = vunpack.c.l.b16 %v2752
    %v8626 = vunpack.c.h.b16 %v2752
    %v8627 = vunpack.c.l.b16 %v2753
    %v8628 = vunpack.c.h.b16 %v2753
    %v8629 = vunpack.c.l.b16 %v2754
    %v8630 = vunpack.c.h.b16 %v2754
    %v8631 = vunpack.c.l.b16 %v2755
    %v8632 = vunpack.c.h.b16 %v2755
    %v8633 = vunpack.c.l.b16 %v2756
    %v8634 = vunpack.c.h.b16 %v2756
    %v8635 = vunpack.c.l.b16 %v2757
    %v8636 = vunpack.c.h.b16 %v2757
    %v8637 = vunpack.c.l.b16 %v2758
    %v8638 = vunpack.c.h.b16 %v2758
    %v8639 = vunpack.c.l.b16 %v2759
    %v8640 = vunpack.c.h.b16 %v2759
    %v8641 = vunpack.c.l.b16 %v2760
    %v8642 = vunpack.c.h.b16 %v2760
    %v8643 = vunpack.c.l.b16 %v2761
    %v8644 = vunpack.c.h.b16 %v2761
    %v8645 = vunpack.c.l.b16 %v2762
    %v8646 = vunpack.c.h.b16 %v2762
    %v8647 = vunpack.c.l.b16 %v2763
    %v8648 = vunpack.c.h.b16 %v2763
    %v8649 = vunpack.c.l.b16 %v2764
    %v8650 = vunpack.c.h.b16 %v2764
    %v8651 = vunpack.c.l.b16 %v2765
    %v8652 = vunpack.c.h.b16 %v2765
    %v8653 = vunpack.c.l.b16 %v2766
    %v8654 = vunpack.c.h.b16 %v2766
    %v8655 = vunpack.c.l.b16 %v2767
    %v8656 = vunpack.c.h.b16 %v2767
    %v8657 = vunpack.c.l.b16 %v2768
    %v8658 = vunpack.c.h.b16 %v2768
    %v8659 = vunpack.c.l.b16 %v2769
    %v8660 = vunpack.c.h.b16 %v2769
    %v8661 = vunpack.c.l.b16 %v2770
    %v8662 = vunpack.c.h.b16 %v2770
    %v8663 = vunpack.c.l.b16 %v2771
    %v8664 = vunpack.c.h.b16 %v2771
    %v8665 = vunpack.c.l.b16 %v2772
    %v8666 = vunpack.c.h.b16 %v2772
    %v8667 = vunpack.c.l.b16 %v2773
    %v8668 = vunpack.c.h.b16 %v2773
    %v8669 = vunpack.c.l.b16 %v2774
    %v8670 = vunpack.c.h.b16 %v2774
    %v8671 = vunpack.c.l.b16 %v2775
    %v8672 = vunpack.c.h.b16 %v2775
    %v8673 = vunpack.c.l.b16 %v2776
    %v8674 = vunpack.c.h.b16 %v2776
    %v8675 = vunpack.c.l.b16 %v2777
    %v8676 = vunpack.c.h.b16 %v2777
    %v8677 = vunpack.c.l.b16 %v2778
    %v8678 = vunpack.c.h.b16 %v2778
    %v8679 = vunpack.c.l.b16 %v2779
    %v8680 = vunpack.c.h.b16 %v2779
    %v8681 = vunpack.c.l.b16 %v2780
    %v8682 = vunpack.c.h.b16 %v2780
    %v8683 = vunpack.c.l.b16 %v2781
    %v8684 = vunpack.c.h.b16 %v2781
    %v8685 = vunpack.c.l.b16 %v2782
    %v8686 = vunpack.c.h.b16 %v2782
    %v8687 = vunpack.c.l.b16 %v2783
    %v8688 = vunpack.c.h.b16 %v2783
    %v8689 = vunpack.c.l.b16 %v2784
    %v8690 = vunpack.c.h.b16 %v2784
    %v8691 = vunpack.c.l.b16 %v2785
    %v8692 = vunpack.c.h.b16 %v2785
    %v8693 = vunpack.c.l.b16 %v2786
    %v8694 = vunpack.c.h.b16 %v2786
    %v8695 = vunpack.c.l.b16 %v2787
    %v8696 = vunpack.c.h.b16 %v2787
    %v8697 = vunpack.c.l.b16 %v2788
    %v8698 = vunpack.c.h.b16 %v2788
    %v8699 = vunpack.c.l.b16 %v2789
    %v8700 = vunpack.c.h.b16 %v2789
    %v8701 = vunpack.c.l.b16 %v2790
    %v8702 = vunpack.c.h.b16 %v2790
    %v8703 = vunpack.c.l.b16 %v2791
    %v8704 = vunpack.c.h.b16 %v2791
    %v8705 = vunpack.c.l.b16 %v2792
    %v8706 = vunpack.c.h.b16 %v2792
    %v8707 = vunpack.c.l.b16 %v2793
    %v8708 = vunpack.c.h.b16 %v2793
    %v8709 = vunpack.c.l.b16 %v2794
    %v8710 = vunpack.c.h.b16 %v2794
    %v8711 = vunpack.c.l.b16 %v2795
    %v8712 = vunpack.c.h.b16 %v2795
    %v8713 = vunpack.c.l.b16 %v2796
    %v8714 = vunpack.c.h.b16 %v2796
    %v8715 = vunpack.c.l.b16 %v2797
    %v8716 = vunpack.c.h.b16 %v2797
    %v8717 = vunpack.c.l.b16 %v2798
    %v8718 = vunpack.c.h.b16 %v2798
    %v8719 = vunpack.c.l.b16 %v2799
    %v8720 = vunpack.c.h.b16 %v2799
    %v8721 = vunpack.c.l.b16 %v2800
    %v8722 = vunpack.c.h.b16 %v2800
    %v8723 = vunpack.c.l.b16 %v2801
    %v8724 = vunpack.c.h.b16 %v2801
    %v8725 = vunpack.c.l.b16 %v2802
    %v8726 = vunpack.c.h.b16 %v2802
    %v8727 = vunpack.c.l.b16 %v2803
    %v8728 = vunpack.c.h.b16 %v2803
    %v8729 = vunpack.c.l.b16 %v2804
    %v8730 = vunpack.c.h.b16 %v2804
    %v8731 = vunpack.c.l.b16 %v2805
    %v8732 = vunpack.c.h.b16 %v2805
    %v8733 = vunpack.c.l.b16 %v2806
    %v8734 = vunpack.c.h.b16 %v2806
    %v8735 = vunpack.c.l.b16 %v2807
    %v8736 = vunpack.c.h.b16 %v2807
    %v8737 = vunpack.c.l.b16 %v2808
    %v8738 = vunpack.c.h.b16 %v2808
    %v8739 = vunpack.c.l.b16 %v2809
    %v8740 = vunpack.c.h.b16 %v2809
    %v8741 = vunpack.c.l.b16 %v2810
    %v8742 = vunpack.c.h.b16 %v2810
    %v8743 = vunpack.c.l.b16 %v2811
    %v8744 = vunpack.c.h.b16 %v2811
    %v8745 = vunpack.c.l.b16 %v2812
    %v8746 = vunpack.c.h.b16 %v2812
    %v8747 = vunpack.c.l.b16 %v2813
    %v8748 = vunpack.c.h.b16 %v2813
    %v8749 = vunpack.c.l.b16 %v2814
    %v8750 = vunpack.c.h.b16 %v2814
    %v8751 = vunpack.c.l.b16 %v2815
    %v8752 = vunpack.c.h.b16 %v2815
    %v8753 = vunpack.c.l.b16 %v2816
    %v8754 = vunpack.c.h.b16 %v2816
    %v8755 = vunpack.c.l.b16 %v2817
    %v8756 = vunpack.c.h.b16 %v2817
    %v8757 = vunpack.c.l.b16 %v2818
    %v8758 = vunpack.c.h.b16 %v2818
    %v8759 = vunpack.c.l.b16 %v2819
    %v8760 = vunpack.c.h.b16 %v2819
    %v8761 = vunpack.c.l.b16 %v2820
    %v8762 = vunpack.c.h.b16 %v2820
    %v8763 = vunpack.c.l.b16 %v2821
    %v8764 = vunpack.c.h.b16 %v2821
    %v8765 = vunpack.c.l.b16 %v2822
    %v8766 = vunpack.c.h.b16 %v2822
    %v8767 = vunpack.c.l.b16 %v2823
    %v8768 = vunpack.c.h.b16 %v2823
    %v8769 = vunpack.c.l.b16 %v2824
    %v8770 = vunpack.c.h.b16 %v2824
    %v8771 = vunpack.c.l.b16 %v2825
    %v8772 = vunpack.c.h.b16 %v2825
    %v8773 = vunpack.c.l.b16 %v2826
    %v8774 = vunpack.c.h.b16 %v2826
    %v8775 = vunpack.c.l.b16 %v2827
    %v8776 = vunpack.c.h.b16 %v2827
    %v8777 = vunpack.c.l.b16 %v2828
    %v8778 = vunpack.c.h.b16 %v2828
    %v8779 = vunpack.c.l.b16 %v2829
    %v8780 = vunpack.c.h.b16 %v2829
    %v8781 = vunpack.c.l.b16 %v2830
    %v8782 = vunpack.c.h.b16 %v2830
    %v8783 = vunpack.c.l.b16 %v2831
    %v8784 = vunpack.c.h.b16 %v2831
    %v8785 = vunpack.c.l.b16 %v2832
    %v8786 = vunpack.c.h.b16 %v2832
    %v8787 = vunpack.c.l.b16 %v2833
    %v8788 = vunpack.c.h.b16 %v2833
    %v8789 = vunpack.c.l.b16 %v2834
    %v8790 = vunpack.c.h.b16 %v2834
    %v8791 = vunpack.c.l.b16 %v2835
    %v8792 = vunpack.c.h.b16 %v2835
    %v8793 = vunpack.c.l.b16 %v2836
    %v8794 = vunpack.c.h.b16 %v2836
    %v8795 = vunpack.c.l.b16 %v2837
    %v8796 = vunpack.c.h.b16 %v2837
    %v8797 = vunpack.c.l.b16 %v2838
    %v8798 = vunpack.c.h.b16 %v2838
    %v8799 = vunpack.c.l.b16 %v2839
    %v8800 = vunpack.c.h.b16 %v2839
    %v8801 = vunpack.c.l.b16 %v2840
    %v8802 = vunpack.c.h.b16 %v2840
    %v8803 = vunpack.c.l.b16 %v2841
    %v8804 = vunpack.c.h.b16 %v2841
    %v8805 = vunpack.c.l.b16 %v2842
    %v8806 = vunpack.c.h.b16 %v2842
    %v8807 = vunpack.c.l.b16 %v2843
    %v8808 = vunpack.c.h.b16 %v2843
    %v8809 = vunpack.c.l.b16 %v2844
    %v8810 = vunpack.c.h.b16 %v2844
    %v8811 = vunpack.c.l.b16 %v2845
    %v8812 = vunpack.c.h.b16 %v2845
    %v8813 = vunpack.c.l.b16 %v2846
    %v8814 = vunpack.c.h.b16 %v2846
    %v8815 = vunpack.c.l.b16 %v2847
    %v8816 = vunpack.c.h.b16 %v2847
    %v8817 = vunpack.c.l.b16 %v2848
    %v8818 = vunpack.c.h.b16 %v2848
    %v8819 = vunpack.c.l.b16 %v2849
    %v8820 = vunpack.c.h.b16 %v2849
    %v8821 = vunpack.c.l.b16 %v2850
    %v8822 = vunpack.c.h.b16 %v2850
    %v8823 = vunpack.c.l.b16 %v2851
    %v8824 = vunpack.c.h.b16 %v2851
    %v8825 = vunpack.c.l.b16 %v2852
    %v8826 = vunpack.c.h.b16 %v2852
    %v8827 = vunpack.c.l.b16 %v2853
    %v8828 = vunpack.c.h.b16 %v2853
    %v8829 = vunpack.c.l.b16 %v2854
    %v8830 = vunpack.c.h.b16 %v2854
    %v8831 = vunpack.c.l.b16 %v2855
    %v8832 = vunpack.c.h.b16 %v2855
    %v8833 = vunpack.c.l.b16 %v2856
    %v8834 = vunpack.c.h.b16 %v2856
    %v8835 = vunpack.c.l.b16 %v2857
    %v8836 = vunpack.c.h.b16 %v2857
    %v8837 = vunpack.c.l.b16 %v2858
    %v8838 = vunpack.c.h.b16 %v2858
    %v8839 = vunpack.c.l.b16 %v2859
    %v8840 = vunpack.c.h.b16 %v2859
    %v8841 = vunpack.c.l.b16 %v2860
    %v8842 = vunpack.c.h.b16 %v2860
    %v8843 = vunpack.c.l.b16 %v2861
    %v8844 = vunpack.c.h.b16 %v2861
    %v8845 = vunpack.c.l.b16 %v2862
    %v8846 = vunpack.c.h.b16 %v2862
    %v8847 = vunpack.c.l.b16 %v2863
    %v8848 = vunpack.c.h.b16 %v2863
    %v8849 = vunpack.c.l.b16 %v2864
    %v8850 = vunpack.c.h.b16 %v2864
    %v8851 = vunpack.c.l.b16 %v2865
    %v8852 = vunpack.c.h.b16 %v2865
    %v8853 = vunpack.c.l.b16 %v2866
    %v8854 = vunpack.c.h.b16 %v2866
    %v8855 = vunpack.c.l.b16 %v2867
    %v8856 = vunpack.c.h.b16 %v2867
    %v8857 = vunpack.c.l.b16 %v2868
    %v8858 = vunpack.c.h.b16 %v2868
    %v8859 = vunpack.c.l.b16 %v2869
    %v8860 = vunpack.c.h.b16 %v2869
    %v8861 = vunpack.c.l.b16 %v2870
    %v8862 = vunpack.c.h.b16 %v2870
    %v8863 = vunpack.c.l.b16 %v2871
    %v8864 = vunpack.c.h.b16 %v2871
    %v8865 = vunpack.c.l.b16 %v2872
    %v8866 = vunpack.c.h.b16 %v2872
    %v8867 = vunpack.c.l.b16 %v2873
    %v8868 = vunpack.c.h.b16 %v2873
    %v8869 = vunpack.c.l.b16 %v2874
    %v8870 = vunpack.c.h.b16 %v2874
    %v8871 = vunpack.c.l.b16 %v2875
    %v8872 = vunpack.c.h.b16 %v2875
    %v8873 = vunpack.c.l.b16 %v2876
    %v8874 = vunpack.c.h.b16 %v2876
    %v8875 = vunpack.c.l.b16 %v2877
    %v8876 = vunpack.c.h.b16 %v2877
    %v8877 = vunpack.c.l.b16 %v2878
    %v8878 = vunpack.c.h.b16 %v2878
    %v8879 = vunpack.c.l.b16 %v2879
    %v8880 = vunpack.c.h.b16 %v2879
    %v8881 = vunpack.c.l.b16 %v2880
    %v8882 = vunpack.c.h.b16 %v2880
    %v8883 = vunpack.c.l.b16 %v2881
    %v8884 = vunpack.c.h.b16 %v2881
    %v8885 = vunpack.c.l.b16 %v2882
    %v8886 = vunpack.c.h.b16 %v2882
    %v8887 = vunpack.c.l.b16 %v2883
    %v8888 = vunpack.c.h.b16 %v2883
    %v8889 = vunpack.c.l.b16 %v2884
    %v8890 = vunpack.c.h.b16 %v2884
    %v8891 = vunpack.c.l.b16 %v2885
    %v8892 = vunpack.c.h.b16 %v2885
    %v8893 = vunpack.c.l.b16 %v2886
    %v8894 = vunpack.c.h.b16 %v2886
    %v8895 = vunpack.c.l.b16 %v2887
    %v8896 = vunpack.c.h.b16 %v2887
    %v8897 = vunpack.c.l.b16 %v2888
    %v8898 = vunpack.c.h.b16 %v2888
    %v8899 = vunpack.c.l.b16 %v2889
    %v8900 = vunpack.c.h.b16 %v2889
    %v8901 = vunpack.c.l.b16 %v2890
    %v8902 = vunpack.c.h.b16 %v2890
    %v8903 = vunpack.c.l.b16 %v2891
    %v8904 = vunpack.c.h.b16 %v2891
    %v8905 = vunpack.c.l.b16 %v2892
    %v8906 = vunpack.c.h.b16 %v2892
    %v8907 = vunpack.c.l.b16 %v2893
    %v8908 = vunpack.c.h.b16 %v2893
    %v8909 = vunpack.c.l.b16 %v2894
    %v8910 = vunpack.c.h.b16 %v2894
    %v8911 = vunpack.c.l.b16 %v2895
    %v8912 = vunpack.c.h.b16 %v2895
    %v8913 = vunpack.c.l.b16 %v2896
    %v8914 = vunpack.c.h.b16 %v2896
    %v8915 = vunpack.c.l.b16 %v2897
    %v8916 = vunpack.c.h.b16 %v2897
    %v8917 = vunpack.c.l.b16 %v2898
    %v8918 = vunpack.c.h.b16 %v2898
    %v8919 = vunpack.c.l.b16 %v2899
    %v8920 = vunpack.c.h.b16 %v2899
    %v8921 = vunpack.c.l.b16 %v2900
    %v8922 = vunpack.c.h.b16 %v2900
    %v8923 = vunpack.c.l.b16 %v2901
    %v8924 = vunpack.c.h.b16 %v2901
    %v8925 = vunpack.c.l.b16 %v2902
    %v8926 = vunpack.c.h.b16 %v2902
    %v8927 = vunpack.c.l.b16 %v2903
    %v8928 = vunpack.c.h.b16 %v2903
    %v8929 = vunpack.c.l.b16 %v2904
    %v8930 = vunpack.c.h.b16 %v2904
    %v8931 = vunpack.c.l.b16 %v2905
    %v8932 = vunpack.c.h.b16 %v2905
    %v8933 = vunpack.c.l.b16 %v2906
    %v8934 = vunpack.c.h.b16 %v2906
    %v8935 = vunpack.c.l.b16 %v2907
    %v8936 = vunpack.c.h.b16 %v2907
    %v8937 = vunpack.c.l.b16 %v2908
    %v8938 = vunpack.c.h.b16 %v2908
    %v8939 = vunpack.c.l.b16 %v2909
    %v8940 = vunpack.c.h.b16 %v2909
    %v8941 = vunpack.c.l.b16 %v2910
    %v8942 = vunpack.c.h.b16 %v2910
    %v8943 = vunpack.c.l.b16 %v2911
    %v8944 = vunpack.c.h.b16 %v2911
    %v8945 = vunpack.c.l.b16 %v2912
    %v8946 = vunpack.c.h.b16 %v2912
    %v8947 = vunpack.c.l.b16 %v2913
    %v8948 = vunpack.c.h.b16 %v2913
    %v8949 = vunpack.c.l.b16 %v2914
    %v8950 = vunpack.c.h.b16 %v2914
    %v8951 = vunpack.c.l.b16 %v2915
    %v8952 = vunpack.c.h.b16 %v2915
    %v8953 = vunpack.c.l.b16 %v2916
    %v8954 = vunpack.c.h.b16 %v2916
    %v8955 = vunpack.c.l.b16 %v2917
    %v8956 = vunpack.c.h.b16 %v2917
    %v8957 = vunpack.c.l.b16 %v2918
    %v8958 = vunpack.c.h.b16 %v2918
    %v8959 = vunpack.c.l.b16 %v2919
    %v8960 = vunpack.c.h.b16 %v2919
    %v8961 = vunpack.c.l.b16 %v2920
    %v8962 = vunpack.c.h.b16 %v2920
    %v8963 = vunpack.c.l.b16 %v2921
    %v8964 = vunpack.c.h.b16 %v2921
    %v8965 = vunpack.c.l.b16 %v2922
    %v8966 = vunpack.c.h.b16 %v2922
    %v8967 = vunpack.c.l.b16 %v2923
    %v8968 = vunpack.c.h.b16 %v2923
    %v8969 = vunpack.c.l.b16 %v2924
    %v8970 = vunpack.c.h.b16 %v2924
    %v8971 = vunpack.c.l.b16 %v2925
    %v8972 = vunpack.c.h.b16 %v2925
    %v8973 = vunpack.c.l.b16 %v2926
    %v8974 = vunpack.c.h.b16 %v2926
    %v8975 = vunpack.c.l.b16 %v2927
    %v8976 = vunpack.c.h.b16 %v2927
    %v8977 = vunpack.c.l.b16 %v2928
    %v8978 = vunpack.c.h.b16 %v2928
    %v8979 = vunpack.c.l.b16 %v2929
    %v8980 = vunpack.c.h.b16 %v2929
    %v8981 = vunpack.c.l.b16 %v2930
    %v8982 = vunpack.c.h.b16 %v2930
    %v8983 = vunpack.c.l.b16 %v2931
    %v8984 = vunpack.c.h.b16 %v2931
    %v8985 = vunpack.c.l.b16 %v2932
    %v8986 = vunpack.c.h.b16 %v2932
    %v8987 = vunpack.c.l.b16 %v2933
    %v8988 = vunpack.c.h.b16 %v2933
    %v8989 = vunpack.c.l.b16 %v2934
    %v8990 = vunpack.c.h.b16 %v2934
    %v8991 = vunpack.c.l.b16 %v2935
    %v8992 = vunpack.c.h.b16 %v2935
    %v8993 = vunpack.c.l.b16 %v2936
    %v8994 = vunpack.c.h.b16 %v2936
    %v8995 = vunpack.c.l.b16 %v2937
    %v8996 = vunpack.c.h.b16 %v2937
    %v8997 = vunpack.c.l.b16 %v2938
    %v8998 = vunpack.c.h.b16 %v2938
    %v8999 = vunpack.c.l.b16 %v2939
    %v9000 = vunpack.c.h.b16 %v2939
    %v9001 = vunpack.c.l.b16 %v2940
    %v9002 = vunpack.c.h.b16 %v2940
    %v9003 = vunpack.c.l.b16 %v2941
    %v9004 = vunpack.c.h.b16 %v2941
    %v9005 = vunpack.c.l.b16 %v2942
    %v9006 = vunpack.c.h.b16 %v2942
    %v9007 = vunpack.c.l.b16 %v2943
    %v9008 = vunpack.c.h.b16 %v2943
    %v9009 = vunpack.c.l.b16 %v2944
    %v9010 = vunpack.c.h.b16 %v2944
    %v9011 = vunpack.c.l.b16 %v2945
    %v9012 = vunpack.c.h.b16 %v2945
    %v9013 = vunpack.c.l.b16 %v2946
    %v9014 = vunpack.c.h.b16 %v2946
    %v9015 = vunpack.c.l.b16 %v2947
    %v9016 = vunpack.c.h.b16 %v2947
    %v9017 = vunpack.c.l.b16 %v2948
    %v9018 = vunpack.c.h.b16 %v2948
    %v9019 = vunpack.c.l.b16 %v2949
    %v9020 = vunpack.c.h.b16 %v2949
    %v9021 = vunpack.c.l.b16 %v2950
    %v9022 = vunpack.c.h.b16 %v2950
    %v9023 = vunpack.c.l.b16 %v2951
    %v9024 = vunpack.c.h.b16 %v2951
    %v9025 = vunpack.c.l.b16 %v2952
    %v9026 = vunpack.c.h.b16 %v2952
    %v9027 = vunpack.c.l.b16 %v2953
    %v9028 = vunpack.c.h.b16 %v2953
    %v9029 = vunpack.c.l.b16 %v2954
    %v9030 = vunpack.c.h.b16 %v2954
    %v9031 = vunpack.c.l.b16 %v2955
    %v9032 = vunpack.c.h.b16 %v2955
    %v9033 = vunpack.c.l.b16 %v2956
    %v9034 = vunpack.c.h.b16 %v2956
    %v9035 = vunpack.c.l.b16 %v2957
    %v9036 = vunpack.c.h.b16 %v2957
    %v9037 = vunpack.c.l.b16 %v2958
    %v9038 = vunpack.c.h.b16 %v2958
    %v9039 = vunpack.c.l.b16 %v2959
    %v9040 = vunpack.c.h.b16 %v2959
    %v9041 = vunpack.c.l.b16 %v2960
    %v9042 = vunpack.c.h.b16 %v2960
    %v9043 = vunpack.c.l.b16 %v2961
    %v9044 = vunpack.c.h.b16 %v2961
    %v9045 = vunpack.c.l.b16 %v2962
    %v9046 = vunpack.c.h.b16 %v2962
    %v9047 = vunpack.c.l.b16 %v2963
    %v9048 = vunpack.c.h.b16 %v2963
    %v9049 = vunpack.c.l.b16 %v2964
    %v9050 = vunpack.c.h.b16 %v2964
    %v9051 = vunpack.c.l.b16 %v2965
    %v9052 = vunpack.c.h.b16 %v2965
    %v9053 = vunpack.c.l.b16 %v2966
    %v9054 = vunpack.c.h.b16 %v2966
    %v9055 = vunpack.c.l.b16 %v2967
    %v9056 = vunpack.c.h.b16 %v2967
    %v9057 = vunpack.c.l.b16 %v2968
    %v9058 = vunpack.c.h.b16 %v2968
    %v9059 = vunpack.c.l.b16 %v2969
    %v9060 = vunpack.c.h.b16 %v2969
    %v9061 = vunpack.c.l.b16 %v2970
    %v9062 = vunpack.c.h.b16 %v2970
    %v9063 = vunpack.c.l.b16 %v2971
    %v9064 = vunpack.c.h.b16 %v2971
    %v9065 = vunpack.c.l.b16 %v2972
    %v9066 = vunpack.c.h.b16 %v2972
    %v9067 = vunpack.c.l.b16 %v2973
    %v9068 = vunpack.c.h.b16 %v2973
    %v9069 = vunpack.c.l.b16 %v2974
    %v9070 = vunpack.c.h.b16 %v2974
    %v9071 = vunpack.c.l.b16 %v2975
    %v9072 = vunpack.c.h.b16 %v2975
    %v9073 = vunpack.c.l.b16 %v2976
    %v9074 = vunpack.c.h.b16 %v2976
    %v9075 = vunpack.c.l.b16 %v2977
    %v9076 = vunpack.c.h.b16 %v2977
    %v9077 = vunpack.c.l.b16 %v2978
    %v9078 = vunpack.c.h.b16 %v2978
    %v9079 = vunpack.c.l.b16 %v2979
    %v9080 = vunpack.c.h.b16 %v2979
    %v9081 = vunpack.c.l.b16 %v2980
    %v9082 = vunpack.c.h.b16 %v2980
    %v9083 = vunpack.c.l.b16 %v2981
    %v9084 = vunpack.c.h.b16 %v2981
    %v9085 = vunpack.c.l.b16 %v2982
    %v9086 = vunpack.c.h.b16 %v2982
    %v9087 = vunpack.c.l.b16 %v2983
    %v9088 = vunpack.c.h.b16 %v2983
    %v9089 = vunpack.c.l.b16 %v2984
    %v9090 = vunpack.c.h.b16 %v2984
    %v9091 = vunpack.c.l.b16 %v2985
    %v9092 = vunpack.c.h.b16 %v2985
    %v9093 = vunpack.c.l.b16 %v2986
    %v9094 = vunpack.c.h.b16 %v2986
    %v9095 = vunpack.c.l.b16 %v2987
    %v9096 = vunpack.c.h.b16 %v2987
    %v9097 = vunpack.c.l.b16 %v2988
    %v9098 = vunpack.c.h.b16 %v2988
    %v9099 = vunpack.c.l.b16 %v2989
    %v9100 = vunpack.c.h.b16 %v2989
    %v9101 = vunpack.c.l.b16 %v2990
    %v9102 = vunpack.c.h.b16 %v2990
    %v9103 = vunpack.c.l.b16 %v2991
    %v9104 = vunpack.c.h.b16 %v2991
    %v9105 = vunpack.c.l.b16 %v2992
    %v9106 = vunpack.c.h.b16 %v2992
    %v9107 = vunpack.c.l.b16 %v2993
    %v9108 = vunpack.c.h.b16 %v2993
    %v9109 = vunpack.c.l.b16 %v2994
    %v9110 = vunpack.c.h.b16 %v2994
    %v9111 = vunpack.c.l.b16 %v2995
    %v9112 = vunpack.c.h.b16 %v2995
    %v9113 = vunpack.c.l.b16 %v2996
    %v9114 = vunpack.c.h.b16 %v2996
    %v9115 = vunpack.c.l.b16 %v2997
    %v9116 = vunpack.c.h.b16 %v2997
    %v9117 = vunpack.c.l.b16 %v2998
    %v9118 = vunpack.c.h.b16 %v2998
    %v9119 = vunpack.c.l.b16 %v2999
    %v9120 = vunpack.c.h.b16 %v2999
    %v9121 = vunpack.c.l.b16 %v3000
    %v9122 = vunpack.c.h.b16 %v3000
    %v9123 = vunpack.c.l.b16 %v3001
    %v9124 = vunpack.c.h.b16 %v3001
    %v9125 = vunpack.c.l.b16 %v3002
    %v9126 = vunpack.c.h.b16 %v3002
    %v9127 = vunpack.c.l.b16 %v3003
    %v9128 = vunpack.c.h.b16 %v3003
    %v9129 = vunpack.c.l.b16 %v3004
    %v9130 = vunpack.c.h.b16 %v3004
    %v9131 = vunpack.c.l.b16 %v3005
    %v9132 = vunpack.c.h.b16 %v3005
    %v9133 = vunpack.c.l.b16 %v3006
    %v9134 = vunpack.c.h.b16 %v3006
    %v9135 = vunpack.c.l.b16 %v3007
    %v9136 = vunpack.c.h.b16 %v3007
    %v9137 = vunpack.c.l.b16 %v3008
    %v9138 = vunpack.c.h.b16 %v3008
    %v9139 = vunpack.c.l.b16 %v3009
    %v9140 = vunpack.c.h.b16 %v3009
    %v9141 = vunpack.c.l.b16 %v3010
    %v9142 = vunpack.c.h.b16 %v3010
    %v9143 = vunpack.c.l.b16 %v3011
    %v9144 = vunpack.c.h.b16 %v3011
    %v9145 = vunpack.c.l.b16 %v3012
    %v9146 = vunpack.c.h.b16 %v3012
    %v9147 = vunpack.c.l.b16 %v3013
    %v9148 = vunpack.c.h.b16 %v3013
    %v9149 = vunpack.c.l.b16 %v3014
    %v9150 = vunpack.c.h.b16 %v3014
    %v9151 = vunpack.c.l.b16 %v3015
    %v9152 = vunpack.c.h.b16 %v3015
    %v9153 = vunpack.c.l.b16 %v3016
    %v9154 = vunpack.c.h.b16 %v3016
    %v9155 = vunpack.c.l.b16 %v3017
    %v9156 = vunpack.c.h.b16 %v3017
    %v9157 = vunpack.c.l.b16 %v3018
    %v9158 = vunpack.c.h.b16 %v3018
    %v9159 = vunpack.c.l.b16 %v3019
    %v9160 = vunpack.c.h.b16 %v3019
    %v9161 = vunpack.c.l.b16 %v3020
    %v9162 = vunpack.c.h.b16 %v3020
    %v9163 = vunpack.c.l.b16 %v3021
    %v9164 = vunpack.c.h.b16 %v3021
    %v9165 = vunpack.c.l.b16 %v3022
    %v9166 = vunpack.c.h.b16 %v3022
    %v9167 = vunpack.c.l.b16 %v3023
    %v9168 = vunpack.c.h.b16 %v3023
    %v9169 = vunpack.c.l.b16 %v3024
    %v9170 = vunpack.c.h.b16 %v3024
    %v9171 = vunpack.c.l.b16 %v3025
    %v9172 = vunpack.c.h.b16 %v3025
    %v9173 = vunpack.c.l.b16 %v3026
    %v9174 = vunpack.c.h.b16 %v3026
    %v9175 = vunpack.c.l.b16 %v3027
    %v9176 = vunpack.c.h.b16 %v3027
    %v9177 = vunpack.c.l.b16 %v3028
    %v9178 = vunpack.c.h.b16 %v3028
    %v9179 = vunpack.c.l.b16 %v3029
    %v9180 = vunpack.c.h.b16 %v3029
    %v9181 = vunpack.c.l.b16 %v3030
    %v9182 = vunpack.c.h.b16 %v3030
    %v9183 = vunpack.c.l.b16 %v3031
    %v9184 = vunpack.c.h.b16 %v3031
    %v9185 = vunpack.c.l.b16 %v3032
    %v9186 = vunpack.c.h.b16 %v3032
    %v9187 = vunpack.c.l.b16 %v3033
    %v9188 = vunpack.c.h.b16 %v3033
    %v9189 = vunpack.c.l.b16 %v3034
    %v9190 = vunpack.c.h.b16 %v3034
    %v9191 = vunpack.c.l.b16 %v3035
    %v9192 = vunpack.c.h.b16 %v3035
    %v9193 = vunpack.c.l.b16 %v3036
    %v9194 = vunpack.c.h.b16 %v3036
    %v9195 = vunpack.c.l.b16 %v3037
    %v9196 = vunpack.c.h.b16 %v3037
    %v9197 = vunpack.c.l.b16 %v3038
    %v9198 = vunpack.c.h.b16 %v3038
    %v9199 = vunpack.c.l.b16 %v3039
    %v9200 = vunpack.c.h.b16 %v3039
    %v9201 = vunpack.c.l.b16 %v3040
    %v9202 = vunpack.c.h.b16 %v3040
    %v9203 = vunpack.c.l.b16 %v3041
    %v9204 = vunpack.c.h.b16 %v3041
    %v9205 = vunpack.c.l.b16 %v3042
    %v9206 = vunpack.c.h.b16 %v3042
    %v9207 = vunpack.c.l.b16 %v3043
    %v9208 = vunpack.c.h.b16 %v3043
    %v9209 = vunpack.c.l.b16 %v3044
    %v9210 = vunpack.c.h.b16 %v3044
    %v9211 = vunpack.c.l.b16 %v3045
    %v9212 = vunpack.c.h.b16 %v3045
    %v9213 = vunpack.c.l.b16 %v3046
    %v9214 = vunpack.c.h.b16 %v3046
    %v9215 = vunpack.c.l.b16 %v3047
    %v9216 = vunpack.c.h.b16 %v3047
    %v9217 = vunpack.c.l.b16 %v3048
    %v9218 = vunpack.c.h.b16 %v3048
    %v9219 = vunpack.c.l.b16 %v3049
    %v9220 = vunpack.c.h.b16 %v3049
    %v9221 = vunpack.c.l.b16 %v3050
    %v9222 = vunpack.c.h.b16 %v3050
    %v9223 = vunpack.c.l.b16 %v3051
    %v9224 = vunpack.c.h.b16 %v3051
    %v9225 = vunpack.c.l.b16 %v3052
    %v9226 = vunpack.c.h.b16 %v3052
    %v9227 = vunpack.c.l.b16 %v3053
    %v9228 = vunpack.c.h.b16 %v3053
    %v9229 = vunpack.c.l.b16 %v3054
    %v9230 = vunpack.c.h.b16 %v3054
    %v9231 = vunpack.c.l.b16 %v3055
    %v9232 = vunpack.c.h.b16 %v3055
    %v9233 = vunpack.c.l.b16 %v3056
    %v9234 = vunpack.c.h.b16 %v3056
    %v9235 = vunpack.c.l.b16 %v3057
    %v9236 = vunpack.c.h.b16 %v3057
    %v9237 = vunpack.c.l.b16 %v3058
    %v9238 = vunpack.c.h.b16 %v3058
    %v9239 = vunpack.c.l.b16 %v3059
    %v9240 = vunpack.c.h.b16 %v3059
    %v9241 = vunpack.c.l.b16 %v3060
    %v9242 = vunpack.c.h.b16 %v3060
    %v9243 = vunpack.c.l.b16 %v3061
    %v9244 = vunpack.c.h.b16 %v3061
    %v9245 = vunpack.c.l.b16 %v3062
    %v9246 = vunpack.c.h.b16 %v3062
    %v9247 = vunpack.c.l.b16 %v3063
    %v9248 = vunpack.c.h.b16 %v3063
    %v9249 = vunpack.c.l.b16 %v3064
    %v9250 = vunpack.c.h.b16 %v3064
    %v9251 = vunpack.c.l.b16 %v3065
    %v9252 = vunpack.c.h.b16 %v3065
    %v9253 = vunpack.c.l.b16 %v3066
    %v9254 = vunpack.c.h.b16 %v3066
    %v9255 = vunpack.c.l.b16 %v3067
    %v9256 = vunpack.c.h.b16 %v3067
    %v9257 = vunpack.c.l.b16 %v3068
    %v9258 = vunpack.c.h.b16 %v3068
    %v9259 = vunpack.c.l.b16 %v3069
    %v9260 = vunpack.c.h.b16 %v3069
    %v9261 = vunpack.c.l.b16 %v3070
    %v9262 = vunpack.c.h.b16 %v3070
    %v9263 = vunpack.c.l.b16 %v3071
    %v9264 = vunpack.c.h.b16 %v3071
    %v9265 = vunpack.c.l.b16 %v3072
    %v9266 = vunpack.c.h.b16 %v3072
    %v9267 = vunpack.c.l.b16 %v3073
    %v9268 = vunpack.c.h.b16 %v3073
    %v9269 = vunpack.c.l.b16 %v3074
    %v9270 = vunpack.c.h.b16 %v3074
    %v9271 = vunpack.c.l.b16 %v3075
    %v9272 = vunpack.c.h.b16 %v3075
    %v9273 = vunpack.c.l.b16 %v3076
    %v9274 = vunpack.c.h.b16 %v3076
    %v9275 = vunpack.c.l.b16 %v3077
    %v9276 = vunpack.c.h.b16 %v3077
    %v9277 = vunpack.c.l.b16 %v3078
    %v9278 = vunpack.c.h.b16 %v3078
    %v9279 = vunpack.c.l.b16 %v3079
    %v9280 = vunpack.c.h.b16 %v3079
    %v9281 = vunpack.c.l.b16 %v3080
    %v9282 = vunpack.c.h.b16 %v3080
    %v9283 = vunpack.c.l.b16 %v3081
    %v9284 = vunpack.c.h.b16 %v3081
    %v9285 = vunpack.c.l.b16 %v3082
    %v9286 = vunpack.c.h.b16 %v3082
    %v9287 = vunpack.c.l.b16 %v3083
    %v9288 = vunpack.c.h.b16 %v3083
    %v9289 = vunpack.c.l.b16 %v3084
    %v9290 = vunpack.c.h.b16 %v3084
    %v9291 = vunpack.c.l.b16 %v3085
    %v9292 = vunpack.c.h.b16 %v3085
    %v9293 = vunpack.c.l.b16 %v3086
    %v9294 = vunpack.c.h.b16 %v3086
    %v9295 = vunpack.c.l.b16 %v3087
    %v9296 = vunpack.c.h.b16 %v3087
    %v9297 = vunpack.c.l.b16 %v3088
    %v9298 = vunpack.c.h.b16 %v3088
    %v9299 = vunpack.c.l.b16 %v3089
    %v9300 = vunpack.c.h.b16 %v3089
    %v9301 = vunpack.c.l.b16 %v3090
    %v9302 = vunpack.c.h.b16 %v3090
    %v9303 = vunpack.c.l.b16 %v3091
    %v9304 = vunpack.c.h.b16 %v3091
    %v9305 = vunpack.c.l.b16 %v3092
    %v9306 = vunpack.c.h.b16 %v3092
    %v9307 = vunpack.c.l.b16 %v3093
    %v9308 = vunpack.c.h.b16 %v3093
    %v9309 = vunpack.c.l.b16 %v3094
    %v9310 = vunpack.c.h.b16 %v3094
    %v9311 = vunpack.c.l.b16 %v3095
    %v9312 = vunpack.c.h.b16 %v3095
    %v9313 = vunpack.c.l.b16 %v3096
    %v9314 = vunpack.c.h.b16 %v3096
    %v9315 = vunpack.c.l.b16 %v3097
    %v9316 = vunpack.c.h.b16 %v3097
    %v9317 = vunpack.c.l.b16 %v3098
    %v9318 = vunpack.c.h.b16 %v3098
    %v9319 = vunpack.c.l.b16 %v3099
    %v9320 = vunpack.c.h.b16 %v3099
    %v9321 = vunpack.c.l.b16 %v3100
    %v9322 = vunpack.c.h.b16 %v3100
    %v9323 = vunpack.c.l.b16 %v3101
    %v9324 = vunpack.c.h.b16 %v3101
    %v9325 = vunpack.c.l.b16 %v3102
    %v9326 = vunpack.c.h.b16 %v3102
    %v9327 = vunpack.c.l.b16 %v3103
    %v9328 = vunpack.c.h.b16 %v3103
    %v9329 = vunpack.c.l.b16 %v3104
    %v9330 = vunpack.c.h.b16 %v3104
    %v9331 = vunpack.c.l.b16 %v3105
    %v9332 = vunpack.c.h.b16 %v3105
    %v9333 = vunpack.c.l.b16 %v3106
    %v9334 = vunpack.c.h.b16 %v3106
    %v9335 = vunpack.c.l.b16 %v3107
    %v9336 = vunpack.c.h.b16 %v3107
    %v9337 = vunpack.c.l.b16 %v3108
    %v9338 = vunpack.c.h.b16 %v3108
    %v9339 = vunpack.c.l.b16 %v3109
    %v9340 = vunpack.c.h.b16 %v3109
    %v9341 = vunpack.c.l.b16 %v3110
    %v9342 = vunpack.c.h.b16 %v3110
    %v9343 = vunpack.c.l.b16 %v3111
    %v9344 = vunpack.c.h.b16 %v3111
    %v9345 = vunpack.c.l.b16 %v3112
    %v9346 = vunpack.c.h.b16 %v3112
    %v9347 = vunpack.c.l.b16 %v3113
    %v9348 = vunpack.c.h.b16 %v3113
    %v9349 = vunpack.c.l.b16 %v3114
    %v9350 = vunpack.c.h.b16 %v3114
    %v9351 = vunpack.c.l.b16 %v3115
    %v9352 = vunpack.c.h.b16 %v3115
    %v9353 = vunpack.c.l.b16 %v3116
    %v9354 = vunpack.c.h.b16 %v3116
    %v9355 = vunpack.c.l.b16 %v3117
    %v9356 = vunpack.c.h.b16 %v3117
    %v9357 = vunpack.c.l.b16 %v3118
    %v9358 = vunpack.c.h.b16 %v3118
    %v9359 = vunpack.c.l.b16 %v3119
    %v9360 = vunpack.c.h.b16 %v3119
    %v9361 = vunpack.c.l.b16 %v3120
    %v9362 = vunpack.c.h.b16 %v3120
    %v9363 = vunpack.c.l.b16 %v3121
    %v9364 = vunpack.c.h.b16 %v3121
    %v9365 = vunpack.c.l.b16 %v3122
    %v9366 = vunpack.c.h.b16 %v3122
    %v9367 = vunpack.c.l.b16 %v3123
    %v9368 = vunpack.c.h.b16 %v3123
    %v9369 = vunpack.c.l.b16 %v3124
    %v9370 = vunpack.c.h.b16 %v3124
    %v9371 = vunpack.c.l.b16 %v3125
    %v9372 = vunpack.c.h.b16 %v3125
    %v9373 = vunpack.c.l.b16 %v3126
    %v9374 = vunpack.c.h.b16 %v3126
    %v9375 = vunpack.c.l.b16 %v3127
    %v9376 = vunpack.c.h.b16 %v3127
    %v9377 = vunpack.c.l.b16 %v3128
    %v9378 = vunpack.c.h.b16 %v3128
    %v9379 = vunpack.c.l.b16 %v3129
    %v9380 = vunpack.c.h.b16 %v3129
    %v9381 = vunpack.c.l.b16 %v3130
    %v9382 = vunpack.c.h.b16 %v3130
    %v9383 = vunpack.c.l.b16 %v3131
    %v9384 = vunpack.c.h.b16 %v3131
    %v9385 = vunpack.c.l.b16 %v3132
    %v9386 = vunpack.c.h.b16 %v3132
    %v9387 = vunpack.c.l.b16 %v3133
    %v9388 = vunpack.c.h.b16 %v3133
    %v9389 = vunpack.c.l.b16 %v3134
    %v9390 = vunpack.c.h.b16 %v3134
    %v9391 = vunpack.c.l.b16 %v3135
    %v9392 = vunpack.c.h.b16 %v3135
    %v9393 = vunpack.c.l.b16 %v3136
    %v9394 = vunpack.c.h.b16 %v3136
    %v9395 = vunpack.c.l.b16 %v3137
    %v9396 = vunpack.c.h.b16 %v3137
    %v9397 = vunpack.c.l.b16 %v3138
    %v9398 = vunpack.c.h.b16 %v3138
    %v9399 = vunpack.c.l.b16 %v3139
    %v9400 = vunpack.c.h.b16 %v3139
    %v9401 = vunpack.c.l.b16 %v3140
    %v9402 = vunpack.c.h.b16 %v3140
    %v9403 = vunpack.c.l.b16 %v3141
    %v9404 = vunpack.c.h.b16 %v3141
    %v9405 = vunpack.c.l.b16 %v3142
    %v9406 = vunpack.c.h.b16 %v3142
    %v9407 = vunpack.c.l.b16 %v3143
    %v9408 = vunpack.c.h.b16 %v3143
    %v9409 = vunpack.c.l.b16 %v3144
    %v9410 = vunpack.c.h.b16 %v3144
    %v9411 = vunpack.c.l.b16 %v3145
    %v9412 = vunpack.c.h.b16 %v3145
    %v9413 = vunpack.c.l.b16 %v3146
    %v9414 = vunpack.c.h.b16 %v3146
    %v9415 = vunpack.c.l.b16 %v3147
    %v9416 = vunpack.c.h.b16 %v3147
    %v9417 = vunpack.c.l.b16 %v3148
    %v9418 = vunpack.c.h.b16 %v3148
    %v9419 = vunpack.c.l.b16 %v3149
    %v9420 = vunpack.c.h.b16 %v3149
    %v9421 = vunpack.c.l.b16 %v3150
    %v9422 = vunpack.c.h.b16 %v3150
    %v9423 = vunpack.c.l.b16 %v3151
    %v9424 = vunpack.c.h.b16 %v3151
    %v9425 = vunpack.c.l.b16 %v3152
    %v9426 = vunpack.c.h.b16 %v3152
    %v9427 = vunpack.c.l.b16 %v3153
    %v9428 = vunpack.c.h.b16 %v3153
    %v9429 = vunpack.c.l.b16 %v3154
    %v9430 = vunpack.c.h.b16 %v3154
    %v9431 = vunpack.c.l.b16 %v3155
    %v9432 = vunpack.c.h.b16 %v3155
    %v9433 = vunpack.c.l.b16 %v3156
    %v9434 = vunpack.c.h.b16 %v3156
    %v9435 = vunpack.c.l.b16 %v3157
    %v9436 = vunpack.c.h.b16 %v3157
    %v9437 = vunpack.c.l.b16 %v3158
    %v9438 = vunpack.c.h.b16 %v3158
    %v9439 = vunpack.c.l.b16 %v3159
    %v9440 = vunpack.c.h.b16 %v3159
    %v9441 = vunpack.c.l.b16 %v3160
    %v9442 = vunpack.c.h.b16 %v3160
    %v9443 = vunpack.c.l.b16 %v3161
    %v9444 = vunpack.c.h.b16 %v3161
    %v9445 = vunpack.c.l.b16 %v3162
    %v9446 = vunpack.c.h.b16 %v3162
    %v9447 = vunpack.c.l.b16 %v3163
    %v9448 = vunpack.c.h.b16 %v3163
    %v9449 = vunpack.c.l.b16 %v3164
    %v9450 = vunpack.c.h.b16 %v3164
    %v9451 = vunpack.c.l.b16 %v3165
    %v9452 = vunpack.c.h.b16 %v3165
    %v9453 = vunpack.c.l.b16 %v3166
    %v9454 = vunpack.c.h.b16 %v3166
    %v9455 = vunpack.c.l.b16 %v3167
    %v9456 = vunpack.c.h.b16 %v3167
    %v9457 = vunpack.c.l.b16 %v3168
    %v9458 = vunpack.c.h.b16 %v3168
    %v9459 = vunpack.c.l.b16 %v3169
    %v9460 = vunpack.c.h.b16 %v3169
    %v9461 = vunpack.c.l.b16 %v3170
    %v9462 = vunpack.c.h.b16 %v3170
    %v9463 = vunpack.c.l.b16 %v3171
    %v9464 = vunpack.c.h.b16 %v3171
    %v9465 = vunpack.c.l.b16 %v3172
    %v9466 = vunpack.c.h.b16 %v3172
    %v9467 = vunpack.c.l.b16 %v3173
    %v9468 = vunpack.c.h.b16 %v3173
    %v9469 = vunpack.c.l.b16 %v3174
    %v9470 = vunpack.c.h.b16 %v3174
    %v9471 = vunpack.c.l.b16 %v3175
    %v9472 = vunpack.c.h.b16 %v3175
    %v9473 = vunpack.c.l.b16 %v3176
    %v9474 = vunpack.c.h.b16 %v3176
    %v9475 = vunpack.c.l.b16 %v3177
    %v9476 = vunpack.c.h.b16 %v3177
    %v9477 = vunpack.c.l.b16 %v3178
    %v9478 = vunpack.c.h.b16 %v3178
    %v9479 = vunpack.c.l.b16 %v3179
    %v9480 = vunpack.c.h.b16 %v3179
    %v9481 = vunpack.c.l.b16 %v3180
    %v9482 = vunpack.c.h.b16 %v3180
    %v9483 = vunpack.c.l.b16 %v3181
    %v9484 = vunpack.c.h.b16 %v3181
    %v9485 = vunpack.c.l.b16 %v3182
    %v9486 = vunpack.c.h.b16 %v3182
    %v9487 = vunpack.c.l.b16 %v3183
    %v9488 = vunpack.c.h.b16 %v3183
    %v9489 = vunpack.c.l.b16 %v3184
    %v9490 = vunpack.c.h.b16 %v3184
    %v9491 = vunpack.c.l.b16 %v3185
    %v9492 = vunpack.c.h.b16 %v3185
    %v9493 = vunpack.c.l.b16 %v3186
    %v9494 = vunpack.c.h.b16 %v3186
    %v9495 = vunpack.c.l.b16 %v3187
    %v9496 = vunpack.c.h.b16 %v3187
    %v9497 = vunpack.c.l.b16 %v3188
    %v9498 = vunpack.c.h.b16 %v3188
    %v9499 = vunpack.c.l.b16 %v3189
    %v9500 = vunpack.c.h.b16 %v3189
    %v9501 = vunpack.c.l.b16 %v3190
    %v9502 = vunpack.c.h.b16 %v3190
    %v9503 = vunpack.c.l.b16 %v3191
    %v9504 = vunpack.c.h.b16 %v3191
    %v9505 = vunpack.c.l.b16 %v3192
    %v9506 = vunpack.c.h.b16 %v3192
    %v9507 = vunpack.c.l.b16 %v3193
    %v9508 = vunpack.c.h.b16 %v3193
    %v9509 = vunpack.c.l.b16 %v3194
    %v9510 = vunpack.c.h.b16 %v3194
    %v9511 = vunpack.c.l.b16 %v3195
    %v9512 = vunpack.c.h.b16 %v3195
    %v9513 = vunpack.c.l.b16 %v3196
    %v9514 = vunpack.c.h.b16 %v3196
    %v9515 = vunpack.c.l.b16 %v3197
    %v9516 = vunpack.c.h.b16 %v3197
    %v9517 = vunpack.c.l.b16 %v3198
    %v9518 = vunpack.c.h.b16 %v3198
    %v9519 = vunpack.c.l.b16 %v3199
    %v9520 = vunpack.c.h.b16 %v3199
    %v9521 = vunpack.c.l.b16 %v3200
    %v9522 = vunpack.c.h.b16 %v3200
    %v9523 = vunpack.c.l.b16 %v3201
    %v9524 = vunpack.c.h.b16 %v3201
    %v9525 = vunpack.c.l.b16 %v3202
    %v9526 = vunpack.c.h.b16 %v3202
    %v9527 = vunpack.c.l.b16 %v3203
    %v9528 = vunpack.c.h.b16 %v3203
    %v9529 = vunpack.c.l.b16 %v3204
    %v9530 = vunpack.c.h.b16 %v3204
    %v9531 = vunpack.c.l.b16 %v3205
    %v9532 = vunpack.c.h.b16 %v3205
    %v9533 = vunpack.c.l.b16 %v3206
    %v9534 = vunpack.c.h.b16 %v3206
    %v9535 = vunpack.c.l.b16 %v3207
    %v9536 = vunpack.c.h.b16 %v3207
    %v9537 = vunpack.c.l.b16 %v3208
    %v9538 = vunpack.c.h.b16 %v3208
    %v9539 = vunpack.c.l.b16 %v3209
    %v9540 = vunpack.c.h.b16 %v3209
    %v9541 = vunpack.c.l.b16 %v3210
    %v9542 = vunpack.c.h.b16 %v3210
    %v9543 = vunpack.c.l.b16 %v3211
    %v9544 = vunpack.c.h.b16 %v3211
    %v9545 = vunpack.c.l.b16 %v3212
    %v9546 = vunpack.c.h.b16 %v3212
    %v9547 = vunpack.c.l.b16 %v3213
    %v9548 = vunpack.c.h.b16 %v3213
    %v9549 = vunpack.c.l.b16 %v3214
    %v9550 = vunpack.c.h.b16 %v3214
    %v9551 = vunpack.c.l.b16 %v3215
    %v9552 = vunpack.c.h.b16 %v3215
    %v9553 = vunpack.c.l.b16 %v3216
    %v9554 = vunpack.c.h.b16 %v3216
    %v9555 = vunpack.c.l.b16 %v3217
    %v9556 = vunpack.c.h.b16 %v3217
    %v9557 = vunpack.c.l.b16 %v3218
    %v9558 = vunpack.c.h.b16 %v3218
    %v9559 = vunpack.c.l.b16 %v3219
    %v9560 = vunpack.c.h.b16 %v3219
    %v9561 = vunpack.c.l.b16 %v3220
    %v9562 = vunpack.c.h.b16 %v3220
    %v9563 = vunpack.c.l.b16 %v3221
    %v9564 = vunpack.c.h.b16 %v3221
    %v9565 = vunpack.c.l.b16 %v3222
    %v9566 = vunpack.c.h.b16 %v3222
    %v9567 = vunpack.c.l.b16 %v3223
    %v9568 = vunpack.c.h.b16 %v3223
    %v9569 = vunpack.c.l.b16 %v3224
    %v9570 = vunpack.c.h.b16 %v3224
    %v9571 = vunpack.c.l.b16 %v3225
    %v9572 = vunpack.c.h.b16 %v3225
    %v9573 = vunpack.c.l.b16 %v3226
    %v9574 = vunpack.c.h.b16 %v3226
    %v9575 = vunpack.c.l.b16 %v3227
    %v9576 = vunpack.c.h.b16 %v3227
    %v9577 = vunpack.c.l.b16 %v3228
    %v9578 = vunpack.c.h.b16 %v3228
    %v9579 = vunpack.c.l.b16 %v3229
    %v9580 = vunpack.c.h.b16 %v3229
    %v9581 = vunpack.c.l.b16 %v3230
    %v9582 = vunpack.c.h.b16 %v3230
    %v9583 = vunpack.c.l.b16 %v3231
    %v9584 = vunpack.c.h.b16 %v3231
    %v9585 = vunpack.c.l.b16 %v3232
    %v9586 = vunpack.c.h.b16 %v3232
    %v9587 = vunpack.c.l.b16 %v3233
    %v9588 = vunpack.c.h.b16 %v3233
    %v9589 = vunpack.c.l.b16 %v3234
    %v9590 = vunpack.c.h.b16 %v3234
    %v9591 = vunpack.c.l.b16 %v3235
    %v9592 = vunpack.c.h.b16 %v3235
    %v9593 = vunpack.c.l.b16 %v3236
    %v9594 = vunpack.c.h.b16 %v3236
    %v9595 = vunpack.c.l.b16 %v3237
    %v9596 = vunpack.c.h.b16 %v3237
    %v9597 = vunpack.c.l.b16 %v3238
    %v9598 = vunpack.c.h.b16 %v3238
    %v9599 = vunpack.c.l.b16 %v3239
    %v9600 = vunpack.c.h.b16 %v3239
    %v9601 = vunpack.c.l.b16 %v3240
    %v9602 = vunpack.c.h.b16 %v3240
    %v9603 = vunpack.c.l.b16 %v3241
    %v9604 = vunpack.c.h.b16 %v3241
    %v9605 = vunpack.c.l.b16 %v3242
    %v9606 = vunpack.c.h.b16 %v3242
    %v9607 = vunpack.c.l.b16 %v3243
    %v9608 = vunpack.c.h.b16 %v3243
    %v9609 = vunpack.c.l.b16 %v3244
    %v9610 = vunpack.c.h.b16 %v3244
    %v9611 = vunpack.c.l.b16 %v3245
    %v9612 = vunpack.c.h.b16 %v3245
    %v9613 = vunpack.c.l.b16 %v3246
    %v9614 = vunpack.c.h.b16 %v3246
    %v9615 = vunpack.c.l.b16 %v3247
    %v9616 = vunpack.c.h.b16 %v3247
    %v9617 = vunpack.c.l.b16 %v3248
    %v9618 = vunpack.c.h.b16 %v3248
    %v9619 = vunpack.c.l.b16 %v3249
    %v9620 = vunpack.c.h.b16 %v3249
    %v9621 = vunpack.c.l.b16 %v3250
    %v9622 = vunpack.c.h.b16 %v3250
    %v9623 = vunpack.c.l.b16 %v3251
    %v9624 = vunpack.c.h.b16 %v3251
    %v9625 = vunpack.c.l.b16 %v3252
    %v9626 = vunpack.c.h.b16 %v3252
    %v9627 = vunpack.c.l.b16 %v3253
    %v9628 = vunpack.c.h.b16 %v3253
    %v9629 = vunpack.c.l.b16 %v3254
    %v9630 = vunpack.c.h.b16 %v3254
    %v9631 = vunpack.c.l.b16 %v3255
    %v9632 = vunpack.c.h.b16 %v3255
    %v9633 = vunpack.c.l.b16 %v3256
    %v9634 = vunpack.c.h.b16 %v3256
    %v9635 = vunpack.c.l.b16 %v3257
    %v9636 = vunpack.c.h.b16 %v3257
    %v9637 = vunpack.c.l.b16 %v3258
    %v9638 = vunpack.c.h.b16 %v3258
    %v9639 = vunpack.c.l.b16 %v3259
    %v9640 = vunpack.c.h.b16 %v3259
    %v9641 = vunpack.c.l.b16 %v3260
    %v9642 = vunpack.c.h.b16 %v3260
    %v9643 = vunpack.c.l.b16 %v3261
    %v9644 = vunpack.c.h.b16 %v3261
    %v9645 = vunpack.c.l.b16 %v3262
    %v9646 = vunpack.c.h.b16 %v3262
    %v9647 = vunpack.c.l.b16 %v3263
    %v9648 = vunpack.c.h.b16 %v3263
    %v9649 = vunpack.c.l.b16 %v3264
    %v9650 = vunpack.c.h.b16 %v3264
    %v9651 = vunpack.c.l.b16 %v3265
    %v9652 = vunpack.c.h.b16 %v3265
    %v9653 = vunpack.c.l.b16 %v3266
    %v9654 = vunpack.c.h.b16 %v3266
    %v9655 = vunpack.c.l.b16 %v3267
    %v9656 = vunpack.c.h.b16 %v3267
    %v9657 = vunpack.c.l.b16 %v3268
    %v9658 = vunpack.c.h.b16 %v3268
    %v9659 = vunpack.c.l.b16 %v3269
    %v9660 = vunpack.c.h.b16 %v3269
    %v9661 = vunpack.c.l.b16 %v3270
    %v9662 = vunpack.c.h.b16 %v3270
    %v9663 = vunpack.c.l.b16 %v3271
    %v9664 = vunpack.c.h.b16 %v3271
    %v9665 = vunpack.c.l.b16 %v3272
    %v9666 = vunpack.c.h.b16 %v3272
    %v9667 = vunpack.c.l.b16 %v3273
    %v9668 = vunpack.c.h.b16 %v3273
    %v9669 = vunpack.c.l.b16 %v3274
    %v9670 = vunpack.c.h.b16 %v3274
    %v9671 = vunpack.c.l.b16 %v3275
    %v9672 = vunpack.c.h.b16 %v3275
    %v9673 = vunpack.c.l.b16 %v3276
    %v9674 = vunpack.c.h.b16 %v3276
    %v9675 = vunpack.c.l.b16 %v3277
    %v9676 = vunpack.c.h.b16 %v3277
    %v9677 = vunpack.c.l.b16 %v3278
    %v9678 = vunpack.c.h.b16 %v3278
    %v9679 = vunpack.c.l.b16 %v3279
    %v9680 = vunpack.c.h.b16 %v3279
    %v9681 = vunpack.c.l.b16 %v3280
    %v9682 = vunpack.c.h.b16 %v3280
    %v9683 = vunpack.c.l.b16 %v3281
    %v9684 = vunpack.c.h.b16 %v3281
    %v9685 = vunpack.c.l.b16 %v3282
    %v9686 = vunpack.c.h.b16 %v3282
    %v9687 = vunpack.c.l.b16 %v3283
    %v9688 = vunpack.c.h.b16 %v3283
    %v9689 = vunpack.c.l.b16 %v3284
    %v9690 = vunpack.c.h.b16 %v3284
    %v9691 = vunpack.c.l.b16 %v3285
    %v9692 = vunpack.c.h.b16 %v3285
    %v9693 = vunpack.c.l.b16 %v3286
    %v9694 = vunpack.c.h.b16 %v3286
    %v9695 = vunpack.c.l.b16 %v3287
    %v9696 = vunpack.c.h.b16 %v3287
    %v9697 = vunpack.c.l.b16 %v3288
    %v9698 = vunpack.c.h.b16 %v3288
    %v9699 = vunpack.c.l.b16 %v3289
    %v9700 = vunpack.c.h.b16 %v3289
    %v9701 = vunpack.c.l.b16 %v3290
    %v9702 = vunpack.c.h.b16 %v3290
    %v9703 = vunpack.c.l.b16 %v3291
    %v9704 = vunpack.c.h.b16 %v3291
    %v9705 = vunpack.c.l.b16 %v3292
    %v9706 = vunpack.c.h.b16 %v3292
    %v9707 = vunpack.c.l.b16 %v3293
    %v9708 = vunpack.c.h.b16 %v3293
    %v9709 = vunpack.c.l.b16 %v3294
    %v9710 = vunpack.c.h.b16 %v3294
    %v9711 = vunpack.c.l.b16 %v3295
    %v9712 = vunpack.c.h.b16 %v3295
    %v9713 = vunpack.c.l.b16 %v3296
    %v9714 = vunpack.c.h.b16 %v3296
    %v9715 = vunpack.c.l.b16 %v3297
    %v9716 = vunpack.c.h.b16 %v3297
    %v9717 = vunpack.c.l.b16 %v3298
    %v9718 = vunpack.c.h.b16 %v3298
    %v9719 = vunpack.c.l.b16 %v3299
    %v9720 = vunpack.c.h.b16 %v3299
    %v9721 = vunpack.c.l.b16 %v3300
    %v9722 = vunpack.c.h.b16 %v3300
    %v9723 = vunpack.c.l.b16 %v3301
    %v9724 = vunpack.c.h.b16 %v3301
    %v9725 = vunpack.c.l.b16 %v3302
    %v9726 = vunpack.c.h.b16 %v3302
    %v9727 = vunpack.c.l.b16 %v3303
    %v9728 = vunpack.c.h.b16 %v3303
    %v9729 = vunpack.c.l.b16 %v3304
    %v9730 = vunpack.c.h.b16 %v3304
    %v9731 = vunpack.c.l.b16 %v3305
    %v9732 = vunpack.c.h.b16 %v3305
    %v9733 = vunpack.c.l.b16 %v3306
    %v9734 = vunpack.c.h.b16 %v3306
    %v9735 = vunpack.c.l.b16 %v3307
    %v9736 = vunpack.c.h.b16 %v3307
    %v9737 = vunpack.c.l.b16 %v3308
    %v9738 = vunpack.c.h.b16 %v3308
    %v9739 = vunpack.c.l.b16 %v3309
    %v9740 = vunpack.c.h.b16 %v3309
    %v9741 = vunpack.c.l.b16 %v3310
    %v9742 = vunpack.c.h.b16 %v3310
    %v9743 = vunpack.c.l.b16 %v3311
    %v9744 = vunpack.c.h.b16 %v3311
    %v9745 = vunpack.c.l.b16 %v3312
    %v9746 = vunpack.c.h.b16 %v3312
    %v9747 = vunpack.c.l.b16 %v3313
    %v9748 = vunpack.c.h.b16 %v3313
    %v9749 = vunpack.c.l.b16 %v3314
    %v9750 = vunpack.c.h.b16 %v3314
    %v9751 = vunpack.c.l.b16 %v3315
    %v9752 = vunpack.c.h.b16 %v3315
    %v9753 = vunpack.c.l.b16 %v3316
    %v9754 = vunpack.c.h.b16 %v3316
    %v9755 = vunpack.c.l.b16 %v3317
    %v9756 = vunpack.c.h.b16 %v3317
    %v9757 = vunpack.c.l.b16 %v3318
    %v9758 = vunpack.c.h.b16 %v3318
    %v9759 = vunpack.c.l.b16 %v3319
    %v9760 = vunpack.c.h.b16 %v3319
    %v9761 = vunpack.c.l.b16 %v3320
    %v9762 = vunpack.c.h.b16 %v3320
    %v9763 = vunpack.c.l.b16 %v3321
    %v9764 = vunpack.c.h.b16 %v3321
    %v9765 = vunpack.c.l.b16 %v3322
    %v9766 = vunpack.c.h.b16 %v3322
    %v9767 = vunpack.c.l.b16 %v3323
    %v9768 = vunpack.c.h.b16 %v3323
    %v9769 = vunpack.c.l.b16 %v3324
    %v9770 = vunpack.c.h.b16 %v3324
    %v9771 = vunpack.c.l.b16 %v3325
    %v9772 = vunpack.c.h.b16 %v3325
    %v9773 = vunpack.c.l.b16 %v3326
    %v9774 = vunpack.c.h.b16 %v3326
    %v9775 = vunpack.c.l.b16 %v3327
    %v9776 = vunpack.c.h.b16 %v3327
    %v9777 = vunpack.c.l.b16 %v3328
    %v9778 = vunpack.c.h.b16 %v3328
    %v9779 = vunpack.c.l.b16 %v3329
    %v9780 = vunpack.c.h.b16 %v3329
    %v9781 = vunpack.c.l.b16 %v3330
    %v9782 = vunpack.c.h.b16 %v3330
    %v9783 = vunpack.c.l.b16 %v3331
    %v9784 = vunpack.c.h.b16 %v3331
    %v9785 = vunpack.c.l.b16 %v3332
    %v9786 = vunpack.c.h.b16 %v3332
    %v9787 = vunpack.c.l.b16 %v3333
    %v9788 = vunpack.c.h.b16 %v3333
    %v9789 = vunpack.c.l.b16 %v3334
    %v9790 = vunpack.c.h.b16 %v3334
    %v9791 = vunpack.c.l.b16 %v3335
    %v9792 = vunpack.c.h.b16 %v3335
    %v9793 = vunpack.c.l.b16 %v3336
    %v9794 = vunpack.c.h.b16 %v3336
    %v9795 = vunpack.c.l.b16 %v3337
    %v9796 = vunpack.c.h.b16 %v3337
    %v9797 = vunpack.c.l.b16 %v3338
    %v9798 = vunpack.c.h.b16 %v3338
    %v9799 = vunpack.c.l.b16 %v3339
    %v9800 = vunpack.c.h.b16 %v3339
    %v9801 = vunpack.c.l.b16 %v3340
    %v9802 = vunpack.c.h.b16 %v3340
    %v9803 = vunpack.c.l.b16 %v3341
    %v9804 = vunpack.c.h.b16 %v3341
    %v9805 = vunpack.c.l.b16 %v3342
    %v9806 = vunpack.c.h.b16 %v3342
    %v9807 = vunpack.c.l.b16 %v3343
    %v9808 = vunpack.c.h.b16 %v3343
    %v9809 = vunpack.c.l.b16 %v3344
    %v9810 = vunpack.c.h.b16 %v3344
    %v9811 = vunpack.c.l.b16 %v3345
    %v9812 = vunpack.c.h.b16 %v3345
    %v9813 = vunpack.c.l.b16 %v3346
    %v9814 = vunpack.c.h.b16 %v3346
    %v9815 = vunpack.c.l.b16 %v3347
    %v9816 = vunpack.c.h.b16 %v3347
    %v9817 = vunpack.c.l.b16 %v3348
    %v9818 = vunpack.c.h.b16 %v3348
    %v9819 = vunpack.c.l.b16 %v3349
    %v9820 = vunpack.c.h.b16 %v3349
    %v9821 = vunpack.c.l.b16 %v3350
    %v9822 = vunpack.c.h.b16 %v3350
    %v9823 = vunpack.c.l.b16 %v3351
    %v9824 = vunpack.c.h.b16 %v3351
    %v9825 = vunpack.c.l.b16 %v3352
    %v9826 = vunpack.c.h.b16 %v3352
    %v9827 = vunpack.c.l.b16 %v3353
    %v9828 = vunpack.c.h.b16 %v3353
    %v9829 = vunpack.c.l.b16 %v3354
    %v9830 = vunpack.c.h.b16 %v3354
    %v9831 = vunpack.c.l.b16 %v3355
    %v9832 = vunpack.c.h.b16 %v3355
    %v9833 = vunpack.c.l.b16 %v3356
    %v9834 = vunpack.c.h.b16 %v3356
    %v9835 = vunpack.c.l.b16 %v3357
    %v9836 = vunpack.c.h.b16 %v3357
    %v9837 = vunpack.c.l.b16 %v3358
    %v9838 = vunpack.c.h.b16 %v3358
    %v9839 = vunpack.c.l.b16 %v3359
    %v9840 = vunpack.c.h.b16 %v3359
    %v9841 = vunpack.c.l.b16 %v3360
    %v9842 = vunpack.c.h.b16 %v3360
    %v9843 = vunpack.c.l.b16 %v3361
    %v9844 = vunpack.c.h.b16 %v3361
    %v9845 = vunpack.c.l.b16 %v3362
    %v9846 = vunpack.c.h.b16 %v3362
    %v9847 = vunpack.c.l.b16 %v3363
    %v9848 = vunpack.c.h.b16 %v3363
    %v9849 = vunpack.c.l.b16 %v3364
    %v9850 = vunpack.c.h.b16 %v3364
    %v9851 = vunpack.c.l.b16 %v3365
    %v9852 = vunpack.c.h.b16 %v3365
    %v9853 = vunpack.c.l.b16 %v3366
    %v9854 = vunpack.c.h.b16 %v3366
    %v9855 = vunpack.c.l.b16 %v3367
    %v9856 = vunpack.c.h.b16 %v3367
    %v9857 = vunpack.c.l.b16 %v3368
    %v9858 = vunpack.c.h.b16 %v3368
    %v9859 = vunpack.c.l.b16 %v3369
    %v9860 = vunpack.c.h.b16 %v3369
    %v9861 = vpack.c.b16 %v7821, %v7813
    %v9862 = vpack.c.b16 %v7822, %v7814
    %v9863 = vpack.c.b16 %v7823, %v7815
    %v9864 = vpack.c.b16 %v7824, %v7816
    %v9865 = vpack.c.b16 %v7825, %v7817
    %v9866 = vpack.c.b16 %v7826, %v7818
    %v9867 = vpack.c.b16 %v7827, %v7819
    %v9868 = vpack.c.b16 %v7828, %v7820
    %v9869 = vpack.c.b16 %v7837, %v7829
    %v9870 = vpack.c.b16 %v7838, %v7830
    %v9871 = vpack.c.b16 %v7839, %v7831
    %v9872 = vpack.c.b16 %v7840, %v7832
    %v9873 = vpack.c.b16 %v7841, %v7833
    %v9874 = vpack.c.b16 %v7842, %v7834
    %v9875 = vpack.c.b16 %v7843, %v7835
    %v9876 = vpack.c.b16 %v7844, %v7836
    %v9877 = vpack.c.b16 %v7853, %v7845
    %v9878 = vpack.c.b16 %v7854, %v7846
    %v9879 = vpack.c.b16 %v7855, %v7847
    %v9880 = vpack.c.b16 %v7856, %v7848
    %v9881 = vpack.c.b16 %v7857, %v7849
    %v9882 = vpack.c.b16 %v7858, %v7850
    %v9883 = vpack.c.b16 %v7859, %v7851
    %v9884 = vpack.c.b16 %v7860, %v7852
    %v9885 = vpack.c.b16 %v7869, %v7861
    %v9886 = vpack.c.b16 %v7870, %v7862
    %v9887 = vpack.c.b16 %v7871, %v7863
    %v9888 = vpack.c.b16 %v7872, %v7864
    %v9889 = vpack.c.b16 %v7873, %v7865
    %v9890 = vpack.c.b16 %v7874, %v7866
    %v9891 = vpack.c.b16 %v7875, %v7867
    %v9892 = vpack.c.b16 %v7876, %v7868
    %v9893 = vpack.c.b16 %v7885, %v7877
    %v9894 = vpack.c.b16 %v7886, %v7878
    %v9895 = vpack.c.b16 %v7887, %v7879
    %v9896 = vpack.c.b16 %v7888, %v7880
    %v9897 = vpack.c.b16 %v7889, %v7881
    %v9898 = vpack.c.b16 %v7890, %v7882
    %v9899 = vpack.c.b16 %v7891, %v7883
    %v9900 = vpack.c.b16 %v7892, %v7884
    %v9901 = vpack.c.b16 %v7901, %v7893
    %v9902 = vpack.c.b16 %v7902, %v7894
    %v9903 = vpack.c.b16 %v7903, %v7895
    %v9904 = vpack.c.b16 %v7904, %v7896
    %v9905 = vpack.c.b16 %v7905, %v7897
    %v9906 = vpack.c.b16 %v7906, %v7898
    %v9907 = vpack.c.b16 %v7907, %v7899
    %v9908 = vpack.c.b16 %v7908, %v7900
    %v9909 = vpack.c.b16 %v7917, %v7909
    %v9910 = vpack.c.b16 %v7918, %v7910
    %v9911 = vpack.c.b16 %v7919, %v7911
    %v9912 = vpack.c.b16 %v7920, %v7912
    %v9913 = vpack.c.b16 %v7921, %v7913
    %v9914 = vpack.c.b16 %v7922, %v7914
    %v9915 = vpack.c.b16 %v7923, %v7915
    %v9916 = vpack.c.b16 %v7924, %v7916
    %v9917 = vpack.c.b16 %v7933, %v7925
    %v9918 = vpack.c.b16 %v7934, %v7926
    %v9919 = vpack.c.b16 %v7935, %v7927
    %v9920 = vpack.c.b16 %v7936, %v7928
    %v9921 = vpack.c.b16 %v7937, %v7929
    %v9922 = vpack.c.b16 %v7938, %v7930
    %v9923 = vpack.c.b16 %v7939, %v7931
    %v9924 = vpack.c.b16 %v7940, %v7932
    %v9925 = vpack.c.b16 %v7949, %v7941
    %v9926 = vpack.c.b16 %v7950, %v7942
    %v9927 = vpack.c.b16 %v7951, %v7943
    %v9928 = vpack.c.b16 %v7952, %v7944
    %v9929 = vpack.c.b16 %v7953, %v7945
    %v9930 = vpack.c.b16 %v7954, %v7946
    %v9931 = vpack.c.b16 %v7955, %v7947
    %v9932 = vpack.c.b16 %v7956, %v7948
    %v9933 = vpack.c.b16 %v7965, %v7957
    %v9934 = vpack.c.b16 %v7966, %v7958
    %v9935 = vpack.c.b16 %v7967, %v7959
    %v9936 = vpack.c.b16 %v7968, %v7960
    %v9937 = vpack.c.b16 %v7969, %v7961
    %v9938 = vpack.c.b16 %v7970, %v7962
    %v9939 = vpack.c.b16 %v7971, %v7963
    %v9940 = vpack.c.b16 %v7972, %v7964
    %v9941 = vpack.c.b16 %v7981, %v7973
    %v9942 = vpack.c.b16 %v7982, %v7974
    %v9943 = vpack.c.b16 %v7983, %v7975
    %v9944 = vpack.c.b16 %v7984, %v7976
    %v9945 = vpack.c.b16 %v7985, %v7977
    %v9946 = vpack.c.b16 %v7986, %v7978
    %v9947 = vpack.c.b16 %v7987, %v7979
    %v9948 = vpack.c.b16 %v7988, %v7980
    %v9949 = vpack.c.b16 %v7997, %v7989
    %v9950 = vpack.c.b16 %v7998, %v7990
    %v9951 = vpack.c.b16 %v7999, %v7991
    %v9952 = vpack.c.b16 %v8000, %v7992
    %v9953 = vpack.c.b16 %v8001, %v7993
    %v9954 = vpack.c.b16 %v8002, %v7994
    %v9955 = vpack.c.b16 %v8003, %v7995
    %v9956 = vpack.c.b16 %v8004, %v7996
    %v9957 = vpack.c.b16 %v8013, %v8005
    %v9958 = vpack.c.b16 %v8014, %v8006
    %v9959 = vpack.c.b16 %v8015, %v8007
    %v9960 = vpack.c.b16 %v8016, %v8008
    %v9961 = vpack.c.b16 %v8017, %v8009
    %v9962 = vpack.c.b16 %v8018, %v8010
    %v9963 = vpack.c.b16 %v8019, %v8011
    %v9964 = vpack.c.b16 %v8020, %v8012
    %v9965 = vpack.c.b16 %v8029, %v8021
    %v9966 = vpack.c.b16 %v8030, %v8022
    %v9967 = vpack.c.b16 %v8031, %v8023
    %v9968 = vpack.c.b16 %v8032, %v8024
    %v9969 = vpack.c.b16 %v8033, %v8025
    %v9970 = vpack.c.b16 %v8034, %v8026
    %v9971 = vpack.c.b16 %v8035, %v8027
    %v9972 = vpack.c.b16 %v8036, %v8028
    %v9973 = vpack.c.b16 %v8045, %v8037
    %v9974 = vpack.c.b16 %v8046, %v8038
    %v9975 = vpack.c.b16 %v8047, %v8039
    %v9976 = vpack.c.b16 %v8048, %v8040
    %v9977 = vpack.c.b16 %v8049, %v8041
    %v9978 = vpack.c.b16 %v8050, %v8042
    %v9979 = vpack.c.b16 %v8051, %v8043
    %v9980 = vpack.c.b16 %v8052, %v8044
    %v9981 = vpack.c.b16 %v8061, %v8053
    %v9982 = vpack.c.b16 %v8062, %v8054
    %v9983 = vpack.c.b16 %v8063, %v8055
    %v9984 = vpack.c.b16 %v8064, %v8056
    %v9985 = vpack.c.b16 %v8065, %v8057
    %v9986 = vpack.c.b16 %v8066, %v8058
    %v9987 = vpack.c.b16 %v8067, %v8059
    %v9988 = vpack.c.b16 %v8068, %v8060
    %v9989 = vpack.c.b16 %v8077, %v8069
    %v9990 = vpack.c.b16 %v8078, %v8070
    %v9991 = vpack.c.b16 %v8079, %v8071
    %v9992 = vpack.c.b16 %v8080, %v8072
    %v9993 = vpack.c.b16 %v8081, %v8073
    %v9994 = vpack.c.b16 %v8082, %v8074
    %v9995 = vpack.c.b16 %v8083, %v8075
    %v9996 = vpack.c.b16 %v8084, %v8076
    %v9997 = vpack.c.b16 %v8093, %v8085
    %v9998 = vpack.c.b16 %v8094, %v8086
    %v9999 = vpack.c.b16 %v8095, %v8087
    %v10000 = vpack.c.b16 %v8096, %v8088
    %v10001 = vpack.c.b16 %v8097, %v8089
    %v10002 = vpack.c.b16 %v8098, %v8090
    %v10003 = vpack.c.b16 %v8099, %v8091
    %v10004 = vpack.c.b16 %v8100, %v8092
    %v10005 = vpack.c.b16 %v8109, %v8101
    %v10006 = vpack.c.b16 %v8110, %v8102
    %v10007 = vpack.c.b16 %v8111, %v8103
    %v10008 = vpack.c.b16 %v8112, %v8104
    %v10009 = vpack.c.b16 %v8113, %v8105
    %v10010 = vpack.c.b16 %v8114, %v8106
    %v10011 = vpack.c.b16 %v8115, %v8107
    %v10012 = vpack.c.b16 %v8116, %v8108
    %v10013 = vpack.c.b16 %v8125, %v8117
    %v10014 = vpack.c.b16 %v8126, %v8118
    %v10015 = vpack.c.b16 %v8127, %v8119
    %v10016 = vpack.c.b16 %v8128, %v8120
    %v10017 = vpack.c.b16 %v8129, %v8121
    %v10018 = vpack.c.b16 %v8130, %v8122
    %v10019 = vpack.c.b16 %v8131, %v8123
    %v10020 = vpack.c.b16 %v8132, %v8124
    %v10021 = vpack.c.b16 %v8141, %v8133
    %v10022 = vpack.c.b16 %v8142, %v8134
    %v10023 = vpack.c.b16 %v8143, %v8135
    %v10024 = vpack.c.b16 %v8144, %v8136
    %v10025 = vpack.c.b16 %v8145, %v8137
    %v10026 = vpack.c.b16 %v8146, %v8138
    %v10027 = vpack.c.b16 %v8147, %v8139
    %v10028 = vpack.c.b16 %v8148, %v8140
    %v10029 = vpack.c.b16 %v8157, %v8149
    %v10030 = vpack.c.b16 %v8158, %v8150
    %v10031 = vpack.c.b16 %v8159, %v8151
    %v10032 = vpack.c.b16 %v8160, %v8152
    %v10033 = vpack.c.b16 %v8161, %v8153
    %v10034 = vpack.c.b16 %v8162, %v8154
    %v10035 = vpack.c.b16 %v8163, %v8155
    %v10036 = vpack.c.b16 %v8164, %v8156
    %v10037 = vpack.c.b16 %v8173, %v8165
    %v10038 = vpack.c.b16 %v8174, %v8166
    %v10039 = vpack.c.b16 %v8175, %v8167
    %v10040 = vpack.c.b16 %v8176, %v8168
    %v10041 = vpack.c.b16 %v8177, %v8169
    %v10042 = vpack.c.b16 %v8178, %v8170
    %v10043 = vpack.c.b16 %v8179, %v8171
    %v10044 = vpack.c.b16 %v8180, %v8172
    %v10045 = vpack.c.b16 %v8189, %v8181
    %v10046 = vpack.c.b16 %v8190, %v8182
    %v10047 = vpack.c.b16 %v8191, %v8183
    %v10048 = vpack.c.b16 %v8192, %v8184
    %v10049 = vpack.c.b16 %v8193, %v8185
    %v10050 = vpack.c.b16 %v8194, %v8186
    %v10051 = vpack.c.b16 %v8195, %v8187
    %v10052 = vpack.c.b16 %v8196, %v8188
    %v10053 = vpack.c.b16 %v8205, %v8197
    %v10054 = vpack.c.b16 %v8206, %v8198
    %v10055 = vpack.c.b16 %v8207, %v8199
    %v10056 = vpack.c.b16 %v8208, %v8200
    %v10057 = vpack.c.b16 %v8209, %v8201
    %v10058 = vpack.c.b16 %v8210, %v8202
    %v10059 = vpack.c.b16 %v8211, %v8203
    %v10060 = vpack.c.b16 %v8212, %v8204
    %v10061 = vpack.c.b16 %v8221, %v8213
    %v10062 = vpack.c.b16 %v8222, %v8214
    %v10063 = vpack.c.b16 %v8223, %v8215
    %v10064 = vpack.c.b16 %v8224, %v8216
    %v10065 = vpack.c.b16 %v8225, %v8217
    %v10066 = vpack.c.b16 %v8226, %v8218
    %v10067 = vpack.c.b16 %v8227, %v8219
    %v10068 = vpack.c.b16 %v8228, %v8220
    %v10069 = vpack.c.b16 %v8237, %v8229
    %v10070 = vpack.c.b16 %v8238, %v8230
    %v10071 = vpack.c.b16 %v8239, %v8231
    %v10072 = vpack.c.b16 %v8240, %v8232
    %v10073 = vpack.c.b16 %v8241, %v8233
    %v10074 = vpack.c.b16 %v8242, %v8234
    %v10075 = vpack.c.b16 %v8243, %v8235
    %v10076 = vpack.c.b16 %v8244, %v8236
    %v10077 = vpack.c.b16 %v8253, %v8245
    %v10078 = vpack.c.b16 %v8254, %v8246
    %v10079 = vpack.c.b16 %v8255, %v8247
    %v10080 = vpack.c.b16 %v8256, %v8248
    %v10081 = vpack.c.b16 %v8257, %v8249
    %v10082 = vpack.c.b16 %v8258, %v8250
    %v10083 = vpack.c.b16 %v8259, %v8251
    %v10084 = vpack.c.b16 %v8260, %v8252
    %v10085 = vpack.c.b16 %v8269, %v8261
    %v10086 = vpack.c.b16 %v8270, %v8262
    %v10087 = vpack.c.b16 %v8271, %v8263
    %v10088 = vpack.c.b16 %v8272, %v8264
    %v10089 = vpack.c.b16 %v8273, %v8265
    %v10090 = vpack.c.b16 %v8274, %v8266
    %v10091 = vpack.c.b16 %v8275, %v8267
    %v10092 = vpack.c.b16 %v8276, %v8268
    %v10093 = vpack.c.b16 %v8285, %v8277
    %v10094 = vpack.c.b16 %v8286, %v8278
    %v10095 = vpack.c.b16 %v8287, %v8279
    %v10096 = vpack.c.b16 %v8288, %v8280
    %v10097 = vpack.c.b16 %v8289, %v8281
    %v10098 = vpack.c.b16 %v8290, %v8282
    %v10099 = vpack.c.b16 %v8291, %v8283
    %v10100 = vpack.c.b16 %v8292, %v8284
    %v10101 = vpack.c.b16 %v8301, %v8293
    %v10102 = vpack.c.b16 %v8302, %v8294
    %v10103 = vpack.c.b16 %v8303, %v8295
    %v10104 = vpack.c.b16 %v8304, %v8296
    %v10105 = vpack.c.b16 %v8305, %v8297
    %v10106 = vpack.c.b16 %v8306, %v8298
    %v10107 = vpack.c.b16 %v8307, %v8299
    %v10108 = vpack.c.b16 %v8308, %v8300
    %v10109 = vpack.c.b16 %v8317, %v8309
    %v10110 = vpack.c.b16 %v8318, %v8310
    %v10111 = vpack.c.b16 %v8319, %v8311
    %v10112 = vpack.c.b16 %v8320, %v8312
    %v10113 = vpack.c.b16 %v8321, %v8313
    %v10114 = vpack.c.b16 %v8322, %v8314
    %v10115 = vpack.c.b16 %v8323, %v8315
    %v10116 = vpack.c.b16 %v8324, %v8316
    %v10117 = vpack.c.b16 %v8333, %v8325
    %v10118 = vpack.c.b16 %v8334, %v8326
    %v10119 = vpack.c.b16 %v8335, %v8327
    %v10120 = vpack.c.b16 %v8336, %v8328
    %v10121 = vpack.c.b16 %v8337, %v8329
    %v10122 = vpack.c.b16 %v8338, %v8330
    %v10123 = vpack.c.b16 %v8339, %v8331
    %v10124 = vpack.c.b16 %v8340, %v8332
    %v10125 = vpack.c.b16 %v8349, %v8341
    %v10126 = vpack.c.b16 %v8350, %v8342
    %v10127 = vpack.c.b16 %v8351, %v8343
    %v10128 = vpack.c.b16 %v8352, %v8344
    %v10129 = vpack.c.b16 %v8353, %v8345
    %v10130 = vpack.c.b16 %v8354, %v8346
    %v10131 = vpack.c.b16 %v8355, %v8347
    %v10132 = vpack.c.b16 %v8356, %v8348
    %v10133 = vpack.c.b16 %v8365, %v8357
    %v10134 = vpack.c.b16 %v8366, %v8358
    %v10135 = vpack.c.b16 %v8367, %v8359
    %v10136 = vpack.c.b16 %v8368, %v8360
    %v10137 = vpack.c.b16 %v8369, %v8361
    %v10138 = vpack.c.b16 %v8370, %v8362
    %v10139 = vpack.c.b16 %v8371, %v8363
    %v10140 = vpack.c.b16 %v8372, %v8364
    %v10141 = vpack.c.b16 %v8381, %v8373
    %v10142 = vpack.c.b16 %v8382, %v8374
    %v10143 = vpack.c.b16 %v8383, %v8375
    %v10144 = vpack.c.b16 %v8384, %v8376
    %v10145 = vpack.c.b16 %v8385, %v8377
    %v10146 = vpack.c.b16 %v8386, %v8378
    %v10147 = vpack.c.b16 %v8387, %v8379
    %v10148 = vpack.c.b16 %v8388, %v8380
    %v10149 = vpack.c.b16 %v8397, %v8389
    %v10150 = vpack.c.b16 %v8398, %v8390
    %v10151 = vpack.c.b16 %v8399, %v8391
    %v10152 = vpack.c.b16 %v8400, %v8392
    %v10153 = vpack.c.b16 %v8401, %v8393
    %v10154 = vpack.c.b16 %v8402, %v8394
    %v10155 = vpack.c.b16 %v8403, %v8395
    %v10156 = vpack.c.b16 %v8404, %v8396
    %v10157 = vpack.c.b16 %v8413, %v8405
    %v10158 = vpack.c.b16 %v8414, %v8406
    %v10159 = vpack.c.b16 %v8415, %v8407
    %v10160 = vpack.c.b16 %v8416, %v8408
    %v10161 = vpack.c.b16 %v8417, %v8409
    %v10162 = vpack.c.b16 %v8418, %v8410
    %v10163 = vpack.c.b16 %v8419, %v8411
    %v10164 = vpack.c.b16 %v8420, %v8412
    %v10165 = vpack.c.b16 %v8429, %v8421
    %v10166 = vpack.c.b16 %v8430, %v8422
    %v10167 = vpack.c.b16 %v8431, %v8423
    %v10168 = vpack.c.b16 %v8432, %v8424
    %v10169 = vpack.c.b16 %v8433, %v8425
    %v10170 = vpack.c.b16 %v8434, %v8426
    %v10171 = vpack.c.b16 %v8435, %v8427
    %v10172 = vpack.c.b16 %v8436, %v8428
    %v10173 = vpack.c.b16 %v8445, %v8437
    %v10174 = vpack.c.b16 %v8446, %v8438
    %v10175 = vpack.c.b16 %v8447, %v8439
    %v10176 = vpack.c.b16 %v8448, %v8440
    %v10177 = vpack.c.b16 %v8449, %v8441
    %v10178 = vpack.c.b16 %v8450, %v8442
    %v10179 = vpack.c.b16 %v8451, %v8443
    %v10180 = vpack.c.b16 %v8452, %v8444
    %v10181 = vpack.c.b16 %v8461, %v8453
    %v10182 = vpack.c.b16 %v8462, %v8454
    %v10183 = vpack.c.b16 %v8463, %v8455
    %v10184 = vpack.c.b16 %v8464, %v8456
    %v10185 = vpack.c.b16 %v8465, %v8457
    %v10186 = vpack.c.b16 %v8466, %v8458
    %v10187 = vpack.c.b16 %v8467, %v8459
    %v10188 = vpack.c.b16 %v8468, %v8460
    %v10189 = vpack.c.b16 %v8477, %v8469
    %v10190 = vpack.c.b16 %v8478, %v8470
    %v10191 = vpack.c.b16 %v8479, %v8471
    %v10192 = vpack.c.b16 %v8480, %v8472
    %v10193 = vpack.c.b16 %v8481, %v8473
    %v10194 = vpack.c.b16 %v8482, %v8474
    %v10195 = vpack.c.b16 %v8483, %v8475
    %v10196 = vpack.c.b16 %v8484, %v8476
    %v10197 = vpack.c.b16 %v8493, %v8485
    %v10198 = vpack.c.b16 %v8494, %v8486
    %v10199 = vpack.c.b16 %v8495, %v8487
    %v10200 = vpack.c.b16 %v8496, %v8488
    %v10201 = vpack.c.b16 %v8497, %v8489
    %v10202 = vpack.c.b16 %v8498, %v8490
    %v10203 = vpack.c.b16 %v8499, %v8491
    %v10204 = vpack.c.b16 %v8500, %v8492
    %v10205 = vpack.c.b16 %v8509, %v8501
    %v10206 = vpack.c.b16 %v8510, %v8502
    %v10207 = vpack.c.b16 %v8511, %v8503
    %v10208 = vpack.c.b16 %v8512, %v8504
    %v10209 = vpack.c.b16 %v8513, %v8505
    %v10210 = vpack.c.b16 %v8514, %v8506
    %v10211 = vpack.c.b16 %v8515, %v8507
    %v10212 = vpack.c.b16 %v8516, %v8508
    %v10213 = vpack.c.b16 %v8525, %v8517
    %v10214 = vpack.c.b16 %v8526, %v8518
    %v10215 = vpack.c.b16 %v8527, %v8519
    %v10216 = vpack.c.b16 %v8528, %v8520
    %v10217 = vpack.c.b16 %v8529, %v8521
    %v10218 = vpack.c.b16 %v8530, %v8522
    %v10219 = vpack.c.b16 %v8531, %v8523
    %v10220 = vpack.c.b16 %v8532, %v8524
    %v10221 = vpack.c.b16 %v8541, %v8533
    %v10222 = vpack.c.b16 %v8542, %v8534
    %v10223 = vpack.c.b16 %v8543, %v8535
    %v10224 = vpack.c.b16 %v8544, %v8536
    %v10225 = vpack.c.b16 %v8545, %v8537
    %v10226 = vpack.c.b16 %v8546, %v8538
    %v10227 = vpack.c.b16 %v8547, %v8539
    %v10228 = vpack.c.b16 %v8548, %v8540
    %v10229 = vpack.c.b16 %v8557, %v8549
    %v10230 = vpack.c.b16 %v8558, %v8550
    %v10231 = vpack.c.b16 %v8559, %v8551
    %v10232 = vpack.c.b16 %v8560, %v8552
    %v10233 = vpack.c.b16 %v8561, %v8553
    %v10234 = vpack.c.b16 %v8562, %v8554
    %v10235 = vpack.c.b16 %v8563, %v8555
    %v10236 = vpack.c.b16 %v8564, %v8556
    %v10237 = vpack.c.b16 %v8573, %v8565
    %v10238 = vpack.c.b16 %v8574, %v8566
    %v10239 = vpack.c.b16 %v8575, %v8567
    %v10240 = vpack.c.b16 %v8576, %v8568
    %v10241 = vpack.c.b16 %v8577, %v8569
    %v10242 = vpack.c.b16 %v8578, %v8570
    %v10243 = vpack.c.b16 %v8579, %v8571
    %v10244 = vpack.c.b16 %v8580, %v8572
    %v10245 = vpack.c.b16 %v8589, %v8581
    %v10246 = vpack.c.b16 %v8590, %v8582
    %v10247 = vpack.c.b16 %v8591, %v8583
    %v10248 = vpack.c.b16 %v8592, %v8584
    %v10249 = vpack.c.b16 %v8593, %v8585
    %v10250 = vpack.c.b16 %v8594, %v8586
    %v10251 = vpack.c.b16 %v8595, %v8587
    %v10252 = vpack.c.b16 %v8596, %v8588
    %v10253 = vpack.c.b16 %v8605, %v8597
    %v10254 = vpack.c.b16 %v8606, %v8598
    %v10255 = vpack.c.b16 %v8607, %v8599
    %v10256 = vpack.c.b16 %v8608, %v8600
    %v10257 = vpack.c.b16 %v8609, %v8601
    %v10258 = vpack.c.b16 %v8610, %v8602
    %v10259 = vpack.c.b16 %v8611, %v8603
    %v10260 = vpack.c.b16 %v8612, %v8604
    %v10261 = vpack.c.b16 %v8621, %v8613
    %v10262 = vpack.c.b16 %v8622, %v8614
    %v10263 = vpack.c.b16 %v8623, %v8615
    %v10264 = vpack.c.b16 %v8624, %v8616
    %v10265 = vpack.c.b16 %v8625, %v8617
    %v10266 = vpack.c.b16 %v8626, %v8618
    %v10267 = vpack.c.b16 %v8627, %v8619
    %v10268 = vpack.c.b16 %v8628, %v8620
    %v10269 = vpack.c.b16 %v8637, %v8629
    %v10270 = vpack.c.b16 %v8638, %v8630
    %v10271 = vpack.c.b16 %v8639, %v8631
    %v10272 = vpack.c.b16 %v8640, %v8632
    %v10273 = vpack.c.b16 %v8641, %v8633
    %v10274 = vpack.c.b16 %v8642, %v8634
    %v10275 = vpack.c.b16 %v8643, %v8635
    %v10276 = vpack.c.b16 %v8644, %v8636
    %v10277 = vpack.c.b16 %v8653, %v8645
    %v10278 = vpack.c.b16 %v8654, %v8646
    %v10279 = vpack.c.b16 %v8655, %v8647
    %v10280 = vpack.c.b16 %v8656, %v8648
    %v10281 = vpack.c.b16 %v8657, %v8649
    %v10282 = vpack.c.b16 %v8658, %v8650
    %v10283 = vpack.c.b16 %v8659, %v8651
    %v10284 = vpack.c.b16 %v8660, %v8652
    %v10285 = vpack.c.b16 %v8669, %v8661
    %v10286 = vpack.c.b16 %v8670, %v8662
    %v10287 = vpack.c.b16 %v8671, %v8663
    %v10288 = vpack.c.b16 %v8672, %v8664
    %v10289 = vpack.c.b16 %v8673, %v8665
    %v10290 = vpack.c.b16 %v8674, %v8666
    %v10291 = vpack.c.b16 %v8675, %v8667
    %v10292 = vpack.c.b16 %v8676, %v8668
    %v10293 = vpack.c.b16 %v8685, %v8677
    %v10294 = vpack.c.b16 %v8686, %v8678
    %v10295 = vpack.c.b16 %v8687, %v8679
    %v10296 = vpack.c.b16 %v8688, %v8680
    %v10297 = vpack.c.b16 %v8689, %v8681
    %v10298 = vpack.c.b16 %v8690, %v8682
    %v10299 = vpack.c.b16 %v8691, %v8683
    %v10300 = vpack.c.b16 %v8692, %v8684
    %v10301 = vpack.c.b16 %v8701, %v8693
    %v10302 = vpack.c.b16 %v8702, %v8694
    %v10303 = vpack.c.b16 %v8703, %v8695
    %v10304 = vpack.c.b16 %v8704, %v8696
    %v10305 = vpack.c.b16 %v8705, %v8697
    %v10306 = vpack.c.b16 %v8706, %v8698
    %v10307 = vpack.c.b16 %v8707, %v8699
    %v10308 = vpack.c.b16 %v8708, %v8700
    %v10309 = vpack.c.b16 %v8717, %v8709
    %v10310 = vpack.c.b16 %v8718, %v8710
    %v10311 = vpack.c.b16 %v8719, %v8711
    %v10312 = vpack.c.b16 %v8720, %v8712
    %v10313 = vpack.c.b16 %v8721, %v8713
    %v10314 = vpack.c.b16 %v8722, %v8714
    %v10315 = vpack.c.b16 %v8723, %v8715
    %v10316 = vpack.c.b16 %v8724, %v8716
    %v10317 = vpack.c.b16 %v8733, %v8725
    %v10318 = vpack.c.b16 %v8734, %v8726
    %v10319 = vpack.c.b16 %v8735, %v8727
    %v10320 = vpack.c.b16 %v8736, %v8728
    %v10321 = vpack.c.b16 %v8737, %v8729
    %v10322 = vpack.c.b16 %v8738, %v8730
    %v10323 = vpack.c.b16 %v8739, %v8731
    %v10324 = vpack.c.b16 %v8740, %v8732
    %v10325 = vpack.c.b16 %v8749, %v8741
    %v10326 = vpack.c.b16 %v8750, %v8742
    %v10327 = vpack.c.b16 %v8751, %v8743
    %v10328 = vpack.c.b16 %v8752, %v8744
    %v10329 = vpack.c.b16 %v8753, %v8745
    %v10330 = vpack.c.b16 %v8754, %v8746
    %v10331 = vpack.c.b16 %v8755, %v8747
    %v10332 = vpack.c.b16 %v8756, %v8748
    %v10333 = vpack.c.b16 %v8765, %v8757
    %v10334 = vpack.c.b16 %v8766, %v8758
    %v10335 = vpack.c.b16 %v8767, %v8759
    %v10336 = vpack.c.b16 %v8768, %v8760
    %v10337 = vpack.c.b16 %v8769, %v8761
    %v10338 = vpack.c.b16 %v8770, %v8762
    %v10339 = vpack.c.b16 %v8771, %v8763
    %v10340 = vpack.c.b16 %v8772, %v8764
    %v10341 = vpack.c.b16 %v8781, %v8773
    %v10342 = vpack.c.b16 %v8782, %v8774
    %v10343 = vpack.c.b16 %v8783, %v8775
    %v10344 = vpack.c.b16 %v8784, %v8776
    %v10345 = vpack.c.b16 %v8785, %v8777
    %v10346 = vpack.c.b16 %v8786, %v8778
    %v10347 = vpack.c.b16 %v8787, %v8779
    %v10348 = vpack.c.b16 %v8788, %v8780
    %v10349 = vpack.c.b16 %v8797, %v8789
    %v10350 = vpack.c.b16 %v8798, %v8790
    %v10351 = vpack.c.b16 %v8799, %v8791
    %v10352 = vpack.c.b16 %v8800, %v8792
    %v10353 = vpack.c.b16 %v8801, %v8793
    %v10354 = vpack.c.b16 %v8802, %v8794
    %v10355 = vpack.c.b16 %v8803, %v8795
    %v10356 = vpack.c.b16 %v8804, %v8796
    %v10357 = vpack.c.b16 %v8813, %v8805
    %v10358 = vpack.c.b16 %v8814, %v8806
    %v10359 = vpack.c.b16 %v8815, %v8807
    %v10360 = vpack.c.b16 %v8816, %v8808
    %v10361 = vpack.c.b16 %v8817, %v8809
    %v10362 = vpack.c.b16 %v8818, %v8810
    %v10363 = vpack.c.b16 %v8819, %v8811
    %v10364 = vpack.c.b16 %v8820, %v8812
    %v10365 = vpack.c.b16 %v8829, %v8821
    %v10366 = vpack.c.b16 %v8830, %v8822
    %v10367 = vpack.c.b16 %v8831, %v8823
    %v10368 = vpack.c.b16 %v8832, %v8824
    %v10369 = vpack.c.b16 %v8833, %v8825
    %v10370 = vpack.c.b16 %v8834, %v8826
    %v10371 = vpack.c.b16 %v8835, %v8827
    %v10372 = vpack.c.b16 %v8836, %v8828
    %v10373 = vpack.c.b16 %v8845, %v8837
    %v10374 = vpack.c.b16 %v8846, %v8838
    %v10375 = vpack.c.b16 %v8847, %v8839
    %v10376 = vpack.c.b16 %v8848, %v8840
    %v10377 = vpack.c.b16 %v8849, %v8841
    %v10378 = vpack.c.b16 %v8850, %v8842
    %v10379 = vpack.c.b16 %v8851, %v8843
    %v10380 = vpack.c.b16 %v8852, %v8844
    %v10381 = vpack.c.b16 %v8861, %v8853
    %v10382 = vpack.c.b16 %v8862, %v8854
    %v10383 = vpack.c.b16 %v8863, %v8855
    %v10384 = vpack.c.b16 %v8864, %v8856
    %v10385 = vpack.c.b16 %v8865, %v8857
    %v10386 = vpack.c.b16 %v8866, %v8858
    %v10387 = vpack.c.b16 %v8867, %v8859
    %v10388 = vpack.c.b16 %v8868, %v8860
    %v10389 = vpack.c.b16 %v8877, %v8869
    %v10390 = vpack.c.b16 %v8878, %v8870
    %v10391 = vpack.c.b16 %v8879, %v8871
    %v10392 = vpack.c.b16 %v8880, %v8872
    %v10393 = vpack.c.b16 %v8881, %v8873
    %v10394 = vpack.c.b16 %v8882, %v8874
    %v10395 = vpack.c.b16 %v8883, %v8875
    %v10396 = vpack.c.b16 %v8884, %v8876
    %v10397 = vpack.c.b16 %v8893, %v8885
    %v10398 = vpack.c.b16 %v8894, %v8886
    %v10399 = vpack.c.b16 %v8895, %v8887
    %v10400 = vpack.c.b16 %v8896, %v8888
    %v10401 = vpack.c.b16 %v8897, %v8889
    %v10402 = vpack.c.b16 %v8898, %v8890
    %v10403 = vpack.c.b16 %v8899, %v8891
    %v10404 = vpack.c.b16 %v8900, %v8892
    %v10405 = vpack.c.b16 %v8909, %v8901
    %v10406 = vpack.c.b16 %v8910, %v8902
    %v10407 = vpack.c.b16 %v8911, %v8903
    %v10408 = vpack.c.b16 %v8912, %v8904
    %v10409 = vpack.c.b16 %v8913, %v8905
    %v10410 = vpack.c.b16 %v8914, %v8906
    %v10411 = vpack.c.b16 %v8915, %v8907
    %v10412 = vpack.c.b16 %v8916, %v8908
    %v10413 = vpack.c.b16 %v8925, %v8917
    %v10414 = vpack.c.b16 %v8926, %v8918
    %v10415 = vpack.c.b16 %v8927, %v8919
    %v10416 = vpack.c.b16 %v8928, %v8920
    %v10417 = vpack.c.b16 %v8929, %v8921
    %v10418 = vpack.c.b16 %v8930, %v8922
    %v10419 = vpack.c.b16 %v8931, %v8923
    %v10420 = vpack.c.b16 %v8932, %v8924
    %v10421 = vpack.c.b16 %v8941, %v8933
    %v10422 = vpack.c.b16 %v8942, %v8934
    %v10423 = vpack.c.b16 %v8943, %v8935
    %v10424 = vpack.c.b16 %v8944, %v8936
    %v10425 = vpack.c.b16 %v8945, %v8937
    %v10426 = vpack.c.b16 %v8946, %v8938
    %v10427 = vpack.c.b16 %v8947, %v8939
    %v10428 = vpack.c.b16 %v8948, %v8940
    %v10429 = vpack.c.b16 %v8957, %v8949
    %v10430 = vpack.c.b16 %v8958, %v8950
    %v10431 = vpack.c.b16 %v8959, %v8951
    %v10432 = vpack.c.b16 %v8960, %v8952
    %v10433 = vpack.c.b16 %v8961, %v8953
    %v10434 = vpack.c.b16 %v8962, %v8954
    %v10435 = vpack.c.b16 %v8963, %v8955
    %v10436 = vpack.c.b16 %v8964, %v8956
    %v10437 = vpack.c.b16 %v8973, %v8965
    %v10438 = vpack.c.b16 %v8974, %v8966
    %v10439 = vpack.c.b16 %v8975, %v8967
    %v10440 = vpack.c.b16 %v8976, %v8968
    %v10441 = vpack.c.b16 %v8977, %v8969
    %v10442 = vpack.c.b16 %v8978, %v8970
    %v10443 = vpack.c.b16 %v8979, %v8971
    %v10444 = vpack.c.b16 %v8980, %v8972
    %v10445 = vpack.c.b16 %v8989, %v8981
    %v10446 = vpack.c.b16 %v8990, %v8982
    %v10447 = vpack.c.b16 %v8991, %v8983
    %v10448 = vpack.c.b16 %v8992, %v8984
    %v10449 = vpack.c.b16 %v8993, %v8985
    %v10450 = vpack.c.b16 %v8994, %v8986
    %v10451 = vpack.c.b16 %v8995, %v8987
    %v10452 = vpack.c.b16 %v8996, %v8988
    %v10453 = vpack.c.b16 %v9005, %v8997
    %v10454 = vpack.c.b16 %v9006, %v8998
    %v10455 = vpack.c.b16 %v9007, %v8999
    %v10456 = vpack.c.b16 %v9008, %v9000
    %v10457 = vpack.c.b16 %v9009, %v9001
    %v10458 = vpack.c.b16 %v9010, %v9002
    %v10459 = vpack.c.b16 %v9011, %v9003
    %v10460 = vpack.c.b16 %v9012, %v9004
    %v10461 = vpack.c.b16 %v9021, %v9013
    %v10462 = vpack.c.b16 %v9022, %v9014
    %v10463 = vpack.c.b16 %v9023, %v9015
    %v10464 = vpack.c.b16 %v9024, %v9016
    %v10465 = vpack.c.b16 %v9025, %v9017
    %v10466 = vpack.c.b16 %v9026, %v9018
    %v10467 = vpack.c.b16 %v9027, %v9019
    %v10468 = vpack.c.b16 %v9028, %v9020
    %v10469 = vpack.c.b16 %v9037, %v9029
    %v10470 = vpack.c.b16 %v9038, %v9030
    %v10471 = vpack.c.b16 %v9039, %v9031
    %v10472 = vpack.c.b16 %v9040, %v9032
    %v10473 = vpack.c.b16 %v9041, %v9033
    %v10474 = vpack.c.b16 %v9042, %v9034
    %v10475 = vpack.c.b16 %v9043, %v9035
    %v10476 = vpack.c.b16 %v9044, %v9036
    %v10477 = vpack.c.b16 %v9053, %v9045
    %v10478 = vpack.c.b16 %v9054, %v9046
    %v10479 = vpack.c.b16 %v9055, %v9047
    %v10480 = vpack.c.b16 %v9056, %v9048
    %v10481 = vpack.c.b16 %v9057, %v9049
    %v10482 = vpack.c.b16 %v9058, %v9050
    %v10483 = vpack.c.b16 %v9059, %v9051
    %v10484 = vpack.c.b16 %v9060, %v9052
    %v10485 = vpack.c.b16 %v9069, %v9061
    %v10486 = vpack.c.b16 %v9070, %v9062
    %v10487 = vpack.c.b16 %v9071, %v9063
    %v10488 = vpack.c.b16 %v9072, %v9064
    %v10489 = vpack.c.b16 %v9073, %v9065
    %v10490 = vpack.c.b16 %v9074, %v9066
    %v10491 = vpack.c.b16 %v9075, %v9067
    %v10492 = vpack.c.b16 %v9076, %v9068
    %v10493 = vpack.c.b16 %v9085, %v9077
    %v10494 = vpack.c.b16 %v9086, %v9078
    %v10495 = vpack.c.b16 %v9087, %v9079
    %v10496 = vpack.c.b16 %v9088, %v9080
    %v10497 = vpack.c.b16 %v9089, %v9081
    %v10498 = vpack.c.b16 %v9090, %v9082
    %v10499 = vpack.c.b16 %v9091, %v9083
    %v10500 = vpack.c.b16 %v9092, %v9084
    %v10501 = vpack.c.b16 %v9101, %v9093
    %v10502 = vpack.c.b16 %v9102, %v9094
    %v10503 = vpack.c.b16 %v9103, %v9095
    %v10504 = vpack.c.b16 %v9104, %v9096
    %v10505 = vpack.c.b16 %v9105, %v9097
    %v10506 = vpack.c.b16 %v9106, %v9098
    %v10507 = vpack.c.b16 %v9107, %v9099
    %v10508 = vpack.c.b16 %v9108, %v9100
    %v10509 = vpack.c.b16 %v9117, %v9109
    %v10510 = vpack.c.b16 %v9118, %v9110
    %v10511 = vpack.c.b16 %v9119, %v9111
    %v10512 = vpack.c.b16 %v9120, %v9112
    %v10513 = vpack.c.b16 %v9121, %v9113
    %v10514 = vpack.c.b16 %v9122, %v9114
    %v10515 = vpack.c.b16 %v9123, %v9115
    %v10516 = vpack.c.b16 %v9124, %v9116
    %v10517 = vpack.c.b16 %v9133, %v9125
    %v10518 = vpack.c.b16 %v9134, %v9126
    %v10519 = vpack.c.b16 %v9135, %v9127
    %v10520 = vpack.c.b16 %v9136, %v9128
    %v10521 = vpack.c.b16 %v9137, %v9129
    %v10522 = vpack.c.b16 %v9138, %v9130
    %v10523 = vpack.c.b16 %v9139, %v9131
    %v10524 = vpack.c.b16 %v9140, %v9132
    %v10525 = vpack.c.b16 %v9149, %v9141
    %v10526 = vpack.c.b16 %v9150, %v9142
    %v10527 = vpack.c.b16 %v9151, %v9143
    %v10528 = vpack.c.b16 %v9152, %v9144
    %v10529 = vpack.c.b16 %v9153, %v9145
    %v10530 = vpack.c.b16 %v9154, %v9146
    %v10531 = vpack.c.b16 %v9155, %v9147
    %v10532 = vpack.c.b16 %v9156, %v9148
    %v10533 = vpack.c.b16 %v9165, %v9157
    %v10534 = vpack.c.b16 %v9166, %v9158
    %v10535 = vpack.c.b16 %v9167, %v9159
    %v10536 = vpack.c.b16 %v9168, %v9160
    %v10537 = vpack.c.b16 %v9169, %v9161
    %v10538 = vpack.c.b16 %v9170, %v9162
    %v10539 = vpack.c.b16 %v9171, %v9163
    %v10540 = vpack.c.b16 %v9172, %v9164
    %v10541 = vpack.c.b16 %v9181, %v9173
    %v10542 = vpack.c.b16 %v9182, %v9174
    %v10543 = vpack.c.b16 %v9183, %v9175
    %v10544 = vpack.c.b16 %v9184, %v9176
    %v10545 = vpack.c.b16 %v9185, %v9177
    %v10546 = vpack.c.b16 %v9186, %v9178
    %v10547 = vpack.c.b16 %v9187, %v9179
    %v10548 = vpack.c.b16 %v9188, %v9180
    %v10549 = vpack.c.b16 %v9197, %v9189
    %v10550 = vpack.c.b16 %v9198, %v9190
    %v10551 = vpack.c.b16 %v9199, %v9191
    %v10552 = vpack.c.b16 %v9200, %v9192
    %v10553 = vpack.c.b16 %v9201, %v9193
    %v10554 = vpack.c.b16 %v9202, %v9194
    %v10555 = vpack.c.b16 %v9203, %v9195
    %v10556 = vpack.c.b16 %v9204, %v9196
    %v10557 = vpack.c.b16 %v9213, %v9205
    %v10558 = vpack.c.b16 %v9214, %v9206
    %v10559 = vpack.c.b16 %v9215, %v9207
    %v10560 = vpack.c.b16 %v9216, %v9208
    %v10561 = vpack.c.b16 %v9217, %v9209
    %v10562 = vpack.c.b16 %v9218, %v9210
    %v10563 = vpack.c.b16 %v9219, %v9211
    %v10564 = vpack.c.b16 %v9220, %v9212
    %v10565 = vpack.c.b16 %v9229, %v9221
    %v10566 = vpack.c.b16 %v9230, %v9222
    %v10567 = vpack.c.b16 %v9231, %v9223
    %v10568 = vpack.c.b16 %v9232, %v9224
    %v10569 = vpack.c.b16 %v9233, %v9225
    %v10570 = vpack.c.b16 %v9234, %v9226
    %v10571 = vpack.c.b16 %v9235, %v9227
    %v10572 = vpack.c.b16 %v9236, %v9228
    %v10573 = vpack.c.b16 %v9245, %v9237
    %v10574 = vpack.c.b16 %v9246, %v9238
    %v10575 = vpack.c.b16 %v9247, %v9239
    %v10576 = vpack.c.b16 %v9248, %v9240
    %v10577 = vpack.c.b16 %v9249, %v9241
    %v10578 = vpack.c.b16 %v9250, %v9242
    %v10579 = vpack.c.b16 %v9251, %v9243
    %v10580 = vpack.c.b16 %v9252, %v9244
    %v10581 = vpack.c.b16 %v9261, %v9253
    %v10582 = vpack.c.b16 %v9262, %v9254
    %v10583 = vpack.c.b16 %v9263, %v9255
    %v10584 = vpack.c.b16 %v9264, %v9256
    %v10585 = vpack.c.b16 %v9265, %v9257
    %v10586 = vpack.c.b16 %v9266, %v9258
    %v10587 = vpack.c.b16 %v9267, %v9259
    %v10588 = vpack.c.b16 %v9268, %v9260
    %v10589 = vpack.c.b16 %v9277, %v9269
    %v10590 = vpack.c.b16 %v9278, %v9270
    %v10591 = vpack.c.b16 %v9279, %v9271
    %v10592 = vpack.c.b16 %v9280, %v9272
    %v10593 = vpack.c.b16 %v9281, %v9273
    %v10594 = vpack.c.b16 %v9282, %v9274
    %v10595 = vpack.c.b16 %v9283, %v9275
    %v10596 = vpack.c.b16 %v9284, %v9276
    %v10597 = vpack.c.b16 %v9293, %v9285
    %v10598 = vpack.c.b16 %v9294, %v9286
    %v10599 = vpack.c.b16 %v9295, %v9287
    %v10600 = vpack.c.b16 %v9296, %v9288
    %v10601 = vpack.c.b16 %v9297, %v9289
    %v10602 = vpack.c.b16 %v9298, %v9290
    %v10603 = vpack.c.b16 %v9299, %v9291
    %v10604 = vpack.c.b16 %v9300, %v9292
    %v10605 = vpack.c.b16 %v9309, %v9301
    %v10606 = vpack.c.b16 %v9310, %v9302
    %v10607 = vpack.c.b16 %v9311, %v9303
    %v10608 = vpack.c.b16 %v9312, %v9304
    %v10609 = vpack.c.b16 %v9313, %v9305
    %v10610 = vpack.c.b16 %v9314, %v9306
    %v10611 = vpack.c.b16 %v9315, %v9307
    %v10612 = vpack.c.b16 %v9316, %v9308
    %v10613 = vpack.c.b16 %v9325, %v9317
    %v10614 = vpack.c.b16 %v9326, %v9318
    %v10615 = vpack.c.b16 %v9327, %v9319
    %v10616 = vpack.c.b16 %v9328, %v9320
    %v10617 = vpack.c.b16 %v9329, %v9321
    %v10618 = vpack.c.b16 %v9330, %v9322
    %v10619 = vpack.c.b16 %v9331, %v9323
    %v10620 = vpack.c.b16 %v9332, %v9324
    %v10621 = vpack.c.b16 %v9341, %v9333
    %v10622 = vpack.c.b16 %v9342, %v9334
    %v10623 = vpack.c.b16 %v9343, %v9335
    %v10624 = vpack.c.b16 %v9344, %v9336
    %v10625 = vpack.c.b16 %v9345, %v9337
    %v10626 = vpack.c.b16 %v9346, %v9338
    %v10627 = vpack.c.b16 %v9347, %v9339
    %v10628 = vpack.c.b16 %v9348, %v9340
    %v10629 = vpack.c.b16 %v9357, %v9349
    %v10630 = vpack.c.b16 %v9358, %v9350
    %v10631 = vpack.c.b16 %v9359, %v9351
    %v10632 = vpack.c.b16 %v9360, %v9352
    %v10633 = vpack.c.b16 %v9361, %v9353
    %v10634 = vpack.c.b16 %v9362, %v9354
    %v10635 = vpack.c.b16 %v9363, %v9355
    %v10636 = vpack.c.b16 %v9364, %v9356
    %v10637 = vpack.c.b16 %v9373, %v9365
    %v10638 = vpack.c.b16 %v9374, %v9366
    %v10639 = vpack.c.b16 %v9375, %v9367
    %v10640 = vpack.c.b16 %v9376, %v9368
    %v10641 = vpack.c.b16 %v9377, %v9369
    %v10642 = vpack.c.b16 %v9378, %v9370
    %v10643 = vpack.c.b16 %v9379, %v9371
    %v10644 = vpack.c.b16 %v9380, %v9372
    %v10645 = vpack.c.b16 %v9389, %v9381
    %v10646 = vpack.c.b16 %v9390, %v9382
    %v10647 = vpack.c.b16 %v9391, %v9383
    %v10648 = vpack.c.b16 %v9392, %v9384
    %v10649 = vpack.c.b16 %v9393, %v9385
    %v10650 = vpack.c.b16 %v9394, %v9386
    %v10651 = vpack.c.b16 %v9395, %v9387
    %v10652 = vpack.c.b16 %v9396, %v9388
    %v10653 = vpack.c.b16 %v9405, %v9397
    %v10654 = vpack.c.b16 %v9406, %v9398
    %v10655 = vpack.c.b16 %v9407, %v9399
    %v10656 = vpack.c.b16 %v9408, %v9400
    %v10657 = vpack.c.b16 %v9409, %v9401
    %v10658 = vpack.c.b16 %v9410, %v9402
    %v10659 = vpack.c.b16 %v9411, %v9403
    %v10660 = vpack.c.b16 %v9412, %v9404
    %v10661 = vpack.c.b16 %v9421, %v9413
    %v10662 = vpack.c.b16 %v9422, %v9414
    %v10663 = vpack.c.b16 %v9423, %v9415
    %v10664 = vpack.c.b16 %v9424, %v9416
    %v10665 = vpack.c.b16 %v9425, %v9417
    %v10666 = vpack.c.b16 %v9426, %v9418
    %v10667 = vpack.c.b16 %v9427, %v9419
    %v10668 = vpack.c.b16 %v9428, %v9420
    %v10669 = vpack.c.b16 %v9437, %v9429
    %v10670 = vpack.c.b16 %v9438, %v9430
    %v10671 = vpack.c.b16 %v9439, %v9431
    %v10672 = vpack.c.b16 %v9440, %v9432
    %v10673 = vpack.c.b16 %v9441, %v9433
    %v10674 = vpack.c.b16 %v9442, %v9434
    %v10675 = vpack.c.b16 %v9443, %v9435
    %v10676 = vpack.c.b16 %v9444, %v9436
    %v10677 = vpack.c.b16 %v9453, %v9445
    %v10678 = vpack.c.b16 %v9454, %v9446
    %v10679 = vpack.c.b16 %v9455, %v9447
    %v10680 = vpack.c.b16 %v9456, %v9448
    %v10681 = vpack.c.b16 %v9457, %v9449
    %v10682 = vpack.c.b16 %v9458, %v9450
    %v10683 = vpack.c.b16 %v9459, %v9451
    %v10684 = vpack.c.b16 %v9460, %v9452
    %v10685 = vpack.c.b16 %v9469, %v9461
    %v10686 = vpack.c.b16 %v9470, %v9462
    %v10687 = vpack.c.b16 %v9471, %v9463
    %v10688 = vpack.c.b16 %v9472, %v9464
    %v10689 = vpack.c.b16 %v9473, %v9465
    %v10690 = vpack.c.b16 %v9474, %v9466
    %v10691 = vpack.c.b16 %v9475, %v9467
    %v10692 = vpack.c.b16 %v9476, %v9468
    %v10693 = vpack.c.b16 %v9485, %v9477
    %v10694 = vpack.c.b16 %v9486, %v9478
    %v10695 = vpack.c.b16 %v9487, %v9479
    %v10696 = vpack.c.b16 %v9488, %v9480
    %v10697 = vpack.c.b16 %v9489, %v9481
    %v10698 = vpack.c.b16 %v9490, %v9482
    %v10699 = vpack.c.b16 %v9491, %v9483
    %v10700 = vpack.c.b16 %v9492, %v9484
    %v10701 = vpack.c.b16 %v9501, %v9493
    %v10702 = vpack.c.b16 %v9502, %v9494
    %v10703 = vpack.c.b16 %v9503, %v9495
    %v10704 = vpack.c.b16 %v9504, %v9496
    %v10705 = vpack.c.b16 %v9505, %v9497
    %v10706 = vpack.c.b16 %v9506, %v9498
    %v10707 = vpack.c.b16 %v9507, %v9499
    %v10708 = vpack.c.b16 %v9508, %v9500
    %v10709 = vpack.c.b16 %v9517, %v9509
    %v10710 = vpack.c.b16 %v9518, %v9510
    %v10711 = vpack.c.b16 %v9519, %v9511
    %v10712 = vpack.c.b16 %v9520, %v9512
    %v10713 = vpack.c.b16 %v9521, %v9513
    %v10714 = vpack.c.b16 %v9522, %v9514
    %v10715 = vpack.c.b16 %v9523, %v9515
    %v10716 = vpack.c.b16 %v9524, %v9516
    %v10717 = vpack.c.b16 %v9533, %v9525
    %v10718 = vpack.c.b16 %v9534, %v9526
    %v10719 = vpack.c.b16 %v9535, %v9527
    %v10720 = vpack.c.b16 %v9536, %v9528
    %v10721 = vpack.c.b16 %v9537, %v9529
    %v10722 = vpack.c.b16 %v9538, %v9530
    %v10723 = vpack.c.b16 %v9539, %v9531
    %v10724 = vpack.c.b16 %v9540, %v9532
    %v10725 = vpack.c.b16 %v9549, %v9541
    %v10726 = vpack.c.b16 %v9550, %v9542
    %v10727 = vpack.c.b16 %v9551, %v9543
    %v10728 = vpack.c.b16 %v9552, %v9544
    %v10729 = vpack.c.b16 %v9553, %v9545
    %v10730 = vpack.c.b16 %v9554, %v9546
    %v10731 = vpack.c.b16 %v9555, %v9547
    %v10732 = vpack.c.b16 %v9556, %v9548
    %v10733 = vpack.c.b16 %v9565, %v9557
    %v10734 = vpack.c.b16 %v9566, %v9558
    %v10735 = vpack.c.b16 %v9567, %v9559
    %v10736 = vpack.c.b16 %v9568, %v9560
    %v10737 = vpack.c.b16 %v9569, %v9561
    %v10738 = vpack.c.b16 %v9570, %v9562
    %v10739 = vpack.c.b16 %v9571, %v9563
    %v10740 = vpack.c.b16 %v9572, %v9564
    %v10741 = vpack.c.b16 %v9581, %v9573
    %v10742 = vpack.c.b16 %v9582, %v9574
    %v10743 = vpack.c.b16 %v9583, %v9575
    %v10744 = vpack.c.b16 %v9584, %v9576
    %v10745 = vpack.c.b16 %v9585, %v9577
    %v10746 = vpack.c.b16 %v9586, %v9578
    %v10747 = vpack.c.b16 %v9587, %v9579
    %v10748 = vpack.c.b16 %v9588, %v9580
    %v10749 = vpack.c.b16 %v9597, %v9589
    %v10750 = vpack.c.b16 %v9598, %v9590
    %v10751 = vpack.c.b16 %v9599, %v9591
    %v10752 = vpack.c.b16 %v9600, %v9592
    %v10753 = vpack.c.b16 %v9601, %v9593
    %v10754 = vpack.c.b16 %v9602, %v9594
    %v10755 = vpack.c.b16 %v9603, %v9595
    %v10756 = vpack.c.b16 %v9604, %v9596
    %v10757 = vpack.c.b16 %v9613, %v9605
    %v10758 = vpack.c.b16 %v9614, %v9606
    %v10759 = vpack.c.b16 %v9615, %v9607
    %v10760 = vpack.c.b16 %v9616, %v9608
    %v10761 = vpack.c.b16 %v9617, %v9609
    %v10762 = vpack.c.b16 %v9618, %v9610
    %v10763 = vpack.c.b16 %v9619, %v9611
    %v10764 = vpack.c.b16 %v9620, %v9612
    %v10765 = vpack.c.b16 %v9629, %v9621
    %v10766 = vpack.c.b16 %v9630, %v9622
    %v10767 = vpack.c.b16 %v9631, %v9623
    %v10768 = vpack.c.b16 %v9632, %v9624
    %v10769 = vpack.c.b16 %v9633, %v9625
    %v10770 = vpack.c.b16 %v9634, %v9626
    %v10771 = vpack.c.b16 %v9635, %v9627
    %v10772 = vpack.c.b16 %v9636, %v9628
    %v10773 = vpack.c.b16 %v9645, %v9637
    %v10774 = vpack.c.b16 %v9646, %v9638
    %v10775 = vpack.c.b16 %v9647, %v9639
    %v10776 = vpack.c.b16 %v9648, %v9640
    %v10777 = vpack.c.b16 %v9649, %v9641
    %v10778 = vpack.c.b16 %v9650, %v9642
    %v10779 = vpack.c.b16 %v9651, %v9643
    %v10780 = vpack.c.b16 %v9652, %v9644
    %v10781 = vpack.c.b16 %v9661, %v9653
    %v10782 = vpack.c.b16 %v9662, %v9654
    %v10783 = vpack.c.b16 %v9663, %v9655
    %v10784 = vpack.c.b16 %v9664, %v9656
    %v10785 = vpack.c.b16 %v9665, %v9657
    %v10786 = vpack.c.b16 %v9666, %v9658
    %v10787 = vpack.c.b16 %v9667, %v9659
    %v10788 = vpack.c.b16 %v9668, %v9660
    %v10789 = vpack.c.b16 %v9677, %v9669
    %v10790 = vpack.c.b16 %v9678, %v9670
    %v10791 = vpack.c.b16 %v9679, %v9671
    %v10792 = vpack.c.b16 %v9680, %v9672
    %v10793 = vpack.c.b16 %v9681, %v9673
    %v10794 = vpack.c.b16 %v9682, %v9674
    %v10795 = vpack.c.b16 %v9683, %v9675
    %v10796 = vpack.c.b16 %v9684, %v9676
    %v10797 = vpack.c.b16 %v9693, %v9685
    %v10798 = vpack.c.b16 %v9694, %v9686
    %v10799 = vpack.c.b16 %v9695, %v9687
    %v10800 = vpack.c.b16 %v9696, %v9688
    %v10801 = vpack.c.b16 %v9697, %v9689
    %v10802 = vpack.c.b16 %v9698, %v9690
    %v10803 = vpack.c.b16 %v9699, %v9691
    %v10804 = vpack.c.b16 %v9700, %v9692
    %v10805 = vpack.c.b16 %v9709, %v9701
    %v10806 = vpack.c.b16 %v9710, %v9702
    %v10807 = vpack.c.b16 %v9711, %v9703
    %v10808 = vpack.c.b16 %v9712, %v9704
    %v10809 = vpack.c.b16 %v9713, %v9705
    %v10810 = vpack.c.b16 %v9714, %v9706
    %v10811 = vpack.c.b16 %v9715, %v9707
    %v10812 = vpack.c.b16 %v9716, %v9708
    %v10813 = vpack.c.b16 %v9725, %v9717
    %v10814 = vpack.c.b16 %v9726, %v9718
    %v10815 = vpack.c.b16 %v9727, %v9719
    %v10816 = vpack.c.b16 %v9728, %v9720
    %v10817 = vpack.c.b16 %v9729, %v9721
    %v10818 = vpack.c.b16 %v9730, %v9722
    %v10819 = vpack.c.b16 %v9731, %v9723
    %v10820 = vpack.c.b16 %v9732, %v9724
    %v10821 = vpack.c.b16 %v9741, %v9733
    %v10822 = vpack.c.b16 %v9742, %v9734
    %v10823 = vpack.c.b16 %v9743, %v9735
    %v10824 = vpack.c.b16 %v9744, %v9736
    %v10825 = vpack.c.b16 %v9745, %v9737
    %v10826 = vpack.c.b16 %v9746, %v9738
    %v10827 = vpack.c.b16 %v9747, %v9739
    %v10828 = vpack.c.b16 %v9748, %v9740
    %v10829 = vpack.c.b16 %v9757, %v9749
    %v10830 = vpack.c.b16 %v9758, %v9750
    %v10831 = vpack.c.b16 %v9759, %v9751
    %v10832 = vpack.c.b16 %v9760, %v9752
    %v10833 = vpack.c.b16 %v9761, %v9753
    %v10834 = vpack.c.b16 %v9762, %v9754
    %v10835 = vpack.c.b16 %v9763, %v9755
    %v10836 = vpack.c.b16 %v9764, %v9756
    %v10837 = vpack.c.b16 %v9773, %v9765
    %v10838 = vpack.c.b16 %v9774, %v9766
    %v10839 = vpack.c.b16 %v9775, %v9767
    %v10840 = vpack.c.b16 %v9776, %v9768
    %v10841 = vpack.c.b16 %v9777, %v9769
    %v10842 = vpack.c.b16 %v9778, %v9770
    %v10843 = vpack.c.b16 %v9779, %v9771
    %v10844 = vpack.c.b16 %v9780, %v9772
    %v10845 = vpack.c.b16 %v9789, %v9781
    %v10846 = vpack.c.b16 %v9790, %v9782
    %v10847 = vpack.c.b16 %v9791, %v9783
    %v10848 = vpack.c.b16 %v9792, %v9784
    %v10849 = vpack.c.b16 %v9793, %v9785
    %v10850 = vpack.c.b16 %v9794, %v9786
    %v10851 = vpack.c.b16 %v9795, %v9787
    %v10852 = vpack.c.b16 %v9796, %v9788
    %v10853 = vpack.c.b16 %v9805, %v9797
    %v10854 = vpack.c.b16 %v9806, %v9798
    %v10855 = vpack.c.b16 %v9807, %v9799
    %v10856 = vpack.c.b16 %v9808, %v9800
    %v10857 = vpack.c.b16 %v9809, %v9801
    %v10858 = vpack.c.b16 %v9810, %v9802
    %v10859 = vpack.c.b16 %v9811, %v9803
    %v10860 = vpack.c.b16 %v9812, %v9804
    %v10861 = vpack.c.b16 %v9821, %v9813
    %v10862 = vpack.c.b16 %v9822, %v9814
    %v10863 = vpack.c.b16 %v9823, %v9815
    %v10864 = vpack.c.b16 %v9824, %v9816
    %v10865 = vpack.c.b16 %v9825, %v9817
    %v10866 = vpack.c.b16 %v9826, %v9818
    %v10867 = vpack.c.b16 %v9827, %v9819
    %v10868 = vpack.c.b16 %v9828, %v9820
    %v10869 = vpack.c.b16 %v9837, %v9829
    %v10870 = vpack.c.b16 %v9838, %v9830
    %v10871 = vpack.c.b16 %v9839, %v9831
    %v10872 = vpack.c.b16 %v9840, %v9832
    %v10873 = vpack.c.b16 %v9841, %v9833
    %v10874 = vpack.c.b16 %v9842, %v9834
    %v10875 = vpack.c.b16 %v9843, %v9835
    %v10876 = vpack.c.b16 %v9844, %v9836
    %v10877 = vpack.c.b16 %v9853, %v9845
    %v10878 = vpack.c.b16 %v9854, %v9846
    %v10879 = vpack.c.b16 %v9855, %v9847
    %v10880 = vpack.c.b16 %v9856, %v9848
    %v10881 = vpack.c.b16 %v9857, %v9849
    %v10882 = vpack.c.b16 %v9858, %v9850
    %v10883 = vpack.c.b16 %v9859, %v9851
    %v10884 = vpack.c.b16 %v9860, %v9852
    %11909 = vmatprep.subr.bf16.mxu0 %v9862
    %11910 = vmatpush1.bf16.msra.mxu0 %v9861
    %11911 = vmatprep.subr.bf16.mxu0 %v9870
    %11912 = vmatpush1.bf16.msra.mxu0 %v9869
    %11913 = vmatprep.subr.bf16.mxu0 %v9878
    %11914 = vmatpush1.bf16.msra.mxu0 %v9877
    %11915 = vmatprep.subr.bf16.mxu0 %v9886
    %11916 = vmatpush1.bf16.msra.mxu0 %v9885
    %11917 = vmatprep.subr.bf16.mxu0 %v9894
    %11918 = vmatpush1.bf16.msra.mxu0 %v9893
    %11919 = vmatprep.subr.bf16.mxu0 %v9902
    %11920 = vmatpush1.bf16.msra.mxu0 %v9901
    %11921 = vmatprep.subr.bf16.mxu0 %v9910
    %11922 = vmatpush1.bf16.msra.mxu0 %v9909
    %11923 = vmatprep.subr.bf16.mxu0 %v9918
    %11924 = vmatpush1.bf16.msra.mxu0 %v9917
    %11925 = vmatprep.subr.bf16.mxu0 %v9926
    %11926 = vmatpush1.bf16.msra.mxu0 %v9925
    %11927 = vmatprep.subr.bf16.mxu0 %v9934
    %11928 = vmatpush1.bf16.msra.mxu0 %v9933
    %11929 = vmatprep.subr.bf16.mxu0 %v9942
    %11930 = vmatpush1.bf16.msra.mxu0 %v9941
    %11931 = vmatprep.subr.bf16.mxu0 %v9950
    %11932 = vmatpush1.bf16.msra.mxu0 %v9949
    %11933 = vmatprep.subr.bf16.mxu0 %v9958
    %11934 = vmatpush1.bf16.msra.mxu0 %v9957
    %11935 = vmatprep.subr.bf16.mxu0 %v9966
    %11936 = vmatpush1.bf16.msra.mxu0 %v9965
    %11937 = vmatprep.subr.bf16.mxu0 %v9974
    %11938 = vmatpush1.bf16.msra.mxu0 %v9973
    %11939 = vmatprep.subr.bf16.mxu0 %v9982
    %11940 = vmatpush1.bf16.msra.mxu0 %v9981
    %11941 = vmatprep.mubr.bf16.mxu0 %v6758
    %11942 = vmatmul.mubr.bf16.gmra.mrb[0].mxu0 %v6757
    %v11943 = vpop.f32.mrb[0].mxu0
    %v11944 = vadd.f32 %v3375, %v11943
    %v11945 = vpop.f32.mrb[0].mxu0
    %v11946 = vadd.f32 %v3379, %v11945
    %v11947 = vpop.f32.mrb[0].mxu0
    %v11948 = vpop.f32.mrb[0].mxu0
    %11949 = vdwg.mxu0
    %11950 = vmatprep.subr.bf16.mxu0 %v9990
    %11951 = vmatpush1.bf16.msra.mxu0 %v9989
    %11952 = vmatprep.subr.bf16.mxu0 %v9998
    %11953 = vmatpush1.bf16.msra.mxu0 %v9997
    %11954 = vmatprep.subr.bf16.mxu0 %v10006
    %11955 = vmatpush1.bf16.msra.mxu0 %v10005
    %11956 = vmatprep.subr.bf16.mxu0 %v10014
    %11957 = vmatpush1.bf16.msra.mxu0 %v10013
    %11958 = vmatprep.subr.bf16.mxu0 %v10022
    %11959 = vmatpush1.bf16.msra.mxu0 %v10021
    %11960 = vmatprep.subr.bf16.mxu0 %v10030
    %11961 = vmatpush1.bf16.msra.mxu0 %v10029
    %11962 = vmatprep.subr.bf16.mxu0 %v10038
    %11963 = vmatpush1.bf16.msra.mxu0 %v10037
    %11964 = vmatprep.subr.bf16.mxu0 %v10046
    %11965 = vmatpush1.bf16.msra.mxu0 %v10045
    %11966 = vmatprep.subr.bf16.mxu0 %v10054
    %11967 = vmatpush1.bf16.msra.mxu0 %v10053
    %11968 = vmatprep.subr.bf16.mxu0 %v10062
    %11969 = vmatpush1.bf16.msra.mxu0 %v10061
    %11970 = vmatprep.subr.bf16.mxu0 %v10070
    %11971 = vmatpush1.bf16.msra.mxu0 %v10069
    %11972 = vmatprep.subr.bf16.mxu0 %v10078
    %11973 = vmatpush1.bf16.msra.mxu0 %v10077
    %11974 = vmatprep.subr.bf16.mxu0 %v10086
    %11975 = vmatpush1.bf16.msra.mxu0 %v10085
    %11976 = vmatprep.subr.bf16.mxu0 %v10094
    %11977 = vmatpush1.bf16.msra.mxu0 %v10093
    %11978 = vmatprep.subr.bf16.mxu0 %v10102
    %11979 = vmatpush1.bf16.msra.mxu0 %v10101
    %11980 = vmatprep.subr.bf16.mxu0 %v10110
    %11981 = vmatpush1.bf16.msra.mxu0 %v10109
    %11982 = vmatprep.mubr.bf16.mxu0 %v6760
    %11983 = vmatmul.mubr.bf16.gmra.mrb[0].mxu0 %v6759
    %v11984 = vpop.f32.mrb[0].mxu0
    %v11985 = vadd.f32 %v11944, %v11984
    %v11986 = vpop.f32.mrb[0].mxu0
    %v11987 = vadd.f32 %v11946, %v11986
    %v11988 = vpop.f32.mrb[0].mxu0
    %v11989 = vpop.f32.mrb[0].mxu0
    %11990 = vdwg.mxu0
    %11991 = vmatprep.subr.bf16.mxu0 %v10118
    %11992 = vmatpush1.bf16.msra.mxu0 %v10117
    %11993 = vmatprep.subr.bf16.mxu0 %v10126
    %11994 = vmatpush1.bf16.msra.mxu0 %v10125
    %11995 = vmatprep.subr.bf16.mxu0 %v10134
    %11996 = vmatpush1.bf16.msra.mxu0 %v10133
    %11997 = vmatprep.subr.bf16.mxu0 %v10142
    %11998 = vmatpush1.bf16.msra.mxu0 %v10141
    %11999 = vmatprep.subr.bf16.mxu0 %v10150
    %12000 = vmatpush1.bf16.msra.mxu0 %v10149
    %12001 = vmatprep.subr.bf16.mxu0 %v10158
    %12002 = vmatpush1.bf16.msra.mxu0 %v10157
    %12003 = vmatprep.subr.bf16.mxu0 %v10166
    %12004 = vmatpush1.bf16.msra.mxu0 %v10165
    %12005 = vmatprep.subr.bf16.mxu0 %v10174
    %12006 = vmatpush1.bf16.msra.mxu0 %v10173
    %12007 = vmatprep.subr.bf16.mxu0 %v10182
    %12008 = vmatpush1.bf16.msra.mxu0 %v10181
    %12009 = vmatprep.subr.bf16.mxu0 %v10190
    %12010 = vmatpush1.bf16.msra.mxu0 %v10189
    %12011 = vmatprep.subr.bf16.mxu0 %v10198
    %12012 = vmatpush1.bf16.msra.mxu0 %v10197
    %12013 = vmatprep.subr.bf16.mxu0 %v10206
    %12014 = vmatpush1.bf16.msra.mxu0 %v10205
    %12015 = vmatprep.subr.bf16.mxu0 %v10214
    %12016 = vmatpush1.bf16.msra.mxu0 %v10213
    %12017 = vmatprep.subr.bf16.mxu0 %v10222
    %12018 = vmatpush1.bf16.msra.mxu0 %v10221
    %12019 = vmatprep.subr.bf16.mxu0 %v10230
    %12020 = vmatpush1.bf16.msra.mxu0 %v10229
    %12021 = vmatprep.subr.bf16.mxu0 %v10238
    %12022 = vmatpush1.bf16.msra.mxu0 %v10237
    %12023 = vmatprep.mubr.bf16.mxu0 %v6762
    %12024 = vmatmul.mubr.bf16.gmra.mrb[0].mxu0 %v6761
    %v12025 = vpop.f32.mrb[0].mxu0
    %v12026 = vadd.f32 %v11985, %v12025
    %v12027 = vpop.f32.mrb[0].mxu0
    %v12028 = vadd.f32 %v11987, %v12027
    %v12029 = vpop.f32.mrb[0].mxu0
    %v12030 = vpop.f32.mrb[0].mxu0
    %12031 = vdwg.mxu0
    %12032 = vmatprep.subr.bf16.mxu0 %v10246
    %12033 = vmatpush1.bf16.msra.mxu0 %v10245
    %12034 = vmatprep.subr.bf16.mxu0 %v10254
    %12035 = vmatpush1.bf16.msra.mxu0 %v10253
    %12036 = vmatprep.subr.bf16.mxu0 %v10262
    %12037 = vmatpush1.bf16.msra.mxu0 %v10261
    %12038 = vmatprep.subr.bf16.mxu0 %v10270
    %12039 = vmatpush1.bf16.msra.mxu0 %v10269
    %12040 = vmatprep.subr.bf16.mxu0 %v10278
    %12041 = vmatpush1.bf16.msra.mxu0 %v10277
    %12042 = vmatprep.subr.bf16.mxu0 %v10286
    %12043 = vmatpush1.bf16.msra.mxu0 %v10285
    %12044 = vmatprep.subr.bf16.mxu0 %v10294
    %12045 = vmatpush1.bf16.msra.mxu0 %v10293
    %12046 = vmatprep.subr.bf16.mxu0 %v10302
    %12047 = vmatpush1.bf16.msra.mxu0 %v10301
    %12048 = vmatprep.subr.bf16.mxu0 %v10310
    %12049 = vmatpush1.bf16.msra.mxu0 %v10309
    %12050 = vmatprep.subr.bf16.mxu0 %v10318
    %12051 = vmatpush1.bf16.msra.mxu0 %v10317
    %12052 = vmatprep.subr.bf16.mxu0 %v10326
    %12053 = vmatpush1.bf16.msra.mxu0 %v10325
    %12054 = vmatprep.subr.bf16.mxu0 %v10334
    %12055 = vmatpush1.bf16.msra.mxu0 %v10333
    %12056 = vmatprep.subr.bf16.mxu0 %v10342
    %12057 = vmatpush1.bf16.msra.mxu0 %v10341
    %12058 = vmatprep.subr.bf16.mxu0 %v10350
    %12059 = vmatpush1.bf16.msra.mxu0 %v10349
    %12060 = vmatprep.subr.bf16.mxu0 %v10358
    %12061 = vmatpush1.bf16.msra.mxu0 %v10357
    %12062 = vmatprep.subr.bf16.mxu0 %v10366
    %12063 = vmatpush1.bf16.msra.mxu0 %v10365
    %12064 = vmatprep.mubr.bf16.mxu0 %v6764
    %12065 = vmatmul.mubr.bf16.gmra.mrb[0].mxu0 %v6763
    %v12066 = vpop.f32.mrb[0].mxu0
    %v12067 = vadd.f32 %v12026, %v12066
    %v12068 = vpop.f32.mrb[0].mxu0
    %v12069 = vadd.f32 %v12028, %v12068
    %v12070 = vpop.f32.mrb[0].mxu0
    %v12071 = vpop.f32.mrb[0].mxu0
    %12072 = vdwg.mxu0
    %12073 = vmatprep.subr.bf16.mxu0 %v10374
    %12074 = vmatpush1.bf16.msra.mxu0 %v10373
    %12075 = vmatprep.subr.bf16.mxu0 %v10382
    %12076 = vmatpush1.bf16.msra.mxu0 %v10381
    %12077 = vmatprep.subr.bf16.mxu0 %v10390
    %12078 = vmatpush1.bf16.msra.mxu0 %v10389
    %12079 = vmatprep.subr.bf16.mxu0 %v10398
    %12080 = vmatpush1.bf16.msra.mxu0 %v10397
    %12081 = vmatprep.subr.bf16.mxu0 %v10406
    %12082 = vmatpush1.bf16.msra.mxu0 %v10405
    %12083 = vmatprep.subr.bf16.mxu0 %v10414
    %12084 = vmatpush1.bf16.msra.mxu0 %v10413
    %12085 = vmatprep.subr.bf16.mxu0 %v10422
    %12086 = vmatpush1.bf16.msra.mxu0 %v10421
    %12087 = vmatprep.subr.bf16.mxu0 %v10430
    %12088 = vmatpush1.bf16.msra.mxu0 %v10429
    %12089 = vmatprep.subr.bf16.mxu0 %v10438
    %12090 = vmatpush1.bf16.msra.mxu0 %v10437
    %12091 = vmatprep.subr.bf16.mxu0 %v10446
    %12092 = vmatpush1.bf16.msra.mxu0 %v10445
    %12093 = vmatprep.subr.bf16.mxu0 %v10454
    %12094 = vmatpush1.bf16.msra.mxu0 %v10453
    %12095 = vmatprep.subr.bf16.mxu0 %v10462
    %12096 = vmatpush1.bf16.msra.mxu0 %v10461
    %12097 = vmatprep.subr.bf16.mxu0 %v10470
    %12098 = vmatpush1.bf16.msra.mxu0 %v10469
    %12099 = vmatprep.subr.bf16.mxu0 %v10478
    %12100 = vmatpush1.bf16.msra.mxu0 %v10477
    %12101 = vmatprep.subr.bf16.mxu0 %v10486
    %12102 = vmatpush1.bf16.msra.mxu0 %v10485
    %12103 = vmatprep.subr.bf16.mxu0 %v10494
    %12104 = vmatpush1.bf16.msra.mxu0 %v10493
    %12105 = vmatprep.mubr.bf16.mxu0 %v6766
    %12106 = vmatmul.mubr.bf16.gmra.mrb[0].mxu0 %v6765
    %v12107 = vpop.f32.mrb[0].mxu0
    %v12108 = vadd.f32 %v12067, %v12107
    %v12109 = vpop.f32.mrb[0].mxu0
    %v12110 = vadd.f32 %v12069, %v12109
    %v12111 = vpop.f32.mrb[0].mxu0
    %v12112 = vpop.f32.mrb[0].mxu0
    %12113 = vdwg.mxu0
    %12114 = vmatprep.subr.bf16.mxu0 %v10502
    %12115 = vmatpush1.bf16.msra.mxu0 %v10501
    %12116 = vmatprep.subr.bf16.mxu0 %v10510
    %12117 = vmatpush1.bf16.msra.mxu0 %v10509
    %12118 = vmatprep.subr.bf16.mxu0 %v10518
    %12119 = vmatpush1.bf16.msra.mxu0 %v10517
    %12120 = vmatprep.subr.bf16.mxu0 %v10526
    %12121 = vmatpush1.bf16.msra.mxu0 %v10525
    %12122 = vmatprep.subr.bf16.mxu0 %v10534
    %12123 = vmatpush1.bf16.msra.mxu0 %v10533
    %12124 = vmatprep.subr.bf16.mxu0 %v10542
    %12125 = vmatpush1.bf16.msra.mxu0 %v10541
    %12126 = vmatprep.subr.bf16.mxu0 %v10550
    %12127 = vmatpush1.bf16.msra.mxu0 %v10549
    %12128 = vmatprep.subr.bf16.mxu0 %v10558
    %12129 = vmatpush1.bf16.msra.mxu0 %v10557
    %12130 = vmatprep.subr.bf16.mxu0 %v10566
    %12131 = vmatpush1.bf16.msra.mxu0 %v10565
    %12132 = vmatprep.subr.bf16.mxu0 %v10574
    %12133 = vmatpush1.bf16.msra.mxu0 %v10573
    %12134 = vmatprep.subr.bf16.mxu0 %v10582
    %12135 = vmatpush1.bf16.msra.mxu0 %v10581
    %12136 = vmatprep.subr.bf16.mxu0 %v10590
    %12137 = vmatpush1.bf16.msra.mxu0 %v10589
    %12138 = vmatprep.subr.bf16.mxu0 %v10598
    %12139 = vmatpush1.bf16.msra.mxu0 %v10597
    %12140 = vmatprep.subr.bf16.mxu0 %v10606
    %12141 = vmatpush1.bf16.msra.mxu0 %v10605
    %12142 = vmatprep.subr.bf16.mxu0 %v10614
    %12143 = vmatpush1.bf16.msra.mxu0 %v10613
    %12144 = vmatprep.subr.bf16.mxu0 %v10622
    %12145 = vmatpush1.bf16.msra.mxu0 %v10621
    %12146 = vmatprep.mubr.bf16.mxu0 %v6768
    %12147 = vmatmul.mubr.bf16.gmra.mrb[0].mxu0 %v6767
    %v12148 = vpop.f32.mrb[0].mxu0
    %v12149 = vadd.f32 %v12108, %v12148
    %v12150 = vpop.f32.mrb[0].mxu0
    %v12151 = vadd.f32 %v12110, %v12150
    %v12152 = vpop.f32.mrb[0].mxu0
    %v12153 = vpop.f32.mrb[0].mxu0
    %12154 = vdwg.mxu0
    %12155 = vmatprep.subr.bf16.mxu0 %v10630
    %12156 = vmatpush1.bf16.msra.mxu0 %v10629
    %12157 = vmatprep.subr.bf16.mxu0 %v10638
    %12158 = vmatpush1.bf16.msra.mxu0 %v10637
    %12159 = vmatprep.subr.bf16.mxu0 %v10646
    %12160 = vmatpush1.bf16.msra.mxu0 %v10645
    %12161 = vmatprep.subr.bf16.mxu0 %v10654
    %12162 = vmatpush1.bf16.msra.mxu0 %v10653
    %12163 = vmatprep.subr.bf16.mxu0 %v10662
    %12164 = vmatpush1.bf16.msra.mxu0 %v10661
    %12165 = vmatprep.subr.bf16.mxu0 %v10670
    %12166 = vmatpush1.bf16.msra.mxu0 %v10669
    %12167 = vmatprep.subr.bf16.mxu0 %v10678
    %12168 = vmatpush1.bf16.msra.mxu0 %v10677
    %12169 = vmatprep.subr.bf16.mxu0 %v10686
    %12170 = vmatpush1.bf16.msra.mxu0 %v10685
    %12171 = vmatprep.subr.bf16.mxu0 %v10694
    %12172 = vmatpush1.bf16.msra.mxu0 %v10693
    %12173 = vmatprep.subr.bf16.mxu0 %v10702
    %12174 = vmatpush1.bf16.msra.mxu0 %v10701
    %12175 = vmatprep.subr.bf16.mxu0 %v10710
    %12176 = vmatpush1.bf16.msra.mxu0 %v10709
    %12177 = vmatprep.subr.bf16.mxu0 %v10718
    %12178 = vmatpush1.bf16.msra.mxu0 %v10717
    %12179 = vmatprep.subr.bf16.mxu0 %v10726
    %12180 = vmatpush1.bf16.msra.mxu0 %v10725
    %12181 = vmatprep.subr.bf16.mxu0 %v10734
    %12182 = vmatpush1.bf16.msra.mxu0 %v10733
    %12183 = vmatprep.subr.bf16.mxu0 %v10742
    %12184 = vmatpush1.bf16.msra.mxu0 %v10741
    %12185 = vmatprep.subr.bf16.mxu0 %v10750
    %12186 = vmatpush1.bf16.msra.mxu0 %v10749
    %12187 = vmatprep.mubr.bf16.mxu0 %v6770
    %12188 = vmatmul.mubr.bf16.gmra.mrb[0].mxu0 %v6769
    %v12189 = vpop.f32.mrb[0].mxu0
    %v12190 = vadd.f32 %v12149, %v12189
    %v12191 = vpop.f32.mrb[0].mxu0
    %v12192 = vadd.f32 %v12151, %v12191
    %v12193 = vpop.f32.mrb[0].mxu0
    %v12194 = vpop.f32.mrb[0].mxu0
    %12195 = vdwg.mxu0
    %12196 = vmatprep.subr.bf16.mxu0 %v10758
    %12197 = vmatpush1.bf16.msra.mxu0 %v10757
    %12198 = vmatprep.subr.bf16.mxu0 %v10766
    %12199 = vmatpush1.bf16.msra.mxu0 %v10765
    %12200 = vmatprep.subr.bf16.mxu0 %v10774
    %12201 = vmatpush1.bf16.msra.mxu0 %v10773
    %12202 = vmatprep.subr.bf16.mxu0 %v10782
    %12203 = vmatpush1.bf16.msra.mxu0 %v10781
    %12204 = vmatprep.subr.bf16.mxu0 %v10790
    %12205 = vmatpush1.bf16.msra.mxu0 %v10789
    %12206 = vmatprep.subr.bf16.mxu0 %v10798
    %12207 = vmatpush1.bf16.msra.mxu0 %v10797
    %12208 = vmatprep.subr.bf16.mxu0 %v10806
    %12209 = vmatpush1.bf16.msra.mxu0 %v10805
    %12210 = vmatprep.subr.bf16.mxu0 %v10814
    %12211 = vmatpush1.bf16.msra.mxu0 %v10813
    %12212 = vmatprep.subr.bf16.mxu0 %v10822
    %12213 = vmatpush1.bf16.msra.mxu0 %v10821
    %12214 = vmatprep.subr.bf16.mxu0 %v10830
    %12215 = vmatpush1.bf16.msra.mxu0 %v10829
    %12216 = vmatprep.subr.bf16.mxu0 %v10838
    %12217 = vmatpush1.bf16.msra.mxu0 %v10837
    %12218 = vmatprep.subr.bf16.mxu0 %v10846
    %12219 = vmatpush1.bf16.msra.mxu0 %v10845
    %12220 = vmatprep.subr.bf16.mxu0 %v10854
    %12221 = vmatpush1.bf16.msra.mxu0 %v10853
    %12222 = vmatprep.subr.bf16.mxu0 %v10862
    %12223 = vmatpush1.bf16.msra.mxu0 %v10861
    %12224 = vmatprep.subr.bf16.mxu0 %v10870
    %12225 = vmatpush1.bf16.msra.mxu0 %v10869
    %12226 = vmatprep.subr.bf16.mxu0 %v10878
    %12227 = vmatpush1.bf16.msra.mxu0 %v10877
    %12228 = vmatprep.mubr.bf16.mxu0 %v6772
    %12229 = vmatmul.mubr.bf16.gmra.mrb[0].mxu0 %v6771
    %v12230 = vpop.f32.mrb[0].mxu0
    %v12231 = vadd.f32 %v12190, %v12230
    %v12232 = vpop.f32.mrb[0].mxu0
    %v12233 = vadd.f32 %v12192, %v12232
    %v12234 = vpop.f32.mrb[0].mxu0
    %v12235 = vpop.f32.mrb[0].mxu0
    %12236 = vdwg.mxu0
    %12237 = vmatprep.subr.bf16.mxu0 %v9864
    %12238 = vmatpush1.bf16.msra.mxu0 %v9863
    %12239 = vmatprep.subr.bf16.mxu0 %v9872
    %12240 = vmatpush1.bf16.msra.mxu0 %v9871
    %12241 = vmatprep.subr.bf16.mxu0 %v9880
    %12242 = vmatpush1.bf16.msra.mxu0 %v9879
    %12243 = vmatprep.subr.bf16.mxu0 %v9888
    %12244 = vmatpush1.bf16.msra.mxu0 %v9887
    %12245 = vmatprep.subr.bf16.mxu0 %v9896
    %12246 = vmatpush1.bf16.msra.mxu0 %v9895
    %12247 = vmatprep.subr.bf16.mxu0 %v9904
    %12248 = vmatpush1.bf16.msra.mxu0 %v9903
    %12249 = vmatprep.subr.bf16.mxu0 %v9912
    %12250 = vmatpush1.bf16.msra.mxu0 %v9911
    %12251 = vmatprep.subr.bf16.mxu0 %v9920
    %12252 = vmatpush1.bf16.msra.mxu0 %v9919
    %12253 = vmatprep.subr.bf16.mxu0 %v9928
    %12254 = vmatpush1.bf16.msra.mxu0 %v9927
    %12255 = vmatprep.subr.bf16.mxu0 %v9936
    %12256 = vmatpush1.bf16.msra.mxu0 %v9935
    %12257 = vmatprep.subr.bf16.mxu0 %v9944
    %12258 = vmatpush1.bf16.msra.mxu0 %v9943
    %12259 = vmatprep.subr.bf16.mxu0 %v9952
    %12260 = vmatpush1.bf16.msra.mxu0 %v9951
    %12261 = vmatprep.subr.bf16.mxu0 %v9960
    %12262 = vmatpush1.bf16.msra.mxu0 %v9959
    %12263 = vmatprep.subr.bf16.mxu0 %v9968
    %12264 = vmatpush1.bf16.msra.mxu0 %v9967
    %12265 = vmatprep.subr.bf16.mxu0 %v9976
    %12266 = vmatpush1.bf16.msra.mxu0 %v9975
    %12267 = vmatprep.subr.bf16.mxu0 %v9984
    %12268 = vmatpush1.bf16.msra.mxu0 %v9983
    %12269 = vmatprep.mubr.bf16.mxu0 %v6758
    %12270 = vmatmul.mubr.bf16.gmra.mrb[0].mxu0 %v6757
    %v12271 = vpop.f32.mrb[0].mxu0
    %v12272 = vadd.f32 %v3383, %v12271
    %v12273 = vpop.f32.mrb[0].mxu0
    %v12274 = vadd.f32 %v3387, %v12273
    %v12275 = vpop.f32.mrb[0].mxu0
    %v12276 = vpop.f32.mrb[0].mxu0
    %12277 = vdwg.mxu0
    %12278 = vmatprep.subr.bf16.mxu0 %v9992
    %12279 = vmatpush1.bf16.msra.mxu0 %v9991
    %12280 = vmatprep.subr.bf16.mxu0 %v10000
    %12281 = vmatpush1.bf16.msra.mxu0 %v9999
    %12282 = vmatprep.subr.bf16.mxu0 %v10008
    %12283 = vmatpush1.bf16.msra.mxu0 %v10007
    %12284 = vmatprep.subr.bf16.mxu0 %v10016
    %12285 = vmatpush1.bf16.msra.mxu0 %v10015
    %12286 = vmatprep.subr.bf16.mxu0 %v10024
    %12287 = vmatpush1.bf16.msra.mxu0 %v10023
    %12288 = vmatprep.subr.bf16.mxu0 %v10032
    %12289 = vmatpush1.bf16.msra.mxu0 %v10031
    %12290 = vmatprep.subr.bf16.mxu0 %v10040
    %12291 = vmatpush1.bf16.msra.mxu0 %v10039
    %12292 = vmatprep.subr.bf16.mxu0 %v10048
    %12293 = vmatpush1.bf16.msra.mxu0 %v10047
    %12294 = vmatprep.subr.bf16.mxu0 %v10056
    %12295 = vmatpush1.bf16.msra.mxu0 %v10055
    %12296 = vmatprep.subr.bf16.mxu0 %v10064
    %12297 = vmatpush1.bf16.msra.mxu0 %v10063
    %12298 = vmatprep.subr.bf16.mxu0 %v10072
    %12299 = vmatpush1.bf16.msra.mxu0 %v10071
    %12300 = vmatprep.subr.bf16.mxu0 %v10080
    %12301 = vmatpush1.bf16.msra.mxu0 %v10079
    %12302 = vmatprep.subr.bf16.mxu0 %v10088
    %12303 = vmatpush1.bf16.msra.mxu0 %v10087
    %12304 = vmatprep.subr.bf16.mxu0 %v10096
    %12305 = vmatpush1.bf16.msra.mxu0 %v10095
    %12306 = vmatprep.subr.bf16.mxu0 %v10104
    %12307 = vmatpush1.bf16.msra.mxu0 %v10103
    %12308 = vmatprep.subr.bf16.mxu0 %v10112
    %12309 = vmatpush1.bf16.msra.mxu0 %v10111
    %12310 = vmatprep.mubr.bf16.mxu0 %v6760
    %12311 = vmatmul.mubr.bf16.gmra.mrb[0].mxu0 %v6759
    %v12312 = vpop.f32.mrb[0].mxu0
    %v12313 = vadd.f32 %v12272, %v12312
    %v12314 = vpop.f32.mrb[0].mxu0
    %v12315 = vadd.f32 %v12274, %v12314
    %v12316 = vpop.f32.mrb[0].mxu0
    %v12317 = vpop.f32.mrb[0].mxu0
    %12318 = vdwg.mxu0
    %12319 = vmatprep.subr.bf16.mxu0 %v10120
    %12320 = vmatpush1.bf16.msra.mxu0 %v10119
    %12321 = vmatprep.subr.bf16.mxu0 %v10128
    %12322 = vmatpush1.bf16.msra.mxu0 %v10127
    %12323 = vmatprep.subr.bf16.mxu0 %v10136
    %12324 = vmatpush1.bf16.msra.mxu0 %v10135
    %12325 = vmatprep.subr.bf16.mxu0 %v10144
    %12326 = vmatpush1.bf16.msra.mxu0 %v10143
    %12327 = vmatprep.subr.bf16.mxu0 %v10152
    %12328 = vmatpush1.bf16.msra.mxu0 %v10151
    %12329 = vmatprep.subr.bf16.mxu0 %v10160
    %12330 = vmatpush1.bf16.msra.mxu0 %v10159
    %12331 = vmatprep.subr.bf16.mxu0 %v10168
    %12332 = vmatpush1.bf16.msra.mxu0 %v10167
    %12333 = vmatprep.subr.bf16.mxu0 %v10176
    %12334 = vmatpush1.bf16.msra.mxu0 %v10175
    %12335 = vmatprep.subr.bf16.mxu0 %v10184
    %12336 = vmatpush1.bf16.msra.mxu0 %v10183
    %12337 = vmatprep.subr.bf16.mxu0 %v10192
    %12338 = vmatpush1.bf16.msra.mxu0 %v10191
    %12339 = vmatprep.subr.bf16.mxu0 %v10200
    %12340 = vmatpush1.bf16.msra.mxu0 %v10199
    %12341 = vmatprep.subr.bf16.mxu0 %v10208
    %12342 = vmatpush1.bf16.msra.mxu0 %v10207
    %12343 = vmatprep.subr.bf16.mxu0 %v10216
    %12344 = vmatpush1.bf16.msra.mxu0 %v10215
    %12345 = vmatprep.subr.bf16.mxu0 %v10224
    %12346 = vmatpush1.bf16.msra.mxu0 %v10223
    %12347 = vmatprep.subr.bf16.mxu0 %v10232
    %12348 = vmatpush1.bf16.msra.mxu0 %v10231
    %12349 = vmatprep.subr.bf16.mxu0 %v10240
    %12350 = vmatpush1.bf16.msra.mxu0 %v10239
    %12351 = vmatprep.mubr.bf16.mxu0 %v6762
    %12352 = vmatmul.mubr.bf16.gmra.mrb[0].mxu0 %v6761
    %v12353 = vpop.f32.mrb[0].mxu0
    %v12354 = vadd.f32 %v12313, %v12353
    %v12355 = vpop.f32.mrb[0].mxu0
    %v12356 = vadd.f32 %v12315, %v12355
    %v12357 = vpop.f32.mrb[0].mxu0
    %v12358 = vpop.f32.mrb[0].mxu0
    %12359 = vdwg.mxu0
    %12360 = vmatprep.subr.bf16.mxu0 %v10248
    %12361 = vmatpush1.bf16.msra.mxu0 %v10247
    %12362 = vmatprep.subr.bf16.mxu0 %v10256
    %12363 = vmatpush1.bf16.msra.mxu0 %v10255
    %12364 = vmatprep.subr.bf16.mxu0 %v10264
    %12365 = vmatpush1.bf16.msra.mxu0 %v10263
    %12366 = vmatprep.subr.bf16.mxu0 %v10272
    %12367 = vmatpush1.bf16.msra.mxu0 %v10271
    %12368 = vmatprep.subr.bf16.mxu0 %v10280
    %12369 = vmatpush1.bf16.msra.mxu0 %v10279
    %12370 = vmatprep.subr.bf16.mxu0 %v10288
    %12371 = vmatpush1.bf16.msra.mxu0 %v10287
    %12372 = vmatprep.subr.bf16.mxu0 %v10296
    %12373 = vmatpush1.bf16.msra.mxu0 %v10295
    %12374 = vmatprep.subr.bf16.mxu0 %v10304
    %12375 = vmatpush1.bf16.msra.mxu0 %v10303
    %12376 = vmatprep.subr.bf16.mxu0 %v10312
    %12377 = vmatpush1.bf16.msra.mxu0 %v10311
    %12378 = vmatprep.subr.bf16.mxu0 %v10320
    %12379 = vmatpush1.bf16.msra.mxu0 %v10319
    %12380 = vmatprep.subr.bf16.mxu0 %v10328
    %12381 = vmatpush1.bf16.msra.mxu0 %v10327
    %12382 = vmatprep.subr.bf16.mxu0 %v10336
    %12383 = vmatpush1.bf16.msra.mxu0 %v10335
    %12384 = vmatprep.subr.bf16.mxu0 %v10344
    %12385 = vmatpush1.bf16.msra.mxu0 %v10343
    %12386 = vmatprep.subr.bf16.mxu0 %v10352
    %12387 = vmatpush1.bf16.msra.mxu0 %v10351
    %12388 = vmatprep.subr.bf16.mxu0 %v10360
    %12389 = vmatpush1.bf16.msra.mxu0 %v10359
    %12390 = vmatprep.subr.bf16.mxu0 %v10368
    %12391 = vmatpush1.bf16.msra.mxu0 %v10367
    %12392 = vmatprep.mubr.bf16.mxu0 %v6764
    %12393 = vmatmul.mubr.bf16.gmra.mrb[0].mxu0 %v6763
    %v12394 = vpop.f32.mrb[0].mxu0
    %v12395 = vadd.f32 %v12354, %v12394
    %v12396 = vpop.f32.mrb[0].mxu0
    %v12397 = vadd.f32 %v12356, %v12396
    %v12398 = vpop.f32.mrb[0].mxu0
    %v12399 = vpop.f32.mrb[0].mxu0
    %12400 = vdwg.mxu0
    %12401 = vmatprep.subr.bf16.mxu0 %v10376
    %12402 = vmatpush1.bf16.msra.mxu0 %v10375
    %12403 = vmatprep.subr.bf16.mxu0 %v10384
    %12404 = vmatpush1.bf16.msra.mxu0 %v10383
    %12405 = vmatprep.subr.bf16.mxu0 %v10392
    %12406 = vmatpush1.bf16.msra.mxu0 %v10391
    %12407 = vmatprep.subr.bf16.mxu0 %v10400
    %12408 = vmatpush1.bf16.msra.mxu0 %v10399
    %12409 = vmatprep.subr.bf16.mxu0 %v10408
    %12410 = vmatpush1.bf16.msra.mxu0 %v10407
    %12411 = vmatprep.subr.bf16.mxu0 %v10416
    %12412 = vmatpush1.bf16.msra.mxu0 %v10415
    %12413 = vmatprep.subr.bf16.mxu0 %v10424
    %12414 = vmatpush1.bf16.msra.mxu0 %v10423
    %12415 = vmatprep.subr.bf16.mxu0 %v10432
    %12416 = vmatpush1.bf16.msra.mxu0 %v10431
    %12417 = vmatprep.subr.bf16.mxu0 %v10440
    %12418 = vmatpush1.bf16.msra.mxu0 %v10439
    %12419 = vmatprep.subr.bf16.mxu0 %v10448
    %12420 = vmatpush1.bf16.msra.mxu0 %v10447
    %12421 = vmatprep.subr.bf16.mxu0 %v10456
    %12422 = vmatpush1.bf16.msra.mxu0 %v10455
    %12423 = vmatprep.subr.bf16.mxu0 %v10464
    %12424 = vmatpush1.bf16.msra.mxu0 %v10463
    %12425 = vmatprep.subr.bf16.mxu0 %v10472
    %12426 = vmatpush1.bf16.msra.mxu0 %v10471
    %12427 = vmatprep.subr.bf16.mxu0 %v10480
    %12428 = vmatpush1.bf16.msra.mxu0 %v10479
    %12429 = vmatprep.subr.bf16.mxu0 %v10488
    %12430 = vmatpush1.bf16.msra.mxu0 %v10487
    %12431 = vmatprep.subr.bf16.mxu0 %v10496
    %12432 = vmatpush1.bf16.msra.mxu0 %v10495
    %12433 = vmatprep.mubr.bf16.mxu0 %v6766
    %12434 = vmatmul.mubr.bf16.gmra.mrb[0].mxu0 %v6765
    %v12435 = vpop.f32.mrb[0].mxu0
    %v12436 = vadd.f32 %v12395, %v12435
    %v12437 = vpop.f32.mrb[0].mxu0
    %v12438 = vadd.f32 %v12397, %v12437
    %v12439 = vpop.f32.mrb[0].mxu0
    %v12440 = vpop.f32.mrb[0].mxu0
    %12441 = vdwg.mxu0
    %12442 = vmatprep.subr.bf16.mxu0 %v10504
    %12443 = vmatpush1.bf16.msra.mxu0 %v10503
    %12444 = vmatprep.subr.bf16.mxu0 %v10512
    %12445 = vmatpush1.bf16.msra.mxu0 %v10511
    %12446 = vmatprep.subr.bf16.mxu0 %v10520
    %12447 = vmatpush1.bf16.msra.mxu0 %v10519
    %12448 = vmatprep.subr.bf16.mxu0 %v10528
    %12449 = vmatpush1.bf16.msra.mxu0 %v10527
    %12450 = vmatprep.subr.bf16.mxu0 %v10536
    %12451 = vmatpush1.bf16.msra.mxu0 %v10535
    %12452 = vmatprep.subr.bf16.mxu0 %v10544
    %12453 = vmatpush1.bf16.msra.mxu0 %v10543
    %12454 = vmatprep.subr.bf16.mxu0 %v10552
    %12455 = vmatpush1.bf16.msra.mxu0 %v10551
    %12456 = vmatprep.subr.bf16.mxu0 %v10560
    %12457 = vmatpush1.bf16.msra.mxu0 %v10559
    %12458 = vmatprep.subr.bf16.mxu0 %v10568
    %12459 = vmatpush1.bf16.msra.mxu0 %v10567
    %12460 = vmatprep.subr.bf16.mxu0 %v10576
    %12461 = vmatpush1.bf16.msra.mxu0 %v10575
    %12462 = vmatprep.subr.bf16.mxu0 %v10584
    %12463 = vmatpush1.bf16.msra.mxu0 %v10583
    %12464 = vmatprep.subr.bf16.mxu0 %v10592
    %12465 = vmatpush1.bf16.msra.mxu0 %v10591
    %12466 = vmatprep.subr.bf16.mxu0 %v10600
    %12467 = vmatpush1.bf16.msra.mxu0 %v10599
    %12468 = vmatprep.subr.bf16.mxu0 %v10608
    %12469 = vmatpush1.bf16.msra.mxu0 %v10607
    %12470 = vmatprep.subr.bf16.mxu0 %v10616
    %12471 = vmatpush1.bf16.msra.mxu0 %v10615
    %12472 = vmatprep.subr.bf16.mxu0 %v10624
    %12473 = vmatpush1.bf16.msra.mxu0 %v10623
    %12474 = vmatprep.mubr.bf16.mxu0 %v6768
    %12475 = vmatmul.mubr.bf16.gmra.mrb[0].mxu0 %v6767
    %v12476 = vpop.f32.mrb[0].mxu0
    %v12477 = vadd.f32 %v12436, %v12476
    %v12478 = vpop.f32.mrb[0].mxu0
    %v12479 = vadd.f32 %v12438, %v12478
    %v12480 = vpop.f32.mrb[0].mxu0
    %v12481 = vpop.f32.mrb[0].mxu0
    %12482 = vdwg.mxu0
    %12483 = vmatprep.subr.bf16.mxu0 %v10632
    %12484 = vmatpush1.bf16.msra.mxu0 %v10631
    %12485 = vmatprep.subr.bf16.mxu0 %v10640
    %12486 = vmatpush1.bf16.msra.mxu0 %v10639
    %12487 = vmatprep.subr.bf16.mxu0 %v10648
    %12488 = vmatpush1.bf16.msra.mxu0 %v10647
    %12489 = vmatprep.subr.bf16.mxu0 %v10656
    %12490 = vmatpush1.bf16.msra.mxu0 %v10655
    %12491 = vmatprep.subr.bf16.mxu0 %v10664
    %12492 = vmatpush1.bf16.msra.mxu0 %v10663
    %12493 = vmatprep.subr.bf16.mxu0 %v10672
    %12494 = vmatpush1.bf16.msra.mxu0 %v10671
    %12495 = vmatprep.subr.bf16.mxu0 %v10680
    %12496 = vmatpush1.bf16.msra.mxu0 %v10679
    %12497 = vmatprep.subr.bf16.mxu0 %v10688
    %12498 = vmatpush1.bf16.msra.mxu0 %v10687
    %12499 = vmatprep.subr.bf16.mxu0 %v10696
    %12500 = vmatpush1.bf16.msra.mxu0 %v10695
    %12501 = vmatprep.subr.bf16.mxu0 %v10704
    %12502 = vmatpush1.bf16.msra.mxu0 %v10703
    %12503 = vmatprep.subr.bf16.mxu0 %v10712
    %12504 = vmatpush1.bf16.msra.mxu0 %v10711
    %12505 = vmatprep.subr.bf16.mxu0 %v10720
    %12506 = vmatpush1.bf16.msra.mxu0 %v10719
    %12507 = vmatprep.subr.bf16.mxu0 %v10728
    %12508 = vmatpush1.bf16.msra.mxu0 %v10727
    %12509 = vmatprep.subr.bf16.mxu0 %v10736
    %12510 = vmatpush1.bf16.msra.mxu0 %v10735
    %12511 = vmatprep.subr.bf16.mxu0 %v10744
    %12512 = vmatpush1.bf16.msra.mxu0 %v10743
    %12513 = vmatprep.subr.bf16.mxu0 %v10752
    %12514 = vmatpush1.bf16.msra.mxu0 %v10751
    %12515 = vmatprep.mubr.bf16.mxu0 %v6770
    %12516 = vmatmul.mubr.bf16.gmra.mrb[0].mxu0 %v6769
    %v12517 = vpop.f32.mrb[0].mxu0
    %v12518 = vadd.f32 %v12477, %v12517
    %v12519 = vpop.f32.mrb[0].mxu0
    %v12520 = vadd.f32 %v12479, %v12519
    %v12521 = vpop.f32.mrb[0].mxu0
    %v12522 = vpop.f32.mrb[0].mxu0
    %12523 = vdwg.mxu0
    %12524 = vmatprep.subr.bf16.mxu0 %v10760
    %12525 = vmatpush1.bf16.msra.mxu0 %v10759
    %12526 = vmatprep.subr.bf16.mxu0 %v10768
    %12527 = vmatpush1.bf16.msra.mxu0 %v10767
    %12528 = vmatprep.subr.bf16.mxu0 %v10776
    %12529 = vmatpush1.bf16.msra.mxu0 %v10775
    %12530 = vmatprep.subr.bf16.mxu0 %v10784
    %12531 = vmatpush1.bf16.msra.mxu0 %v10783
    %12532 = vmatprep.subr.bf16.mxu0 %v10792
    %12533 = vmatpush1.bf16.msra.mxu0 %v10791
    %12534 = vmatprep.subr.bf16.mxu0 %v10800
    %12535 = vmatpush1.bf16.msra.mxu0 %v10799
    %12536 = vmatprep.subr.bf16.mxu0 %v10808
    %12537 = vmatpush1.bf16.msra.mxu0 %v10807
    %12538 = vmatprep.subr.bf16.mxu0 %v10816
    %12539 = vmatpush1.bf16.msra.mxu0 %v10815
    %12540 = vmatprep.subr.bf16.mxu0 %v10824
    %12541 = vmatpush1.bf16.msra.mxu0 %v10823
    %12542 = vmatprep.subr.bf16.mxu0 %v10832
    %12543 = vmatpush1.bf16.msra.mxu0 %v10831
    %12544 = vmatprep.subr.bf16.mxu0 %v10840
    %12545 = vmatpush1.bf16.msra.mxu0 %v10839
    %12546 = vmatprep.subr.bf16.mxu0 %v10848
    %12547 = vmatpush1.bf16.msra.mxu0 %v10847
    %12548 = vmatprep.subr.bf16.mxu0 %v10856
    %12549 = vmatpush1.bf16.msra.mxu0 %v10855
    %12550 = vmatprep.subr.bf16.mxu0 %v10864
    %12551 = vmatpush1.bf16.msra.mxu0 %v10863
    %12552 = vmatprep.subr.bf16.mxu0 %v10872
    %12553 = vmatpush1.bf16.msra.mxu0 %v10871
    %12554 = vmatprep.subr.bf16.mxu0 %v10880
    %12555 = vmatpush1.bf16.msra.mxu0 %v10879
    %12556 = vmatprep.mubr.bf16.mxu0 %v6772
    %12557 = vmatmul.mubr.bf16.gmra.mrb[0].mxu0 %v6771
    %v12558 = vpop.f32.mrb[0].mxu0
    %v12559 = vadd.f32 %v12518, %v12558
    %v12560 = vpop.f32.mrb[0].mxu0
    %v12561 = vadd.f32 %v12520, %v12560
    %v12562 = vpop.f32.mrb[0].mxu0
    %v12563 = vpop.f32.mrb[0].mxu0
    %12564 = vdwg.mxu0
    %12565 = vmatprep.subr.bf16.mxu0 %v9866
    %12566 = vmatpush1.bf16.msra.mxu0 %v9865
    %12567 = vmatprep.subr.bf16.mxu0 %v9874
    %12568 = vmatpush1.bf16.msra.mxu0 %v9873
    %12569 = vmatprep.subr.bf16.mxu0 %v9882
    %12570 = vmatpush1.bf16.msra.mxu0 %v9881
    %12571 = vmatprep.subr.bf16.mxu0 %v9890
    %12572 = vmatpush1.bf16.msra.mxu0 %v9889
    %12573 = vmatprep.subr.bf16.mxu0 %v9898
    %12574 = vmatpush1.bf16.msra.mxu0 %v9897
    %12575 = vmatprep.subr.bf16.mxu0 %v9906
    %12576 = vmatpush1.bf16.msra.mxu0 %v9905
    %12577 = vmatprep.subr.bf16.mxu0 %v9914
    %12578 = vmatpush1.bf16.msra.mxu0 %v9913
    %12579 = vmatprep.subr.bf16.mxu0 %v9922
    %12580 = vmatpush1.bf16.msra.mxu0 %v9921
    %12581 = vmatprep.subr.bf16.mxu0 %v9930
    %12582 = vmatpush1.bf16.msra.mxu0 %v9929
    %12583 = vmatprep.subr.bf16.mxu0 %v9938
    %12584 = vmatpush1.bf16.msra.mxu0 %v9937
    %12585 = vmatprep.subr.bf16.mxu0 %v9946
    %12586 = vmatpush1.bf16.msra.mxu0 %v9945
    %12587 = vmatprep.subr.bf16.mxu0 %v9954
    %12588 = vmatpush1.bf16.msra.mxu0 %v9953
    %12589 = vmatprep.subr.bf16.mxu0 %v9962
    %12590 = vmatpush1.bf16.msra.mxu0 %v9961
    %12591 = vmatprep.subr.bf16.mxu0 %v9970
    %12592 = vmatpush1.bf16.msra.mxu0 %v9969
    %12593 = vmatprep.subr.bf16.mxu0 %v9978
    %12594 = vmatpush1.bf16.msra.mxu0 %v9977
    %12595 = vmatprep.subr.bf16.mxu0 %v9986
    %12596 = vmatpush1.bf16.msra.mxu0 %v9985
    %12597 = vmatprep.mubr.bf16.mxu0 %v6758
    %12598 = vmatmul.mubr.bf16.gmra.mrb[0].mxu0 %v6757
    %v12599 = vpop.f32.mrb[0].mxu0
    %v12600 = vadd.f32 %v3391, %v12599
    %v12601 = vpop.f32.mrb[0].mxu0
    %v12602 = vadd.f32 %v3395, %v12601
    %v12603 = vpop.f32.mrb[0].mxu0
    %v12604 = vpop.f32.mrb[0].mxu0
    %12605 = vdwg.mxu0
    %12606 = vmatprep.subr.bf16.mxu0 %v9994
    %12607 = vmatpush1.bf16.msra.mxu0 %v9993
    %12608 = vmatprep.subr.bf16.mxu0 %v10002
    %12609 = vmatpush1.bf16.msra.mxu0 %v10001
    %12610 = vmatprep.subr.bf16.mxu0 %v10010
    %12611 = vmatpush1.bf16.msra.mxu0 %v10009
    %12612 = vmatprep.subr.bf16.mxu0 %v10018
    %12613 = vmatpush1.bf16.msra.mxu0 %v10017
    %12614 = vmatprep.subr.bf16.mxu0 %v10026
    %12615 = vmatpush1.bf16.msra.mxu0 %v10025
    %12616 = vmatprep.subr.bf16.mxu0 %v10034
    %12617 = vmatpush1.bf16.msra.mxu0 %v10033
    %12618 = vmatprep.subr.bf16.mxu0 %v10042
    %12619 = vmatpush1.bf16.msra.mxu0 %v10041
    %12620 = vmatprep.subr.bf16.mxu0 %v10050
    %12621 = vmatpush1.bf16.msra.mxu0 %v10049
    %12622 = vmatprep.subr.bf16.mxu0 %v10058
    %12623 = vmatpush1.bf16.msra.mxu0 %v10057
    %12624 = vmatprep.subr.bf16.mxu0 %v10066
    %12625 = vmatpush1.bf16.msra.mxu0 %v10065
    %12626 = vmatprep.subr.bf16.mxu0 %v10074
    %12627 = vmatpush1.bf16.msra.mxu0 %v10073
    %12628 = vmatprep.subr.bf16.mxu0 %v10082
    %12629 = vmatpush1.bf16.msra.mxu0 %v10081
    %12630 = vmatprep.subr.bf16.mxu0 %v10090
    %12631 = vmatpush1.bf16.msra.mxu0 %v10089
    %12632 = vmatprep.subr.bf16.mxu0 %v10098
    %12633 = vmatpush1.bf16.msra.mxu0 %v10097
    %12634 = vmatprep.subr.bf16.mxu0 %v10106
    %12635 = vmatpush1.bf16.msra.mxu0 %v10105
    %12636 = vmatprep.subr.bf16.mxu0 %v10114
    %12637 = vmatpush1.bf16.msra.mxu0 %v10113
    %12638 = vmatprep.mubr.bf16.mxu0 %v6760
    %12639 = vmatmul.mubr.bf16.gmra.mrb[0].mxu0 %v6759
    %v12640 = vpop.f32.mrb[0].mxu0
    %v12641 = vadd.f32 %v12600, %v12640
    %v12642 = vpop.f32.mrb[0].mxu0
    %v12643 = vadd.f32 %v12602, %v12642
    %v12644 = vpop.f32.mrb[0].mxu0
    %v12645 = vpop.f32.mrb[0].mxu0
    %12646 = vdwg.mxu0
    %12647 = vmatprep.subr.bf16.mxu0 %v10122
    %12648 = vmatpush1.bf16.msra.mxu0 %v10121
    %12649 = vmatprep.subr.bf16.mxu0 %v10130
    %12650 = vmatpush1.bf16.msra.mxu0 %v10129
    %12651 = vmatprep.subr.bf16.mxu0 %v10138
    %12652 = vmatpush1.bf16.msra.mxu0 %v10137
    %12653 = vmatprep.subr.bf16.mxu0 %v10146
    %12654 = vmatpush1.bf16.msra.mxu0 %v10145
    %12655 = vmatprep.subr.bf16.mxu0 %v10154
    %12656 = vmatpush1.bf16.msra.mxu0 %v10153
    %12657 = vmatprep.subr.bf16.mxu0 %v10162
    %12658 = vmatpush1.bf16.msra.mxu0 %v10161
    %12659 = vmatprep.subr.bf16.mxu0 %v10170
    %12660 = vmatpush1.bf16.msra.mxu0 %v10169
    %12661 = vmatprep.subr.bf16.mxu0 %v10178
    %12662 = vmatpush1.bf16.msra.mxu0 %v10177
    %12663 = vmatprep.subr.bf16.mxu0 %v10186
    %12664 = vmatpush1.bf16.msra.mxu0 %v10185
    %12665 = vmatprep.subr.bf16.mxu0 %v10194
    %12666 = vmatpush1.bf16.msra.mxu0 %v10193
    %12667 = vmatprep.subr.bf16.mxu0 %v10202
    %12668 = vmatpush1.bf16.msra.mxu0 %v10201
    %12669 = vmatprep.subr.bf16.mxu0 %v10210
    %12670 = vmatpush1.bf16.msra.mxu0 %v10209
    %12671 = vmatprep.subr.bf16.mxu0 %v10218
    %12672 = vmatpush1.bf16.msra.mxu0 %v10217
    %12673 = vmatprep.subr.bf16.mxu0 %v10226
    %12674 = vmatpush1.bf16.msra.mxu0 %v10225
    %12675 = vmatprep.subr.bf16.mxu0 %v10234
    %12676 = vmatpush1.bf16.msra.mxu0 %v10233
    %12677 = vmatprep.subr.bf16.mxu0 %v10242
    %12678 = vmatpush1.bf16.msra.mxu0 %v10241
    %12679 = vmatprep.mubr.bf16.mxu0 %v6762
    %12680 = vmatmul.mubr.bf16.gmra.mrb[0].mxu0 %v6761
    %v12681 = vpop.f32.mrb[0].mxu0
    %v12682 = vadd.f32 %v12641, %v12681
    %v12683 = vpop.f32.mrb[0].mxu0
    %v12684 = vadd.f32 %v12643, %v12683
    %v12685 = vpop.f32.mrb[0].mxu0
    %v12686 = vpop.f32.mrb[0].mxu0
    %12687 = vdwg.mxu0
    %12688 = vmatprep.subr.bf16.mxu0 %v10250
    %12689 = vmatpush1.bf16.msra.mxu0 %v10249
    %12690 = vmatprep.subr.bf16.mxu0 %v10258
    %12691 = vmatpush1.bf16.msra.mxu0 %v10257
    %12692 = vmatprep.subr.bf16.mxu0 %v10266
    %12693 = vmatpush1.bf16.msra.mxu0 %v10265
    %12694 = vmatprep.subr.bf16.mxu0 %v10274
    %12695 = vmatpush1.bf16.msra.mxu0 %v10273
    %12696 = vmatprep.subr.bf16.mxu0 %v10282
    %12697 = vmatpush1.bf16.msra.mxu0 %v10281
    %12698 = vmatprep.subr.bf16.mxu0 %v10290
    %12699 = vmatpush1.bf16.msra.mxu0 %v10289
    %12700 = vmatprep.subr.bf16.mxu0 %v10298
    %12701 = vmatpush1.bf16.msra.mxu0 %v10297
    %12702 = vmatprep.subr.bf16.mxu0 %v10306
    %12703 = vmatpush1.bf16.msra.mxu0 %v10305
    %12704 = vmatprep.subr.bf16.mxu0 %v10314
    %12705 = vmatpush1.bf16.msra.mxu0 %v10313
    %12706 = vmatprep.subr.bf16.mxu0 %v10322
    %12707 = vmatpush1.bf16.msra.mxu0 %v10321
    %12708 = vmatprep.subr.bf16.mxu0 %v10330
    %12709 = vmatpush1.bf16.msra.mxu0 %v10329
    %12710 = vmatprep.subr.bf16.mxu0 %v10338
    %12711 = vmatpush1.bf16.msra.mxu0 %v10337
    %12712 = vmatprep.subr.bf16.mxu0 %v10346
    %12713 = vmatpush1.bf16.msra.mxu0 %v10345
    %12714 = vmatprep.subr.bf16.mxu0 %v10354
    %12715 = vmatpush1.bf16.msra.mxu0 %v10353
    %12716 = vmatprep.subr.bf16.mxu0 %v10362
    %12717 = vmatpush1.bf16.msra.mxu0 %v10361
    %12718 = vmatprep.subr.bf16.mxu0 %v10370
    %12719 = vmatpush1.bf16.msra.mxu0 %v10369
    %12720 = vmatprep.mubr.bf16.mxu0 %v6764
    %12721 = vmatmul.mubr.bf16.gmra.mrb[0].mxu0 %v6763
    %v12722 = vpop.f32.mrb[0].mxu0
    %v12723 = vadd.f32 %v12682, %v12722
    %v12724 = vpop.f32.mrb[0].mxu0
    %v12725 = vadd.f32 %v12684, %v12724
    %v12726 = vpop.f32.mrb[0].mxu0
    %v12727 = vpop.f32.mrb[0].mxu0
    %12728 = vdwg.mxu0
    %12729 = vmatprep.subr.bf16.mxu0 %v10378
    %12730 = vmatpush1.bf16.msra.mxu0 %v10377
    %12731 = vmatprep.subr.bf16.mxu0 %v10386
    %12732 = vmatpush1.bf16.msra.mxu0 %v10385
    %12733 = vmatprep.subr.bf16.mxu0 %v10394
    %12734 = vmatpush1.bf16.msra.mxu0 %v10393
    %12735 = vmatprep.subr.bf16.mxu0 %v10402
    %12736 = vmatpush1.bf16.msra.mxu0 %v10401
    %12737 = vmatprep.subr.bf16.mxu0 %v10410
    %12738 = vmatpush1.bf16.msra.mxu0 %v10409
    %12739 = vmatprep.subr.bf16.mxu0 %v10418
    %12740 = vmatpush1.bf16.msra.mxu0 %v10417
    %12741 = vmatprep.subr.bf16.mxu0 %v10426
    %12742 = vmatpush1.bf16.msra.mxu0 %v10425
    %12743 = vmatprep.subr.bf16.mxu0 %v10434
    %12744 = vmatpush1.bf16.msra.mxu0 %v10433
    %12745 = vmatprep.subr.bf16.mxu0 %v10442
    %12746 = vmatpush1.bf16.msra.mxu0 %v10441
    %12747 = vmatprep.subr.bf16.mxu0 %v10450
    %12748 = vmatpush1.bf16.msra.mxu0 %v10449
    %12749 = vmatprep.subr.bf16.mxu0 %v10458
    %12750 = vmatpush1.bf16.msra.mxu0 %v10457
    %12751 = vmatprep.subr.bf16.mxu0 %v10466
    %12752 = vmatpush1.bf16.msra.mxu0 %v10465
    %12753 = vmatprep.subr.bf16.mxu0 %v10474
    %12754 = vmatpush1.bf16.msra.mxu0 %v10473
    %12755 = vmatprep.subr.bf16.mxu0 %v10482
    %12756 = vmatpush1.bf16.msra.mxu0 %v10481
    %12757 = vmatprep.subr.bf16.mxu0 %v10490
    %12758 = vmatpush1.bf16.msra.mxu0 %v10489
    %12759 = vmatprep.subr.bf16.mxu0 %v10498
    %12760 = vmatpush1.bf16.msra.mxu0 %v10497
    %12761 = vmatprep.mubr.bf16.mxu0 %v6766
    %12762 = vmatmul.mubr.bf16.gmra.mrb[0].mxu0 %v6765
    %v12763 = vpop.f32.mrb[0].mxu0
    %v12764 = vadd.f32 %v12723, %v12763
    %v12765 = vpop.f32.mrb[0].mxu0
    %v12766 = vadd.f32 %v12725, %v12765
    %v12767 = vpop.f32.mrb[0].mxu0
    %v12768 = vpop.f32.mrb[0].mxu0
    %12769 = vdwg.mxu0
    %12770 = vmatprep.subr.bf16.mxu0 %v10506
    %12771 = vmatpush1.bf16.msra.mxu0 %v10505
    %12772 = vmatprep.subr.bf16.mxu0 %v10514
    %12773 = vmatpush1.bf16.msra.mxu0 %v10513
    %12774 = vmatprep.subr.bf16.mxu0 %v10522
    %12775 = vmatpush1.bf16.msra.mxu0 %v10521
    %12776 = vmatprep.subr.bf16.mxu0 %v10530
    %12777 = vmatpush1.bf16.msra.mxu0 %v10529
    %12778 = vmatprep.subr.bf16.mxu0 %v10538
    %12779 = vmatpush1.bf16.msra.mxu0 %v10537
    %12780 = vmatprep.subr.bf16.mxu0 %v10546
    %12781 = vmatpush1.bf16.msra.mxu0 %v10545
    %12782 = vmatprep.subr.bf16.mxu0 %v10554
    %12783 = vmatpush1.bf16.msra.mxu0 %v10553
    %12784 = vmatprep.subr.bf16.mxu0 %v10562
    %12785 = vmatpush1.bf16.msra.mxu0 %v10561
    %12786 = vmatprep.subr.bf16.mxu0 %v10570
    %12787 = vmatpush1.bf16.msra.mxu0 %v10569
    %12788 = vmatprep.subr.bf16.mxu0 %v10578
    %12789 = vmatpush1.bf16.msra.mxu0 %v10577
    %12790 = vmatprep.subr.bf16.mxu0 %v10586
    %12791 = vmatpush1.bf16.msra.mxu0 %v10585
    %12792 = vmatprep.subr.bf16.mxu0 %v10594
    %12793 = vmatpush1.bf16.msra.mxu0 %v10593
    %12794 = vmatprep.subr.bf16.mxu0 %v10602
    %12795 = vmatpush1.bf16.msra.mxu0 %v10601
    %12796 = vmatprep.subr.bf16.mxu0 %v10610
    %12797 = vmatpush1.bf16.msra.mxu0 %v10609
    %12798 = vmatprep.subr.bf16.mxu0 %v10618
    %12799 = vmatpush1.bf16.msra.mxu0 %v10617
    %12800 = vmatprep.subr.bf16.mxu0 %v10626
    %12801 = vmatpush1.bf16.msra.mxu0 %v10625
    %12802 = vmatprep.mubr.bf16.mxu0 %v6768
    %12803 = vmatmul.mubr.bf16.gmra.mrb[0].mxu0 %v6767
    %v12804 = vpop.f32.mrb[0].mxu0
    %v12805 = vadd.f32 %v12764, %v12804
    %v12806 = vpop.f32.mrb[0].mxu0
    %v12807 = vadd.f32 %v12766, %v12806
    %v12808 = vpop.f32.mrb[0].mxu0
    %v12809 = vpop.f32.mrb[0].mxu0
    %12810 = vdwg.mxu0
    %12811 = vmatprep.subr.bf16.mxu0 %v10634
    %12812 = vmatpush1.bf16.msra.mxu0 %v10633
    %12813 = vmatprep.subr.bf16.mxu0 %v10642
    %12814 = vmatpush1.bf16.msra.mxu0 %v10641
    %12815 = vmatprep.subr.bf16.mxu0 %v10650
    %12816 = vmatpush1.bf16.msra.mxu0 %v10649
    %12817 = vmatprep.subr.bf16.mxu0 %v10658
    %12818 = vmatpush1.bf16.msra.mxu0 %v10657
    %12819 = vmatprep.subr.bf16.mxu0 %v10666
    %12820 = vmatpush1.bf16.msra.mxu0 %v10665
    %12821 = vmatprep.subr.bf16.mxu0 %v10674
    %12822 = vmatpush1.bf16.msra.mxu0 %v10673
    %12823 = vmatprep.subr.bf16.mxu0 %v10682
    %12824 = vmatpush1.bf16.msra.mxu0 %v10681
    %12825 = vmatprep.subr.bf16.mxu0 %v10690
    %12826 = vmatpush1.bf16.msra.mxu0 %v10689
    %12827 = vmatprep.subr.bf16.mxu0 %v10698
    %12828 = vmatpush1.bf16.msra.mxu0 %v10697
    %12829 = vmatprep.subr.bf16.mxu0 %v10706
    %12830 = vmatpush1.bf16.msra.mxu0 %v10705
    %12831 = vmatprep.subr.bf16.mxu0 %v10714
    %12832 = vmatpush1.bf16.msra.mxu0 %v10713
    %12833 = vmatprep.subr.bf16.mxu0 %v10722
    %12834 = vmatpush1.bf16.msra.mxu0 %v10721
    %12835 = vmatprep.subr.bf16.mxu0 %v10730
    %12836 = vmatpush1.bf16.msra.mxu0 %v10729
    %12837 = vmatprep.subr.bf16.mxu0 %v10738
    %12838 = vmatpush1.bf16.msra.mxu0 %v10737
    %12839 = vmatprep.subr.bf16.mxu0 %v10746
    %12840 = vmatpush1.bf16.msra.mxu0 %v10745
    %12841 = vmatprep.subr.bf16.mxu0 %v10754
    %12842 = vmatpush1.bf16.msra.mxu0 %v10753
    %12843 = vmatprep.mubr.bf16.mxu0 %v6770
    %12844 = vmatmul.mubr.bf16.gmra.mrb[0].mxu0 %v6769
    %v12845 = vpop.f32.mrb[0].mxu0
    %v12846 = vadd.f32 %v12805, %v12845
    %v12847 = vpop.f32.mrb[0].mxu0
    %v12848 = vadd.f32 %v12807, %v12847
    %v12849 = vpop.f32.mrb[0].mxu0
    %v12850 = vpop.f32.mrb[0].mxu0
    %12851 = vdwg.mxu0
    %12852 = vmatprep.subr.bf16.mxu0 %v10762
    %12853 = vmatpush1.bf16.msra.mxu0 %v10761
    %12854 = vmatprep.subr.bf16.mxu0 %v10770
    %12855 = vmatpush1.bf16.msra.mxu0 %v10769
    %12856 = vmatprep.subr.bf16.mxu0 %v10778
    %12857 = vmatpush1.bf16.msra.mxu0 %v10777
    %12858 = vmatprep.subr.bf16.mxu0 %v10786
    %12859 = vmatpush1.bf16.msra.mxu0 %v10785
    %12860 = vmatprep.subr.bf16.mxu0 %v10794
    %12861 = vmatpush1.bf16.msra.mxu0 %v10793
    %12862 = vmatprep.subr.bf16.mxu0 %v10802
    %12863 = vmatpush1.bf16.msra.mxu0 %v10801
    %12864 = vmatprep.subr.bf16.mxu0 %v10810
    %12865 = vmatpush1.bf16.msra.mxu0 %v10809
    %12866 = vmatprep.subr.bf16.mxu0 %v10818
    %12867 = vmatpush1.bf16.msra.mxu0 %v10817
    %12868 = vmatprep.subr.bf16.mxu0 %v10826
    %12869 = vmatpush1.bf16.msra.mxu0 %v10825
    %12870 = vmatprep.subr.bf16.mxu0 %v10834
    %12871 = vmatpush1.bf16.msra.mxu0 %v10833
    %12872 = vmatprep.subr.bf16.mxu0 %v10842
    %12873 = vmatpush1.bf16.msra.mxu0 %v10841
    %12874 = vmatprep.subr.bf16.mxu0 %v10850
    %12875 = vmatpush1.bf16.msra.mxu0 %v10849
    %12876 = vmatprep.subr.bf16.mxu0 %v10858
    %12877 = vmatpush1.bf16.msra.mxu0 %v10857
    %12878 = vmatprep.subr.bf16.mxu0 %v10866
    %12879 = vmatpush1.bf16.msra.mxu0 %v10865
    %12880 = vmatprep.subr.bf16.mxu0 %v10874
    %12881 = vmatpush1.bf16.msra.mxu0 %v10873
    %12882 = vmatprep.subr.bf16.mxu0 %v10882
    %12883 = vmatpush1.bf16.msra.mxu0 %v10881
    %12884 = vmatprep.mubr.bf16.mxu0 %v6772
    %12885 = vmatmul.mubr.bf16.gmra.mrb[0].mxu0 %v6771
    %v12886 = vpop.f32.mrb[0].mxu0
    %v12887 = vadd.f32 %v12846, %v12886
    %v12888 = vpop.f32.mrb[0].mxu0
    %v12889 = vadd.f32 %v12848, %v12888
    %v12890 = vpop.f32.mrb[0].mxu0
    %v12891 = vpop.f32.mrb[0].mxu0
    %12892 = vdwg.mxu0
    %12893 = vmatprep.subr.bf16.mxu0 %v9868
    %12894 = vmatpush1.bf16.msra.mxu0 %v9867
    %12895 = vmatprep.subr.bf16.mxu0 %v9876
    %12896 = vmatpush1.bf16.msra.mxu0 %v9875
    %12897 = vmatprep.subr.bf16.mxu0 %v9884
    %12898 = vmatpush1.bf16.msra.mxu0 %v9883
    %12899 = vmatprep.subr.bf16.mxu0 %v9892
    %12900 = vmatpush1.bf16.msra.mxu0 %v9891
    %12901 = vmatprep.subr.bf16.mxu0 %v9900
    %12902 = vmatpush1.bf16.msra.mxu0 %v9899
    %12903 = vmatprep.subr.bf16.mxu0 %v9908
    %12904 = vmatpush1.bf16.msra.mxu0 %v9907
    %12905 = vmatprep.subr.bf16.mxu0 %v9916
    %12906 = vmatpush1.bf16.msra.mxu0 %v9915
    %12907 = vmatprep.subr.bf16.mxu0 %v9924
    %12908 = vmatpush1.bf16.msra.mxu0 %v9923
    %12909 = vmatprep.subr.bf16.mxu0 %v9932
    %12910 = vmatpush1.bf16.msra.mxu0 %v9931
    %12911 = vmatprep.subr.bf16.mxu0 %v9940
    %12912 = vmatpush1.bf16.msra.mxu0 %v9939
    %12913 = vmatprep.subr.bf16.mxu0 %v9948
    %12914 = vmatpush1.bf16.msra.mxu0 %v9947
    %12915 = vmatprep.subr.bf16.mxu0 %v9956
    %12916 = vmatpush1.bf16.msra.mxu0 %v9955
    %12917 = vmatprep.subr.bf16.mxu0 %v9964
    %12918 = vmatpush1.bf16.msra.mxu0 %v9963
    %12919 = vmatprep.subr.bf16.mxu0 %v9972
    %12920 = vmatpush1.bf16.msra.mxu0 %v9971
    %12921 = vmatprep.subr.bf16.mxu0 %v9980
    %12922 = vmatpush1.bf16.msra.mxu0 %v9979
    %12923 = vmatprep.subr.bf16.mxu0 %v9988
    %12924 = vmatpush1.bf16.msra.mxu0 %v9987
    %12925 = vmatprep.mubr.bf16.mxu0 %v6758
    %12926 = vmatmul.mubr.bf16.gmra.mrb[0].mxu0 %v6757
    %v12927 = vpop.f32.mrb[0].mxu0
    %v12928 = vadd.f32 %v3399, %v12927
    %v12929 = vpop.f32.mrb[0].mxu0
    %v12930 = vadd.f32 %v3403, %v12929
    %v12931 = vpop.f32.mrb[0].mxu0
    %v12932 = vpop.f32.mrb[0].mxu0
    %12933 = vdwg.mxu0
    %12934 = vmatprep.subr.bf16.mxu0 %v9996
    %12935 = vmatpush1.bf16.msra.mxu0 %v9995
    %12936 = vmatprep.subr.bf16.mxu0 %v10004
    %12937 = vmatpush1.bf16.msra.mxu0 %v10003
    %12938 = vmatprep.subr.bf16.mxu0 %v10012
    %12939 = vmatpush1.bf16.msra.mxu0 %v10011
    %12940 = vmatprep.subr.bf16.mxu0 %v10020
    %12941 = vmatpush1.bf16.msra.mxu0 %v10019
    %12942 = vmatprep.subr.bf16.mxu0 %v10028
    %12943 = vmatpush1.bf16.msra.mxu0 %v10027
    %12944 = vmatprep.subr.bf16.mxu0 %v10036
    %12945 = vmatpush1.bf16.msra.mxu0 %v10035
    %12946 = vmatprep.subr.bf16.mxu0 %v10044
    %12947 = vmatpush1.bf16.msra.mxu0 %v10043
    %12948 = vmatprep.subr.bf16.mxu0 %v10052
    %12949 = vmatpush1.bf16.msra.mxu0 %v10051
    %12950 = vmatprep.subr.bf16.mxu0 %v10060
    %12951 = vmatpush1.bf16.msra.mxu0 %v10059
    %12952 = vmatprep.subr.bf16.mxu0 %v10068
    %12953 = vmatpush1.bf16.msra.mxu0 %v10067
    %12954 = vmatprep.subr.bf16.mxu0 %v10076
    %12955 = vmatpush1.bf16.msra.mxu0 %v10075
    %12956 = vmatprep.subr.bf16.mxu0 %v10084
    %12957 = vmatpush1.bf16.msra.mxu0 %v10083
    %12958 = vmatprep.subr.bf16.mxu0 %v10092
    %12959 = vmatpush1.bf16.msra.mxu0 %v10091
    %12960 = vmatprep.subr.bf16.mxu0 %v10100
    %12961 = vmatpush1.bf16.msra.mxu0 %v10099
    %12962 = vmatprep.subr.bf16.mxu0 %v10108
    %12963 = vmatpush1.bf16.msra.mxu0 %v10107
    %12964 = vmatprep.subr.bf16.mxu0 %v10116
    %12965 = vmatpush1.bf16.msra.mxu0 %v10115
    %12966 = vmatprep.mubr.bf16.mxu0 %v6760
    %12967 = vmatmul.mubr.bf16.gmra.mrb[0].mxu0 %v6759
    %v12968 = vpop.f32.mrb[0].mxu0
    %v12969 = vadd.f32 %v12928, %v12968
    %v12970 = vpop.f32.mrb[0].mxu0
    %v12971 = vadd.f32 %v12930, %v12970
    %v12972 = vpop.f32.mrb[0].mxu0
    %v12973 = vpop.f32.mrb[0].mxu0
    %12974 = vdwg.mxu0
    %12975 = vmatprep.subr.bf16.mxu0 %v10124
    %12976 = vmatpush1.bf16.msra.mxu0 %v10123
    %12977 = vmatprep.subr.bf16.mxu0 %v10132
    %12978 = vmatpush1.bf16.msra.mxu0 %v10131
    %12979 = vmatprep.subr.bf16.mxu0 %v10140
    %12980 = vmatpush1.bf16.msra.mxu0 %v10139
    %12981 = vmatprep.subr.bf16.mxu0 %v10148
    %12982 = vmatpush1.bf16.msra.mxu0 %v10147
    %12983 = vmatprep.subr.bf16.mxu0 %v10156
    %12984 = vmatpush1.bf16.msra.mxu0 %v10155
    %12985 = vmatprep.subr.bf16.mxu0 %v10164
    %12986 = vmatpush1.bf16.msra.mxu0 %v10163
    %12987 = vmatprep.subr.bf16.mxu0 %v10172
    %12988 = vmatpush1.bf16.msra.mxu0 %v10171
    %12989 = vmatprep.subr.bf16.mxu0 %v10180
    %12990 = vmatpush1.bf16.msra.mxu0 %v10179
    %12991 = vmatprep.subr.bf16.mxu0 %v10188
    %12992 = vmatpush1.bf16.msra.mxu0 %v10187
    %12993 = vmatprep.subr.bf16.mxu0 %v10196
    %12994 = vmatpush1.bf16.msra.mxu0 %v10195
    %12995 = vmatprep.subr.bf16.mxu0 %v10204
    %12996 = vmatpush1.bf16.msra.mxu0 %v10203
    %12997 = vmatprep.subr.bf16.mxu0 %v10212
    %12998 = vmatpush1.bf16.msra.mxu0 %v10211
    %12999 = vmatprep.subr.bf16.mxu0 %v10220
    %13000 = vmatpush1.bf16.msra.mxu0 %v10219
    %13001 = vmatprep.subr.bf16.mxu0 %v10228
    %13002 = vmatpush1.bf16.msra.mxu0 %v10227
    %13003 = vmatprep.subr.bf16.mxu0 %v10236
    %13004 = vmatpush1.bf16.msra.mxu0 %v10235
    %13005 = vmatprep.subr.bf16.mxu0 %v10244
    %13006 = vmatpush1.bf16.msra.mxu0 %v10243
    %13007 = vmatprep.mubr.bf16.mxu0 %v6762
    %13008 = vmatmul.mubr.bf16.gmra.mrb[0].mxu0 %v6761
    %v13009 = vpop.f32.mrb[0].mxu0
    %v13010 = vadd.f32 %v12969, %v13009
    %v13011 = vpop.f32.mrb[0].mxu0
    %v13012 = vadd.f32 %v12971, %v13011
    %v13013 = vpop.f32.mrb[0].mxu0
    %v13014 = vpop.f32.mrb[0].mxu0
    %13015 = vdwg.mxu0
    %13016 = vmatprep.subr.bf16.mxu0 %v10252
    %13017 = vmatpush1.bf16.msra.mxu0 %v10251
    %13018 = vmatprep.subr.bf16.mxu0 %v10260
    %13019 = vmatpush1.bf16.msra.mxu0 %v10259
    %13020 = vmatprep.subr.bf16.mxu0 %v10268
    %13021 = vmatpush1.bf16.msra.mxu0 %v10267
    %13022 = vmatprep.subr.bf16.mxu0 %v10276
    %13023 = vmatpush1.bf16.msra.mxu0 %v10275
    %13024 = vmatprep.subr.bf16.mxu0 %v10284
    %13025 = vmatpush1.bf16.msra.mxu0 %v10283
    %13026 = vmatprep.subr.bf16.mxu0 %v10292
    %13027 = vmatpush1.bf16.msra.mxu0 %v10291
    %13028 = vmatprep.subr.bf16.mxu0 %v10300
    %13029 = vmatpush1.bf16.msra.mxu0 %v10299
    %13030 = vmatprep.subr.bf16.mxu0 %v10308
    %13031 = vmatpush1.bf16.msra.mxu0 %v10307
    %13032 = vmatprep.subr.bf16.mxu0 %v10316
    %13033 = vmatpush1.bf16.msra.mxu0 %v10315
    %13034 = vmatprep.subr.bf16.mxu0 %v10324
    %13035 = vmatpush1.bf16.msra.mxu0 %v10323
    %13036 = vmatprep.subr.bf16.mxu0 %v10332
    %13037 = vmatpush1.bf16.msra.mxu0 %v10331
    %13038 = vmatprep.subr.bf16.mxu0 %v10340
    %13039 = vmatpush1.bf16.msra.mxu0 %v10339
    %13040 = vmatprep.subr.bf16.mxu0 %v10348
    %13041 = vmatpush1.bf16.msra.mxu0 %v10347
    %13042 = vmatprep.subr.bf16.mxu0 %v10356
    %13043 = vmatpush1.bf16.msra.mxu0 %v10355
    %13044 = vmatprep.subr.bf16.mxu0 %v10364
    %13045 = vmatpush1.bf16.msra.mxu0 %v10363
    %13046 = vmatprep.subr.bf16.mxu0 %v10372
    %13047 = vmatpush1.bf16.msra.mxu0 %v10371
    %13048 = vmatprep.mubr.bf16.mxu0 %v6764
    %13049 = vmatmul.mubr.bf16.gmra.mrb[0].mxu0 %v6763
    %v13050 = vpop.f32.mrb[0].mxu0
    %v13051 = vadd.f32 %v13010, %v13050
    %v13052 = vpop.f32.mrb[0].mxu0
    %v13053 = vadd.f32 %v13012, %v13052
    %v13054 = vpop.f32.mrb[0].mxu0
    %v13055 = vpop.f32.mrb[0].mxu0
    %13056 = vdwg.mxu0
    %13057 = vmatprep.subr.bf16.mxu0 %v10380
    %13058 = vmatpush1.bf16.msra.mxu0 %v10379
    %13059 = vmatprep.subr.bf16.mxu0 %v10388
    %13060 = vmatpush1.bf16.msra.mxu0 %v10387
    %13061 = vmatprep.subr.bf16.mxu0 %v10396
    %13062 = vmatpush1.bf16.msra.mxu0 %v10395
    %13063 = vmatprep.subr.bf16.mxu0 %v10404
    %13064 = vmatpush1.bf16.msra.mxu0 %v10403
    %13065 = vmatprep.subr.bf16.mxu0 %v10412
    %13066 = vmatpush1.bf16.msra.mxu0 %v10411
    %13067 = vmatprep.subr.bf16.mxu0 %v10420
    %13068 = vmatpush1.bf16.msra.mxu0 %v10419
    %13069 = vmatprep.subr.bf16.mxu0 %v10428
    %13070 = vmatpush1.bf16.msra.mxu0 %v10427
    %13071 = vmatprep.subr.bf16.mxu0 %v10436
    %13072 = vmatpush1.bf16.msra.mxu0 %v10435
    %13073 = vmatprep.subr.bf16.mxu0 %v10444
    %13074 = vmatpush1.bf16.msra.mxu0 %v10443
    %13075 = vmatprep.subr.bf16.mxu0 %v10452
    %13076 = vmatpush1.bf16.msra.mxu0 %v10451
    %13077 = vmatprep.subr.bf16.mxu0 %v10460
    %13078 = vmatpush1.bf16.msra.mxu0 %v10459
    %13079 = vmatprep.subr.bf16.mxu0 %v10468
    %13080 = vmatpush1.bf16.msra.mxu0 %v10467
    %13081 = vmatprep.subr.bf16.mxu0 %v10476
    %13082 = vmatpush1.bf16.msra.mxu0 %v10475
    %13083 = vmatprep.subr.bf16.mxu0 %v10484
    %13084 = vmatpush1.bf16.msra.mxu0 %v10483
    %13085 = vmatprep.subr.bf16.mxu0 %v10492
    %13086 = vmatpush1.bf16.msra.mxu0 %v10491
    %13087 = vmatprep.subr.bf16.mxu0 %v10500
    %13088 = vmatpush1.bf16.msra.mxu0 %v10499
    %13089 = vmatprep.mubr.bf16.mxu0 %v6766
    %13090 = vmatmul.mubr.bf16.gmra.mrb[0].mxu0 %v6765
    %v13091 = vpop.f32.mrb[0].mxu0
    %v13092 = vadd.f32 %v13051, %v13091
    %v13093 = vpop.f32.mrb[0].mxu0
    %v13094 = vadd.f32 %v13053, %v13093
    %v13095 = vpop.f32.mrb[0].mxu0
    %v13096 = vpop.f32.mrb[0].mxu0
    %13097 = vdwg.mxu0
    %13098 = vmatprep.subr.bf16.mxu0 %v10508
    %13099 = vmatpush1.bf16.msra.mxu0 %v10507
    %13100 = vmatprep.subr.bf16.mxu0 %v10516
    %13101 = vmatpush1.bf16.msra.mxu0 %v10515
    %13102 = vmatprep.subr.bf16.mxu0 %v10524
    %13103 = vmatpush1.bf16.msra.mxu0 %v10523
    %13104 = vmatprep.subr.bf16.mxu0 %v10532
    %13105 = vmatpush1.bf16.msra.mxu0 %v10531
    %13106 = vmatprep.subr.bf16.mxu0 %v10540
    %13107 = vmatpush1.bf16.msra.mxu0 %v10539
    %13108 = vmatprep.subr.bf16.mxu0 %v10548
    %13109 = vmatpush1.bf16.msra.mxu0 %v10547
    %13110 = vmatprep.subr.bf16.mxu0 %v10556
    %13111 = vmatpush1.bf16.msra.mxu0 %v10555
    %13112 = vmatprep.subr.bf16.mxu0 %v10564
    %13113 = vmatpush1.bf16.msra.mxu0 %v10563
    %13114 = vmatprep.subr.bf16.mxu0 %v10572
    %13115 = vmatpush1.bf16.msra.mxu0 %v10571
    %13116 = vmatprep.subr.bf16.mxu0 %v10580
    %13117 = vmatpush1.bf16.msra.mxu0 %v10579
    %13118 = vmatprep.subr.bf16.mxu0 %v10588
    %13119 = vmatpush1.bf16.msra.mxu0 %v10587
    %13120 = vmatprep.subr.bf16.mxu0 %v10596
    %13121 = vmatpush1.bf16.msra.mxu0 %v10595
    %13122 = vmatprep.subr.bf16.mxu0 %v10604
    %13123 = vmatpush1.bf16.msra.mxu0 %v10603
    %13124 = vmatprep.subr.bf16.mxu0 %v10612
    %13125 = vmatpush1.bf16.msra.mxu0 %v10611
    %13126 = vmatprep.subr.bf16.mxu0 %v10620
    %13127 = vmatpush1.bf16.msra.mxu0 %v10619
    %13128 = vmatprep.subr.bf16.mxu0 %v10628
    %13129 = vmatpush1.bf16.msra.mxu0 %v10627
    %13130 = vmatprep.mubr.bf16.mxu0 %v6768
    %13131 = vmatmul.mubr.bf16.gmra.mrb[0].mxu0 %v6767
    %v13132 = vpop.f32.mrb[0].mxu0
    %v13133 = vadd.f32 %v13092, %v13132
    %v13134 = vpop.f32.mrb[0].mxu0
    %v13135 = vadd.f32 %v13094, %v13134
    %v13136 = vpop.f32.mrb[0].mxu0
    %v13137 = vpop.f32.mrb[0].mxu0
    %13138 = vdwg.mxu0
    %13139 = vmatprep.subr.bf16.mxu0 %v10636
    %13140 = vmatpush1.bf16.msra.mxu0 %v10635
    %13141 = vmatprep.subr.bf16.mxu0 %v10644
    %13142 = vmatpush1.bf16.msra.mxu0 %v10643
    %13143 = vmatprep.subr.bf16.mxu0 %v10652
    %13144 = vmatpush1.bf16.msra.mxu0 %v10651
    %13145 = vmatprep.subr.bf16.mxu0 %v10660
    %13146 = vmatpush1.bf16.msra.mxu0 %v10659
    %13147 = vmatprep.subr.bf16.mxu0 %v10668
    %13148 = vmatpush1.bf16.msra.mxu0 %v10667
    %13149 = vmatprep.subr.bf16.mxu0 %v10676
    %13150 = vmatpush1.bf16.msra.mxu0 %v10675
    %13151 = vmatprep.subr.bf16.mxu0 %v10684
    %13152 = vmatpush1.bf16.msra.mxu0 %v10683
    %13153 = vmatprep.subr.bf16.mxu0 %v10692
    %13154 = vmatpush1.bf16.msra.mxu0 %v10691
    %13155 = vmatprep.subr.bf16.mxu0 %v10700
    %13156 = vmatpush1.bf16.msra.mxu0 %v10699
    %13157 = vmatprep.subr.bf16.mxu0 %v10708
    %13158 = vmatpush1.bf16.msra.mxu0 %v10707
    %13159 = vmatprep.subr.bf16.mxu0 %v10716
    %13160 = vmatpush1.bf16.msra.mxu0 %v10715
    %13161 = vmatprep.subr.bf16.mxu0 %v10724
    %13162 = vmatpush1.bf16.msra.mxu0 %v10723
    %13163 = vmatprep.subr.bf16.mxu0 %v10732
    %13164 = vmatpush1.bf16.msra.mxu0 %v10731
    %13165 = vmatprep.subr.bf16.mxu0 %v10740
    %13166 = vmatpush1.bf16.msra.mxu0 %v10739
    %13167 = vmatprep.subr.bf16.mxu0 %v10748
    %13168 = vmatpush1.bf16.msra.mxu0 %v10747
    %13169 = vmatprep.subr.bf16.mxu0 %v10756
    %13170 = vmatpush1.bf16.msra.mxu0 %v10755
    %13171 = vmatprep.mubr.bf16.mxu0 %v6770
    %13172 = vmatmul.mubr.bf16.gmra.mrb[0].mxu0 %v6769
    %v13173 = vpop.f32.mrb[0].mxu0
    %v13174 = vadd.f32 %v13133, %v13173
    %v13175 = vpop.f32.mrb[0].mxu0
    %v13176 = vadd.f32 %v13135, %v13175
    %v13177 = vpop.f32.mrb[0].mxu0
    %v13178 = vpop.f32.mrb[0].mxu0
    %13179 = vdwg.mxu0
    %13180 = vmatprep.subr.bf16.mxu0 %v10764
    %13181 = vmatpush1.bf16.msra.mxu0 %v10763
    %13182 = vmatprep.subr.bf16.mxu0 %v10772
    %13183 = vmatpush1.bf16.msra.mxu0 %v10771
    %13184 = vmatprep.subr.bf16.mxu0 %v10780
    %13185 = vmatpush1.bf16.msra.mxu0 %v10779
    %13186 = vmatprep.subr.bf16.mxu0 %v10788
    %13187 = vmatpush1.bf16.msra.mxu0 %v10787
    %13188 = vmatprep.subr.bf16.mxu0 %v10796
    %13189 = vmatpush1.bf16.msra.mxu0 %v10795
    %13190 = vmatprep.subr.bf16.mxu0 %v10804
    %13191 = vmatpush1.bf16.msra.mxu0 %v10803
    %13192 = vmatprep.subr.bf16.mxu0 %v10812
    %13193 = vmatpush1.bf16.msra.mxu0 %v10811
    %13194 = vmatprep.subr.bf16.mxu0 %v10820
    %13195 = vmatpush1.bf16.msra.mxu0 %v10819
    %13196 = vmatprep.subr.bf16.mxu0 %v10828
    %13197 = vmatpush1.bf16.msra.mxu0 %v10827
    %13198 = vmatprep.subr.bf16.mxu0 %v10836
    %13199 = vmatpush1.bf16.msra.mxu0 %v10835
    %13200 = vmatprep.subr.bf16.mxu0 %v10844
    %13201 = vmatpush1.bf16.msra.mxu0 %v10843
    %13202 = vmatprep.subr.bf16.mxu0 %v10852
    %13203 = vmatpush1.bf16.msra.mxu0 %v10851
    %13204 = vmatprep.subr.bf16.mxu0 %v10860
    %13205 = vmatpush1.bf16.msra.mxu0 %v10859
    %13206 = vmatprep.subr.bf16.mxu0 %v10868
    %13207 = vmatpush1.bf16.msra.mxu0 %v10867
    %13208 = vmatprep.subr.bf16.mxu0 %v10876
    %13209 = vmatpush1.bf16.msra.mxu0 %v10875
    %13210 = vmatprep.subr.bf16.mxu0 %v10884
    %13211 = vmatpush1.bf16.msra.mxu0 %v10883
    %13212 = vmatprep.mubr.bf16.mxu0 %v6772
    %13213 = vmatmul.mubr.bf16.gmra.mrb[0].mxu0 %v6771
    %v13214 = vpop.f32.mrb[0].mxu0
    %v13215 = vadd.f32 %v13174, %v13214
    %v13216 = vpop.f32.mrb[0].mxu0
    %v13217 = vadd.f32 %v13176, %v13216
    %v13218 = vpop.f32.mrb[0].mxu0
    %v13219 = vpop.f32.mrb[0].mxu0
    %13220 = vdwg.mxu0
    %v13229 = vcombine.low %v12231, %v12233
    %v13230 = vcombine.low %v12559, %v12561
    %v13232 = vunpack.c.l.s4 1983009808
    %v13233 = vunpack.c.0.s8 %v13232
    %v13234 = vlaneseq
    %v13235 = vshrl.u32 %v13234, 7
    %v13236 = vsub.s32 %v13233, %v13235
    %v13237 = vrot.slane %v13229, %v13236
    %v13239 = vunpack.c.l.s4 1983009808
    %v13240 = vunpack.c.0.s8 %v13239
    %v13241 = vlaneseq
    %v13242 = vshrl.u32 %v13241, 7
    %v13243 = vsub.s32 %v13240, %v13242
    %v13244 = vrot.slane %v13230, %v13243
    %v13245 = vcombine.low %v13237, %v13244
    %v13246 = vcombine.low %v12887, %v12889
    %v13247 = vcombine.low %v13215, %v13217
    %v13249 = vunpack.c.l.s4 1983009808
    %v13250 = vunpack.c.0.s8 %v13249
    %v13251 = vlaneseq
    %v13252 = vshrl.u32 %v13251, 7
    %v13253 = vsub.s32 %v13250, %v13252
    %v13254 = vrot.slane %v13246, %v13253
    %v13256 = vunpack.c.l.s4 1983009808
    %v13257 = vunpack.c.0.s8 %v13256
    %v13258 = vlaneseq
    %v13259 = vshrl.u32 %v13258, 7
    %v13260 = vsub.s32 %v13257, %v13259
    %v13261 = vrot.slane %v13247, %v13260
    %v13262 = vcombine.low %v13254, %v13261
    %13265 = vst [vmem:[#allocation7] sm:$0xff] %v13245
    %13266 = vst [vmem:[#allocation7 + $0x8] sm:$0xff] %v13262
    // Predicated region
    $region22: #{resnet50_cutted_forward.1} parent=1 // pred_check
      _
    $region23: #{resnet50_cutted_forward.1} parent=1 // pred_check_branch
      %13268 = sbr.rel (0) target = $region25
    $region24: #{resnet50_cutted_forward.1} parent=1 // pred_region
      %s13270 = ssub.s32 256, 256
      %13271 = vsyncadd [#allocation4], %s13270
      %s13273 = sshll.u32 [#allocation7], 4
      %s13274 = int_to_ptr.vmem [resolvable:$true] %s13273
      %13276 = dma.vmem_to_hbm [thread:$0]  %s13274, 256, %s3, [#allocation4]
    $region25: #{resnet50_cutted_forward.1} parent=1 // pred_fallthru
      _
    // Predicated region
    $region26: #{resnet50_cutted_forward.1} parent=1 // pred_check
      _
    $region27: #{resnet50_cutted_forward.1} parent=1 // pred_check_branch
      %13278 = sbr.rel (0) target = $region29
    $region28: #{resnet50_cutted_forward.1} parent=1 // pred_region
      %13279 = dma.done [#allocation4], 256
    $region29: #{resnet50_cutted_forward.1} parent=1 // pred_fallthru
      _
    %13280 = vsyncpa [#allocation3], 1
    %13281 = vsyncpa [#allocation6], 1
    %13282 = vsyncpa [#allocation4], 1

</llo_original>
